<compile_context>
chip_gen: v7x
topology: tpu7x:2x2x1
jax: 0.10.0
libtpu: 0.0.40
codegen_flags: <defaults>
</compile_context>

<pallas_src>
import functools

import numpy as np
import jax
import jax.numpy as jnp
from jax.experimental import pallas as pl
from jax.experimental.pallas import tpu as pltpu


def _round_up(x, m):
    return (x + m - 1) // m * m


def _pad_to(a, target_shape):
    pads = [(0, t - s) for s, t in zip(a.shape, target_shape)]
    if all(p == (0, 0) for p in pads):
        return a
    return jnp.pad(a, pads)


def _const_spec(arr):
    nd = arr.ndim
    return pl.BlockSpec(arr.shape, lambda b, _nd=nd: (0,) * _nd)


def cross_attn_block_kernel(
    x_ref,            # (Bb, Np, Cp) f32  zero-padded image tokens
    wscore_ref,       # (Cp, HL)  bf16    k_w @ blockdiag_h(scale * q_h^T)
    vw_ref,           # (Cp, Cp)  bf16    v projection weight
    projw_ref,        # (Cp, Cp)  bf16    attention output projection weight
    lm2_ref,          # (Np, HL)  bf16    lm_w tiled over heads
    bias_ref,         # (Np, Cp)  f32     rowsum(lm_w) * proj_b + lm_b (pad cols = 0)
    hmask_ref,        # (HL, Cp)  f32     head-diagonal mask
    n2w_ref, n2b_ref,               # (1, Cp) f32   norm2 affine (pad = 0)
    fc1w_ref, fc1b_ref,             # (Cp, Hp) bf16 / (1, Hp) f32
    fc2w_ref, fc2b_ref,             # (Hp, Cp) bf16 / (1, Cp) f32
    out_ref,          # (Bb, Np, Cp) f32
    *, n_real, c_real, eps,
):
    f32, bf16 = jnp.float32, jnp.bfloat16

    x3 = x_ref[...]                                 # (Bb, Np, Cp)
    Bb, Np, Cp = x3.shape
    M = Bb * Np
    xm = x3.reshape(M, Cp)                          # layout-free: Np % 8 == 0
    xm_b = xm.astype(bf16)

    # ---- attention scores for ALL heads in one wide MXU pass --------------
    s = jnp.dot(xm_b, wscore_ref[...], preferred_element_type=f32)   # (M, HL)
    HL = s.shape[-1]
    s3 = s.reshape(Bb, Np, HL)
    m_ = jnp.max(s3, axis=1, keepdims=True)          # softmax over tokens (axis=1)
    p3 = jnp.exp(s3 - m_)
    if n_real != Np:                                  # drop padded-token rows
        nidx = jax.lax.broadcasted_iota(jnp.int32, (Bb, Np, HL), 1)
        p3 = jnp.where(nidx < n_real, p3, 0.0)
    denom = jnp.sum(p3, axis=1, keepdims=True)
    # approx reciprocal (EUP slot): rows sum to 1 +- ~1e-3 (intentional).
    p3 = (p3 * pl.reciprocal(denom, approx=True)).astype(bf16)

    # ---- v projection ------------------------------------------------------
    v = jnp.dot(xm_b, vw_ref[...], preferred_element_type=f32)        # (M, Cp)
    v3 = v.astype(bf16).reshape(Bb, Np, Cp)

    hmask = hmask_ref[...]
    projw = projw_ref[...]
    lm2 = lm2_ref[...]
    bias = bias_ref[...]

    # ---- per-batch attention core: PV -> head-diag -> proj -> linear_map ---
    for b in range(Bb):                               # static unroll, clean 2-D matmuls
        # full[m, c] = sum_n p[n, m] * v[n, c]   (contract over tokens)
        full_b = jax.lax.dot_general(
            p3[b], v3[b], (((0,), (0,)), ((), ())),
            preferred_element_type=f32)                                # (HL, Cp)
        pj = jnp.dot((full_b * hmask).astype(bf16), projw,
                     preferred_element_type=f32)                       # (HL, Cp)
        y_b = jnp.dot(lm2, pj.astype(bf16),
                      preferred_element_type=f32) + bias               # (Np, Cp)
        out_ref[b] = x3[b] + y_b        # residual 1; out buffer doubles as x1 scratch

    # ---- norm2 + MLP + residual 2, flattened over all rows -----------------
    x1 = out_ref[...].reshape(M, Cp)
    inv_c = 1.0 / c_real                               # padded lanes of x1 are zero
    mean = jnp.sum(x1, axis=-1, keepdims=True) * inv_c
    var = jnp.sum(x1 * x1, axis=-1, keepdims=True) * inv_c - mean * mean
    xn = (x1 - mean) * jax.lax.rsqrt(var + eps) * n2w_ref[...] + n2b_ref[...]

    h1 = jnp.dot(xn.astype(bf16), fc1w_ref[...],
                 preferred_element_type=f32) + fc1b_ref[...]
    # tanh-approx GELU (EUP) instead of erf (VPU polynomial): ~3e-4 abs error.
    h1 = 0.5 * h1 * (1.0 + jnp.tanh(0.7978845608028654 *
                                    (h1 + 0.044715 * h1 * h1 * h1)))
    h2 = jnp.dot(h1.astype(bf16), fc2w_ref[...],
                 preferred_element_type=f32) + fc2b_ref[...]

    out_ref[...] = (x1 + h2).reshape(Bb, Np, Cp).astype(out_ref.dtype)


def _tpu_config():
    try:
        kind = jax.devices()[0].device_kind.lower()
    except Exception:
        kind = ""
    dual_core = any(t in kind for t in ("v7", "v4", "v5p"))
    older = any(t in kind for t in ("v2", "v3", "v4", "v5", "v6"))
    # 128 MiB physical VMEM on <= v6e; be conservative (32 MiB) on v7x / unknown.
    vmem_limit = (64 << 20) if older else (32 << 20)
    return dual_core, vmem_limit


def _pick_block_b(B, Np, Cp, Hidp, HL, weight_bytes, vmem_limit, dual_core):
    budget = max(int(vmem_limit * 0.6) - 2 * weight_bytes, 1)

    def vmem_use(bb):
        io = 2 * 2 * bb * Np * Cp * 4                      # x + out blocks, double-buffered
        inter = bb * Np * (6 * HL + 16 * Cp + 6 * Hidp)    # live intermediates (approx)
        return io + inter

    divs = [d for d in range(1, B + 1) if B % d == 0 and vmem_use(d) <= budget] or [1]
    if dual_core:
        # prefer an even number of grid steps (>=4 if possible) for the 2 TensorCores
        for ok in (lambda d: (B // d) % 2 == 0 and B // d >= 4,
                   lambda d: (B // d) % 2 == 0 and B // d >= 2):
            good = [d for d in divs if ok(d)]
            if good:
                return max(good)
    return max(divs)                                       # single core: biggest that fits


def cross_attention_img_block(x, text_feat, params, num_heads, block_b=None):
    f32, bf16 = jnp.float32, jnp.bfloat16
    B, N, C = x.shape
    L = text_feat.shape[0]
    H = num_heads
    assert C % H == 0
    hd = C // H
    scale = hd ** -0.5
    HL = H * L
    hidden = params["fc1_w"].shape[1]
    assert params["lm_w"].shape == (N, L), "linear_map must map text_L -> N(=129)"

    Np = _round_up(N, 8)          # 129 -> 136: sublane-aligned reshapes
    Cp = _round_up(C, 128)        # lane-dense channels
    Hidp = _round_up(hidden, 128)

    # ---- grid-invariant precompute (tiny; plain XLA outside the kernel) ----
    q = (text_feat.astype(f32) @ params["qq_w"].astype(f32)) * scale          # (L, C)
    k_w = params["kv_w"][:, :C].astype(f32)
    v_w = params["kv_w"][:, C:].astype(f32)
    # scores = x @ w_score  ==  (x @ k_w) @ blockdiag_h(scale * q_h^T)
    w_score = jnp.einsum("chd,lhd->chl", k_w.reshape(C, H, hd),
                         q.reshape(L, H, hd)).reshape(C, HL)
    w_score = _pad_to(w_score, (Cp, HL)).astype(bf16)

    v_w_p = _pad_to(v_w, (Cp, Cp)).astype(bf16)
    proj_w_p = _pad_to(params["proj_w"].astype(f32), (Cp, Cp)).astype(bf16)

    lm_w = params["lm_w"].astype(f32)                          # (N, L)
    lm_b = params["lm_b"].reshape(N, 1).astype(f32)
    proj_b = params["proj_b"].reshape(1, C).astype(f32)
    lm2 = _pad_to(jnp.tile(lm_w, (1, H)), (Np, HL)).astype(bf16)   # lm2[n, h*L+l] = lm_w[n, l]
    bias_term = _pad_to(lm_w.sum(axis=1, keepdims=True) * proj_b + lm_b,
                        (Np, Cp)).astype(f32)

    # head-diagonal mask: 1 where channel c belongs to the head of row m = h*L+l
    hmask_np = ((np.arange(HL)[:, None] // L) == (np.arange(Cp)[None, :] // hd)) \
        & (np.arange(Cp)[None, :] < C)
    hmask = jnp.asarray(hmask_np, dtype=f32)

    n2_w = _pad_to(params["n2_w"].reshape(1, C).astype(f32), (1, Cp))
    n2_b = _pad_to(params["n2_b"].reshape(1, C).astype(f32), (1, Cp))
    fc1_w = _pad_to(params["fc1_w"].astype(f32), (Cp, Hidp)).astype(bf16)
    fc1_b = _pad_to(params["fc1_b"].reshape(1, hidden).astype(f32), (1, Hidp))
    fc2_w = _pad_to(params["fc2_w"].astype(f32), (Hidp, Cp)).astype(bf16)
    fc2_b = _pad_to(params["fc2_b"].reshape(1, C).astype(f32), (1, Cp))

    x_p = _pad_to(x.astype(f32), (B, Np, Cp))

    const_args = [w_score, v_w_p, proj_w_p, lm2, bias_term, hmask,
                  n2_w, n2_b, fc1_w, fc1_b, fc2_w, fc2_b]
    weight_bytes = sum(int(a.size) * a.dtype.itemsize for a in const_args)

    dual_core, vmem_limit = _tpu_config()
    if block_b is None:
        block_b = _pick_block_b(B, Np, Cp, Hidp, HL, weight_bytes,
                                vmem_limit, dual_core)
    assert B % block_b == 0
    grid_b = B // block_b

    kernel = functools.partial(cross_attn_block_kernel,
                               n_real=N, c_real=C, eps=1e-5)

    in_specs = [pl.BlockSpec((block_b, Np, Cp), lambda b: (b, 0, 0))] + \
               [_const_spec(a) for a in const_args]

    flops = 2 * B * (Np * Cp * HL        # scores
                     + Np * Cp * Cp      # v projection
                     + Np * HL * Cp      # PV
                     + HL * Cp * Cp      # proj
                     + Np * HL * Cp      # linear_map
                     + 2 * Np * Cp * Hidp)   # fc1 + fc2
    transcendentals = B * Np * (HL + Hidp)
    bytes_accessed = 2 * B * Np * Cp * 4 + weight_bytes   # weights DMA'd once

    out = pl.pallas_call(
        kernel,
        out_shape=jax.ShapeDtypeStruct((B, Np, Cp), jnp.float32),
        grid=(grid_b,),
        in_specs=in_specs,
        out_specs=pl.BlockSpec((block_b, Np, Cp), lambda b: (b, 0, 0)),
        compiler_params=pltpu.CompilerParams(
            dimension_semantics=("parallel",),
            vmem_limit_bytes=int(vmem_limit)),
        cost_estimate=pl.CostEstimate(
            flops=int(flops), transcendentals=int(transcendentals),
            bytes_accessed=int(bytes_accessed)),
    )(x_p, *const_args)

    return out[:, :N, :C].astype(x.dtype)


def reference_block(x, text, p, num_heads):
    """Pure-JAX (f32) mirror of the PyTorch forward, for validation."""
    B, N, C = x.shape
    L = text.shape[0]
    hd = C // num_heads
    scale = hd ** -0.5
    tf = jnp.broadcast_to(text[None], (B, L, C))
    q = tf @ p["qq_w"]
    kv = x @ p["kv_w"]
    k = kv[..., :C].reshape(B, N, num_heads, hd).transpose(0, 2, 1, 3)
    v = kv[..., C:].reshape(B, N, num_heads, hd).transpose(0, 2, 1, 3)
    qh = q.reshape(B, L, num_heads, hd).transpose(0, 2, 1, 3)
    attn = jnp.einsum("bhld,bhnd->bhln", qh, k) * scale
    attn = jax.nn.softmax(attn, axis=-1)
    o = jnp.einsum("bhln,bhnd->bhld", attn, v).transpose(0, 2, 1, 3).reshape(B, L, C)
    o = o @ p["proj_w"] + p["proj_b"]
    y = jnp.einsum("nl,blc->bnc", p["lm_w"], o) + p["lm_b"][None]
    x1 = x + y
    mean = x1.mean(-1, keepdims=True)
    var = ((x1 - mean) ** 2).mean(-1, keepdims=True)
    xn = (x1 - mean) / jnp.sqrt(var + 1e-5) * p["n2_w"] + p["n2_b"]
    h = jax.nn.gelu(xn @ p["fc1_w"] + p["fc1_b"], approximate=False)
    h = h @ p["fc2_w"] + p["fc2_b"]
    return x1 + h


if __name__ == "__main__":
    # Small shapes consistent with the module: dim=32, heads=4, text_L=8,
    # N=129 (required by linear_map's output width), mlp_ratio=4 -> hidden=128.
    # These exercise both the N->136 and C->128 padding paths.
    B, N, C = 8, 129, 32
    num_heads = 4
    text_L = 8
    hidden = int(C * 4.0)

    key = jax.random.PRNGKey(0)
    ks = jax.random.split(key, 16)

    def w(k, shape, s=0.02):
        return jax.random.normal(k, shape, dtype=jnp.float32) * s

    params = {
        # linear weights stored in (in, out) orientation (i.e. torch weight.T)
        "qq_w":  w(ks[0], (C, C)),
        "kv_w":  w(ks[1], (C, 2 * C)),
        "proj_w": w(ks[2], (C, C)),
        "proj_b": w(ks[3], (1, C)),
        # linear_map stored in torch (out, in) = (129, text_L) orientation
        "lm_w":  w(ks[4], (N, text_L)),
        "lm_b":  w(ks[5], (N, 1)),
        "n2_w":  jnp.ones((1, C), jnp.float32) + w(ks[6], (1, C)),
        "n2_b":  w(ks[7], (1, C)),
        "fc1_w": w(ks[8], (C, hidden)),
        "fc1_b": w(ks[9], (1, hidden)),
        "fc2_w": w(ks[10], (hidden, C)),
        "fc2_b": w(ks[11], (1, C)),
    }

    x = jax.random.normal(ks[12], (B, N, C), dtype=jnp.float32)
    text_feat = jax.random.normal(ks[13], (text_L, C), dtype=jnp.float32)

    out = cross_attention_img_block(x, text_feat, params, num_heads)
    out = jax.block_until_ready(out)

    ref = jax.block_until_ready(reference_block(x, text_feat, params, num_heads))
    assert out.shape == (B, N, C)
    err = float(jnp.max(jnp.abs(out - ref)))
    # bf16 MXU operands + approx reciprocal + tanh GELU: tolerance covers it.
    assert jnp.allclose(out, ref, rtol=2e-2, atol=5e-3), err

    print("KERNEL_OK")
</pallas_src>

<mosaic_0001>
module attributes {stable_mosaic.version = 11 : i64} {
  func.func @cross_attn_block_kernel(%arg0: i32, %arg1: memref<8x136x128xf32, #tpu.memory_space<vmem>>, %arg2: memref<128x32xbf16, #tpu.memory_space<vmem>>, %arg3: memref<128x128xbf16, #tpu.memory_space<vmem>>, %arg4: memref<128x128xbf16, #tpu.memory_space<vmem>>, %arg5: memref<136x32xbf16, #tpu.memory_space<vmem>>, %arg6: memref<136x128xf32, #tpu.memory_space<vmem>>, %arg7: memref<32x128xf32, #tpu.memory_space<vmem>>, %arg8: memref<1x128xf32, #tpu.memory_space<vmem>>, %arg9: memref<1x128xf32, #tpu.memory_space<vmem>>, %arg10: memref<128x128xbf16, #tpu.memory_space<vmem>>, %arg11: memref<1x128xf32, #tpu.memory_space<vmem>>, %arg12: memref<128x128xbf16, #tpu.memory_space<vmem>>, %arg13: memref<1x128xf32, #tpu.memory_space<vmem>>, %arg14: memref<8x136x128xf32, #tpu.memory_space<vmem>>) attributes {dimension_semantics = [#tpu.dimension_semantics<parallel>], iteration_bounds = array<i64: 1>, scalar_prefetch = 0 : i64, scratch_operands = 0 : i64, tpu.core_type = #tpu.core_type<tc>, window_params = [{transform_indices = @transform_0, window_bounds = array<i64: 8, 136, 128>}, {pipeline_mode = #tpu.pipeline_mode<synchronous>, transform_indices = @transform_1, window_bounds = array<i64: 128, 32>}, {pipeline_mode = #tpu.pipeline_mode<synchronous>, transform_indices = @transform_2, window_bounds = array<i64: 128, 128>}, {pipeline_mode = #tpu.pipeline_mode<synchronous>, transform_indices = @transform_3, window_bounds = array<i64: 128, 128>}, {pipeline_mode = #tpu.pipeline_mode<synchronous>, transform_indices = @transform_4, window_bounds = array<i64: 136, 32>}, {pipeline_mode = #tpu.pipeline_mode<synchronous>, transform_indices = @transform_5, window_bounds = array<i64: 136, 128>}, {pipeline_mode = #tpu.pipeline_mode<synchronous>, transform_indices = @transform_6, window_bounds = array<i64: 32, 128>}, {pipeline_mode = #tpu.pipeline_mode<synchronous>, transform_indices = @transform_7, window_bounds = array<i64: 1, 128>}, {pipeline_mode = #tpu.pipeline_mode<synchronous>, transform_indices = @transform_8, window_bounds = array<i64: 1, 128>}, {pipeline_mode = #tpu.pipeline_mode<synchronous>, transform_indices = @transform_9, window_bounds = array<i64: 128, 128>}, {pipeline_mode = #tpu.pipeline_mode<synchronous>, transform_indices = @transform_10, window_bounds = array<i64: 1, 128>}, {pipeline_mode = #tpu.pipeline_mode<synchronous>, transform_indices = @transform_11, window_bounds = array<i64: 128, 128>}, {pipeline_mode = #tpu.pipeline_mode<synchronous>, transform_indices = @transform_12, window_bounds = array<i64: 1, 128>}, {transform_indices = @transform_13, window_bounds = array<i64: 8, 136, 128>}]} {
    %c0 = arith.constant 0 : index
    %c0_0 = arith.constant 0 : index
    %c0_1 = arith.constant 0 : index
    %0 = vector.load %arg1[%c0, %c0_0, %c0_1] : memref<8x136x128xf32, #tpu.memory_space<vmem>>, vector<8x136x128xf32>
    %1 = vector.shape_cast %0 : vector<8x136x128xf32> to vector<1088x128xf32>
    %2 = arith.truncf %1 : vector<1088x128xf32> to vector<1088x128xbf16>
    %c0_2 = arith.constant 0 : index
    %c0_3 = arith.constant 0 : index
    %3 = vector.load %arg2[%c0_2, %c0_3] : memref<128x32xbf16, #tpu.memory_space<vmem>>, vector<128x32xbf16>
    %cst = arith.constant dense<0.000000e+00> : vector<1088x32xf32>
    %4 = tpu.matmul %2, %3, %cst {dimension_numbers = #tpu.dot_dimension_numbers<[1], [0], [0], [1], [0, 0, 1, 1], [], []>} : vector<1088x128xbf16>, vector<128x32xbf16>, vector<1088x32xf32> -> vector<1088x32xf32>
    %5 = vector.shape_cast %4 : vector<1088x32xf32> to vector<8x136x32xf32>
    %cst_4 = arith.constant dense<0xFF800000> : vector<8x32xf32>
    %6 = vector.multi_reduction <maximumf>, %5, %cst_4 [1] : vector<8x136x32xf32> to vector<8x32xf32>
    %7 = vector.shape_cast %6 : vector<8x32xf32> to vector<8x1x32xf32>
    %8 = vector.broadcast %7 : vector<8x1x32xf32> to vector<8x136x32xf32>
    %9 = arith.subf %5, %8 : vector<8x136x32xf32>
    %10 = math.exp %9 : vector<8x136x32xf32>
    %11 = tpu.iota {dimensions = array<i32: 1>} : vector<8x136x32xi32>
    %c129_i32 = arith.constant 129 : i32
    %12 = vector.broadcast %c129_i32 : i32 to vector<8x136x32xi32>
    %13 = arith.cmpi slt, %11, %12 : vector<8x136x32xi32>
    %cst_5 = arith.constant 0.000000e+00 : f32
    %14 = vector.broadcast %cst_5 : f32 to vector<8x136x32xf32>
    %15 = arith.select %13, %10, %14 : vector<8x136x32xi1>, vector<8x136x32xf32>
    %cst_6 = arith.constant dense<0.000000e+00> : vector<8x32xf32>
    %16 = vector.multi_reduction <add>, %15, %cst_6 [1] : vector<8x136x32xf32> to vector<8x32xf32>
    %17 = vector.shape_cast %16 : vector<8x32xf32> to vector<8x1x32xf32>
    %18 = tpu.reciprocal %17 {approx = true} : vector<8x1x32xf32> -> vector<8x1x32xf32>
    %19 = vector.broadcast %18 : vector<8x1x32xf32> to vector<8x136x32xf32>
    %20 = arith.mulf %15, %19 : vector<8x136x32xf32>
    %21 = arith.truncf %20 : vector<8x136x32xf32> to vector<8x136x32xbf16>
    %c0_7 = arith.constant 0 : index
    %c0_8 = arith.constant 0 : index
    %22 = vector.load %arg3[%c0_7, %c0_8] : memref<128x128xbf16, #tpu.memory_space<vmem>>, vector<128x128xbf16>
    %cst_9 = arith.constant dense<0.000000e+00> : vector<1088x128xf32>
    %23 = tpu.matmul %2, %22, %cst_9 {dimension_numbers = #tpu.dot_dimension_numbers<[1], [0], [0], [1], [0, 0, 1, 1], [], []>} : vector<1088x128xbf16>, vector<128x128xbf16>, vector<1088x128xf32> -> vector<1088x128xf32>
    %24 = arith.truncf %23 : vector<1088x128xf32> to vector<1088x128xbf16>
    %25 = vector.shape_cast %24 : vector<1088x128xbf16> to vector<8x136x128xbf16>
    %c0_10 = arith.constant 0 : index
    %c0_11 = arith.constant 0 : index
    %26 = vector.load %arg7[%c0_10, %c0_11] : memref<32x128xf32, #tpu.memory_space<vmem>>, vector<32x128xf32>
    %c0_12 = arith.constant 0 : index
    %c0_13 = arith.constant 0 : index
    %27 = vector.load %arg4[%c0_12, %c0_13] : memref<128x128xbf16, #tpu.memory_space<vmem>>, vector<128x128xbf16>
    %c0_14 = arith.constant 0 : index
    %c0_15 = arith.constant 0 : index
    %28 = vector.load %arg5[%c0_14, %c0_15] : memref<136x32xbf16, #tpu.memory_space<vmem>>, vector<136x32xbf16>
    %c0_16 = arith.constant 0 : index
    %c0_17 = arith.constant 0 : index
    %29 = vector.load %arg6[%c0_16, %c0_17] : memref<136x128xf32, #tpu.memory_space<vmem>>, vector<136x128xf32>
    %30 = vector.extract_strided_slice %21 {offsets = [0, 0, 0], sizes = [1, 136, 32], strides = [1, 1, 1]} : vector<8x136x32xbf16> to vector<1x136x32xbf16>
    %31 = vector.shape_cast %30 : vector<1x136x32xbf16> to vector<136x32xbf16>
    %32 = vector.extract_strided_slice %25 {offsets = [0, 0, 0], sizes = [1, 136, 128], strides = [1, 1, 1]} : vector<8x136x128xbf16> to vector<1x136x128xbf16>
    %33 = vector.shape_cast %32 : vector<1x136x128xbf16> to vector<136x128xbf16>
    %cst_18 = arith.constant dense<0.000000e+00> : vector<32x128xf32>
    %34 = tpu.matmul %31, %33, %cst_18 {dimension_numbers = #tpu.dot_dimension_numbers<[0], [0], [1], [1], [0, 1, 1, 1], [], []>} : vector<136x32xbf16>, vector<136x128xbf16>, vector<32x128xf32> -> vector<32x128xf32>
    %35 = arith.mulf %34, %26 : vector<32x128xf32>
    %36 = arith.truncf %35 : vector<32x128xf32> to vector<32x128xbf16>
    %cst_19 = arith.constant dense<0.000000e+00> : vector<32x128xf32>
    %37 = tpu.matmul %36, %27, %cst_19 {dimension_numbers = #tpu.dot_dimension_numbers<[1], [0], [0], [1], [0, 0, 1, 1], [], []>} : vector<32x128xbf16>, vector<128x128xbf16>, vector<32x128xf32> -> vector<32x128xf32>
    %38 = arith.truncf %37 : vector<32x128xf32> to vector<32x128xbf16>
    %cst_20 = arith.constant dense<0.000000e+00> : vector<136x128xf32>
    %39 = tpu.matmul %28, %38, %cst_20 {dimension_numbers = #tpu.dot_dimension_numbers<[1], [0], [0], [1], [0, 0, 1, 1], [], []>} : vector<136x32xbf16>, vector<32x128xbf16>, vector<136x128xf32> -> vector<136x128xf32>
    %40 = arith.addf %39, %29 : vector<136x128xf32>
    %41 = vector.extract_strided_slice %0 {offsets = [0, 0, 0], sizes = [1, 136, 128], strides = [1, 1, 1]} : vector<8x136x128xf32> to vector<1x136x128xf32>
    %42 = vector.shape_cast %41 : vector<1x136x128xf32> to vector<136x128xf32>
    %43 = arith.addf %42, %40 : vector<136x128xf32>
    %c0_21 = arith.constant 0 : index
    %c0_22 = arith.constant 0 : index
    %c0_23 = arith.constant 0 : index
    %44 = vector.load %arg14[%c0_21, %c0_22, %c0_23] : memref<8x136x128xf32, #tpu.memory_space<vmem>>, vector<1x136x128xf32>
    %45 = vector.shape_cast %44 : vector<1x136x128xf32> to vector<136x128xf32>
    %46 = vector.shape_cast %43 : vector<136x128xf32> to vector<1x136x128xf32>
    tpu.vector_store %arg14[%c0_21, %c0_22, %c0_23], %46 {strides = array<i32>} : memref<8x136x128xf32, #tpu.memory_space<vmem>>, vector<1x136x128xf32>,
    %47 = vector.extract_strided_slice %21 {offsets = [1, 0, 0], sizes = [1, 136, 32], strides = [1, 1, 1]} : vector<8x136x32xbf16> to vector<1x136x32xbf16>
    %48 = vector.shape_cast %47 : vector<1x136x32xbf16> to vector<136x32xbf16>
    %49 = vector.extract_strided_slice %25 {offsets = [1, 0, 0], sizes = [1, 136, 128], strides = [1, 1, 1]} : vector<8x136x128xbf16> to vector<1x136x128xbf16>
    %50 = vector.shape_cast %49 : vector<1x136x128xbf16> to vector<136x128xbf16>
    %cst_24 = arith.constant dense<0.000000e+00> : vector<32x128xf32>
    %51 = tpu.matmul %48, %50, %cst_24 {dimension_numbers = #tpu.dot_dimension_numbers<[0], [0], [1], [1], [0, 1, 1, 1], [], []>} : vector<136x32xbf16>, vector<136x128xbf16>, vector<32x128xf32> -> vector<32x128xf32>
    %52 = arith.mulf %51, %26 : vector<32x128xf32>
    %53 = arith.truncf %52 : vector<32x128xf32> to vector<32x128xbf16>
    %cst_25 = arith.constant dense<0.000000e+00> : vector<32x128xf32>
    %54 = tpu.matmul %53, %27, %cst_25 {dimension_numbers = #tpu.dot_dimension_numbers<[1], [0], [0], [1], [0, 0, 1, 1], [], []>} : vector<32x128xbf16>, vector<128x128xbf16>, vector<32x128xf32> -> vector<32x128xf32>
    %55 = arith.truncf %54 : vector<32x128xf32> to vector<32x128xbf16>
    %cst_26 = arith.constant dense<0.000000e+00> : vector<136x128xf32>
    %56 = tpu.matmul %28, %55, %cst_26 {dimension_numbers = #tpu.dot_dimension_numbers<[1], [0], [0], [1], [0, 0, 1, 1], [], []>} : vector<136x32xbf16>, vector<32x128xbf16>, vector<136x128xf32> -> vector<136x128xf32>
    %57 = arith.addf %56, %29 : vector<136x128xf32>
    %58 = vector.extract_strided_slice %0 {offsets = [1, 0, 0], sizes = [1, 136, 128], strides = [1, 1, 1]} : vector<8x136x128xf32> to vector<1x136x128xf32>
    %59 = vector.shape_cast %58 : vector<1x136x128xf32> to vector<136x128xf32>
    %60 = arith.addf %59, %57 : vector<136x128xf32>
    %c1 = arith.constant 1 : index
    %c0_27 = arith.constant 0 : index
    %c0_28 = arith.constant 0 : index
    %61 = vector.load %arg14[%c1, %c0_27, %c0_28] : memref<8x136x128xf32, #tpu.memory_space<vmem>>, vector<1x136x128xf32>
    %62 = vector.shape_cast %61 : vector<1x136x128xf32> to vector<136x128xf32>
    %63 = vector.shape_cast %60 : vector<136x128xf32> to vector<1x136x128xf32>
    tpu.vector_store %arg14[%c1, %c0_27, %c0_28], %63 {strides = array<i32>} : memref<8x136x128xf32, #tpu.memory_space<vmem>>, vector<1x136x128xf32>,
    %64 = vector.extract_strided_slice %21 {offsets = [2, 0, 0], sizes = [1, 136, 32], strides = [1, 1, 1]} : vector<8x136x32xbf16> to vector<1x136x32xbf16>
    %65 = vector.shape_cast %64 : vector<1x136x32xbf16> to vector<136x32xbf16>
    %66 = vector.extract_strided_slice %25 {offsets = [2, 0, 0], sizes = [1, 136, 128], strides = [1, 1, 1]} : vector<8x136x128xbf16> to vector<1x136x128xbf16>
    %67 = vector.shape_cast %66 : vector<1x136x128xbf16> to vector<136x128xbf16>
    %cst_29 = arith.constant dense<0.000000e+00> : vector<32x128xf32>
    %68 = tpu.matmul %65, %67, %cst_29 {dimension_numbers = #tpu.dot_dimension_numbers<[0], [0], [1], [1], [0, 1, 1, 1], [], []>} : vector<136x32xbf16>, vector<136x128xbf16>, vector<32x128xf32> -> vector<32x128xf32>
    %69 = arith.mulf %68, %26 : vector<32x128xf32>
    %70 = arith.truncf %69 : vector<32x128xf32> to vector<32x128xbf16>
    %cst_30 = arith.constant dense<0.000000e+00> : vector<32x128xf32>
    %71 = tpu.matmul %70, %27, %cst_30 {dimension_numbers = #tpu.dot_dimension_numbers<[1], [0], [0], [1], [0, 0, 1, 1], [], []>} : vector<32x128xbf16>, vector<128x128xbf16>, vector<32x128xf32> -> vector<32x128xf32>
    %72 = arith.truncf %71 : vector<32x128xf32> to vector<32x128xbf16>
    %cst_31 = arith.constant dense<0.000000e+00> : vector<136x128xf32>
    %73 = tpu.matmul %28, %72, %cst_31 {dimension_numbers = #tpu.dot_dimension_numbers<[1], [0], [0], [1], [0, 0, 1, 1], [], []>} : vector<136x32xbf16>, vector<32x128xbf16>, vector<136x128xf32> -> vector<136x128xf32>
    %74 = arith.addf %73, %29 : vector<136x128xf32>
    %75 = vector.extract_strided_slice %0 {offsets = [2, 0, 0], sizes = [1, 136, 128], strides = [1, 1, 1]} : vector<8x136x128xf32> to vector<1x136x128xf32>
    %76 = vector.shape_cast %75 : vector<1x136x128xf32> to vector<136x128xf32>
    %77 = arith.addf %76, %74 : vector<136x128xf32>
    %c2 = arith.constant 2 : index
    %c0_32 = arith.constant 0 : index
    %c0_33 = arith.constant 0 : index
    %78 = vector.load %arg14[%c2, %c0_32, %c0_33] : memref<8x136x128xf32, #tpu.memory_space<vmem>>, vector<1x136x128xf32>
    %79 = vector.shape_cast %78 : vector<1x136x128xf32> to vector<136x128xf32>
    %80 = vector.shape_cast %77 : vector<136x128xf32> to vector<1x136x128xf32>
    tpu.vector_store %arg14[%c2, %c0_32, %c0_33], %80 {strides = array<i32>} : memref<8x136x128xf32, #tpu.memory_space<vmem>>, vector<1x136x128xf32>,
    %81 = vector.extract_strided_slice %21 {offsets = [3, 0, 0], sizes = [1, 136, 32], strides = [1, 1, 1]} : vector<8x136x32xbf16> to vector<1x136x32xbf16>
    %82 = vector.shape_cast %81 : vector<1x136x32xbf16> to vector<136x32xbf16>
    %83 = vector.extract_strided_slice %25 {offsets = [3, 0, 0], sizes = [1, 136, 128], strides = [1, 1, 1]} : vector<8x136x128xbf16> to vector<1x136x128xbf16>
    %84 = vector.shape_cast %83 : vector<1x136x128xbf16> to vector<136x128xbf16>
    %cst_34 = arith.constant dense<0.000000e+00> : vector<32x128xf32>
    %85 = tpu.matmul %82, %84, %cst_34 {dimension_numbers = #tpu.dot_dimension_numbers<[0], [0], [1], [1], [0, 1, 1, 1], [], []>} : vector<136x32xbf16>, vector<136x128xbf16>, vector<32x128xf32> -> vector<32x128xf32>
    %86 = arith.mulf %85, %26 : vector<32x128xf32>
    %87 = arith.truncf %86 : vector<32x128xf32> to vector<32x128xbf16>
    %cst_35 = arith.constant dense<0.000000e+00> : vector<32x128xf32>
    %88 = tpu.matmul %87, %27, %cst_35 {dimension_numbers = #tpu.dot_dimension_numbers<[1], [0], [0], [1], [0, 0, 1, 1], [], []>} : vector<32x128xbf16>, vector<128x128xbf16>, vector<32x128xf32> -> vector<32x128xf32>
    %89 = arith.truncf %88 : vector<32x128xf32> to vector<32x128xbf16>
    %cst_36 = arith.constant dense<0.000000e+00> : vector<136x128xf32>
    %90 = tpu.matmul %28, %89, %cst_36 {dimension_numbers = #tpu.dot_dimension_numbers<[1], [0], [0], [1], [0, 0, 1, 1], [], []>} : vector<136x32xbf16>, vector<32x128xbf16>, vector<136x128xf32> -> vector<136x128xf32>
    %91 = arith.addf %90, %29 : vector<136x128xf32>
    %92 = vector.extract_strided_slice %0 {offsets = [3, 0, 0], sizes = [1, 136, 128], strides = [1, 1, 1]} : vector<8x136x128xf32> to vector<1x136x128xf32>
    %93 = vector.shape_cast %92 : vector<1x136x128xf32> to vector<136x128xf32>
    %94 = arith.addf %93, %91 : vector<136x128xf32>
    %c3 = arith.constant 3 : index
    %c0_37 = arith.constant 0 : index
    %c0_38 = arith.constant 0 : index
    %95 = vector.load %arg14[%c3, %c0_37, %c0_38] : memref<8x136x128xf32, #tpu.memory_space<vmem>>, vector<1x136x128xf32>
    %96 = vector.shape_cast %95 : vector<1x136x128xf32> to vector<136x128xf32>
    %97 = vector.shape_cast %94 : vector<136x128xf32> to vector<1x136x128xf32>
    tpu.vector_store %arg14[%c3, %c0_37, %c0_38], %97 {strides = array<i32>} : memref<8x136x128xf32, #tpu.memory_space<vmem>>, vector<1x136x128xf32>,
    %98 = vector.extract_strided_slice %21 {offsets = [4, 0, 0], sizes = [1, 136, 32], strides = [1, 1, 1]} : vector<8x136x32xbf16> to vector<1x136x32xbf16>
    %99 = vector.shape_cast %98 : vector<1x136x32xbf16> to vector<136x32xbf16>
    %100 = vector.extract_strided_slice %25 {offsets = [4, 0, 0], sizes = [1, 136, 128], strides = [1, 1, 1]} : vector<8x136x128xbf16> to vector<1x136x128xbf16>
    %101 = vector.shape_cast %100 : vector<1x136x128xbf16> to vector<136x128xbf16>
    %cst_39 = arith.constant dense<0.000000e+00> : vector<32x128xf32>
    %102 = tpu.matmul %99, %101, %cst_39 {dimension_numbers = #tpu.dot_dimension_numbers<[0], [0], [1], [1], [0, 1, 1, 1], [], []>} : vector<136x32xbf16>, vector<136x128xbf16>, vector<32x128xf32> -> vector<32x128xf32>
    %103 = arith.mulf %102, %26 : vector<32x128xf32>
    %104 = arith.truncf %103 : vector<32x128xf32> to vector<32x128xbf16>
    %cst_40 = arith.constant dense<0.000000e+00> : vector<32x128xf32>
    %105 = tpu.matmul %104, %27, %cst_40 {dimension_numbers = #tpu.dot_dimension_numbers<[1], [0], [0], [1], [0, 0, 1, 1], [], []>} : vector<32x128xbf16>, vector<128x128xbf16>, vector<32x128xf32> -> vector<32x128xf32>
    %106 = arith.truncf %105 : vector<32x128xf32> to vector<32x128xbf16>
    %cst_41 = arith.constant dense<0.000000e+00> : vector<136x128xf32>
    %107 = tpu.matmul %28, %106, %cst_41 {dimension_numbers = #tpu.dot_dimension_numbers<[1], [0], [0], [1], [0, 0, 1, 1], [], []>} : vector<136x32xbf16>, vector<32x128xbf16>, vector<136x128xf32> -> vector<136x128xf32>
    %108 = arith.addf %107, %29 : vector<136x128xf32>
    %109 = vector.extract_strided_slice %0 {offsets = [4, 0, 0], sizes = [1, 136, 128], strides = [1, 1, 1]} : vector<8x136x128xf32> to vector<1x136x128xf32>
    %110 = vector.shape_cast %109 : vector<1x136x128xf32> to vector<136x128xf32>
    %111 = arith.addf %110, %108 : vector<136x128xf32>
    %c4 = arith.constant 4 : index
    %c0_42 = arith.constant 0 : index
    %c0_43 = arith.constant 0 : index
    %112 = vector.load %arg14[%c4, %c0_42, %c0_43] : memref<8x136x128xf32, #tpu.memory_space<vmem>>, vector<1x136x128xf32>
    %113 = vector.shape_cast %112 : vector<1x136x128xf32> to vector<136x128xf32>
    %114 = vector.shape_cast %111 : vector<136x128xf32> to vector<1x136x128xf32>
    tpu.vector_store %arg14[%c4, %c0_42, %c0_43], %114 {strides = array<i32>} : memref<8x136x128xf32, #tpu.memory_space<vmem>>, vector<1x136x128xf32>,
    %115 = vector.extract_strided_slice %21 {offsets = [5, 0, 0], sizes = [1, 136, 32], strides = [1, 1, 1]} : vector<8x136x32xbf16> to vector<1x136x32xbf16>
    %116 = vector.shape_cast %115 : vector<1x136x32xbf16> to vector<136x32xbf16>
    %117 = vector.extract_strided_slice %25 {offsets = [5, 0, 0], sizes = [1, 136, 128], strides = [1, 1, 1]} : vector<8x136x128xbf16> to vector<1x136x128xbf16>
    %118 = vector.shape_cast %117 : vector<1x136x128xbf16> to vector<136x128xbf16>
    %cst_44 = arith.constant dense<0.000000e+00> : vector<32x128xf32>
    %119 = tpu.matmul %116, %118, %cst_44 {dimension_numbers = #tpu.dot_dimension_numbers<[0], [0], [1], [1], [0, 1, 1, 1], [], []>} : vector<136x32xbf16>, vector<136x128xbf16>, vector<32x128xf32> -> vector<32x128xf32>
    %120 = arith.mulf %119, %26 : vector<32x128xf32>
    %121 = arith.truncf %120 : vector<32x128xf32> to vector<32x128xbf16>
    %cst_45 = arith.constant dense<0.000000e+00> : vector<32x128xf32>
    %122 = tpu.matmul %121, %27, %cst_45 {dimension_numbers = #tpu.dot_dimension_numbers<[1], [0], [0], [1], [0, 0, 1, 1], [], []>} : vector<32x128xbf16>, vector<128x128xbf16>, vector<32x128xf32> -> vector<32x128xf32>
    %123 = arith.truncf %122 : vector<32x128xf32> to vector<32x128xbf16>
    %cst_46 = arith.constant dense<0.000000e+00> : vector<136x128xf32>
    %124 = tpu.matmul %28, %123, %cst_46 {dimension_numbers = #tpu.dot_dimension_numbers<[1], [0], [0], [1], [0, 0, 1, 1], [], []>} : vector<136x32xbf16>, vector<32x128xbf16>, vector<136x128xf32> -> vector<136x128xf32>
    %125 = arith.addf %124, %29 : vector<136x128xf32>
    %126 = vector.extract_strided_slice %0 {offsets = [5, 0, 0], sizes = [1, 136, 128], strides = [1, 1, 1]} : vector<8x136x128xf32> to vector<1x136x128xf32>
    %127 = vector.shape_cast %126 : vector<1x136x128xf32> to vector<136x128xf32>
    %128 = arith.addf %127, %125 : vector<136x128xf32>
    %c5 = arith.constant 5 : index
    %c0_47 = arith.constant 0 : index
    %c0_48 = arith.constant 0 : index
    %129 = vector.load %arg14[%c5, %c0_47, %c0_48] : memref<8x136x128xf32, #tpu.memory_space<vmem>>, vector<1x136x128xf32>
    %130 = vector.shape_cast %129 : vector<1x136x128xf32> to vector<136x128xf32>
    %131 = vector.shape_cast %128 : vector<136x128xf32> to vector<1x136x128xf32>
    tpu.vector_store %arg14[%c5, %c0_47, %c0_48], %131 {strides = array<i32>} : memref<8x136x128xf32, #tpu.memory_space<vmem>>, vector<1x136x128xf32>,
    %132 = vector.extract_strided_slice %21 {offsets = [6, 0, 0], sizes = [1, 136, 32], strides = [1, 1, 1]} : vector<8x136x32xbf16> to vector<1x136x32xbf16>
    %133 = vector.shape_cast %132 : vector<1x136x32xbf16> to vector<136x32xbf16>
    %134 = vector.extract_strided_slice %25 {offsets = [6, 0, 0], sizes = [1, 136, 128], strides = [1, 1, 1]} : vector<8x136x128xbf16> to vector<1x136x128xbf16>
    %135 = vector.shape_cast %134 : vector<1x136x128xbf16> to vector<136x128xbf16>
    %cst_49 = arith.constant dense<0.000000e+00> : vector<32x128xf32>
    %136 = tpu.matmul %133, %135, %cst_49 {dimension_numbers = #tpu.dot_dimension_numbers<[0], [0], [1], [1], [0, 1, 1, 1], [], []>} : vector<136x32xbf16>, vector<136x128xbf16>, vector<32x128xf32> -> vector<32x128xf32>
    %137 = arith.mulf %136, %26 : vector<32x128xf32>
    %138 = arith.truncf %137 : vector<32x128xf32> to vector<32x128xbf16>
    %cst_50 = arith.constant dense<0.000000e+00> : vector<32x128xf32>
    %139 = tpu.matmul %138, %27, %cst_50 {dimension_numbers = #tpu.dot_dimension_numbers<[1], [0], [0], [1], [0, 0, 1, 1], [], []>} : vector<32x128xbf16>, vector<128x128xbf16>, vector<32x128xf32> -> vector<32x128xf32>
    %140 = arith.truncf %139 : vector<32x128xf32> to vector<32x128xbf16>
    %cst_51 = arith.constant dense<0.000000e+00> : vector<136x128xf32>
    %141 = tpu.matmul %28, %140, %cst_51 {dimension_numbers = #tpu.dot_dimension_numbers<[1], [0], [0], [1], [0, 0, 1, 1], [], []>} : vector<136x32xbf16>, vector<32x128xbf16>, vector<136x128xf32> -> vector<136x128xf32>
    %142 = arith.addf %141, %29 : vector<136x128xf32>
    %143 = vector.extract_strided_slice %0 {offsets = [6, 0, 0], sizes = [1, 136, 128], strides = [1, 1, 1]} : vector<8x136x128xf32> to vector<1x136x128xf32>
    %144 = vector.shape_cast %143 : vector<1x136x128xf32> to vector<136x128xf32>
    %145 = arith.addf %144, %142 : vector<136x128xf32>
    %c6 = arith.constant 6 : index
    %c0_52 = arith.constant 0 : index
    %c0_53 = arith.constant 0 : index
    %146 = vector.load %arg14[%c6, %c0_52, %c0_53] : memref<8x136x128xf32, #tpu.memory_space<vmem>>, vector<1x136x128xf32>
    %147 = vector.shape_cast %146 : vector<1x136x128xf32> to vector<136x128xf32>
    %148 = vector.shape_cast %145 : vector<136x128xf32> to vector<1x136x128xf32>
    tpu.vector_store %arg14[%c6, %c0_52, %c0_53], %148 {strides = array<i32>} : memref<8x136x128xf32, #tpu.memory_space<vmem>>, vector<1x136x128xf32>,
    %149 = vector.extract_strided_slice %21 {offsets = [7, 0, 0], sizes = [1, 136, 32], strides = [1, 1, 1]} : vector<8x136x32xbf16> to vector<1x136x32xbf16>
    %150 = vector.shape_cast %149 : vector<1x136x32xbf16> to vector<136x32xbf16>
    %151 = vector.extract_strided_slice %25 {offsets = [7, 0, 0], sizes = [1, 136, 128], strides = [1, 1, 1]} : vector<8x136x128xbf16> to vector<1x136x128xbf16>
    %152 = vector.shape_cast %151 : vector<1x136x128xbf16> to vector<136x128xbf16>
    %cst_54 = arith.constant dense<0.000000e+00> : vector<32x128xf32>
    %153 = tpu.matmul %150, %152, %cst_54 {dimension_numbers = #tpu.dot_dimension_numbers<[0], [0], [1], [1], [0, 1, 1, 1], [], []>} : vector<136x32xbf16>, vector<136x128xbf16>, vector<32x128xf32> -> vector<32x128xf32>
    %154 = arith.mulf %153, %26 : vector<32x128xf32>
    %155 = arith.truncf %154 : vector<32x128xf32> to vector<32x128xbf16>
    %cst_55 = arith.constant dense<0.000000e+00> : vector<32x128xf32>
    %156 = tpu.matmul %155, %27, %cst_55 {dimension_numbers = #tpu.dot_dimension_numbers<[1], [0], [0], [1], [0, 0, 1, 1], [], []>} : vector<32x128xbf16>, vector<128x128xbf16>, vector<32x128xf32> -> vector<32x128xf32>
    %157 = arith.truncf %156 : vector<32x128xf32> to vector<32x128xbf16>
    %cst_56 = arith.constant dense<0.000000e+00> : vector<136x128xf32>
    %158 = tpu.matmul %28, %157, %cst_56 {dimension_numbers = #tpu.dot_dimension_numbers<[1], [0], [0], [1], [0, 0, 1, 1], [], []>} : vector<136x32xbf16>, vector<32x128xbf16>, vector<136x128xf32> -> vector<136x128xf32>
    %159 = arith.addf %158, %29 : vector<136x128xf32>
    %160 = vector.extract_strided_slice %0 {offsets = [7, 0, 0], sizes = [1, 136, 128], strides = [1, 1, 1]} : vector<8x136x128xf32> to vector<1x136x128xf32>
    %161 = vector.shape_cast %160 : vector<1x136x128xf32> to vector<136x128xf32>
    %162 = arith.addf %161, %159 : vector<136x128xf32>
    %c7 = arith.constant 7 : index
    %c0_57 = arith.constant 0 : index
    %c0_58 = arith.constant 0 : index
    %163 = vector.load %arg14[%c7, %c0_57, %c0_58] : memref<8x136x128xf32, #tpu.memory_space<vmem>>, vector<1x136x128xf32>
    %164 = vector.shape_cast %163 : vector<1x136x128xf32> to vector<136x128xf32>
    %165 = vector.shape_cast %162 : vector<136x128xf32> to vector<1x136x128xf32>
    tpu.vector_store %arg14[%c7, %c0_57, %c0_58], %165 {strides = array<i32>} : memref<8x136x128xf32, #tpu.memory_space<vmem>>, vector<1x136x128xf32>,
    %c0_59 = arith.constant 0 : index
    %c0_60 = arith.constant 0 : index
    %c0_61 = arith.constant 0 : index
    %166 = vector.load %arg14[%c0_59, %c0_60, %c0_61] : memref<8x136x128xf32, #tpu.memory_space<vmem>>, vector<8x136x128xf32>
    %167 = vector.shape_cast %166 : vector<8x136x128xf32> to vector<1088x128xf32>
    %cst_62 = arith.constant dense<0.000000e+00> : vector<1088xf32>
    %168 = vector.multi_reduction <add>, %167, %cst_62 [1] : vector<1088x128xf32> to vector<1088xf32>
    %169 = vector.shape_cast %168 : vector<1088xf32> to vector<1088x1xf32>
    %cst_63 = arith.constant 3.125000e-02 : f32
    %170 = vector.broadcast %cst_63 : f32 to vector<1088x1xf32>
    %171 = arith.mulf %169, %170 : vector<1088x1xf32>
    %172 = arith.mulf %167, %167 : vector<1088x128xf32>
    %cst_64 = arith.constant dense<0.000000e+00> : vector<1088xf32>
    %173 = vector.multi_reduction <add>, %172, %cst_64 [1] : vector<1088x128xf32> to vector<1088xf32>
    %174 = vector.shape_cast %173 : vector<1088xf32> to vector<1088x1xf32>
    %cst_65 = arith.constant 3.125000e-02 : f32
    %175 = vector.broadcast %cst_65 : f32 to vector<1088x1xf32>
    %176 = arith.mulf %174, %175 : vector<1088x1xf32>
    %177 = arith.mulf %171, %171 : vector<1088x1xf32>
    %178 = arith.subf %176, %177 : vector<1088x1xf32>
    %179 = vector.broadcast %171 : vector<1088x1xf32> to vector<1088x128xf32>
    %180 = arith.subf %167, %179 : vector<1088x128xf32>
    %cst_66 = arith.constant 9.99999974E-6 : f32
    %181 = vector.broadcast %cst_66 : f32 to vector<1088x1xf32>
    %182 = arith.addf %178, %181 : vector<1088x1xf32>
    %183 = math.rsqrt %182 : vector<1088x1xf32>
    %184 = vector.broadcast %183 : vector<1088x1xf32> to vector<1088x128xf32>
    %185 = arith.mulf %180, %184 : vector<1088x128xf32>
    %c0_67 = arith.constant 0 : index
    %c0_68 = arith.constant 0 : index
    %186 = vector.load %arg8[%c0_67, %c0_68] : memref<1x128xf32, #tpu.memory_space<vmem>>, vector<1x128xf32>
    %187 = vector.broadcast %186 : vector<1x128xf32> to vector<1088x128xf32>
    %188 = arith.mulf %185, %187 : vector<1088x128xf32>
    %c0_69 = arith.constant 0 : index
    %c0_70 = arith.constant 0 : index
    %189 = vector.load %arg9[%c0_69, %c0_70] : memref<1x128xf32, #tpu.memory_space<vmem>>, vector<1x128xf32>
    %190 = vector.broadcast %189 : vector<1x128xf32> to vector<1088x128xf32>
    %191 = arith.addf %188, %190 : vector<1088x128xf32>
    %192 = arith.truncf %191 : vector<1088x128xf32> to vector<1088x128xbf16>
    %c0_71 = arith.constant 0 : index
    %c0_72 = arith.constant 0 : index
    %193 = vector.load %arg10[%c0_71, %c0_72] : memref<128x128xbf16, #tpu.memory_space<vmem>>, vector<128x128xbf16>
    %cst_73 = arith.constant dense<0.000000e+00> : vector<1088x128xf32>
    %194 = tpu.matmul %192, %193, %cst_73 {dimension_numbers = #tpu.dot_dimension_numbers<[1], [0], [0], [1], [0, 0, 1, 1], [], []>} : vector<1088x128xbf16>, vector<128x128xbf16>, vector<1088x128xf32> -> vector<1088x128xf32>
    %c0_74 = arith.constant 0 : index
    %c0_75 = arith.constant 0 : index
    %195 = vector.load %arg11[%c0_74, %c0_75] : memref<1x128xf32, #tpu.memory_space<vmem>>, vector<1x128xf32>
    %196 = vector.broadcast %195 : vector<1x128xf32> to vector<1088x128xf32>
    %197 = arith.addf %194, %196 : vector<1088x128xf32>
    %cst_76 = arith.constant 5.000000e-01 : f32
    %198 = vector.broadcast %cst_76 : f32 to vector<1088x128xf32>
    %199 = arith.mulf %198, %197 : vector<1088x128xf32>
    %cst_77 = arith.constant 4.471500e-02 : f32
    %200 = vector.broadcast %cst_77 : f32 to vector<1088x128xf32>
    %201 = arith.mulf %200, %197 : vector<1088x128xf32>
    %202 = arith.mulf %201, %197 : vector<1088x128xf32>
    %203 = arith.mulf %202, %197 : vector<1088x128xf32>
    %204 = arith.addf %197, %203 : vector<1088x128xf32>
    %cst_78 = arith.constant 0.797884583 : f32
    %205 = vector.broadcast %cst_78 : f32 to vector<1088x128xf32>
    %206 = arith.mulf %205, %204 : vector<1088x128xf32>
    %207 = math.tanh %206 : vector<1088x128xf32>
    %cst_79 = arith.constant 1.000000e+00 : f32
    %208 = vector.broadcast %cst_79 : f32 to vector<1088x128xf32>
    %209 = arith.addf %208, %207 : vector<1088x128xf32>
    %210 = arith.mulf %199, %209 : vector<1088x128xf32>
    %211 = arith.truncf %210 : vector<1088x128xf32> to vector<1088x128xbf16>
    %c0_80 = arith.constant 0 : index
    %c0_81 = arith.constant 0 : index
    %212 = vector.load %arg12[%c0_80, %c0_81] : memref<128x128xbf16, #tpu.memory_space<vmem>>, vector<128x128xbf16>
    %cst_82 = arith.constant dense<0.000000e+00> : vector<1088x128xf32>
    %213 = tpu.matmul %211, %212, %cst_82 {dimension_numbers = #tpu.dot_dimension_numbers<[1], [0], [0], [1], [0, 0, 1, 1], [], []>} : vector<1088x128xbf16>, vector<128x128xbf16>, vector<1088x128xf32> -> vector<1088x128xf32>
    %c0_83 = arith.constant 0 : index
    %c0_84 = arith.constant 0 : index
    %214 = vector.load %arg13[%c0_83, %c0_84] : memref<1x128xf32, #tpu.memory_space<vmem>>, vector<1x128xf32>
    %215 = vector.broadcast %214 : vector<1x128xf32> to vector<1088x128xf32>
    %216 = arith.addf %213, %215 : vector<1088x128xf32>
    %217 = arith.addf %167, %216 : vector<1088x128xf32>
    %218 = vector.shape_cast %217 : vector<1088x128xf32> to vector<8x136x128xf32>
    %c0_85 = arith.constant 0 : index
    %c0_86 = arith.constant 0 : index
    %c0_87 = arith.constant 0 : index
    %219 = vector.load %arg14[%c0_85, %c0_86, %c0_87] : memref<8x136x128xf32, #tpu.memory_space<vmem>>, vector<8x136x128xf32>
    tpu.vector_store %arg14[%c0_85, %c0_86, %c0_87], %218 {strides = array<i32>} : memref<8x136x128xf32, #tpu.memory_space<vmem>>, vector<8x136x128xf32>,
    return
  }
  func.func @transform_0(%arg0: i32) -> (i32, i32, i32) {
    %c0_i32 = arith.constant 0 : i32
    %c0_i32_0 = arith.constant 0 : i32
    %c0_i32_1 = arith.constant 0 : i32
    return %arg0, %c0_i32, %c0_i32_0 : i32, i32, i32
  }
  func.func @transform_1(%arg0: i32) -> (i32, i32) {
    %c0_i32 = arith.constant 0 : i32
    %c0_i32_0 = arith.constant 0 : i32
    %c0_i32_1 = arith.constant 0 : i32
    return %c0_i32, %c0_i32_0 : i32, i32
  }
  func.func @transform_2(%arg0: i32) -> (i32, i32) {
    %c0_i32 = arith.constant 0 : i32
    %c0_i32_0 = arith.constant 0 : i32
    %c0_i32_1 = arith.constant 0 : i32
    return %c0_i32, %c0_i32_0 : i32, i32
  }
  func.func @transform_3(%arg0: i32) -> (i32, i32) {
    %c0_i32 = arith.constant 0 : i32
    %c0_i32_0 = arith.constant 0 : i32
    %c0_i32_1 = arith.constant 0 : i32
    return %c0_i32, %c0_i32_0 : i32, i32
  }
  func.func @transform_4(%arg0: i32) -> (i32, i32) {
    %c0_i32 = arith.constant 0 : i32
    %c0_i32_0 = arith.constant 0 : i32
    %c0_i32_1 = arith.constant 0 : i32
    return %c0_i32, %c0_i32_0 : i32, i32
  }
  func.func @transform_5(%arg0: i32) -> (i32, i32) {
    %c0_i32 = arith.constant 0 : i32
    %c0_i32_0 = arith.constant 0 : i32
    %c0_i32_1 = arith.constant 0 : i32
    return %c0_i32, %c0_i32_0 : i32, i32
  }
  func.func @transform_6(%arg0: i32) -> (i32, i32) {
    %c0_i32 = arith.constant 0 : i32
    %c0_i32_0 = arith.constant 0 : i32
    %c0_i32_1 = arith.constant 0 : i32
    return %c0_i32, %c0_i32_0 : i32, i32
  }
  func.func @transform_7(%arg0: i32) -> (i32, i32) {
    %c0_i32 = arith.constant 0 : i32
    %c0_i32_0 = arith.constant 0 : i32
    %c0_i32_1 = arith.constant 0 : i32
    return %c0_i32, %c0_i32_0 : i32, i32
  }
  func.func @transform_8(%arg0: i32) -> (i32, i32) {
    %c0_i32 = arith.constant 0 : i32
    %c0_i32_0 = arith.constant 0 : i32
    %c0_i32_1 = arith.constant 0 : i32
    return %c0_i32, %c0_i32_0 : i32, i32
  }
  func.func @transform_9(%arg0: i32) -> (i32, i32) {
    %c0_i32 = arith.constant 0 : i32
    %c0_i32_0 = arith.constant 0 : i32
    %c0_i32_1 = arith.constant 0 : i32
    return %c0_i32, %c0_i32_0 : i32, i32
  }
  func.func @transform_10(%arg0: i32) -> (i32, i32) {
    %c0_i32 = arith.constant 0 : i32
    %c0_i32_0 = arith.constant 0 : i32
    %c0_i32_1 = arith.constant 0 : i32
    return %c0_i32, %c0_i32_0 : i32, i32
  }
  func.func @transform_11(%arg0: i32) -> (i32, i32) {
    %c0_i32 = arith.constant 0 : i32
    %c0_i32_0 = arith.constant 0 : i32
    %c0_i32_1 = arith.constant 0 : i32
    return %c0_i32, %c0_i32_0 : i32, i32
  }
  func.func @transform_12(%arg0: i32) -> (i32, i32) {
    %c0_i32 = arith.constant 0 : i32
    %c0_i32_0 = arith.constant 0 : i32
    %c0_i32_1 = arith.constant 0 : i32
    return %c0_i32, %c0_i32_0 : i32, i32
  }
  func.func @transform_13(%arg0: i32) -> (i32, i32, i32) {
    %c0_i32 = arith.constant 0 : i32
    %c0_i32_0 = arith.constant 0 : i32
    %c0_i32_1 = arith.constant 0 : i32
    return %arg0, %c0_i32, %c0_i32_0 : i32, i32, i32
  }
}

</mosaic_0001>

<llo_original>
// kernel: tpu_custom_call.1
$region0: #{tpu_custom_call.1}
  #allocation0 [shape = 'u32[]', space=smem, size = 0x4, offset = 0x4, fixed_abs, tag = 'smem constant byte address 0x4 - core index']
  #allocation1 [shape = 'u32[144,128]{1,0:T(1,128)}', space=vmem, size = 0x12000, scoped, tag = 'internal scratch']
  %s0 = inlined_call_operand.hbm [shape: f32[8,136,128], index: 0, kind: input, shape index: {}]
  %s1 = inlined_call_operand.vmem [shape: bf16[128,32], index: 1, kind: input, shape index: {}]
  %s2 = inlined_call_operand.hbm [shape: bf16[128,128], index: 2, kind: input, shape index: {}]
  %s3 = inlined_call_operand.hbm [shape: bf16[128,128], index: 3, kind: input, shape index: {}]
  %s4 = inlined_call_operand.vmem [shape: bf16[136,32], index: 4, kind: input, shape index: {}]
  %s5 = inlined_call_operand.vmem [shape: f32[136,128], index: 5, kind: input, shape index: {}]
  %s6 = inlined_call_operand.hbm [shape: f32[32,128], index: 6, kind: input, shape index: {}]
  %s7 = inlined_call_operand.vmem [shape: f32[1,128], index: 7, kind: input, shape index: {}]
  %s8 = inlined_call_operand.vmem [shape: f32[1,128], index: 8, kind: input, shape index: {}]
  %s9 = inlined_call_operand.vmem [shape: bf16[128,128], index: 9, kind: input, shape index: {}]
  %s10 = inlined_call_operand.vmem [shape: f32[1,128], index: 10, kind: input, shape index: {}]
  %s11 = inlined_call_operand.hbm [shape: bf16[128,128], index: 11, kind: input, shape index: {}]
  %s12 = inlined_call_operand.vmem [shape: f32[1,128], index: 12, kind: input, shape index: {}]
  %s13 = inlined_call_operand.hbm [shape: f32[8,136,128], index: 13, kind: output, shape index: {}]
  %s14 = sld [smem:[#allocation0]]
  $region82: #{tpu_custom_call.1} parent=0
    _
  %s16 = ssub.s32 1, %s14
  %s17 = scalar_select 0, %s16, %s14
  $region1: #{tpu_custom_call.1} parent=0
    #allocation2 [shape = 'u8[557056]{0}', space=vmem, size = 0x88000, scoped, tag = 'input window, operand 0, single buffered']
    #allocation3 [shape = 's32[1]{0}', space=sflag, size = 0x4, scoped, tag = 'scoped memory for tpu_custom_call.1']
    #allocation4 [shape = 's32[1]{0}', space=sflag, size = 0x4, scoped, tag = 'scoped memory for tpu_custom_call.1']
    #allocation5 [shape = 'u8[32768]{0}', space=vmem, size = 0x8000, scoped, tag = 'input window, operand 2, single buffered']
    #allocation6 [shape = 's32[1]{0}', space=sflag, size = 0x4, scoped, tag = 'scoped memory for tpu_custom_call.1']
    #allocation7 [shape = 'u8[32768]{0}', space=vmem, size = 0x8000, scoped, tag = 'input window, operand 3, single buffered']
    #allocation8 [shape = 'u8[16384]{0}', space=vmem, size = 0x4000, scoped, tag = 'input window, operand 6, single buffered']
    #allocation9 [shape = 's32[1]{0}', space=sflag, size = 0x4, scoped, tag = 'scoped memory for tpu_custom_call.1']
    #allocation10 [shape = 'u8[32768]{0}', space=vmem, size = 0x8000, scoped, tag = 'input window, operand 11, single buffered']
    #allocation11 [shape = 'u8[557056]{0}', space=vmem, size = 0x88000, scoped, tag = 'output window, operand 0, single buffered']
    %18 = vsyncpa [#allocation3], 0
    %19 = vsyncpa [#allocation6], 0
    %20 = vsyncpa [#allocation9], 0
    %21 = vsyncpa [#allocation4], 0
    // Predicated region
    $region2: #{tpu_custom_call.1} parent=1 // pred_check
      _
    $region3: #{tpu_custom_call.1} parent=1 // pred_check_branch
      %23 = sbr.rel (0) target = $region5
    $region4: #{tpu_custom_call.1} parent=1 // pred_region
      %s25 = ssub.s32 17408, 17408
      %26 = vsyncadd [#allocation3], %s25
      %s27 = sshll.u32 [#allocation2], 4
      %s28 = int_to_ptr.vmem [resolvable:$true] %s27
      %33 = dma.hbm_to_vmem [thread:$0]  %s0, 17408, %s28, [#allocation3], 128, 128, 8
    $region5: #{tpu_custom_call.1} parent=1 // pred_fallthru
      _
    // Predicated region
    $region6: #{tpu_custom_call.1} parent=1 // pred_check
      _
    $region7: #{tpu_custom_call.1} parent=1 // pred_check_branch
      %35 = sbr.rel (0) target = $region9
    $region8: #{tpu_custom_call.1} parent=1 // pred_region
      _
    $region9: #{tpu_custom_call.1} parent=1 // pred_fallthru
      _
    // Predicated region
    $region10: #{tpu_custom_call.1} parent=1 // pred_check
      _
    $region11: #{tpu_custom_call.1} parent=1 // pred_check_branch
      %37 = sbr.rel (0) target = $region13
    $region12: #{tpu_custom_call.1} parent=1 // pred_region
      %s39 = ssub.s32 1024, 1024
      %40 = vsyncadd [#allocation6], %s39
      %s41 = sshll.u32 [#allocation5], 4
      %s42 = int_to_ptr.vmem [resolvable:$true] %s41
      %47 = dma.hbm_to_vmem [thread:$0]  %s2, 1024, %s42, [#allocation6], 64, 64, 4
    $region13: #{tpu_custom_call.1} parent=1 // pred_fallthru
      _
    // Predicated region
    $region14: #{tpu_custom_call.1} parent=1 // pred_check
      _
    $region15: #{tpu_custom_call.1} parent=1 // pred_check_branch
      %49 = sbr.rel (0) target = $region17
    $region16: #{tpu_custom_call.1} parent=1 // pred_region
      %s51 = ssub.s32 1024, 1024
      %52 = vsyncadd [#allocation6], %s51
      %s53 = sshll.u32 [#allocation7], 4
      %s54 = int_to_ptr.vmem [resolvable:$true] %s53
      %59 = dma.hbm_to_vmem [thread:$0]  %s3, 1024, %s54, [#allocation6], 64, 64, 4
    $region17: #{tpu_custom_call.1} parent=1 // pred_fallthru
      _
    // Predicated region
    $region18: #{tpu_custom_call.1} parent=1 // pred_check
      _
    $region19: #{tpu_custom_call.1} parent=1 // pred_check_branch
      %61 = sbr.rel (0) target = $region21
    $region20: #{tpu_custom_call.1} parent=1 // pred_region
      _
    $region21: #{tpu_custom_call.1} parent=1 // pred_fallthru
      _
    // Predicated region
    $region22: #{tpu_custom_call.1} parent=1 // pred_check
      _
    $region23: #{tpu_custom_call.1} parent=1 // pred_check_branch
      %63 = sbr.rel (0) target = $region25
    $region24: #{tpu_custom_call.1} parent=1 // pred_region
      _
    $region25: #{tpu_custom_call.1} parent=1 // pred_fallthru
      _
    // Predicated region
    $region26: #{tpu_custom_call.1} parent=1 // pred_check
      _
    $region27: #{tpu_custom_call.1} parent=1 // pred_check_branch
      %65 = sbr.rel (0) target = $region29
    $region28: #{tpu_custom_call.1} parent=1 // pred_region
      %s67 = ssub.s32 512, 512
      %68 = vsyncadd [#allocation9], %s67
      %s69 = sshll.u32 [#allocation8], 4
      %s70 = int_to_ptr.vmem [resolvable:$true] %s69
      %75 = dma.hbm_to_vmem [thread:$0]  %s6, 512, %s70, [#allocation9], 128, 128, 8
    $region29: #{tpu_custom_call.1} parent=1 // pred_fallthru
      _
    // Predicated region
    $region30: #{tpu_custom_call.1} parent=1 // pred_check
      _
    $region31: #{tpu_custom_call.1} parent=1 // pred_check_branch
      %77 = sbr.rel (0) target = $region33
    $region32: #{tpu_custom_call.1} parent=1 // pred_region
      _
    $region33: #{tpu_custom_call.1} parent=1 // pred_fallthru
      _
    // Predicated region
    $region34: #{tpu_custom_call.1} parent=1 // pred_check
      _
    $region35: #{tpu_custom_call.1} parent=1 // pred_check_branch
      %79 = sbr.rel (0) target = $region37
    $region36: #{tpu_custom_call.1} parent=1 // pred_region
      _
    $region37: #{tpu_custom_call.1} parent=1 // pred_fallthru
      _
    // Predicated region
    $region38: #{tpu_custom_call.1} parent=1 // pred_check
      _
    $region39: #{tpu_custom_call.1} parent=1 // pred_check_branch
      %81 = sbr.rel (0) target = $region41
    $region40: #{tpu_custom_call.1} parent=1 // pred_region
      _
    $region41: #{tpu_custom_call.1} parent=1 // pred_fallthru
      _
    // Predicated region
    $region42: #{tpu_custom_call.1} parent=1 // pred_check
      _
    $region43: #{tpu_custom_call.1} parent=1 // pred_check_branch
      %83 = sbr.rel (0) target = $region45
    $region44: #{tpu_custom_call.1} parent=1 // pred_region
      _
    $region45: #{tpu_custom_call.1} parent=1 // pred_fallthru
      _
    // Predicated region
    $region46: #{tpu_custom_call.1} parent=1 // pred_check
      _
    $region47: #{tpu_custom_call.1} parent=1 // pred_check_branch
      %85 = sbr.rel (0) target = $region49
    $region48: #{tpu_custom_call.1} parent=1 // pred_region
      %s87 = ssub.s32 1024, 1024
      %88 = vsyncadd [#allocation9], %s87
      %s89 = sshll.u32 [#allocation10], 4
      %s90 = int_to_ptr.vmem [resolvable:$true] %s89
      %95 = dma.hbm_to_vmem [thread:$0]  %s11, 1024, %s90, [#allocation9], 64, 64, 4
    $region49: #{tpu_custom_call.1} parent=1 // pred_fallthru
      _
    // Predicated region
    $region50: #{tpu_custom_call.1} parent=1 // pred_check
      _
    $region51: #{tpu_custom_call.1} parent=1 // pred_check_branch
      %97 = sbr.rel (0) target = $region53
    $region52: #{tpu_custom_call.1} parent=1 // pred_region
      _
    $region53: #{tpu_custom_call.1} parent=1 // pred_fallthru
      _
    // Predicated region
    $region54: #{tpu_custom_call.1} parent=1 // pred_check
      _
    $region55: #{tpu_custom_call.1} parent=1 // pred_check_branch
      %99 = sbr.rel (0) target = $region57
    $region56: #{tpu_custom_call.1} parent=1 // pred_region
      %100 = dma.done [#allocation3], 17408
    $region57: #{tpu_custom_call.1} parent=1 // pred_fallthru
      _
    // Predicated region
    $region58: #{tpu_custom_call.1} parent=1 // pred_check
      _
    $region59: #{tpu_custom_call.1} parent=1 // pred_check_branch
      %102 = sbr.rel (0) target = $region61
    $region60: #{tpu_custom_call.1} parent=1 // pred_region
      %103 = dma.done [#allocation6], 1024
    $region61: #{tpu_custom_call.1} parent=1 // pred_fallthru
      _
    // Predicated region
    $region62: #{tpu_custom_call.1} parent=1 // pred_check
      _
    $region63: #{tpu_custom_call.1} parent=1 // pred_check_branch
      %105 = sbr.rel (0) target = $region65
    $region64: #{tpu_custom_call.1} parent=1 // pred_region
      %106 = dma.done [#allocation6], 1024
    $region65: #{tpu_custom_call.1} parent=1 // pred_fallthru
      _
    // Predicated region
    $region66: #{tpu_custom_call.1} parent=1 // pred_check
      _
    $region67: #{tpu_custom_call.1} parent=1 // pred_check_branch
      %108 = sbr.rel (0) target = $region69
    $region68: #{tpu_custom_call.1} parent=1 // pred_region
      %109 = dma.done [#allocation9], 512
    $region69: #{tpu_custom_call.1} parent=1 // pred_fallthru
      _
    // Predicated region
    $region70: #{tpu_custom_call.1} parent=1 // pred_check
      _
    $region71: #{tpu_custom_call.1} parent=1 // pred_check_branch
      %111 = sbr.rel (0) target = $region73
    $region72: #{tpu_custom_call.1} parent=1 // pred_region
      %112 = dma.done [#allocation9], 1024
    $region73: #{tpu_custom_call.1} parent=1 // pred_fallthru
      _
    %v114 = vld [vmem:[#allocation2] sm:$0xff]
    %v115 = vld [vmem:[#allocation2 + $0x8] sm:$0xff]
    %v116 = vld [vmem:[#allocation2 + $0x10] sm:$0xff]
    %v117 = vld [vmem:[#allocation2 + $0x18] sm:$0xff]
    %v118 = vld [vmem:[#allocation2 + $0x20] sm:$0xff]
    %v119 = vld [vmem:[#allocation2 + $0x28] sm:$0xff]
    %v120 = vld [vmem:[#allocation2 + $0x30] sm:$0xff]
    %v121 = vld [vmem:[#allocation2 + $0x38] sm:$0xff]
    %v122 = vld [vmem:[#allocation2 + $0x40] sm:$0xff]
    %v123 = vld [vmem:[#allocation2 + $0x48] sm:$0xff]
    %v124 = vld [vmem:[#allocation2 + $0x50] sm:$0xff]
    %v125 = vld [vmem:[#allocation2 + $0x58] sm:$0xff]
    %v126 = vld [vmem:[#allocation2 + $0x60] sm:$0xff]
    %v127 = vld [vmem:[#allocation2 + $0x68] sm:$0xff]
    %v128 = vld [vmem:[#allocation2 + $0x70] sm:$0xff]
    %v129 = vld [vmem:[#allocation2 + $0x78] sm:$0xff]
    %v130 = vld [vmem:[#allocation2 + $0x80] sm:$0xff]
    %v131 = vld [vmem:[#allocation2 + $0x88] sm:$0xff]
    %v132 = vld [vmem:[#allocation2 + $0x90] sm:$0xff]
    %v133 = vld [vmem:[#allocation2 + $0x98] sm:$0xff]
    %v134 = vld [vmem:[#allocation2 + $0xa0] sm:$0xff]
    %v135 = vld [vmem:[#allocation2 + $0xa8] sm:$0xff]
    %v136 = vld [vmem:[#allocation2 + $0xb0] sm:$0xff]
    %v137 = vld [vmem:[#allocation2 + $0xb8] sm:$0xff]
    %v138 = vld [vmem:[#allocation2 + $0xc0] sm:$0xff]
    %v139 = vld [vmem:[#allocation2 + $0xc8] sm:$0xff]
    %v140 = vld [vmem:[#allocation2 + $0xd0] sm:$0xff]
    %v141 = vld [vmem:[#allocation2 + $0xd8] sm:$0xff]
    %v142 = vld [vmem:[#allocation2 + $0xe0] sm:$0xff]
    %v143 = vld [vmem:[#allocation2 + $0xe8] sm:$0xff]
    %v144 = vld [vmem:[#allocation2 + $0xf0] sm:$0xff]
    %v145 = vld [vmem:[#allocation2 + $0xf8] sm:$0xff]
    %v146 = vld [vmem:[#allocation2 + $0x100] sm:$0xff]
    %v147 = vld [vmem:[#allocation2 + $0x108] sm:$0xff]
    %v148 = vld [vmem:[#allocation2 + $0x110] sm:$0xff]
    %v149 = vld [vmem:[#allocation2 + $0x118] sm:$0xff]
    %v150 = vld [vmem:[#allocation2 + $0x120] sm:$0xff]
    %v151 = vld [vmem:[#allocation2 + $0x128] sm:$0xff]
    %v152 = vld [vmem:[#allocation2 + $0x130] sm:$0xff]
    %v153 = vld [vmem:[#allocation2 + $0x138] sm:$0xff]
    %v154 = vld [vmem:[#allocation2 + $0x140] sm:$0xff]
    %v155 = vld [vmem:[#allocation2 + $0x148] sm:$0xff]
    %v156 = vld [vmem:[#allocation2 + $0x150] sm:$0xff]
    %v157 = vld [vmem:[#allocation2 + $0x158] sm:$0xff]
    %v158 = vld [vmem:[#allocation2 + $0x160] sm:$0xff]
    %v159 = vld [vmem:[#allocation2 + $0x168] sm:$0xff]
    %v160 = vld [vmem:[#allocation2 + $0x170] sm:$0xff]
    %v161 = vld [vmem:[#allocation2 + $0x178] sm:$0xff]
    %v162 = vld [vmem:[#allocation2 + $0x180] sm:$0xff]
    %v163 = vld [vmem:[#allocation2 + $0x188] sm:$0xff]
    %v164 = vld [vmem:[#allocation2 + $0x190] sm:$0xff]
    %v165 = vld [vmem:[#allocation2 + $0x198] sm:$0xff]
    %v166 = vld [vmem:[#allocation2 + $0x1a0] sm:$0xff]
    %v167 = vld [vmem:[#allocation2 + $0x1a8] sm:$0xff]
    %v168 = vld [vmem:[#allocation2 + $0x1b0] sm:$0xff]
    %v169 = vld [vmem:[#allocation2 + $0x1b8] sm:$0xff]
    %v170 = vld [vmem:[#allocation2 + $0x1c0] sm:$0xff]
    %v171 = vld [vmem:[#allocation2 + $0x1c8] sm:$0xff]
    %v172 = vld [vmem:[#allocation2 + $0x1d0] sm:$0xff]
    %v173 = vld [vmem:[#allocation2 + $0x1d8] sm:$0xff]
    %v174 = vld [vmem:[#allocation2 + $0x1e0] sm:$0xff]
    %v175 = vld [vmem:[#allocation2 + $0x1e8] sm:$0xff]
    %v176 = vld [vmem:[#allocation2 + $0x1f0] sm:$0xff]
    %v177 = vld [vmem:[#allocation2 + $0x1f8] sm:$0xff]
    %v178 = vld [vmem:[#allocation2 + $0x200] sm:$0xff]
    %v179 = vld [vmem:[#allocation2 + $0x208] sm:$0xff]
    %v180 = vld [vmem:[#allocation2 + $0x210] sm:$0xff]
    %v181 = vld [vmem:[#allocation2 + $0x218] sm:$0xff]
    %v182 = vld [vmem:[#allocation2 + $0x220] sm:$0xff]
    %v183 = vld [vmem:[#allocation2 + $0x228] sm:$0xff]
    %v184 = vld [vmem:[#allocation2 + $0x230] sm:$0xff]
    %v185 = vld [vmem:[#allocation2 + $0x238] sm:$0xff]
    %v186 = vld [vmem:[#allocation2 + $0x240] sm:$0xff]
    %v187 = vld [vmem:[#allocation2 + $0x248] sm:$0xff]
    %v188 = vld [vmem:[#allocation2 + $0x250] sm:$0xff]
    %v189 = vld [vmem:[#allocation2 + $0x258] sm:$0xff]
    %v190 = vld [vmem:[#allocation2 + $0x260] sm:$0xff]
    %v191 = vld [vmem:[#allocation2 + $0x268] sm:$0xff]
    %v192 = vld [vmem:[#allocation2 + $0x270] sm:$0xff]
    %v193 = vld [vmem:[#allocation2 + $0x278] sm:$0xff]
    %v194 = vld [vmem:[#allocation2 + $0x280] sm:$0xff]
    %v195 = vld [vmem:[#allocation2 + $0x288] sm:$0xff]
    %v196 = vld [vmem:[#allocation2 + $0x290] sm:$0xff]
    %v197 = vld [vmem:[#allocation2 + $0x298] sm:$0xff]
    %v198 = vld [vmem:[#allocation2 + $0x2a0] sm:$0xff]
    %v199 = vld [vmem:[#allocation2 + $0x2a8] sm:$0xff]
    %v200 = vld [vmem:[#allocation2 + $0x2b0] sm:$0xff]
    %v201 = vld [vmem:[#allocation2 + $0x2b8] sm:$0xff]
    %v202 = vld [vmem:[#allocation2 + $0x2c0] sm:$0xff]
    %v203 = vld [vmem:[#allocation2 + $0x2c8] sm:$0xff]
    %v204 = vld [vmem:[#allocation2 + $0x2d0] sm:$0xff]
    %v205 = vld [vmem:[#allocation2 + $0x2d8] sm:$0xff]
    %v206 = vld [vmem:[#allocation2 + $0x2e0] sm:$0xff]
    %v207 = vld [vmem:[#allocation2 + $0x2e8] sm:$0xff]
    %v208 = vld [vmem:[#allocation2 + $0x2f0] sm:$0xff]
    %v209 = vld [vmem:[#allocation2 + $0x2f8] sm:$0xff]
    %v210 = vld [vmem:[#allocation2 + $0x300] sm:$0xff]
    %v211 = vld [vmem:[#allocation2 + $0x308] sm:$0xff]
    %v212 = vld [vmem:[#allocation2 + $0x310] sm:$0xff]
    %v213 = vld [vmem:[#allocation2 + $0x318] sm:$0xff]
    %v214 = vld [vmem:[#allocation2 + $0x320] sm:$0xff]
    %v215 = vld [vmem:[#allocation2 + $0x328] sm:$0xff]
    %v216 = vld [vmem:[#allocation2 + $0x330] sm:$0xff]
    %v217 = vld [vmem:[#allocation2 + $0x338] sm:$0xff]
    %v218 = vld [vmem:[#allocation2 + $0x340] sm:$0xff]
    %v219 = vld [vmem:[#allocation2 + $0x348] sm:$0xff]
    %v220 = vld [vmem:[#allocation2 + $0x350] sm:$0xff]
    %v221 = vld [vmem:[#allocation2 + $0x358] sm:$0xff]
    %v222 = vld [vmem:[#allocation2 + $0x360] sm:$0xff]
    %v223 = vld [vmem:[#allocation2 + $0x368] sm:$0xff]
    %v224 = vld [vmem:[#allocation2 + $0x370] sm:$0xff]
    %v225 = vld [vmem:[#allocation2 + $0x378] sm:$0xff]
    %v226 = vld [vmem:[#allocation2 + $0x380] sm:$0xff]
    %v227 = vld [vmem:[#allocation2 + $0x388] sm:$0xff]
    %v228 = vld [vmem:[#allocation2 + $0x390] sm:$0xff]
    %v229 = vld [vmem:[#allocation2 + $0x398] sm:$0xff]
    %v230 = vld [vmem:[#allocation2 + $0x3a0] sm:$0xff]
    %v231 = vld [vmem:[#allocation2 + $0x3a8] sm:$0xff]
    %v232 = vld [vmem:[#allocation2 + $0x3b0] sm:$0xff]
    %v233 = vld [vmem:[#allocation2 + $0x3b8] sm:$0xff]
    %v234 = vld [vmem:[#allocation2 + $0x3c0] sm:$0xff]
    %v235 = vld [vmem:[#allocation2 + $0x3c8] sm:$0xff]
    %v236 = vld [vmem:[#allocation2 + $0x3d0] sm:$0xff]
    %v237 = vld [vmem:[#allocation2 + $0x3d8] sm:$0xff]
    %v238 = vld [vmem:[#allocation2 + $0x3e0] sm:$0xff]
    %v239 = vld [vmem:[#allocation2 + $0x3e8] sm:$0xff]
    %v240 = vld [vmem:[#allocation2 + $0x3f0] sm:$0xff]
    %v241 = vld [vmem:[#allocation2 + $0x3f8] sm:$0xff]
    %v242 = vld [vmem:[#allocation2 + $0x400] sm:$0xff]
    %v243 = vld [vmem:[#allocation2 + $0x408] sm:$0xff]
    %v244 = vld [vmem:[#allocation2 + $0x410] sm:$0xff]
    %v245 = vld [vmem:[#allocation2 + $0x418] sm:$0xff]
    %v246 = vld [vmem:[#allocation2 + $0x420] sm:$0xff]
    %v247 = vld [vmem:[#allocation2 + $0x428] sm:$0xff]
    %v248 = vld [vmem:[#allocation2 + $0x430] sm:$0xff]
    %v249 = vld [vmem:[#allocation2 + $0x438] sm:$0xff]
    %v250 = vpack.c.bf16 %v115, %v114
    %v251 = vpack.c.bf16 %v117, %v116
    %v252 = vpack.c.bf16 %v119, %v118
    %v253 = vpack.c.bf16 %v121, %v120
    %v254 = vpack.c.bf16 %v123, %v122
    %v255 = vpack.c.bf16 %v125, %v124
    %v256 = vpack.c.bf16 %v127, %v126
    %v257 = vpack.c.bf16 %v129, %v128
    %v258 = vpack.c.bf16 %v131, %v130
    %v259 = vpack.c.bf16 %v133, %v132
    %v260 = vpack.c.bf16 %v135, %v134
    %v261 = vpack.c.bf16 %v137, %v136
    %v262 = vpack.c.bf16 %v139, %v138
    %v263 = vpack.c.bf16 %v141, %v140
    %v264 = vpack.c.bf16 %v143, %v142
    %v265 = vpack.c.bf16 %v145, %v144
    %v266 = vpack.c.bf16 %v147, %v146
    %v267 = vpack.c.bf16 %v149, %v148
    %v268 = vpack.c.bf16 %v151, %v150
    %v269 = vpack.c.bf16 %v153, %v152
    %v270 = vpack.c.bf16 %v155, %v154
    %v271 = vpack.c.bf16 %v157, %v156
    %v272 = vpack.c.bf16 %v159, %v158
    %v273 = vpack.c.bf16 %v161, %v160
    %v274 = vpack.c.bf16 %v163, %v162
    %v275 = vpack.c.bf16 %v165, %v164
    %v276 = vpack.c.bf16 %v167, %v166
    %v277 = vpack.c.bf16 %v169, %v168
    %v278 = vpack.c.bf16 %v171, %v170
    %v279 = vpack.c.bf16 %v173, %v172
    %v280 = vpack.c.bf16 %v175, %v174
    %v281 = vpack.c.bf16 %v177, %v176
    %v282 = vpack.c.bf16 %v179, %v178
    %v283 = vpack.c.bf16 %v181, %v180
    %v284 = vpack.c.bf16 %v183, %v182
    %v285 = vpack.c.bf16 %v185, %v184
    %v286 = vpack.c.bf16 %v187, %v186
    %v287 = vpack.c.bf16 %v189, %v188
    %v288 = vpack.c.bf16 %v191, %v190
    %v289 = vpack.c.bf16 %v193, %v192
    %v290 = vpack.c.bf16 %v195, %v194
    %v291 = vpack.c.bf16 %v197, %v196
    %v292 = vpack.c.bf16 %v199, %v198
    %v293 = vpack.c.bf16 %v201, %v200
    %v294 = vpack.c.bf16 %v203, %v202
    %v295 = vpack.c.bf16 %v205, %v204
    %v296 = vpack.c.bf16 %v207, %v206
    %v297 = vpack.c.bf16 %v209, %v208
    %v298 = vpack.c.bf16 %v211, %v210
    %v299 = vpack.c.bf16 %v213, %v212
    %v300 = vpack.c.bf16 %v215, %v214
    %v301 = vpack.c.bf16 %v217, %v216
    %v302 = vpack.c.bf16 %v219, %v218
    %v303 = vpack.c.bf16 %v221, %v220
    %v304 = vpack.c.bf16 %v223, %v222
    %v305 = vpack.c.bf16 %v225, %v224
    %v306 = vpack.c.bf16 %v227, %v226
    %v307 = vpack.c.bf16 %v229, %v228
    %v308 = vpack.c.bf16 %v231, %v230
    %v309 = vpack.c.bf16 %v233, %v232
    %v310 = vpack.c.bf16 %v235, %v234
    %v311 = vpack.c.bf16 %v237, %v236
    %v312 = vpack.c.bf16 %v239, %v238
    %v313 = vpack.c.bf16 %v241, %v240
    %v314 = vpack.c.bf16 %v243, %v242
    %v315 = vpack.c.bf16 %v245, %v244
    %v316 = vpack.c.bf16 %v247, %v246
    %v317 = vpack.c.bf16 %v249, %v248
    %v318 = vld [vmem:[%s1] sm:$0xf]
    %v319 = vld [vmem:[%s1 + $0x4] sm:$0xf]
    %v320 = vld [vmem:[%s1 + $0x8] sm:$0xf]
    %v321 = vld [vmem:[%s1 + $0xc] sm:$0xf]
    %v322 = vld [vmem:[%s1 + $0x10] sm:$0xf]
    %v323 = vld [vmem:[%s1 + $0x14] sm:$0xf]
    %v324 = vld [vmem:[%s1 + $0x18] sm:$0xf]
    %v325 = vld [vmem:[%s1 + $0x1c] sm:$0xf]
    %v326 = vld [vmem:[%s1 + $0x20] sm:$0xf]
    %v327 = vld [vmem:[%s1 + $0x24] sm:$0xf]
    %v328 = vld [vmem:[%s1 + $0x28] sm:$0xf]
    %v329 = vld [vmem:[%s1 + $0x2c] sm:$0xf]
    %v330 = vld [vmem:[%s1 + $0x30] sm:$0xf]
    %v331 = vld [vmem:[%s1 + $0x34] sm:$0xf]
    %v332 = vld [vmem:[%s1 + $0x38] sm:$0xf]
    %v333 = vld [vmem:[%s1 + $0x3c] sm:$0xf]
    %v350 = vunpack.c.l.b16 %v318
    %v351 = vunpack.c.l.b16 %v319
    %v352 = vunpack.c.l.b16 %v320
    %v353 = vunpack.c.l.b16 %v321
    %v354 = vunpack.c.l.b16 %v322
    %v355 = vunpack.c.l.b16 %v323
    %v356 = vunpack.c.l.b16 %v324
    %v357 = vunpack.c.l.b16 %v325
    %v358 = vunpack.c.l.b16 %v326
    %v359 = vunpack.c.l.b16 %v327
    %v360 = vunpack.c.l.b16 %v328
    %v361 = vunpack.c.l.b16 %v329
    %v362 = vunpack.c.l.b16 %v330
    %v363 = vunpack.c.l.b16 %v331
    %v364 = vunpack.c.l.b16 %v332
    %v365 = vunpack.c.l.b16 %v333
    %v366 = vpack.c.b16 %v351, %v350
    %v367 = vpack.c.b16 %v353, %v352
    %v368 = vpack.c.b16 %v355, %v354
    %v369 = vpack.c.b16 %v357, %v356
    %v370 = vpack.c.b16 %v359, %v358
    %v371 = vpack.c.b16 %v361, %v360
    %v372 = vpack.c.b16 %v363, %v362
    %v373 = vpack.c.b16 %v365, %v364
    %382 = vmatprep.subr.bf16.mxu0 0
    %383 = vmatpush1.bf16.msra.mxu0 %v366
    %384 = vmatprep.subr.bf16.mxu0 0
    %385 = vmatpush1.bf16.msra.mxu0 %v367
    %386 = vmatprep.subr.bf16.mxu0 0
    %387 = vmatpush1.bf16.msra.mxu0 %v368
    %388 = vmatprep.subr.bf16.mxu0 0
    %389 = vmatpush1.bf16.msra.mxu0 %v369
    %390 = vmatprep.subr.bf16.mxu0 0
    %391 = vmatpush1.bf16.msra.mxu0 %v370
    %392 = vmatprep.subr.bf16.mxu0 0
    %393 = vmatpush1.bf16.msra.mxu0 %v371
    %394 = vmatprep.subr.bf16.mxu0 0
    %395 = vmatpush1.bf16.msra.mxu0 %v372
    %396 = vmatprep.subr.bf16.mxu0 0
    %397 = vmatpush1.bf16.msra.mxu0 %v373
    %398 = vmatprep.subr.bf16.mxu0 0
    %399 = vmatpush1.bf16.msra.mxu0 0
    %400 = vmatprep.subr.bf16.mxu0 0
    %401 = vmatpush1.bf16.msra.mxu0 0
    %402 = vmatprep.subr.bf16.mxu0 0
    %403 = vmatpush1.bf16.msra.mxu0 0
    %404 = vmatprep.subr.bf16.mxu0 0
    %405 = vmatpush1.bf16.msra.mxu0 0
    %406 = vmatprep.subr.bf16.mxu0 0
    %407 = vmatpush1.bf16.msra.mxu0 0
    %408 = vmatprep.subr.bf16.mxu0 0
    %409 = vmatpush1.bf16.msra.mxu0 0
    %410 = vmatprep.subr.bf16.mxu0 0
    %411 = vmatpush1.bf16.msra.mxu0 0
    %412 = vmatprep.subr.bf16.mxu0 0
    %413 = vmatpush1.bf16.msra.mxu0 0
    %414 = vmatprep.mubr.bf16.mxu0 0
    %415 = vmatmul.mubr.bf16.gmra.mrb[0].mxu0 %v250
    %v416 = vpop.f32.mrb[0].mxu0
    %v417 = vadd.f32 0.0, %v416
    %v418 = vpop.f32.mrb[0].mxu0
    %v419 = vpop.f32.mrb[0].mxu0
    %v420 = vadd.f32 0.0, %v419
    %v421 = vpop.f32.mrb[0].mxu0
    %422 = vmatprep.mubr.bf16.mxu0 0
    %423 = vmatmul.mubr.bf16.gmra.mrb[0].mxu0 %v251
    %v424 = vpop.f32.mrb[0].mxu0
    %v425 = vadd.f32 0.0, %v424
    %v426 = vpop.f32.mrb[0].mxu0
    %v427 = vpop.f32.mrb[0].mxu0
    %v428 = vadd.f32 0.0, %v427
    %v429 = vpop.f32.mrb[0].mxu0
    %430 = vmatprep.mubr.bf16.mxu0 0
    %431 = vmatmul.mubr.bf16.gmra.mrb[0].mxu0 %v252
    %v432 = vpop.f32.mrb[0].mxu0
    %v433 = vadd.f32 0.0, %v432
    %v434 = vpop.f32.mrb[0].mxu0
    %v435 = vpop.f32.mrb[0].mxu0
    %v436 = vadd.f32 0.0, %v435
    %v437 = vpop.f32.mrb[0].mxu0
    %438 = vmatprep.mubr.bf16.mxu0 0
    %439 = vmatmul.mubr.bf16.gmra.mrb[0].mxu0 %v253
    %v440 = vpop.f32.mrb[0].mxu0
    %v441 = vadd.f32 0.0, %v440
    %v442 = vpop.f32.mrb[0].mxu0
    %v443 = vpop.f32.mrb[0].mxu0
    %v444 = vadd.f32 0.0, %v443
    %v445 = vpop.f32.mrb[0].mxu0
    %446 = vmatprep.mubr.bf16.mxu0 0
    %447 = vmatmul.mubr.bf16.gmra.mrb[0].mxu0 %v254
    %v448 = vpop.f32.mrb[0].mxu0
    %v449 = vadd.f32 0.0, %v448
    %v450 = vpop.f32.mrb[0].mxu0
    %v451 = vpop.f32.mrb[0].mxu0
    %v452 = vadd.f32 0.0, %v451
    %v453 = vpop.f32.mrb[0].mxu0
    %454 = vmatprep.mubr.bf16.mxu0 0
    %455 = vmatmul.mubr.bf16.gmra.mrb[0].mxu0 %v255
    %v456 = vpop.f32.mrb[0].mxu0
    %v457 = vadd.f32 0.0, %v456
    %v458 = vpop.f32.mrb[0].mxu0
    %v459 = vpop.f32.mrb[0].mxu0
    %v460 = vadd.f32 0.0, %v459
    %v461 = vpop.f32.mrb[0].mxu0
    %462 = vmatprep.mubr.bf16.mxu0 0
    %463 = vmatmul.mubr.bf16.gmra.mrb[0].mxu0 %v256
    %v464 = vpop.f32.mrb[0].mxu0
    %v465 = vadd.f32 0.0, %v464
    %v466 = vpop.f32.mrb[0].mxu0
    %v467 = vpop.f32.mrb[0].mxu0
    %v468 = vadd.f32 0.0, %v467
    %v469 = vpop.f32.mrb[0].mxu0
    %470 = vmatprep.mubr.bf16.mxu0 0
    %471 = vmatmul.mubr.bf16.gmra.mrb[0].mxu0 %v257
    %v472 = vpop.f32.mrb[0].mxu0
    %v473 = vadd.f32 0.0, %v472
    %v474 = vpop.f32.mrb[0].mxu0
    %v475 = vpop.f32.mrb[0].mxu0
    %v476 = vadd.f32 0.0, %v475
    %v477 = vpop.f32.mrb[0].mxu0
    %478 = vmatprep.mubr.bf16.mxu0 0
    %479 = vmatmul.mubr.bf16.gmra.mrb[0].mxu0 %v258
    %v480 = vpop.f32.mrb[0].mxu0
    %v481 = vadd.f32 0.0, %v480
    %v482 = vpop.f32.mrb[0].mxu0
    %v483 = vpop.f32.mrb[0].mxu0
    %v484 = vadd.f32 0.0, %v483
    %v485 = vpop.f32.mrb[0].mxu0
    %486 = vmatprep.mubr.bf16.mxu0 0
    %487 = vmatmul.mubr.bf16.gmra.mrb[0].mxu0 %v259
    %v488 = vpop.f32.mrb[0].mxu0
    %v489 = vadd.f32 0.0, %v488
    %v490 = vpop.f32.mrb[0].mxu0
    %v491 = vpop.f32.mrb[0].mxu0
    %v492 = vadd.f32 0.0, %v491
    %v493 = vpop.f32.mrb[0].mxu0
    %494 = vmatprep.mubr.bf16.mxu0 0
    %495 = vmatmul.mubr.bf16.gmra.mrb[0].mxu0 %v260
    %v496 = vpop.f32.mrb[0].mxu0
    %v497 = vadd.f32 0.0, %v496
    %v498 = vpop.f32.mrb[0].mxu0
    %v499 = vpop.f32.mrb[0].mxu0
    %v500 = vadd.f32 0.0, %v499
    %v501 = vpop.f32.mrb[0].mxu0
    %502 = vmatprep.mubr.bf16.mxu0 0
    %503 = vmatmul.mubr.bf16.gmra.mrb[0].mxu0 %v261
    %v504 = vpop.f32.mrb[0].mxu0
    %v505 = vadd.f32 0.0, %v504
    %v506 = vpop.f32.mrb[0].mxu0
    %v507 = vpop.f32.mrb[0].mxu0
    %v508 = vadd.f32 0.0, %v507
    %v509 = vpop.f32.mrb[0].mxu0
    %510 = vmatprep.mubr.bf16.mxu0 0
    %511 = vmatmul.mubr.bf16.gmra.mrb[0].mxu0 %v262
    %v512 = vpop.f32.mrb[0].mxu0
    %v513 = vadd.f32 0.0, %v512
    %v514 = vpop.f32.mrb[0].mxu0
    %v515 = vpop.f32.mrb[0].mxu0
    %v516 = vadd.f32 0.0, %v515
    %v517 = vpop.f32.mrb[0].mxu0
    %518 = vmatprep.mubr.bf16.mxu0 0
    %519 = vmatmul.mubr.bf16.gmra.mrb[0].mxu0 %v263
    %v520 = vpop.f32.mrb[0].mxu0
    %v521 = vadd.f32 0.0, %v520
    %v522 = vpop.f32.mrb[0].mxu0
    %v523 = vpop.f32.mrb[0].mxu0
    %v524 = vadd.f32 0.0, %v523
    %v525 = vpop.f32.mrb[0].mxu0
    %526 = vmatprep.mubr.bf16.mxu0 0
    %527 = vmatmul.mubr.bf16.gmra.mrb[0].mxu0 %v264
    %v528 = vpop.f32.mrb[0].mxu0
    %v529 = vadd.f32 0.0, %v528
    %v530 = vpop.f32.mrb[0].mxu0
    %v531 = vpop.f32.mrb[0].mxu0
    %v532 = vadd.f32 0.0, %v531
    %v533 = vpop.f32.mrb[0].mxu0
    %534 = vmatprep.mubr.bf16.mxu0 0
    %535 = vmatmul.mubr.bf16.gmra.mrb[0].mxu0 %v265
    %v536 = vpop.f32.mrb[0].mxu0
    %v537 = vadd.f32 0.0, %v536
    %v538 = vpop.f32.mrb[0].mxu0
    %v539 = vpop.f32.mrb[0].mxu0
    %v540 = vadd.f32 0.0, %v539
    %v541 = vpop.f32.mrb[0].mxu0
    %542 = vmatprep.mubr.bf16.mxu0 0
    %543 = vmatmul.mubr.bf16.gmra.mrb[0].mxu0 %v266
    %v544 = vpop.f32.mrb[0].mxu0
    %v545 = vadd.f32 0.0, %v544
    %v546 = vpop.f32.mrb[0].mxu0
    %v547 = vpop.f32.mrb[0].mxu0
    %v548 = vadd.f32 0.0, %v547
    %v549 = vpop.f32.mrb[0].mxu0
    %550 = vmatprep.mubr.bf16.mxu0 0
    %551 = vmatmul.mubr.bf16.gmra.mrb[0].mxu0 %v267
    %v552 = vpop.f32.mrb[0].mxu0
    %v553 = vadd.f32 0.0, %v552
    %v554 = vpop.f32.mrb[0].mxu0
    %v555 = vpop.f32.mrb[0].mxu0
    %v556 = vadd.f32 0.0, %v555
    %v557 = vpop.f32.mrb[0].mxu0
    %558 = vmatprep.mubr.bf16.mxu0 0
    %559 = vmatmul.mubr.bf16.gmra.mrb[0].mxu0 %v268
    %v560 = vpop.f32.mrb[0].mxu0
    %v561 = vadd.f32 0.0, %v560
    %v562 = vpop.f32.mrb[0].mxu0
    %v563 = vpop.f32.mrb[0].mxu0
    %v564 = vadd.f32 0.0, %v563
    %v565 = vpop.f32.mrb[0].mxu0
    %566 = vmatprep.mubr.bf16.mxu0 0
    %567 = vmatmul.mubr.bf16.gmra.mrb[0].mxu0 %v269
    %v568 = vpop.f32.mrb[0].mxu0
    %v569 = vadd.f32 0.0, %v568
    %v570 = vpop.f32.mrb[0].mxu0
    %v571 = vpop.f32.mrb[0].mxu0
    %v572 = vadd.f32 0.0, %v571
    %v573 = vpop.f32.mrb[0].mxu0
    %574 = vmatprep.mubr.bf16.mxu0 0
    %575 = vmatmul.mubr.bf16.gmra.mrb[0].mxu0 %v270
    %v576 = vpop.f32.mrb[0].mxu0
    %v577 = vadd.f32 0.0, %v576
    %v578 = vpop.f32.mrb[0].mxu0
    %v579 = vpop.f32.mrb[0].mxu0
    %v580 = vadd.f32 0.0, %v579
    %v581 = vpop.f32.mrb[0].mxu0
    %582 = vmatprep.mubr.bf16.mxu0 0
    %583 = vmatmul.mubr.bf16.gmra.mrb[0].mxu0 %v271
    %v584 = vpop.f32.mrb[0].mxu0
    %v585 = vadd.f32 0.0, %v584
    %v586 = vpop.f32.mrb[0].mxu0
    %v587 = vpop.f32.mrb[0].mxu0
    %v588 = vadd.f32 0.0, %v587
    %v589 = vpop.f32.mrb[0].mxu0
    %590 = vmatprep.mubr.bf16.mxu0 0
    %591 = vmatmul.mubr.bf16.gmra.mrb[0].mxu0 %v272
    %v592 = vpop.f32.mrb[0].mxu0
    %v593 = vadd.f32 0.0, %v592
    %v594 = vpop.f32.mrb[0].mxu0
    %v595 = vpop.f32.mrb[0].mxu0
    %v596 = vadd.f32 0.0, %v595
    %v597 = vpop.f32.mrb[0].mxu0
    %598 = vmatprep.mubr.bf16.mxu0 0
    %599 = vmatmul.mubr.bf16.gmra.mrb[0].mxu0 %v273
    %v600 = vpop.f32.mrb[0].mxu0
    %v601 = vadd.f32 0.0, %v600
    %v602 = vpop.f32.mrb[0].mxu0
    %v603 = vpop.f32.mrb[0].mxu0
    %v604 = vadd.f32 0.0, %v603
    %v605 = vpop.f32.mrb[0].mxu0
    %606 = vmatprep.mubr.bf16.mxu0 0
    %607 = vmatmul.mubr.bf16.gmra.mrb[0].mxu0 %v274
    %v608 = vpop.f32.mrb[0].mxu0
    %v609 = vadd.f32 0.0, %v608
    %v610 = vpop.f32.mrb[0].mxu0
    %v611 = vpop.f32.mrb[0].mxu0
    %v612 = vadd.f32 0.0, %v611
    %v613 = vpop.f32.mrb[0].mxu0
    %614 = vmatprep.mubr.bf16.mxu0 0
    %615 = vmatmul.mubr.bf16.gmra.mrb[0].mxu0 %v275
    %v616 = vpop.f32.mrb[0].mxu0
    %v617 = vadd.f32 0.0, %v616
    %v618 = vpop.f32.mrb[0].mxu0
    %v619 = vpop.f32.mrb[0].mxu0
    %v620 = vadd.f32 0.0, %v619
    %v621 = vpop.f32.mrb[0].mxu0
    %622 = vmatprep.mubr.bf16.mxu0 0
    %623 = vmatmul.mubr.bf16.gmra.mrb[0].mxu0 %v276
    %v624 = vpop.f32.mrb[0].mxu0
    %v625 = vadd.f32 0.0, %v624
    %v626 = vpop.f32.mrb[0].mxu0
    %v627 = vpop.f32.mrb[0].mxu0
    %v628 = vadd.f32 0.0, %v627
    %v629 = vpop.f32.mrb[0].mxu0
    %630 = vmatprep.mubr.bf16.mxu0 0
    %631 = vmatmul.mubr.bf16.gmra.mrb[0].mxu0 %v277
    %v632 = vpop.f32.mrb[0].mxu0
    %v633 = vadd.f32 0.0, %v632
    %v634 = vpop.f32.mrb[0].mxu0
    %v635 = vpop.f32.mrb[0].mxu0
    %v636 = vadd.f32 0.0, %v635
    %v637 = vpop.f32.mrb[0].mxu0
    %638 = vmatprep.mubr.bf16.mxu0 0
    %639 = vmatmul.mubr.bf16.gmra.mrb[0].mxu0 %v278
    %v640 = vpop.f32.mrb[0].mxu0
    %v641 = vadd.f32 0.0, %v640
    %v642 = vpop.f32.mrb[0].mxu0
    %v643 = vpop.f32.mrb[0].mxu0
    %v644 = vadd.f32 0.0, %v643
    %v645 = vpop.f32.mrb[0].mxu0
    %646 = vmatprep.mubr.bf16.mxu0 0
    %647 = vmatmul.mubr.bf16.gmra.mrb[0].mxu0 %v279
    %v648 = vpop.f32.mrb[0].mxu0
    %v649 = vadd.f32 0.0, %v648
    %v650 = vpop.f32.mrb[0].mxu0
    %v651 = vpop.f32.mrb[0].mxu0
    %v652 = vadd.f32 0.0, %v651
    %v653 = vpop.f32.mrb[0].mxu0
    %654 = vmatprep.mubr.bf16.mxu0 0
    %655 = vmatmul.mubr.bf16.gmra.mrb[0].mxu0 %v280
    %v656 = vpop.f32.mrb[0].mxu0
    %v657 = vadd.f32 0.0, %v656
    %v658 = vpop.f32.mrb[0].mxu0
    %v659 = vpop.f32.mrb[0].mxu0
    %v660 = vadd.f32 0.0, %v659
    %v661 = vpop.f32.mrb[0].mxu0
    %662 = vmatprep.mubr.bf16.mxu0 0
    %663 = vmatmul.mubr.bf16.gmra.mrb[0].mxu0 %v281
    %v664 = vpop.f32.mrb[0].mxu0
    %v665 = vadd.f32 0.0, %v664
    %v666 = vpop.f32.mrb[0].mxu0
    %v667 = vpop.f32.mrb[0].mxu0
    %v668 = vadd.f32 0.0, %v667
    %v669 = vpop.f32.mrb[0].mxu0
    %670 = vmatprep.mubr.bf16.mxu0 0
    %671 = vmatmul.mubr.bf16.gmra.mrb[0].mxu0 %v282
    %v672 = vpop.f32.mrb[0].mxu0
    %v673 = vadd.f32 0.0, %v672
    %v674 = vpop.f32.mrb[0].mxu0
    %v675 = vpop.f32.mrb[0].mxu0
    %v676 = vadd.f32 0.0, %v675
    %v677 = vpop.f32.mrb[0].mxu0
    %678 = vmatprep.mubr.bf16.mxu0 0
    %679 = vmatmul.mubr.bf16.gmra.mrb[0].mxu0 %v283
    %v680 = vpop.f32.mrb[0].mxu0
    %v681 = vadd.f32 0.0, %v680
    %v682 = vpop.f32.mrb[0].mxu0
    %v683 = vpop.f32.mrb[0].mxu0
    %v684 = vadd.f32 0.0, %v683
    %v685 = vpop.f32.mrb[0].mxu0
    %686 = vmatprep.mubr.bf16.mxu0 0
    %687 = vmatmul.mubr.bf16.gmra.mrb[0].mxu0 %v284
    %v688 = vpop.f32.mrb[0].mxu0
    %v689 = vadd.f32 0.0, %v688
    %v690 = vpop.f32.mrb[0].mxu0
    %v691 = vpop.f32.mrb[0].mxu0
    %v692 = vadd.f32 0.0, %v691
    %v693 = vpop.f32.mrb[0].mxu0
    %694 = vmatprep.mubr.bf16.mxu0 0
    %695 = vmatmul.mubr.bf16.gmra.mrb[0].mxu0 %v285
    %v696 = vpop.f32.mrb[0].mxu0
    %v697 = vadd.f32 0.0, %v696
    %v698 = vpop.f32.mrb[0].mxu0
    %v699 = vpop.f32.mrb[0].mxu0
    %v700 = vadd.f32 0.0, %v699
    %v701 = vpop.f32.mrb[0].mxu0
    %702 = vmatprep.mubr.bf16.mxu0 0
    %703 = vmatmul.mubr.bf16.gmra.mrb[0].mxu0 %v286
    %v704 = vpop.f32.mrb[0].mxu0
    %v705 = vadd.f32 0.0, %v704
    %v706 = vpop.f32.mrb[0].mxu0
    %v707 = vpop.f32.mrb[0].mxu0
    %v708 = vadd.f32 0.0, %v707
    %v709 = vpop.f32.mrb[0].mxu0
    %710 = vmatprep.mubr.bf16.mxu0 0
    %711 = vmatmul.mubr.bf16.gmra.mrb[0].mxu0 %v287
    %v712 = vpop.f32.mrb[0].mxu0
    %v713 = vadd.f32 0.0, %v712
    %v714 = vpop.f32.mrb[0].mxu0
    %v715 = vpop.f32.mrb[0].mxu0
    %v716 = vadd.f32 0.0, %v715
    %v717 = vpop.f32.mrb[0].mxu0
    %718 = vmatprep.mubr.bf16.mxu0 0
    %719 = vmatmul.mubr.bf16.gmra.mrb[0].mxu0 %v288
    %v720 = vpop.f32.mrb[0].mxu0
    %v721 = vadd.f32 0.0, %v720
    %v722 = vpop.f32.mrb[0].mxu0
    %v723 = vpop.f32.mrb[0].mxu0
    %v724 = vadd.f32 0.0, %v723
    %v725 = vpop.f32.mrb[0].mxu0
    %726 = vmatprep.mubr.bf16.mxu0 0
    %727 = vmatmul.mubr.bf16.gmra.mrb[0].mxu0 %v289
    %v728 = vpop.f32.mrb[0].mxu0
    %v729 = vadd.f32 0.0, %v728
    %v730 = vpop.f32.mrb[0].mxu0
    %v731 = vpop.f32.mrb[0].mxu0
    %v732 = vadd.f32 0.0, %v731
    %v733 = vpop.f32.mrb[0].mxu0
    %734 = vmatprep.mubr.bf16.mxu0 0
    %735 = vmatmul.mubr.bf16.gmra.mrb[0].mxu0 %v290
    %v736 = vpop.f32.mrb[0].mxu0
    %v737 = vadd.f32 0.0, %v736
    %v738 = vpop.f32.mrb[0].mxu0
    %v739 = vpop.f32.mrb[0].mxu0
    %v740 = vadd.f32 0.0, %v739
    %v741 = vpop.f32.mrb[0].mxu0
    %742 = vmatprep.mubr.bf16.mxu0 0
    %743 = vmatmul.mubr.bf16.gmra.mrb[0].mxu0 %v291
    %v744 = vpop.f32.mrb[0].mxu0
    %v745 = vadd.f32 0.0, %v744
    %v746 = vpop.f32.mrb[0].mxu0
    %v747 = vpop.f32.mrb[0].mxu0
    %v748 = vadd.f32 0.0, %v747
    %v749 = vpop.f32.mrb[0].mxu0
    %750 = vmatprep.mubr.bf16.mxu0 0
    %751 = vmatmul.mubr.bf16.gmra.mrb[0].mxu0 %v292
    %v752 = vpop.f32.mrb[0].mxu0
    %v753 = vadd.f32 0.0, %v752
    %v754 = vpop.f32.mrb[0].mxu0
    %v755 = vpop.f32.mrb[0].mxu0
    %v756 = vadd.f32 0.0, %v755
    %v757 = vpop.f32.mrb[0].mxu0
    %758 = vmatprep.mubr.bf16.mxu0 0
    %759 = vmatmul.mubr.bf16.gmra.mrb[0].mxu0 %v293
    %v760 = vpop.f32.mrb[0].mxu0
    %v761 = vadd.f32 0.0, %v760
    %v762 = vpop.f32.mrb[0].mxu0
    %v763 = vpop.f32.mrb[0].mxu0
    %v764 = vadd.f32 0.0, %v763
    %v765 = vpop.f32.mrb[0].mxu0
    %766 = vmatprep.mubr.bf16.mxu0 0
    %767 = vmatmul.mubr.bf16.gmra.mrb[0].mxu0 %v294
    %v768 = vpop.f32.mrb[0].mxu0
    %v769 = vadd.f32 0.0, %v768
    %v770 = vpop.f32.mrb[0].mxu0
    %v771 = vpop.f32.mrb[0].mxu0
    %v772 = vadd.f32 0.0, %v771
    %v773 = vpop.f32.mrb[0].mxu0
    %774 = vmatprep.mubr.bf16.mxu0 0
    %775 = vmatmul.mubr.bf16.gmra.mrb[0].mxu0 %v295
    %v776 = vpop.f32.mrb[0].mxu0
    %v777 = vadd.f32 0.0, %v776
    %v778 = vpop.f32.mrb[0].mxu0
    %v779 = vpop.f32.mrb[0].mxu0
    %v780 = vadd.f32 0.0, %v779
    %v781 = vpop.f32.mrb[0].mxu0
    %782 = vmatprep.mubr.bf16.mxu0 0
    %783 = vmatmul.mubr.bf16.gmra.mrb[0].mxu0 %v296
    %v784 = vpop.f32.mrb[0].mxu0
    %v785 = vadd.f32 0.0, %v784
    %v786 = vpop.f32.mrb[0].mxu0
    %v787 = vpop.f32.mrb[0].mxu0
    %v788 = vadd.f32 0.0, %v787
    %v789 = vpop.f32.mrb[0].mxu0
    %790 = vmatprep.mubr.bf16.mxu0 0
    %791 = vmatmul.mubr.bf16.gmra.mrb[0].mxu0 %v297
    %v792 = vpop.f32.mrb[0].mxu0
    %v793 = vadd.f32 0.0, %v792
    %v794 = vpop.f32.mrb[0].mxu0
    %v795 = vpop.f32.mrb[0].mxu0
    %v796 = vadd.f32 0.0, %v795
    %v797 = vpop.f32.mrb[0].mxu0
    %798 = vmatprep.mubr.bf16.mxu0 0
    %799 = vmatmul.mubr.bf16.gmra.mrb[0].mxu0 %v298
    %v800 = vpop.f32.mrb[0].mxu0
    %v801 = vadd.f32 0.0, %v800
    %v802 = vpop.f32.mrb[0].mxu0
    %v803 = vpop.f32.mrb[0].mxu0
    %v804 = vadd.f32 0.0, %v803
    %v805 = vpop.f32.mrb[0].mxu0
    %806 = vmatprep.mubr.bf16.mxu0 0
    %807 = vmatmul.mubr.bf16.gmra.mrb[0].mxu0 %v299
    %v808 = vpop.f32.mrb[0].mxu0
    %v809 = vadd.f32 0.0, %v808
    %v810 = vpop.f32.mrb[0].mxu0
    %v811 = vpop.f32.mrb[0].mxu0
    %v812 = vadd.f32 0.0, %v811
    %v813 = vpop.f32.mrb[0].mxu0
    %814 = vmatprep.mubr.bf16.mxu0 0
    %815 = vmatmul.mubr.bf16.gmra.mrb[0].mxu0 %v300
    %v816 = vpop.f32.mrb[0].mxu0
    %v817 = vadd.f32 0.0, %v816
    %v818 = vpop.f32.mrb[0].mxu0
    %v819 = vpop.f32.mrb[0].mxu0
    %v820 = vadd.f32 0.0, %v819
    %v821 = vpop.f32.mrb[0].mxu0
    %822 = vmatprep.mubr.bf16.mxu0 0
    %823 = vmatmul.mubr.bf16.gmra.mrb[0].mxu0 %v301
    %v824 = vpop.f32.mrb[0].mxu0
    %v825 = vadd.f32 0.0, %v824
    %v826 = vpop.f32.mrb[0].mxu0
    %v827 = vpop.f32.mrb[0].mxu0
    %v828 = vadd.f32 0.0, %v827
    %v829 = vpop.f32.mrb[0].mxu0
    %830 = vmatprep.mubr.bf16.mxu0 0
    %831 = vmatmul.mubr.bf16.gmra.mrb[0].mxu0 %v302
    %v832 = vpop.f32.mrb[0].mxu0
    %v833 = vadd.f32 0.0, %v832
    %v834 = vpop.f32.mrb[0].mxu0
    %v835 = vpop.f32.mrb[0].mxu0
    %v836 = vadd.f32 0.0, %v835
    %v837 = vpop.f32.mrb[0].mxu0
    %838 = vmatprep.mubr.bf16.mxu0 0
    %839 = vmatmul.mubr.bf16.gmra.mrb[0].mxu0 %v303
    %v840 = vpop.f32.mrb[0].mxu0
    %v841 = vadd.f32 0.0, %v840
    %v842 = vpop.f32.mrb[0].mxu0
    %v843 = vpop.f32.mrb[0].mxu0
    %v844 = vadd.f32 0.0, %v843
    %v845 = vpop.f32.mrb[0].mxu0
    %846 = vmatprep.mubr.bf16.mxu0 0
    %847 = vmatmul.mubr.bf16.gmra.mrb[0].mxu0 %v304
    %v848 = vpop.f32.mrb[0].mxu0
    %v849 = vadd.f32 0.0, %v848
    %v850 = vpop.f32.mrb[0].mxu0
    %v851 = vpop.f32.mrb[0].mxu0
    %v852 = vadd.f32 0.0, %v851
    %v853 = vpop.f32.mrb[0].mxu0
    %854 = vmatprep.mubr.bf16.mxu0 0
    %855 = vmatmul.mubr.bf16.gmra.mrb[0].mxu0 %v305
    %v856 = vpop.f32.mrb[0].mxu0
    %v857 = vadd.f32 0.0, %v856
    %v858 = vpop.f32.mrb[0].mxu0
    %v859 = vpop.f32.mrb[0].mxu0
    %v860 = vadd.f32 0.0, %v859
    %v861 = vpop.f32.mrb[0].mxu0
    %862 = vmatprep.mubr.bf16.mxu0 0
    %863 = vmatmul.mubr.bf16.gmra.mrb[0].mxu0 %v306
    %v864 = vpop.f32.mrb[0].mxu0
    %v865 = vadd.f32 0.0, %v864
    %v866 = vpop.f32.mrb[0].mxu0
    %v867 = vpop.f32.mrb[0].mxu0
    %v868 = vadd.f32 0.0, %v867
    %v869 = vpop.f32.mrb[0].mxu0
    %870 = vmatprep.mubr.bf16.mxu0 0
    %871 = vmatmul.mubr.bf16.gmra.mrb[0].mxu0 %v307
    %v872 = vpop.f32.mrb[0].mxu0
    %v873 = vadd.f32 0.0, %v872
    %v874 = vpop.f32.mrb[0].mxu0
    %v875 = vpop.f32.mrb[0].mxu0
    %v876 = vadd.f32 0.0, %v875
    %v877 = vpop.f32.mrb[0].mxu0
    %878 = vmatprep.mubr.bf16.mxu0 0
    %879 = vmatmul.mubr.bf16.gmra.mrb[0].mxu0 %v308
    %v880 = vpop.f32.mrb[0].mxu0
    %v881 = vadd.f32 0.0, %v880
    %v882 = vpop.f32.mrb[0].mxu0
    %v883 = vpop.f32.mrb[0].mxu0
    %v884 = vadd.f32 0.0, %v883
    %v885 = vpop.f32.mrb[0].mxu0
    %886 = vmatprep.mubr.bf16.mxu0 0
    %887 = vmatmul.mubr.bf16.gmra.mrb[0].mxu0 %v309
    %v888 = vpop.f32.mrb[0].mxu0
    %v889 = vadd.f32 0.0, %v888
    %v890 = vpop.f32.mrb[0].mxu0
    %v891 = vpop.f32.mrb[0].mxu0
    %v892 = vadd.f32 0.0, %v891
    %v893 = vpop.f32.mrb[0].mxu0
    %894 = vmatprep.mubr.bf16.mxu0 0
    %895 = vmatmul.mubr.bf16.gmra.mrb[0].mxu0 %v310
    %v896 = vpop.f32.mrb[0].mxu0
    %v897 = vadd.f32 0.0, %v896
    %v898 = vpop.f32.mrb[0].mxu0
    %v899 = vpop.f32.mrb[0].mxu0
    %v900 = vadd.f32 0.0, %v899
    %v901 = vpop.f32.mrb[0].mxu0
    %902 = vmatprep.mubr.bf16.mxu0 0
    %903 = vmatmul.mubr.bf16.gmra.mrb[0].mxu0 %v311
    %v904 = vpop.f32.mrb[0].mxu0
    %v905 = vadd.f32 0.0, %v904
    %v906 = vpop.f32.mrb[0].mxu0
    %v907 = vpop.f32.mrb[0].mxu0
    %v908 = vadd.f32 0.0, %v907
    %v909 = vpop.f32.mrb[0].mxu0
    %910 = vmatprep.mubr.bf16.mxu0 0
    %911 = vmatmul.mubr.bf16.gmra.mrb[0].mxu0 %v312
    %v912 = vpop.f32.mrb[0].mxu0
    %v913 = vadd.f32 0.0, %v912
    %v914 = vpop.f32.mrb[0].mxu0
    %v915 = vpop.f32.mrb[0].mxu0
    %v916 = vadd.f32 0.0, %v915
    %v917 = vpop.f32.mrb[0].mxu0
    %918 = vmatprep.mubr.bf16.mxu0 0
    %919 = vmatmul.mubr.bf16.gmra.mrb[0].mxu0 %v313
    %v920 = vpop.f32.mrb[0].mxu0
    %v921 = vadd.f32 0.0, %v920
    %v922 = vpop.f32.mrb[0].mxu0
    %v923 = vpop.f32.mrb[0].mxu0
    %v924 = vadd.f32 0.0, %v923
    %v925 = vpop.f32.mrb[0].mxu0
    %926 = vmatprep.mubr.bf16.mxu0 0
    %927 = vmatmul.mubr.bf16.gmra.mrb[0].mxu0 %v314
    %v928 = vpop.f32.mrb[0].mxu0
    %v929 = vadd.f32 0.0, %v928
    %v930 = vpop.f32.mrb[0].mxu0
    %v931 = vpop.f32.mrb[0].mxu0
    %v932 = vadd.f32 0.0, %v931
    %v933 = vpop.f32.mrb[0].mxu0
    %934 = vmatprep.mubr.bf16.mxu0 0
    %935 = vmatmul.mubr.bf16.gmra.mrb[0].mxu0 %v315
    %v936 = vpop.f32.mrb[0].mxu0
    %v937 = vadd.f32 0.0, %v936
    %v938 = vpop.f32.mrb[0].mxu0
    %v939 = vpop.f32.mrb[0].mxu0
    %v940 = vadd.f32 0.0, %v939
    %v941 = vpop.f32.mrb[0].mxu0
    %942 = vmatprep.mubr.bf16.mxu0 0
    %943 = vmatmul.mubr.bf16.gmra.mrb[0].mxu0 %v316
    %v944 = vpop.f32.mrb[0].mxu0
    %v945 = vadd.f32 0.0, %v944
    %v946 = vpop.f32.mrb[0].mxu0
    %v947 = vpop.f32.mrb[0].mxu0
    %v948 = vadd.f32 0.0, %v947
    %v949 = vpop.f32.mrb[0].mxu0
    %950 = vmatprep.mubr.bf16.mxu0 0
    %951 = vmatmul.mubr.bf16.gmra.mrb[0].mxu0 %v317
    %v952 = vpop.f32.mrb[0].mxu0
    %v953 = vadd.f32 0.0, %v952
    %v954 = vpop.f32.mrb[0].mxu0
    %v955 = vpop.f32.mrb[0].mxu0
    %v956 = vadd.f32 0.0, %v955
    %v957 = vpop.f32.mrb[0].mxu0
    %958 = vdwg.mxu0
    %vm959 = vcmask 261120
    %v960 = vsel %vm959, %v417, -inf
    %v961 = vsel %vm959, %v420, -inf
    %v962 = vmax.f32 %v960, %v961
    %v963 = vsel %vm959, %v425, -inf
    %v964 = vmax.f32 %v962, %v963
    %v965 = vsel %vm959, %v428, -inf
    %v966 = vmax.f32 %v964, %v965
    %v967 = vsel %vm959, %v433, -inf
    %v968 = vmax.f32 %v966, %v967
    %v969 = vsel %vm959, %v436, -inf
    %v970 = vmax.f32 %v968, %v969
    %v971 = vsel %vm959, %v441, -inf
    %v972 = vmax.f32 %v970, %v971
    %v973 = vsel %vm959, %v444, -inf
    %v974 = vmax.f32 %v972, %v973
    %v975 = vsel %vm959, %v449, -inf
    %v976 = vmax.f32 %v974, %v975
    %v977 = vsel %vm959, %v452, -inf
    %v978 = vmax.f32 %v976, %v977
    %v979 = vsel %vm959, %v457, -inf
    %v980 = vmax.f32 %v978, %v979
    %v981 = vsel %vm959, %v460, -inf
    %v982 = vmax.f32 %v980, %v981
    %v983 = vsel %vm959, %v465, -inf
    %v984 = vmax.f32 %v982, %v983
    %v985 = vsel %vm959, %v468, -inf
    %v986 = vmax.f32 %v984, %v985
    %v987 = vsel %vm959, %v473, -inf
    %v988 = vmax.f32 %v986, %v987
    %v989 = vsel %vm959, %v476, -inf
    %v990 = vmax.f32 %v988, %v989
    %v991 = vsel %vm959, %v481, -inf
    %v992 = vmax.f32 %v990, %v991
    %v993 = vrot.slane %v992, 4
    %v994 = vmax.f32 %v992, %v993
    %v995 = vrot.slane %v994, 2
    %v996 = vmax.f32 %v994, %v995
    %v997 = vrot.slane %v996, 1
    %v998 = vmax.f32 %v996, %v997
    %v999 = vsel %vm959, %v484, -inf
    %v1000 = vsel %vm959, %v489, -inf
    %v1001 = vmax.f32 %v999, %v1000
    %v1002 = vsel %vm959, %v492, -inf
    %v1003 = vmax.f32 %v1001, %v1002
    %v1004 = vsel %vm959, %v497, -inf
    %v1005 = vmax.f32 %v1003, %v1004
    %v1006 = vsel %vm959, %v500, -inf
    %v1007 = vmax.f32 %v1005, %v1006
    %v1008 = vsel %vm959, %v505, -inf
    %v1009 = vmax.f32 %v1007, %v1008
    %v1010 = vsel %vm959, %v508, -inf
    %v1011 = vmax.f32 %v1009, %v1010
    %v1012 = vsel %vm959, %v513, -inf
    %v1013 = vmax.f32 %v1011, %v1012
    %v1014 = vsel %vm959, %v516, -inf
    %v1015 = vmax.f32 %v1013, %v1014
    %v1016 = vsel %vm959, %v521, -inf
    %v1017 = vmax.f32 %v1015, %v1016
    %v1018 = vsel %vm959, %v524, -inf
    %v1019 = vmax.f32 %v1017, %v1018
    %v1020 = vsel %vm959, %v529, -inf
    %v1021 = vmax.f32 %v1019, %v1020
    %v1022 = vsel %vm959, %v532, -inf
    %v1023 = vmax.f32 %v1021, %v1022
    %v1024 = vsel %vm959, %v537, -inf
    %v1025 = vmax.f32 %v1023, %v1024
    %v1026 = vsel %vm959, %v540, -inf
    %v1027 = vmax.f32 %v1025, %v1026
    %v1028 = vsel %vm959, %v545, -inf
    %v1029 = vmax.f32 %v1027, %v1028
    %v1030 = vsel %vm959, %v548, -inf
    %v1031 = vmax.f32 %v1029, %v1030
    %v1032 = vrot.slane %v1031, 4
    %v1033 = vmax.f32 %v1031, %v1032
    %v1034 = vrot.slane %v1033, 2
    %v1035 = vmax.f32 %v1033, %v1034
    %v1036 = vrot.slane %v1035, 1
    %v1037 = vmax.f32 %v1035, %v1036
    %v1038 = vsel %vm959, %v553, -inf
    %v1039 = vsel %vm959, %v556, -inf
    %v1040 = vmax.f32 %v1038, %v1039
    %v1041 = vsel %vm959, %v561, -inf
    %v1042 = vmax.f32 %v1040, %v1041
    %v1043 = vsel %vm959, %v564, -inf
    %v1044 = vmax.f32 %v1042, %v1043
    %v1045 = vsel %vm959, %v569, -inf
    %v1046 = vmax.f32 %v1044, %v1045
    %v1047 = vsel %vm959, %v572, -inf
    %v1048 = vmax.f32 %v1046, %v1047
    %v1049 = vsel %vm959, %v577, -inf
    %v1050 = vmax.f32 %v1048, %v1049
    %v1051 = vsel %vm959, %v580, -inf
    %v1052 = vmax.f32 %v1050, %v1051
    %v1053 = vsel %vm959, %v585, -inf
    %v1054 = vmax.f32 %v1052, %v1053
    %v1055 = vsel %vm959, %v588, -inf
    %v1056 = vmax.f32 %v1054, %v1055
    %v1057 = vsel %vm959, %v593, -inf
    %v1058 = vmax.f32 %v1056, %v1057
    %v1059 = vsel %vm959, %v596, -inf
    %v1060 = vmax.f32 %v1058, %v1059
    %v1061 = vsel %vm959, %v601, -inf
    %v1062 = vmax.f32 %v1060, %v1061
    %v1063 = vsel %vm959, %v604, -inf
    %v1064 = vmax.f32 %v1062, %v1063
    %v1065 = vsel %vm959, %v609, -inf
    %v1066 = vmax.f32 %v1064, %v1065
    %v1067 = vsel %vm959, %v612, -inf
    %v1068 = vmax.f32 %v1066, %v1067
    %v1069 = vsel %vm959, %v617, -inf
    %v1070 = vmax.f32 %v1068, %v1069
    %v1071 = vrot.slane %v1070, 4
    %v1072 = vmax.f32 %v1070, %v1071
    %v1073 = vrot.slane %v1072, 2
    %v1074 = vmax.f32 %v1072, %v1073
    %v1075 = vrot.slane %v1074, 1
    %v1076 = vmax.f32 %v1074, %v1075
    %v1077 = vsel %vm959, %v620, -inf
    %v1078 = vsel %vm959, %v625, -inf
    %v1079 = vmax.f32 %v1077, %v1078
    %v1080 = vsel %vm959, %v628, -inf
    %v1081 = vmax.f32 %v1079, %v1080
    %v1082 = vsel %vm959, %v633, -inf
    %v1083 = vmax.f32 %v1081, %v1082
    %v1084 = vsel %vm959, %v636, -inf
    %v1085 = vmax.f32 %v1083, %v1084
    %v1086 = vsel %vm959, %v641, -inf
    %v1087 = vmax.f32 %v1085, %v1086
    %v1088 = vsel %vm959, %v644, -inf
    %v1089 = vmax.f32 %v1087, %v1088
    %v1090 = vsel %vm959, %v649, -inf
    %v1091 = vmax.f32 %v1089, %v1090
    %v1092 = vsel %vm959, %v652, -inf
    %v1093 = vmax.f32 %v1091, %v1092
    %v1094 = vsel %vm959, %v657, -inf
    %v1095 = vmax.f32 %v1093, %v1094
    %v1096 = vsel %vm959, %v660, -inf
    %v1097 = vmax.f32 %v1095, %v1096
    %v1098 = vsel %vm959, %v665, -inf
    %v1099 = vmax.f32 %v1097, %v1098
    %v1100 = vsel %vm959, %v668, -inf
    %v1101 = vmax.f32 %v1099, %v1100
    %v1102 = vsel %vm959, %v673, -inf
    %v1103 = vmax.f32 %v1101, %v1102
    %v1104 = vsel %vm959, %v676, -inf
    %v1105 = vmax.f32 %v1103, %v1104
    %v1106 = vsel %vm959, %v681, -inf
    %v1107 = vmax.f32 %v1105, %v1106
    %v1108 = vsel %vm959, %v684, -inf
    %v1109 = vmax.f32 %v1107, %v1108
    %v1110 = vrot.slane %v1109, 4
    %v1111 = vmax.f32 %v1109, %v1110
    %v1112 = vrot.slane %v1111, 2
    %v1113 = vmax.f32 %v1111, %v1112
    %v1114 = vrot.slane %v1113, 1
    %v1115 = vmax.f32 %v1113, %v1114
    %v1116 = vsel %vm959, %v689, -inf
    %v1117 = vsel %vm959, %v692, -inf
    %v1118 = vmax.f32 %v1116, %v1117
    %v1119 = vsel %vm959, %v697, -inf
    %v1120 = vmax.f32 %v1118, %v1119
    %v1121 = vsel %vm959, %v700, -inf
    %v1122 = vmax.f32 %v1120, %v1121
    %v1123 = vsel %vm959, %v705, -inf
    %v1124 = vmax.f32 %v1122, %v1123
    %v1125 = vsel %vm959, %v708, -inf
    %v1126 = vmax.f32 %v1124, %v1125
    %v1127 = vsel %vm959, %v713, -inf
    %v1128 = vmax.f32 %v1126, %v1127
    %v1129 = vsel %vm959, %v716, -inf
    %v1130 = vmax.f32 %v1128, %v1129
    %v1131 = vsel %vm959, %v721, -inf
    %v1132 = vmax.f32 %v1130, %v1131
    %v1133 = vsel %vm959, %v724, -inf
    %v1134 = vmax.f32 %v1132, %v1133
    %v1135 = vsel %vm959, %v729, -inf
    %v1136 = vmax.f32 %v1134, %v1135
    %v1137 = vsel %vm959, %v732, -inf
    %v1138 = vmax.f32 %v1136, %v1137
    %v1139 = vsel %vm959, %v737, -inf
    %v1140 = vmax.f32 %v1138, %v1139
    %v1141 = vsel %vm959, %v740, -inf
    %v1142 = vmax.f32 %v1140, %v1141
    %v1143 = vsel %vm959, %v745, -inf
    %v1144 = vmax.f32 %v1142, %v1143
    %v1145 = vsel %vm959, %v748, -inf
    %v1146 = vmax.f32 %v1144, %v1145
    %v1147 = vsel %vm959, %v753, -inf
    %v1148 = vmax.f32 %v1146, %v1147
    %v1149 = vrot.slane %v1148, 4
    %v1150 = vmax.f32 %v1148, %v1149
    %v1151 = vrot.slane %v1150, 2
    %v1152 = vmax.f32 %v1150, %v1151
    %v1153 = vrot.slane %v1152, 1
    %v1154 = vmax.f32 %v1152, %v1153
    %v1155 = vsel %vm959, %v756, -inf
    %v1156 = vsel %vm959, %v761, -inf
    %v1157 = vmax.f32 %v1155, %v1156
    %v1158 = vsel %vm959, %v764, -inf
    %v1159 = vmax.f32 %v1157, %v1158
    %v1160 = vsel %vm959, %v769, -inf
    %v1161 = vmax.f32 %v1159, %v1160
    %v1162 = vsel %vm959, %v772, -inf
    %v1163 = vmax.f32 %v1161, %v1162
    %v1164 = vsel %vm959, %v777, -inf
    %v1165 = vmax.f32 %v1163, %v1164
    %v1166 = vsel %vm959, %v780, -inf
    %v1167 = vmax.f32 %v1165, %v1166
    %v1168 = vsel %vm959, %v785, -inf
    %v1169 = vmax.f32 %v1167, %v1168
    %v1170 = vsel %vm959, %v788, -inf
    %v1171 = vmax.f32 %v1169, %v1170
    %v1172 = vsel %vm959, %v793, -inf
    %v1173 = vmax.f32 %v1171, %v1172
    %v1174 = vsel %vm959, %v796, -inf
    %v1175 = vmax.f32 %v1173, %v1174
    %v1176 = vsel %vm959, %v801, -inf
    %v1177 = vmax.f32 %v1175, %v1176
    %v1178 = vsel %vm959, %v804, -inf
    %v1179 = vmax.f32 %v1177, %v1178
    %v1180 = vsel %vm959, %v809, -inf
    %v1181 = vmax.f32 %v1179, %v1180
    %v1182 = vsel %vm959, %v812, -inf
    %v1183 = vmax.f32 %v1181, %v1182
    %v1184 = vsel %vm959, %v817, -inf
    %v1185 = vmax.f32 %v1183, %v1184
    %v1186 = vsel %vm959, %v820, -inf
    %v1187 = vmax.f32 %v1185, %v1186
    %v1188 = vrot.slane %v1187, 4
    %v1189 = vmax.f32 %v1187, %v1188
    %v1190 = vrot.slane %v1189, 2
    %v1191 = vmax.f32 %v1189, %v1190
    %v1192 = vrot.slane %v1191, 1
    %v1193 = vmax.f32 %v1191, %v1192
    %v1194 = vsel %vm959, %v825, -inf
    %v1195 = vsel %vm959, %v828, -inf
    %v1196 = vmax.f32 %v1194, %v1195
    %v1197 = vsel %vm959, %v833, -inf
    %v1198 = vmax.f32 %v1196, %v1197
    %v1199 = vsel %vm959, %v836, -inf
    %v1200 = vmax.f32 %v1198, %v1199
    %v1201 = vsel %vm959, %v841, -inf
    %v1202 = vmax.f32 %v1200, %v1201
    %v1203 = vsel %vm959, %v844, -inf
    %v1204 = vmax.f32 %v1202, %v1203
    %v1205 = vsel %vm959, %v849, -inf
    %v1206 = vmax.f32 %v1204, %v1205
    %v1207 = vsel %vm959, %v852, -inf
    %v1208 = vmax.f32 %v1206, %v1207
    %v1209 = vsel %vm959, %v857, -inf
    %v1210 = vmax.f32 %v1208, %v1209
    %v1211 = vsel %vm959, %v860, -inf
    %v1212 = vmax.f32 %v1210, %v1211
    %v1213 = vsel %vm959, %v865, -inf
    %v1214 = vmax.f32 %v1212, %v1213
    %v1215 = vsel %vm959, %v868, -inf
    %v1216 = vmax.f32 %v1214, %v1215
    %v1217 = vsel %vm959, %v873, -inf
    %v1218 = vmax.f32 %v1216, %v1217
    %v1219 = vsel %vm959, %v876, -inf
    %v1220 = vmax.f32 %v1218, %v1219
    %v1221 = vsel %vm959, %v881, -inf
    %v1222 = vmax.f32 %v1220, %v1221
    %v1223 = vsel %vm959, %v884, -inf
    %v1224 = vmax.f32 %v1222, %v1223
    %v1225 = vsel %vm959, %v889, -inf
    %v1226 = vmax.f32 %v1224, %v1225
    %v1227 = vrot.slane %v1226, 4
    %v1228 = vmax.f32 %v1226, %v1227
    %v1229 = vrot.slane %v1228, 2
    %v1230 = vmax.f32 %v1228, %v1229
    %v1231 = vrot.slane %v1230, 1
    %v1232 = vmax.f32 %v1230, %v1231
    %v1233 = vsel %vm959, %v892, -inf
    %v1234 = vsel %vm959, %v897, -inf
    %v1235 = vmax.f32 %v1233, %v1234
    %v1236 = vsel %vm959, %v900, -inf
    %v1237 = vmax.f32 %v1235, %v1236
    %v1238 = vsel %vm959, %v905, -inf
    %v1239 = vmax.f32 %v1237, %v1238
    %v1240 = vsel %vm959, %v908, -inf
    %v1241 = vmax.f32 %v1239, %v1240
    %v1242 = vsel %vm959, %v913, -inf
    %v1243 = vmax.f32 %v1241, %v1242
    %v1244 = vsel %vm959, %v916, -inf
    %v1245 = vmax.f32 %v1243, %v1244
    %v1246 = vsel %vm959, %v921, -inf
    %v1247 = vmax.f32 %v1245, %v1246
    %v1248 = vsel %vm959, %v924, -inf
    %v1249 = vmax.f32 %v1247, %v1248
    %v1250 = vsel %vm959, %v929, -inf
    %v1251 = vmax.f32 %v1249, %v1250
    %v1252 = vsel %vm959, %v932, -inf
    %v1253 = vmax.f32 %v1251, %v1252
    %v1254 = vsel %vm959, %v937, -inf
    %v1255 = vmax.f32 %v1253, %v1254
    %v1256 = vsel %vm959, %v940, -inf
    %v1257 = vmax.f32 %v1255, %v1256
    %v1258 = vsel %vm959, %v945, -inf
    %v1259 = vmax.f32 %v1257, %v1258
    %v1260 = vsel %vm959, %v948, -inf
    %v1261 = vmax.f32 %v1259, %v1260
    %v1262 = vsel %vm959, %v953, -inf
    %v1263 = vmax.f32 %v1261, %v1262
    %v1264 = vsel %vm959, %v956, -inf
    %v1265 = vmax.f32 %v1263, %v1264
    %v1266 = vrot.slane %v1265, 4
    %v1267 = vmax.f32 %v1265, %v1266
    %v1268 = vrot.slane %v1267, 2
    %v1269 = vmax.f32 %v1267, %v1268
    %v1270 = vrot.slane %v1269, 1
    %v1271 = vmax.f32 %v1269, %v1270
    %v1272 = vsub.f32 %v417, %v998
    %v1273 = vsub.f32 %v420, %v998
    %v1274 = vsub.f32 %v425, %v998
    %v1275 = vsub.f32 %v428, %v998
    %v1276 = vsub.f32 %v433, %v998
    %v1277 = vsub.f32 %v436, %v998
    %v1278 = vsub.f32 %v441, %v998
    %v1279 = vsub.f32 %v444, %v998
    %v1280 = vsub.f32 %v449, %v998
    %v1281 = vsub.f32 %v452, %v998
    %v1282 = vsub.f32 %v457, %v998
    %v1283 = vsub.f32 %v460, %v998
    %v1284 = vsub.f32 %v465, %v998
    %v1285 = vsub.f32 %v468, %v998
    %v1286 = vsub.f32 %v473, %v998
    %v1287 = vsub.f32 %v476, %v998
    %v1288 = vsub.f32 %v481, %v998
    %v1289 = vsub.f32 %v484, %v1037
    %v1290 = vsub.f32 %v489, %v1037
    %v1291 = vsub.f32 %v492, %v1037
    %v1292 = vsub.f32 %v497, %v1037
    %v1293 = vsub.f32 %v500, %v1037
    %v1294 = vsub.f32 %v505, %v1037
    %v1295 = vsub.f32 %v508, %v1037
    %v1296 = vsub.f32 %v513, %v1037
    %v1297 = vsub.f32 %v516, %v1037
    %v1298 = vsub.f32 %v521, %v1037
    %v1299 = vsub.f32 %v524, %v1037
    %v1300 = vsub.f32 %v529, %v1037
    %v1301 = vsub.f32 %v532, %v1037
    %v1302 = vsub.f32 %v537, %v1037
    %v1303 = vsub.f32 %v540, %v1037
    %v1304 = vsub.f32 %v545, %v1037
    %v1305 = vsub.f32 %v548, %v1037
    %v1306 = vsub.f32 %v553, %v1076
    %v1307 = vsub.f32 %v556, %v1076
    %v1308 = vsub.f32 %v561, %v1076
    %v1309 = vsub.f32 %v564, %v1076
    %v1310 = vsub.f32 %v569, %v1076
    %v1311 = vsub.f32 %v572, %v1076
    %v1312 = vsub.f32 %v577, %v1076
    %v1313 = vsub.f32 %v580, %v1076
    %v1314 = vsub.f32 %v585, %v1076
    %v1315 = vsub.f32 %v588, %v1076
    %v1316 = vsub.f32 %v593, %v1076
    %v1317 = vsub.f32 %v596, %v1076
    %v1318 = vsub.f32 %v601, %v1076
    %v1319 = vsub.f32 %v604, %v1076
    %v1320 = vsub.f32 %v609, %v1076
    %v1321 = vsub.f32 %v612, %v1076
    %v1322 = vsub.f32 %v617, %v1076
    %v1323 = vsub.f32 %v620, %v1115
    %v1324 = vsub.f32 %v625, %v1115
    %v1325 = vsub.f32 %v628, %v1115
    %v1326 = vsub.f32 %v633, %v1115
    %v1327 = vsub.f32 %v636, %v1115
    %v1328 = vsub.f32 %v641, %v1115
    %v1329 = vsub.f32 %v644, %v1115
    %v1330 = vsub.f32 %v649, %v1115
    %v1331 = vsub.f32 %v652, %v1115
    %v1332 = vsub.f32 %v657, %v1115
    %v1333 = vsub.f32 %v660, %v1115
    %v1334 = vsub.f32 %v665, %v1115
    %v1335 = vsub.f32 %v668, %v1115
    %v1336 = vsub.f32 %v673, %v1115
    %v1337 = vsub.f32 %v676, %v1115
    %v1338 = vsub.f32 %v681, %v1115
    %v1339 = vsub.f32 %v684, %v1115
    %v1340 = vsub.f32 %v689, %v1154
    %v1341 = vsub.f32 %v692, %v1154
    %v1342 = vsub.f32 %v697, %v1154
    %v1343 = vsub.f32 %v700, %v1154
    %v1344 = vsub.f32 %v705, %v1154
    %v1345 = vsub.f32 %v708, %v1154
    %v1346 = vsub.f32 %v713, %v1154
    %v1347 = vsub.f32 %v716, %v1154
    %v1348 = vsub.f32 %v721, %v1154
    %v1349 = vsub.f32 %v724, %v1154
    %v1350 = vsub.f32 %v729, %v1154
    %v1351 = vsub.f32 %v732, %v1154
    %v1352 = vsub.f32 %v737, %v1154
    %v1353 = vsub.f32 %v740, %v1154
    %v1354 = vsub.f32 %v745, %v1154
    %v1355 = vsub.f32 %v748, %v1154
    %v1356 = vsub.f32 %v753, %v1154
    %v1357 = vsub.f32 %v756, %v1193
    %v1358 = vsub.f32 %v761, %v1193
    %v1359 = vsub.f32 %v764, %v1193
    %v1360 = vsub.f32 %v769, %v1193
    %v1361 = vsub.f32 %v772, %v1193
    %v1362 = vsub.f32 %v777, %v1193
    %v1363 = vsub.f32 %v780, %v1193
    %v1364 = vsub.f32 %v785, %v1193
    %v1365 = vsub.f32 %v788, %v1193
    %v1366 = vsub.f32 %v793, %v1193
    %v1367 = vsub.f32 %v796, %v1193
    %v1368 = vsub.f32 %v801, %v1193
    %v1369 = vsub.f32 %v804, %v1193
    %v1370 = vsub.f32 %v809, %v1193
    %v1371 = vsub.f32 %v812, %v1193
    %v1372 = vsub.f32 %v817, %v1193
    %v1373 = vsub.f32 %v820, %v1193
    %v1374 = vsub.f32 %v825, %v1232
    %v1375 = vsub.f32 %v828, %v1232
    %v1376 = vsub.f32 %v833, %v1232
    %v1377 = vsub.f32 %v836, %v1232
    %v1378 = vsub.f32 %v841, %v1232
    %v1379 = vsub.f32 %v844, %v1232
    %v1380 = vsub.f32 %v849, %v1232
    %v1381 = vsub.f32 %v852, %v1232
    %v1382 = vsub.f32 %v857, %v1232
    %v1383 = vsub.f32 %v860, %v1232
    %v1384 = vsub.f32 %v865, %v1232
    %v1385 = vsub.f32 %v868, %v1232
    %v1386 = vsub.f32 %v873, %v1232
    %v1387 = vsub.f32 %v876, %v1232
    %v1388 = vsub.f32 %v881, %v1232
    %v1389 = vsub.f32 %v884, %v1232
    %v1390 = vsub.f32 %v889, %v1232
    %v1391 = vsub.f32 %v892, %v1271
    %v1392 = vsub.f32 %v897, %v1271
    %v1393 = vsub.f32 %v900, %v1271
    %v1394 = vsub.f32 %v905, %v1271
    %v1395 = vsub.f32 %v908, %v1271
    %v1396 = vsub.f32 %v913, %v1271
    %v1397 = vsub.f32 %v916, %v1271
    %v1398 = vsub.f32 %v921, %v1271
    %v1399 = vsub.f32 %v924, %v1271
    %v1400 = vsub.f32 %v929, %v1271
    %v1401 = vsub.f32 %v932, %v1271
    %v1402 = vsub.f32 %v937, %v1271
    %v1403 = vsub.f32 %v940, %v1271
    %v1404 = vsub.f32 %v945, %v1271
    %v1405 = vsub.f32 %v948, %v1271
    %v1406 = vsub.f32 %v953, %v1271
    %v1407 = vsub.f32 %v956, %v1271
    %v1408 = vmul.f32 %v1272, 1.442695
    %v1409 = vpow.pop %v1408
    %v1410 = vmul.f32 %v1273, 1.442695
    %v1411 = vpow.pop %v1410
    %v1412 = vmul.f32 %v1274, 1.442695
    %v1413 = vpow.pop %v1412
    %v1414 = vmul.f32 %v1275, 1.442695
    %v1415 = vpow.pop %v1414
    %v1416 = vmul.f32 %v1276, 1.442695
    %v1417 = vpow.pop %v1416
    %v1418 = vmul.f32 %v1277, 1.442695
    %v1419 = vpow.pop %v1418
    %v1420 = vmul.f32 %v1278, 1.442695
    %v1421 = vpow.pop %v1420
    %v1422 = vmul.f32 %v1279, 1.442695
    %v1423 = vpow.pop %v1422
    %v1424 = vmul.f32 %v1280, 1.442695
    %v1425 = vpow.pop %v1424
    %v1426 = vmul.f32 %v1281, 1.442695
    %v1427 = vpow.pop %v1426
    %v1428 = vmul.f32 %v1282, 1.442695
    %v1429 = vpow.pop %v1428
    %v1430 = vmul.f32 %v1283, 1.442695
    %v1431 = vpow.pop %v1430
    %v1432 = vmul.f32 %v1284, 1.442695
    %v1433 = vpow.pop %v1432
    %v1434 = vmul.f32 %v1285, 1.442695
    %v1435 = vpow.pop %v1434
    %v1436 = vmul.f32 %v1286, 1.442695
    %v1437 = vpow.pop %v1436
    %v1438 = vmul.f32 %v1287, 1.442695
    %v1439 = vpow.pop %v1438
    %v1440 = vmul.f32 %v1288, 1.442695
    %v1441 = vpow.pop %v1440
    %v1442 = vmul.f32 %v1289, 1.442695
    %v1443 = vpow.pop %v1442
    %v1444 = vmul.f32 %v1290, 1.442695
    %v1445 = vpow.pop %v1444
    %v1446 = vmul.f32 %v1291, 1.442695
    %v1447 = vpow.pop %v1446
    %v1448 = vmul.f32 %v1292, 1.442695
    %v1449 = vpow.pop %v1448
    %v1450 = vmul.f32 %v1293, 1.442695
    %v1451 = vpow.pop %v1450
    %v1452 = vmul.f32 %v1294, 1.442695
    %v1453 = vpow.pop %v1452
    %v1454 = vmul.f32 %v1295, 1.442695
    %v1455 = vpow.pop %v1454
    %v1456 = vmul.f32 %v1296, 1.442695
    %v1457 = vpow.pop %v1456
    %v1458 = vmul.f32 %v1297, 1.442695
    %v1459 = vpow.pop %v1458
    %v1460 = vmul.f32 %v1298, 1.442695
    %v1461 = vpow.pop %v1460
    %v1462 = vmul.f32 %v1299, 1.442695
    %v1463 = vpow.pop %v1462
    %v1464 = vmul.f32 %v1300, 1.442695
    %v1465 = vpow.pop %v1464
    %v1466 = vmul.f32 %v1301, 1.442695
    %v1467 = vpow.pop %v1466
    %v1468 = vmul.f32 %v1302, 1.442695
    %v1469 = vpow.pop %v1468
    %v1470 = vmul.f32 %v1303, 1.442695
    %v1471 = vpow.pop %v1470
    %v1472 = vmul.f32 %v1304, 1.442695
    %v1473 = vpow.pop %v1472
    %v1474 = vmul.f32 %v1305, 1.442695
    %v1475 = vpow.pop %v1474
    %v1476 = vmul.f32 %v1306, 1.442695
    %v1477 = vpow.pop %v1476
    %v1478 = vmul.f32 %v1307, 1.442695
    %v1479 = vpow.pop %v1478
    %v1480 = vmul.f32 %v1308, 1.442695
    %v1481 = vpow.pop %v1480
    %v1482 = vmul.f32 %v1309, 1.442695
    %v1483 = vpow.pop %v1482
    %v1484 = vmul.f32 %v1310, 1.442695
    %v1485 = vpow.pop %v1484
    %v1486 = vmul.f32 %v1311, 1.442695
    %v1487 = vpow.pop %v1486
    %v1488 = vmul.f32 %v1312, 1.442695
    %v1489 = vpow.pop %v1488
    %v1490 = vmul.f32 %v1313, 1.442695
    %v1491 = vpow.pop %v1490
    %v1492 = vmul.f32 %v1314, 1.442695
    %v1493 = vpow.pop %v1492
    %v1494 = vmul.f32 %v1315, 1.442695
    %v1495 = vpow.pop %v1494
    %v1496 = vmul.f32 %v1316, 1.442695
    %v1497 = vpow.pop %v1496
    %v1498 = vmul.f32 %v1317, 1.442695
    %v1499 = vpow.pop %v1498
    %v1500 = vmul.f32 %v1318, 1.442695
    %v1501 = vpow.pop %v1500
    %v1502 = vmul.f32 %v1319, 1.442695
    %v1503 = vpow.pop %v1502
    %v1504 = vmul.f32 %v1320, 1.442695
    %v1505 = vpow.pop %v1504
    %v1506 = vmul.f32 %v1321, 1.442695
    %v1507 = vpow.pop %v1506
    %v1508 = vmul.f32 %v1322, 1.442695
    %v1509 = vpow.pop %v1508
    %v1510 = vmul.f32 %v1323, 1.442695
    %v1511 = vpow.pop %v1510
    %v1512 = vmul.f32 %v1324, 1.442695
    %v1513 = vpow.pop %v1512
    %v1514 = vmul.f32 %v1325, 1.442695
    %v1515 = vpow.pop %v1514
    %v1516 = vmul.f32 %v1326, 1.442695
    %v1517 = vpow.pop %v1516
    %v1518 = vmul.f32 %v1327, 1.442695
    %v1519 = vpow.pop %v1518
    %v1520 = vmul.f32 %v1328, 1.442695
    %v1521 = vpow.pop %v1520
    %v1522 = vmul.f32 %v1329, 1.442695
    %v1523 = vpow.pop %v1522
    %v1524 = vmul.f32 %v1330, 1.442695
    %v1525 = vpow.pop %v1524
    %v1526 = vmul.f32 %v1331, 1.442695
    %v1527 = vpow.pop %v1526
    %v1528 = vmul.f32 %v1332, 1.442695
    %v1529 = vpow.pop %v1528
    %v1530 = vmul.f32 %v1333, 1.442695
    %v1531 = vpow.pop %v1530
    %v1532 = vmul.f32 %v1334, 1.442695
    %v1533 = vpow.pop %v1532
    %v1534 = vmul.f32 %v1335, 1.442695
    %v1535 = vpow.pop %v1534
    %v1536 = vmul.f32 %v1336, 1.442695
    %v1537 = vpow.pop %v1536
    %v1538 = vmul.f32 %v1337, 1.442695
    %v1539 = vpow.pop %v1538
    %v1540 = vmul.f32 %v1338, 1.442695
    %v1541 = vpow.pop %v1540
    %v1542 = vmul.f32 %v1339, 1.442695
    %v1543 = vpow.pop %v1542
    %v1544 = vmul.f32 %v1340, 1.442695
    %v1545 = vpow.pop %v1544
    %v1546 = vmul.f32 %v1341, 1.442695
    %v1547 = vpow.pop %v1546
    %v1548 = vmul.f32 %v1342, 1.442695
    %v1549 = vpow.pop %v1548
    %v1550 = vmul.f32 %v1343, 1.442695
    %v1551 = vpow.pop %v1550
    %v1552 = vmul.f32 %v1344, 1.442695
    %v1553 = vpow.pop %v1552
    %v1554 = vmul.f32 %v1345, 1.442695
    %v1555 = vpow.pop %v1554
    %v1556 = vmul.f32 %v1346, 1.442695
    %v1557 = vpow.pop %v1556
    %v1558 = vmul.f32 %v1347, 1.442695
    %v1559 = vpow.pop %v1558
    %v1560 = vmul.f32 %v1348, 1.442695
    %v1561 = vpow.pop %v1560
    %v1562 = vmul.f32 %v1349, 1.442695
    %v1563 = vpow.pop %v1562
    %v1564 = vmul.f32 %v1350, 1.442695
    %v1565 = vpow.pop %v1564
    %v1566 = vmul.f32 %v1351, 1.442695
    %v1567 = vpow.pop %v1566
    %v1568 = vmul.f32 %v1352, 1.442695
    %v1569 = vpow.pop %v1568
    %v1570 = vmul.f32 %v1353, 1.442695
    %v1571 = vpow.pop %v1570
    %v1572 = vmul.f32 %v1354, 1.442695
    %v1573 = vpow.pop %v1572
    %v1574 = vmul.f32 %v1355, 1.442695
    %v1575 = vpow.pop %v1574
    %v1576 = vmul.f32 %v1356, 1.442695
    %v1577 = vpow.pop %v1576
    %v1578 = vmul.f32 %v1357, 1.442695
    %v1579 = vpow.pop %v1578
    %v1580 = vmul.f32 %v1358, 1.442695
    %v1581 = vpow.pop %v1580
    %v1582 = vmul.f32 %v1359, 1.442695
    %v1583 = vpow.pop %v1582
    %v1584 = vmul.f32 %v1360, 1.442695
    %v1585 = vpow.pop %v1584
    %v1586 = vmul.f32 %v1361, 1.442695
    %v1587 = vpow.pop %v1586
    %v1588 = vmul.f32 %v1362, 1.442695
    %v1589 = vpow.pop %v1588
    %v1590 = vmul.f32 %v1363, 1.442695
    %v1591 = vpow.pop %v1590
    %v1592 = vmul.f32 %v1364, 1.442695
    %v1593 = vpow.pop %v1592
    %v1594 = vmul.f32 %v1365, 1.442695
    %v1595 = vpow.pop %v1594
    %v1596 = vmul.f32 %v1366, 1.442695
    %v1597 = vpow.pop %v1596
    %v1598 = vmul.f32 %v1367, 1.442695
    %v1599 = vpow.pop %v1598
    %v1600 = vmul.f32 %v1368, 1.442695
    %v1601 = vpow.pop %v1600
    %v1602 = vmul.f32 %v1369, 1.442695
    %v1603 = vpow.pop %v1602
    %v1604 = vmul.f32 %v1370, 1.442695
    %v1605 = vpow.pop %v1604
    %v1606 = vmul.f32 %v1371, 1.442695
    %v1607 = vpow.pop %v1606
    %v1608 = vmul.f32 %v1372, 1.442695
    %v1609 = vpow.pop %v1608
    %v1610 = vmul.f32 %v1373, 1.442695
    %v1611 = vpow.pop %v1610
    %v1612 = vmul.f32 %v1374, 1.442695
    %v1613 = vpow.pop %v1612
    %v1614 = vmul.f32 %v1375, 1.442695
    %v1615 = vpow.pop %v1614
    %v1616 = vmul.f32 %v1376, 1.442695
    %v1617 = vpow.pop %v1616
    %v1618 = vmul.f32 %v1377, 1.442695
    %v1619 = vpow.pop %v1618
    %v1620 = vmul.f32 %v1378, 1.442695
    %v1621 = vpow.pop %v1620
    %v1622 = vmul.f32 %v1379, 1.442695
    %v1623 = vpow.pop %v1622
    %v1624 = vmul.f32 %v1380, 1.442695
    %v1625 = vpow.pop %v1624
    %v1626 = vmul.f32 %v1381, 1.442695
    %v1627 = vpow.pop %v1626
    %v1628 = vmul.f32 %v1382, 1.442695
    %v1629 = vpow.pop %v1628
    %v1630 = vmul.f32 %v1383, 1.442695
    %v1631 = vpow.pop %v1630
    %v1632 = vmul.f32 %v1384, 1.442695
    %v1633 = vpow.pop %v1632
    %v1634 = vmul.f32 %v1385, 1.442695
    %v1635 = vpow.pop %v1634
    %v1636 = vmul.f32 %v1386, 1.442695
    %v1637 = vpow.pop %v1636
    %v1638 = vmul.f32 %v1387, 1.442695
    %v1639 = vpow.pop %v1638
    %v1640 = vmul.f32 %v1388, 1.442695
    %v1641 = vpow.pop %v1640
    %v1642 = vmul.f32 %v1389, 1.442695
    %v1643 = vpow.pop %v1642
    %v1644 = vmul.f32 %v1390, 1.442695
    %v1645 = vpow.pop %v1644
    %v1646 = vmul.f32 %v1391, 1.442695
    %v1647 = vpow.pop %v1646
    %v1648 = vmul.f32 %v1392, 1.442695
    %v1649 = vpow.pop %v1648
    %v1650 = vmul.f32 %v1393, 1.442695
    %v1651 = vpow.pop %v1650
    %v1652 = vmul.f32 %v1394, 1.442695
    %v1653 = vpow.pop %v1652
    %v1654 = vmul.f32 %v1395, 1.442695
    %v1655 = vpow.pop %v1654
    %v1656 = vmul.f32 %v1396, 1.442695
    %v1657 = vpow.pop %v1656
    %v1658 = vmul.f32 %v1397, 1.442695
    %v1659 = vpow.pop %v1658
    %v1660 = vmul.f32 %v1398, 1.442695
    %v1661 = vpow.pop %v1660
    %v1662 = vmul.f32 %v1399, 1.442695
    %v1663 = vpow.pop %v1662
    %v1664 = vmul.f32 %v1400, 1.442695
    %v1665 = vpow.pop %v1664
    %v1666 = vmul.f32 %v1401, 1.442695
    %v1667 = vpow.pop %v1666
    %v1668 = vmul.f32 %v1402, 1.442695
    %v1669 = vpow.pop %v1668
    %v1670 = vmul.f32 %v1403, 1.442695
    %v1671 = vpow.pop %v1670
    %v1672 = vmul.f32 %v1404, 1.442695
    %v1673 = vpow.pop %v1672
    %v1674 = vmul.f32 %v1405, 1.442695
    %v1675 = vpow.pop %v1674
    %v1676 = vmul.f32 %v1406, 1.442695
    %v1677 = vpow.pop %v1676
    %v1678 = vmul.f32 %v1407, 1.442695
    %v1679 = vpow.pop %v1678
    %v1680 = vlaneseq
    %v1681 = vshrl.u32 %v1680, 7
    %v1682 = vadd.s32 %v1681, 8
    %v1683 = vadd.s32 %v1681, 16
    %v1684 = vadd.s32 %v1681, 24
    %v1685 = vadd.s32 %v1681, 32
    %v1686 = vadd.s32 %v1681, 40
    %v1687 = vadd.s32 %v1681, 48
    %v1688 = vadd.s32 %v1681, 56
    %v1689 = vadd.s32 %v1681, 64
    %v1690 = vadd.s32 %v1681, 72
    %v1691 = vadd.s32 %v1681, 80
    %v1692 = vadd.s32 %v1681, 88
    %v1693 = vadd.s32 %v1681, 96
    %v1694 = vadd.s32 %v1681, 104
    %v1695 = vadd.s32 %v1681, 112
    %v1696 = vadd.s32 %v1681, 120
    %v1697 = vadd.s32 %v1681, 128
    %vm1698 = vcmp.lt.s32.totalorder %v1681, 129
    %vm1699 = vcmp.lt.s32.totalorder %v1682, 129
    %vm1700 = vcmp.lt.s32.totalorder %v1683, 129
    %vm1701 = vcmp.lt.s32.totalorder %v1684, 129
    %vm1702 = vcmp.lt.s32.totalorder %v1685, 129
    %vm1703 = vcmp.lt.s32.totalorder %v1686, 129
    %vm1704 = vcmp.lt.s32.totalorder %v1687, 129
    %vm1705 = vcmp.lt.s32.totalorder %v1688, 129
    %vm1706 = vcmp.lt.s32.totalorder %v1689, 129
    %vm1707 = vcmp.lt.s32.totalorder %v1690, 129
    %vm1708 = vcmp.lt.s32.totalorder %v1691, 129
    %vm1709 = vcmp.lt.s32.totalorder %v1692, 129
    %vm1710 = vcmp.lt.s32.totalorder %v1693, 129
    %vm1711 = vcmp.lt.s32.totalorder %v1694, 129
    %vm1712 = vcmp.lt.s32.totalorder %v1695, 129
    %vm1713 = vcmp.lt.s32.totalorder %v1696, 129
    %vm1714 = vcmp.lt.s32.totalorder %v1697, 129
    %v1715 = vsel %vm1698, %v1409, 0.0
    %v1716 = vsel %vm1699, %v1411, 0.0
    %v1717 = vsel %vm1700, %v1413, 0.0
    %v1718 = vsel %vm1701, %v1415, 0.0
    %v1719 = vsel %vm1702, %v1417, 0.0
    %v1720 = vsel %vm1703, %v1419, 0.0
    %v1721 = vsel %vm1704, %v1421, 0.0
    %v1722 = vsel %vm1705, %v1423, 0.0
    %v1723 = vsel %vm1706, %v1425, 0.0
    %v1724 = vsel %vm1707, %v1427, 0.0
    %v1725 = vsel %vm1708, %v1429, 0.0
    %v1726 = vsel %vm1709, %v1431, 0.0
    %v1727 = vsel %vm1710, %v1433, 0.0
    %v1728 = vsel %vm1711, %v1435, 0.0
    %v1729 = vsel %vm1712, %v1437, 0.0
    %v1730 = vsel %vm1713, %v1439, 0.0
    %v1731 = vsel %vm1714, %v1441, 0.0
    %v1732 = vsel %vm1698, %v1443, 0.0
    %v1733 = vsel %vm1699, %v1445, 0.0
    %v1734 = vsel %vm1700, %v1447, 0.0
    %v1735 = vsel %vm1701, %v1449, 0.0
    %v1736 = vsel %vm1702, %v1451, 0.0
    %v1737 = vsel %vm1703, %v1453, 0.0
    %v1738 = vsel %vm1704, %v1455, 0.0
    %v1739 = vsel %vm1705, %v1457, 0.0
    %v1740 = vsel %vm1706, %v1459, 0.0
    %v1741 = vsel %vm1707, %v1461, 0.0
    %v1742 = vsel %vm1708, %v1463, 0.0
    %v1743 = vsel %vm1709, %v1465, 0.0
    %v1744 = vsel %vm1710, %v1467, 0.0
    %v1745 = vsel %vm1711, %v1469, 0.0
    %v1746 = vsel %vm1712, %v1471, 0.0
    %v1747 = vsel %vm1713, %v1473, 0.0
    %v1748 = vsel %vm1714, %v1475, 0.0
    %v1749 = vsel %vm1698, %v1477, 0.0
    %v1750 = vsel %vm1699, %v1479, 0.0
    %v1751 = vsel %vm1700, %v1481, 0.0
    %v1752 = vsel %vm1701, %v1483, 0.0
    %v1753 = vsel %vm1702, %v1485, 0.0
    %v1754 = vsel %vm1703, %v1487, 0.0
    %v1755 = vsel %vm1704, %v1489, 0.0
    %v1756 = vsel %vm1705, %v1491, 0.0
    %v1757 = vsel %vm1706, %v1493, 0.0
    %v1758 = vsel %vm1707, %v1495, 0.0
    %v1759 = vsel %vm1708, %v1497, 0.0
    %v1760 = vsel %vm1709, %v1499, 0.0
    %v1761 = vsel %vm1710, %v1501, 0.0
    %v1762 = vsel %vm1711, %v1503, 0.0
    %v1763 = vsel %vm1712, %v1505, 0.0
    %v1764 = vsel %vm1713, %v1507, 0.0
    %v1765 = vsel %vm1714, %v1509, 0.0
    %v1766 = vsel %vm1698, %v1511, 0.0
    %v1767 = vsel %vm1699, %v1513, 0.0
    %v1768 = vsel %vm1700, %v1515, 0.0
    %v1769 = vsel %vm1701, %v1517, 0.0
    %v1770 = vsel %vm1702, %v1519, 0.0
    %v1771 = vsel %vm1703, %v1521, 0.0
    %v1772 = vsel %vm1704, %v1523, 0.0
    %v1773 = vsel %vm1705, %v1525, 0.0
    %v1774 = vsel %vm1706, %v1527, 0.0
    %v1775 = vsel %vm1707, %v1529, 0.0
    %v1776 = vsel %vm1708, %v1531, 0.0
    %v1777 = vsel %vm1709, %v1533, 0.0
    %v1778 = vsel %vm1710, %v1535, 0.0
    %v1779 = vsel %vm1711, %v1537, 0.0
    %v1780 = vsel %vm1712, %v1539, 0.0
    %v1781 = vsel %vm1713, %v1541, 0.0
    %v1782 = vsel %vm1714, %v1543, 0.0
    %v1783 = vsel %vm1698, %v1545, 0.0
    %v1784 = vsel %vm1699, %v1547, 0.0
    %v1785 = vsel %vm1700, %v1549, 0.0
    %v1786 = vsel %vm1701, %v1551, 0.0
    %v1787 = vsel %vm1702, %v1553, 0.0
    %v1788 = vsel %vm1703, %v1555, 0.0
    %v1789 = vsel %vm1704, %v1557, 0.0
    %v1790 = vsel %vm1705, %v1559, 0.0
    %v1791 = vsel %vm1706, %v1561, 0.0
    %v1792 = vsel %vm1707, %v1563, 0.0
    %v1793 = vsel %vm1708, %v1565, 0.0
    %v1794 = vsel %vm1709, %v1567, 0.0
    %v1795 = vsel %vm1710, %v1569, 0.0
    %v1796 = vsel %vm1711, %v1571, 0.0
    %v1797 = vsel %vm1712, %v1573, 0.0
    %v1798 = vsel %vm1713, %v1575, 0.0
    %v1799 = vsel %vm1714, %v1577, 0.0
    %v1800 = vsel %vm1698, %v1579, 0.0
    %v1801 = vsel %vm1699, %v1581, 0.0
    %v1802 = vsel %vm1700, %v1583, 0.0
    %v1803 = vsel %vm1701, %v1585, 0.0
    %v1804 = vsel %vm1702, %v1587, 0.0
    %v1805 = vsel %vm1703, %v1589, 0.0
    %v1806 = vsel %vm1704, %v1591, 0.0
    %v1807 = vsel %vm1705, %v1593, 0.0
    %v1808 = vsel %vm1706, %v1595, 0.0
    %v1809 = vsel %vm1707, %v1597, 0.0
    %v1810 = vsel %vm1708, %v1599, 0.0
    %v1811 = vsel %vm1709, %v1601, 0.0
    %v1812 = vsel %vm1710, %v1603, 0.0
    %v1813 = vsel %vm1711, %v1605, 0.0
    %v1814 = vsel %vm1712, %v1607, 0.0
    %v1815 = vsel %vm1713, %v1609, 0.0
    %v1816 = vsel %vm1714, %v1611, 0.0
    %v1817 = vsel %vm1698, %v1613, 0.0
    %v1818 = vsel %vm1699, %v1615, 0.0
    %v1819 = vsel %vm1700, %v1617, 0.0
    %v1820 = vsel %vm1701, %v1619, 0.0
    %v1821 = vsel %vm1702, %v1621, 0.0
    %v1822 = vsel %vm1703, %v1623, 0.0
    %v1823 = vsel %vm1704, %v1625, 0.0
    %v1824 = vsel %vm1705, %v1627, 0.0
    %v1825 = vsel %vm1706, %v1629, 0.0
    %v1826 = vsel %vm1707, %v1631, 0.0
    %v1827 = vsel %vm1708, %v1633, 0.0
    %v1828 = vsel %vm1709, %v1635, 0.0
    %v1829 = vsel %vm1710, %v1637, 0.0
    %v1830 = vsel %vm1711, %v1639, 0.0
    %v1831 = vsel %vm1712, %v1641, 0.0
    %v1832 = vsel %vm1713, %v1643, 0.0
    %v1833 = vsel %vm1714, %v1645, 0.0
    %v1834 = vsel %vm1698, %v1647, 0.0
    %v1835 = vsel %vm1699, %v1649, 0.0
    %v1836 = vsel %vm1700, %v1651, 0.0
    %v1837 = vsel %vm1701, %v1653, 0.0
    %v1838 = vsel %vm1702, %v1655, 0.0
    %v1839 = vsel %vm1703, %v1657, 0.0
    %v1840 = vsel %vm1704, %v1659, 0.0
    %v1841 = vsel %vm1705, %v1661, 0.0
    %v1842 = vsel %vm1706, %v1663, 0.0
    %v1843 = vsel %vm1707, %v1665, 0.0
    %v1844 = vsel %vm1708, %v1667, 0.0
    %v1845 = vsel %vm1709, %v1669, 0.0
    %v1846 = vsel %vm1710, %v1671, 0.0
    %v1847 = vsel %vm1711, %v1673, 0.0
    %v1848 = vsel %vm1712, %v1675, 0.0
    %v1849 = vsel %vm1713, %v1677, 0.0
    %v1850 = vsel %vm1714, %v1679, 0.0
    %v1851 = vsel %vm959, %v1715, 0.0
    %v1852 = vsel %vm959, %v1716, 0.0
    %v1853 = vadd.f32 %v1851, %v1852
    %v1854 = vsel %vm959, %v1717, 0.0
    %v1855 = vadd.f32 %v1853, %v1854
    %v1856 = vsel %vm959, %v1718, 0.0
    %v1857 = vadd.f32 %v1855, %v1856
    %v1858 = vsel %vm959, %v1719, 0.0
    %v1859 = vadd.f32 %v1857, %v1858
    %v1860 = vsel %vm959, %v1720, 0.0
    %v1861 = vadd.f32 %v1859, %v1860
    %v1862 = vsel %vm959, %v1721, 0.0
    %v1863 = vadd.f32 %v1861, %v1862
    %v1864 = vsel %vm959, %v1722, 0.0
    %v1865 = vadd.f32 %v1863, %v1864
    %v1866 = vsel %vm959, %v1723, 0.0
    %v1867 = vadd.f32 %v1865, %v1866
    %v1868 = vsel %vm959, %v1724, 0.0
    %v1869 = vadd.f32 %v1867, %v1868
    %v1870 = vsel %vm959, %v1725, 0.0
    %v1871 = vadd.f32 %v1869, %v1870
    %v1872 = vsel %vm959, %v1726, 0.0
    %v1873 = vadd.f32 %v1871, %v1872
    %v1874 = vsel %vm959, %v1727, 0.0
    %v1875 = vadd.f32 %v1873, %v1874
    %v1876 = vsel %vm959, %v1728, 0.0
    %v1877 = vadd.f32 %v1875, %v1876
    %v1878 = vsel %vm959, %v1729, 0.0
    %v1879 = vadd.f32 %v1877, %v1878
    %v1880 = vsel %vm959, %v1730, 0.0
    %v1881 = vadd.f32 %v1879, %v1880
    %v1882 = vsel %vm959, %v1731, 0.0
    %v1883 = vadd.f32 %v1881, %v1882
    %v1884 = vrot.slane %v1883, 4
    %v1885 = vadd.f32 %v1883, %v1884
    %v1886 = vrot.slane %v1885, 2
    %v1887 = vadd.f32 %v1885, %v1886
    %v1888 = vrot.slane %v1887, 1
    %v1889 = vadd.f32 %v1887, %v1888
    %v1890 = vsel %vm959, %v1732, 0.0
    %v1891 = vsel %vm959, %v1733, 0.0
    %v1892 = vadd.f32 %v1890, %v1891
    %v1893 = vsel %vm959, %v1734, 0.0
    %v1894 = vadd.f32 %v1892, %v1893
    %v1895 = vsel %vm959, %v1735, 0.0
    %v1896 = vadd.f32 %v1894, %v1895
    %v1897 = vsel %vm959, %v1736, 0.0
    %v1898 = vadd.f32 %v1896, %v1897
    %v1899 = vsel %vm959, %v1737, 0.0
    %v1900 = vadd.f32 %v1898, %v1899
    %v1901 = vsel %vm959, %v1738, 0.0
    %v1902 = vadd.f32 %v1900, %v1901
    %v1903 = vsel %vm959, %v1739, 0.0
    %v1904 = vadd.f32 %v1902, %v1903
    %v1905 = vsel %vm959, %v1740, 0.0
    %v1906 = vadd.f32 %v1904, %v1905
    %v1907 = vsel %vm959, %v1741, 0.0
    %v1908 = vadd.f32 %v1906, %v1907
    %v1909 = vsel %vm959, %v1742, 0.0
    %v1910 = vadd.f32 %v1908, %v1909
    %v1911 = vsel %vm959, %v1743, 0.0
    %v1912 = vadd.f32 %v1910, %v1911
    %v1913 = vsel %vm959, %v1744, 0.0
    %v1914 = vadd.f32 %v1912, %v1913
    %v1915 = vsel %vm959, %v1745, 0.0
    %v1916 = vadd.f32 %v1914, %v1915
    %v1917 = vsel %vm959, %v1746, 0.0
    %v1918 = vadd.f32 %v1916, %v1917
    %v1919 = vsel %vm959, %v1747, 0.0
    %v1920 = vadd.f32 %v1918, %v1919
    %v1921 = vsel %vm959, %v1748, 0.0
    %v1922 = vadd.f32 %v1920, %v1921
    %v1923 = vrot.slane %v1922, 4
    %v1924 = vadd.f32 %v1922, %v1923
    %v1925 = vrot.slane %v1924, 2
    %v1926 = vadd.f32 %v1924, %v1925
    %v1927 = vrot.slane %v1926, 1
    %v1928 = vadd.f32 %v1926, %v1927
    %v1929 = vsel %vm959, %v1749, 0.0
    %v1930 = vsel %vm959, %v1750, 0.0
    %v1931 = vadd.f32 %v1929, %v1930
    %v1932 = vsel %vm959, %v1751, 0.0
    %v1933 = vadd.f32 %v1931, %v1932
    %v1934 = vsel %vm959, %v1752, 0.0
    %v1935 = vadd.f32 %v1933, %v1934
    %v1936 = vsel %vm959, %v1753, 0.0
    %v1937 = vadd.f32 %v1935, %v1936
    %v1938 = vsel %vm959, %v1754, 0.0
    %v1939 = vadd.f32 %v1937, %v1938
    %v1940 = vsel %vm959, %v1755, 0.0
    %v1941 = vadd.f32 %v1939, %v1940
    %v1942 = vsel %vm959, %v1756, 0.0
    %v1943 = vadd.f32 %v1941, %v1942
    %v1944 = vsel %vm959, %v1757, 0.0
    %v1945 = vadd.f32 %v1943, %v1944
    %v1946 = vsel %vm959, %v1758, 0.0
    %v1947 = vadd.f32 %v1945, %v1946
    %v1948 = vsel %vm959, %v1759, 0.0
    %v1949 = vadd.f32 %v1947, %v1948
    %v1950 = vsel %vm959, %v1760, 0.0
    %v1951 = vadd.f32 %v1949, %v1950
    %v1952 = vsel %vm959, %v1761, 0.0
    %v1953 = vadd.f32 %v1951, %v1952
    %v1954 = vsel %vm959, %v1762, 0.0
    %v1955 = vadd.f32 %v1953, %v1954
    %v1956 = vsel %vm959, %v1763, 0.0
    %v1957 = vadd.f32 %v1955, %v1956
    %v1958 = vsel %vm959, %v1764, 0.0
    %v1959 = vadd.f32 %v1957, %v1958
    %v1960 = vsel %vm959, %v1765, 0.0
    %v1961 = vadd.f32 %v1959, %v1960
    %v1962 = vrot.slane %v1961, 4
    %v1963 = vadd.f32 %v1961, %v1962
    %v1964 = vrot.slane %v1963, 2
    %v1965 = vadd.f32 %v1963, %v1964
    %v1966 = vrot.slane %v1965, 1
    %v1967 = vadd.f32 %v1965, %v1966
    %v1968 = vsel %vm959, %v1766, 0.0
    %v1969 = vsel %vm959, %v1767, 0.0
    %v1970 = vadd.f32 %v1968, %v1969
    %v1971 = vsel %vm959, %v1768, 0.0
    %v1972 = vadd.f32 %v1970, %v1971
    %v1973 = vsel %vm959, %v1769, 0.0
    %v1974 = vadd.f32 %v1972, %v1973
    %v1975 = vsel %vm959, %v1770, 0.0
    %v1976 = vadd.f32 %v1974, %v1975
    %v1977 = vsel %vm959, %v1771, 0.0
    %v1978 = vadd.f32 %v1976, %v1977
    %v1979 = vsel %vm959, %v1772, 0.0
    %v1980 = vadd.f32 %v1978, %v1979
    %v1981 = vsel %vm959, %v1773, 0.0
    %v1982 = vadd.f32 %v1980, %v1981
    %v1983 = vsel %vm959, %v1774, 0.0
    %v1984 = vadd.f32 %v1982, %v1983
    %v1985 = vsel %vm959, %v1775, 0.0
    %v1986 = vadd.f32 %v1984, %v1985
    %v1987 = vsel %vm959, %v1776, 0.0
    %v1988 = vadd.f32 %v1986, %v1987
    %v1989 = vsel %vm959, %v1777, 0.0
    %v1990 = vadd.f32 %v1988, %v1989
    %v1991 = vsel %vm959, %v1778, 0.0
    %v1992 = vadd.f32 %v1990, %v1991
    %v1993 = vsel %vm959, %v1779, 0.0
    %v1994 = vadd.f32 %v1992, %v1993
    %v1995 = vsel %vm959, %v1780, 0.0
    %v1996 = vadd.f32 %v1994, %v1995
    %v1997 = vsel %vm959, %v1781, 0.0
    %v1998 = vadd.f32 %v1996, %v1997
    %v1999 = vsel %vm959, %v1782, 0.0
    %v2000 = vadd.f32 %v1998, %v1999
    %v2001 = vrot.slane %v2000, 4
    %v2002 = vadd.f32 %v2000, %v2001
    %v2003 = vrot.slane %v2002, 2
    %v2004 = vadd.f32 %v2002, %v2003
    %v2005 = vrot.slane %v2004, 1
    %v2006 = vadd.f32 %v2004, %v2005
    %v2007 = vsel %vm959, %v1783, 0.0
    %v2008 = vsel %vm959, %v1784, 0.0
    %v2009 = vadd.f32 %v2007, %v2008
    %v2010 = vsel %vm959, %v1785, 0.0
    %v2011 = vadd.f32 %v2009, %v2010
    %v2012 = vsel %vm959, %v1786, 0.0
    %v2013 = vadd.f32 %v2011, %v2012
    %v2014 = vsel %vm959, %v1787, 0.0
    %v2015 = vadd.f32 %v2013, %v2014
    %v2016 = vsel %vm959, %v1788, 0.0
    %v2017 = vadd.f32 %v2015, %v2016
    %v2018 = vsel %vm959, %v1789, 0.0
    %v2019 = vadd.f32 %v2017, %v2018
    %v2020 = vsel %vm959, %v1790, 0.0
    %v2021 = vadd.f32 %v2019, %v2020
    %v2022 = vsel %vm959, %v1791, 0.0
    %v2023 = vadd.f32 %v2021, %v2022
    %v2024 = vsel %vm959, %v1792, 0.0
    %v2025 = vadd.f32 %v2023, %v2024
    %v2026 = vsel %vm959, %v1793, 0.0
    %v2027 = vadd.f32 %v2025, %v2026
    %v2028 = vsel %vm959, %v1794, 0.0
    %v2029 = vadd.f32 %v2027, %v2028
    %v2030 = vsel %vm959, %v1795, 0.0
    %v2031 = vadd.f32 %v2029, %v2030
    %v2032 = vsel %vm959, %v1796, 0.0
    %v2033 = vadd.f32 %v2031, %v2032
    %v2034 = vsel %vm959, %v1797, 0.0
    %v2035 = vadd.f32 %v2033, %v2034
    %v2036 = vsel %vm959, %v1798, 0.0
    %v2037 = vadd.f32 %v2035, %v2036
    %v2038 = vsel %vm959, %v1799, 0.0
    %v2039 = vadd.f32 %v2037, %v2038
    %v2040 = vrot.slane %v2039, 4
    %v2041 = vadd.f32 %v2039, %v2040
    %v2042 = vrot.slane %v2041, 2
    %v2043 = vadd.f32 %v2041, %v2042
    %v2044 = vrot.slane %v2043, 1
    %v2045 = vadd.f32 %v2043, %v2044
    %v2046 = vsel %vm959, %v1800, 0.0
    %v2047 = vsel %vm959, %v1801, 0.0
    %v2048 = vadd.f32 %v2046, %v2047
    %v2049 = vsel %vm959, %v1802, 0.0
    %v2050 = vadd.f32 %v2048, %v2049
    %v2051 = vsel %vm959, %v1803, 0.0
    %v2052 = vadd.f32 %v2050, %v2051
    %v2053 = vsel %vm959, %v1804, 0.0
    %v2054 = vadd.f32 %v2052, %v2053
    %v2055 = vsel %vm959, %v1805, 0.0
    %v2056 = vadd.f32 %v2054, %v2055
    %v2057 = vsel %vm959, %v1806, 0.0
    %v2058 = vadd.f32 %v2056, %v2057
    %v2059 = vsel %vm959, %v1807, 0.0
    %v2060 = vadd.f32 %v2058, %v2059
    %v2061 = vsel %vm959, %v1808, 0.0
    %v2062 = vadd.f32 %v2060, %v2061
    %v2063 = vsel %vm959, %v1809, 0.0
    %v2064 = vadd.f32 %v2062, %v2063
    %v2065 = vsel %vm959, %v1810, 0.0
    %v2066 = vadd.f32 %v2064, %v2065
    %v2067 = vsel %vm959, %v1811, 0.0
    %v2068 = vadd.f32 %v2066, %v2067
    %v2069 = vsel %vm959, %v1812, 0.0
    %v2070 = vadd.f32 %v2068, %v2069
    %v2071 = vsel %vm959, %v1813, 0.0
    %v2072 = vadd.f32 %v2070, %v2071
    %v2073 = vsel %vm959, %v1814, 0.0
    %v2074 = vadd.f32 %v2072, %v2073
    %v2075 = vsel %vm959, %v1815, 0.0
    %v2076 = vadd.f32 %v2074, %v2075
    %v2077 = vsel %vm959, %v1816, 0.0
    %v2078 = vadd.f32 %v2076, %v2077
    %v2079 = vrot.slane %v2078, 4
    %v2080 = vadd.f32 %v2078, %v2079
    %v2081 = vrot.slane %v2080, 2
    %v2082 = vadd.f32 %v2080, %v2081
    %v2083 = vrot.slane %v2082, 1
    %v2084 = vadd.f32 %v2082, %v2083
    %v2085 = vsel %vm959, %v1817, 0.0
    %v2086 = vsel %vm959, %v1818, 0.0
    %v2087 = vadd.f32 %v2085, %v2086
    %v2088 = vsel %vm959, %v1819, 0.0
    %v2089 = vadd.f32 %v2087, %v2088
    %v2090 = vsel %vm959, %v1820, 0.0
    %v2091 = vadd.f32 %v2089, %v2090
    %v2092 = vsel %vm959, %v1821, 0.0
    %v2093 = vadd.f32 %v2091, %v2092
    %v2094 = vsel %vm959, %v1822, 0.0
    %v2095 = vadd.f32 %v2093, %v2094
    %v2096 = vsel %vm959, %v1823, 0.0
    %v2097 = vadd.f32 %v2095, %v2096
    %v2098 = vsel %vm959, %v1824, 0.0
    %v2099 = vadd.f32 %v2097, %v2098
    %v2100 = vsel %vm959, %v1825, 0.0
    %v2101 = vadd.f32 %v2099, %v2100
    %v2102 = vsel %vm959, %v1826, 0.0
    %v2103 = vadd.f32 %v2101, %v2102
    %v2104 = vsel %vm959, %v1827, 0.0
    %v2105 = vadd.f32 %v2103, %v2104
    %v2106 = vsel %vm959, %v1828, 0.0
    %v2107 = vadd.f32 %v2105, %v2106
    %v2108 = vsel %vm959, %v1829, 0.0
    %v2109 = vadd.f32 %v2107, %v2108
    %v2110 = vsel %vm959, %v1830, 0.0
    %v2111 = vadd.f32 %v2109, %v2110
    %v2112 = vsel %vm959, %v1831, 0.0
    %v2113 = vadd.f32 %v2111, %v2112
    %v2114 = vsel %vm959, %v1832, 0.0
    %v2115 = vadd.f32 %v2113, %v2114
    %v2116 = vsel %vm959, %v1833, 0.0
    %v2117 = vadd.f32 %v2115, %v2116
    %v2118 = vrot.slane %v2117, 4
    %v2119 = vadd.f32 %v2117, %v2118
    %v2120 = vrot.slane %v2119, 2
    %v2121 = vadd.f32 %v2119, %v2120
    %v2122 = vrot.slane %v2121, 1
    %v2123 = vadd.f32 %v2121, %v2122
    %v2124 = vsel %vm959, %v1834, 0.0
    %v2125 = vsel %vm959, %v1835, 0.0
    %v2126 = vadd.f32 %v2124, %v2125
    %v2127 = vsel %vm959, %v1836, 0.0
    %v2128 = vadd.f32 %v2126, %v2127
    %v2129 = vsel %vm959, %v1837, 0.0
    %v2130 = vadd.f32 %v2128, %v2129
    %v2131 = vsel %vm959, %v1838, 0.0
    %v2132 = vadd.f32 %v2130, %v2131
    %v2133 = vsel %vm959, %v1839, 0.0
    %v2134 = vadd.f32 %v2132, %v2133
    %v2135 = vsel %vm959, %v1840, 0.0
    %v2136 = vadd.f32 %v2134, %v2135
    %v2137 = vsel %vm959, %v1841, 0.0
    %v2138 = vadd.f32 %v2136, %v2137
    %v2139 = vsel %vm959, %v1842, 0.0
    %v2140 = vadd.f32 %v2138, %v2139
    %v2141 = vsel %vm959, %v1843, 0.0
    %v2142 = vadd.f32 %v2140, %v2141
    %v2143 = vsel %vm959, %v1844, 0.0
    %v2144 = vadd.f32 %v2142, %v2143
    %v2145 = vsel %vm959, %v1845, 0.0
    %v2146 = vadd.f32 %v2144, %v2145
    %v2147 = vsel %vm959, %v1846, 0.0
    %v2148 = vadd.f32 %v2146, %v2147
    %v2149 = vsel %vm959, %v1847, 0.0
    %v2150 = vadd.f32 %v2148, %v2149
    %v2151 = vsel %vm959, %v1848, 0.0
    %v2152 = vadd.f32 %v2150, %v2151
    %v2153 = vsel %vm959, %v1849, 0.0
    %v2154 = vadd.f32 %v2152, %v2153
    %v2155 = vsel %vm959, %v1850, 0.0
    %v2156 = vadd.f32 %v2154, %v2155
    %v2157 = vrot.slane %v2156, 4
    %v2158 = vadd.f32 %v2156, %v2157
    %v2159 = vrot.slane %v2158, 2
    %v2160 = vadd.f32 %v2158, %v2159
    %v2161 = vrot.slane %v2160, 1
    %v2162 = vadd.f32 %v2160, %v2161
    %v2163 = vrcp.pop %v1889
    %v2164 = vrcp.pop %v1928
    %v2165 = vrcp.pop %v1967
    %v2166 = vrcp.pop %v2006
    %v2167 = vrcp.pop %v2045
    %v2168 = vrcp.pop %v2084
    %v2169 = vrcp.pop %v2123
    %v2170 = vrcp.pop %v2162
    %v2171 = vmul.f32 %v1715, %v2163
    %v2172 = vmul.f32 %v1716, %v2163
    %v2173 = vmul.f32 %v1717, %v2163
    %v2174 = vmul.f32 %v1718, %v2163
    %v2175 = vmul.f32 %v1719, %v2163
    %v2176 = vmul.f32 %v1720, %v2163
    %v2177 = vmul.f32 %v1721, %v2163
    %v2178 = vmul.f32 %v1722, %v2163
    %v2179 = vmul.f32 %v1723, %v2163
    %v2180 = vmul.f32 %v1724, %v2163
    %v2181 = vmul.f32 %v1725, %v2163
    %v2182 = vmul.f32 %v1726, %v2163
    %v2183 = vmul.f32 %v1727, %v2163
    %v2184 = vmul.f32 %v1728, %v2163
    %v2185 = vmul.f32 %v1729, %v2163
    %v2186 = vmul.f32 %v1730, %v2163
    %v2187 = vmul.f32 %v1731, %v2163
    %v2188 = vmul.f32 %v1732, %v2164
    %v2189 = vmul.f32 %v1733, %v2164
    %v2190 = vmul.f32 %v1734, %v2164
    %v2191 = vmul.f32 %v1735, %v2164
    %v2192 = vmul.f32 %v1736, %v2164
    %v2193 = vmul.f32 %v1737, %v2164
    %v2194 = vmul.f32 %v1738, %v2164
    %v2195 = vmul.f32 %v1739, %v2164
    %v2196 = vmul.f32 %v1740, %v2164
    %v2197 = vmul.f32 %v1741, %v2164
    %v2198 = vmul.f32 %v1742, %v2164
    %v2199 = vmul.f32 %v1743, %v2164
    %v2200 = vmul.f32 %v1744, %v2164
    %v2201 = vmul.f32 %v1745, %v2164
    %v2202 = vmul.f32 %v1746, %v2164
    %v2203 = vmul.f32 %v1747, %v2164
    %v2204 = vmul.f32 %v1748, %v2164
    %v2205 = vmul.f32 %v1749, %v2165
    %v2206 = vmul.f32 %v1750, %v2165
    %v2207 = vmul.f32 %v1751, %v2165
    %v2208 = vmul.f32 %v1752, %v2165
    %v2209 = vmul.f32 %v1753, %v2165
    %v2210 = vmul.f32 %v1754, %v2165
    %v2211 = vmul.f32 %v1755, %v2165
    %v2212 = vmul.f32 %v1756, %v2165
    %v2213 = vmul.f32 %v1757, %v2165
    %v2214 = vmul.f32 %v1758, %v2165
    %v2215 = vmul.f32 %v1759, %v2165
    %v2216 = vmul.f32 %v1760, %v2165
    %v2217 = vmul.f32 %v1761, %v2165
    %v2218 = vmul.f32 %v1762, %v2165
    %v2219 = vmul.f32 %v1763, %v2165
    %v2220 = vmul.f32 %v1764, %v2165
    %v2221 = vmul.f32 %v1765, %v2165
    %v2222 = vmul.f32 %v1766, %v2166
    %v2223 = vmul.f32 %v1767, %v2166
    %v2224 = vmul.f32 %v1768, %v2166
    %v2225 = vmul.f32 %v1769, %v2166
    %v2226 = vmul.f32 %v1770, %v2166
    %v2227 = vmul.f32 %v1771, %v2166
    %v2228 = vmul.f32 %v1772, %v2166
    %v2229 = vmul.f32 %v1773, %v2166
    %v2230 = vmul.f32 %v1774, %v2166
    %v2231 = vmul.f32 %v1775, %v2166
    %v2232 = vmul.f32 %v1776, %v2166
    %v2233 = vmul.f32 %v1777, %v2166
    %v2234 = vmul.f32 %v1778, %v2166
    %v2235 = vmul.f32 %v1779, %v2166
    %v2236 = vmul.f32 %v1780, %v2166
    %v2237 = vmul.f32 %v1781, %v2166
    %v2238 = vmul.f32 %v1782, %v2166
    %v2239 = vmul.f32 %v1783, %v2167
    %v2240 = vmul.f32 %v1784, %v2167
    %v2241 = vmul.f32 %v1785, %v2167
    %v2242 = vmul.f32 %v1786, %v2167
    %v2243 = vmul.f32 %v1787, %v2167
    %v2244 = vmul.f32 %v1788, %v2167
    %v2245 = vmul.f32 %v1789, %v2167
    %v2246 = vmul.f32 %v1790, %v2167
    %v2247 = vmul.f32 %v1791, %v2167
    %v2248 = vmul.f32 %v1792, %v2167
    %v2249 = vmul.f32 %v1793, %v2167
    %v2250 = vmul.f32 %v1794, %v2167
    %v2251 = vmul.f32 %v1795, %v2167
    %v2252 = vmul.f32 %v1796, %v2167
    %v2253 = vmul.f32 %v1797, %v2167
    %v2254 = vmul.f32 %v1798, %v2167
    %v2255 = vmul.f32 %v1799, %v2167
    %v2256 = vmul.f32 %v1800, %v2168
    %v2257 = vmul.f32 %v1801, %v2168
    %v2258 = vmul.f32 %v1802, %v2168
    %v2259 = vmul.f32 %v1803, %v2168
    %v2260 = vmul.f32 %v1804, %v2168
    %v2261 = vmul.f32 %v1805, %v2168
    %v2262 = vmul.f32 %v1806, %v2168
    %v2263 = vmul.f32 %v1807, %v2168
    %v2264 = vmul.f32 %v1808, %v2168
    %v2265 = vmul.f32 %v1809, %v2168
    %v2266 = vmul.f32 %v1810, %v2168
    %v2267 = vmul.f32 %v1811, %v2168
    %v2268 = vmul.f32 %v1812, %v2168
    %v2269 = vmul.f32 %v1813, %v2168
    %v2270 = vmul.f32 %v1814, %v2168
    %v2271 = vmul.f32 %v1815, %v2168
    %v2272 = vmul.f32 %v1816, %v2168
    %v2273 = vmul.f32 %v1817, %v2169
    %v2274 = vmul.f32 %v1818, %v2169
    %v2275 = vmul.f32 %v1819, %v2169
    %v2276 = vmul.f32 %v1820, %v2169
    %v2277 = vmul.f32 %v1821, %v2169
    %v2278 = vmul.f32 %v1822, %v2169
    %v2279 = vmul.f32 %v1823, %v2169
    %v2280 = vmul.f32 %v1824, %v2169
    %v2281 = vmul.f32 %v1825, %v2169
    %v2282 = vmul.f32 %v1826, %v2169
    %v2283 = vmul.f32 %v1827, %v2169
    %v2284 = vmul.f32 %v1828, %v2169
    %v2285 = vmul.f32 %v1829, %v2169
    %v2286 = vmul.f32 %v1830, %v2169
    %v2287 = vmul.f32 %v1831, %v2169
    %v2288 = vmul.f32 %v1832, %v2169
    %v2289 = vmul.f32 %v1833, %v2169
    %v2290 = vmul.f32 %v1834, %v2170
    %v2291 = vmul.f32 %v1835, %v2170
    %v2292 = vmul.f32 %v1836, %v2170
    %v2293 = vmul.f32 %v1837, %v2170
    %v2294 = vmul.f32 %v1838, %v2170
    %v2295 = vmul.f32 %v1839, %v2170
    %v2296 = vmul.f32 %v1840, %v2170
    %v2297 = vmul.f32 %v1841, %v2170
    %v2298 = vmul.f32 %v1842, %v2170
    %v2299 = vmul.f32 %v1843, %v2170
    %v2300 = vmul.f32 %v1844, %v2170
    %v2301 = vmul.f32 %v1845, %v2170
    %v2302 = vmul.f32 %v1846, %v2170
    %v2303 = vmul.f32 %v1847, %v2170
    %v2304 = vmul.f32 %v1848, %v2170
    %v2305 = vmul.f32 %v1849, %v2170
    %v2306 = vmul.f32 %v1850, %v2170
    %v2307 = vpack.c.bf16 %v2172, %v2171
    %v2308 = vpack.c.bf16 %v2174, %v2173
    %v2309 = vpack.c.bf16 %v2176, %v2175
    %v2310 = vpack.c.bf16 %v2178, %v2177
    %v2311 = vpack.c.bf16 %v2180, %v2179
    %v2312 = vpack.c.bf16 %v2182, %v2181
    %v2313 = vpack.c.bf16 %v2184, %v2183
    %v2314 = vpack.c.bf16 %v2186, %v2185
    %v2315 = vpack.c.bf16 %v2187, %v2187
    %v2316 = vpack.c.bf16 %v2189, %v2188
    %v2317 = vpack.c.bf16 %v2191, %v2190
    %v2318 = vpack.c.bf16 %v2193, %v2192
    %v2319 = vpack.c.bf16 %v2195, %v2194
    %v2320 = vpack.c.bf16 %v2197, %v2196
    %v2321 = vpack.c.bf16 %v2199, %v2198
    %v2322 = vpack.c.bf16 %v2201, %v2200
    %v2323 = vpack.c.bf16 %v2203, %v2202
    %v2324 = vpack.c.bf16 %v2204, %v2204
    %v2325 = vpack.c.bf16 %v2206, %v2205
    %v2326 = vpack.c.bf16 %v2208, %v2207
    %v2327 = vpack.c.bf16 %v2210, %v2209
    %v2328 = vpack.c.bf16 %v2212, %v2211
    %v2329 = vpack.c.bf16 %v2214, %v2213
    %v2330 = vpack.c.bf16 %v2216, %v2215
    %v2331 = vpack.c.bf16 %v2218, %v2217
    %v2332 = vpack.c.bf16 %v2220, %v2219
    %v2333 = vpack.c.bf16 %v2221, %v2221
    %v2334 = vpack.c.bf16 %v2223, %v2222
    %v2335 = vpack.c.bf16 %v2225, %v2224
    %v2336 = vpack.c.bf16 %v2227, %v2226
    %v2337 = vpack.c.bf16 %v2229, %v2228
    %v2338 = vpack.c.bf16 %v2231, %v2230
    %v2339 = vpack.c.bf16 %v2233, %v2232
    %v2340 = vpack.c.bf16 %v2235, %v2234
    %v2341 = vpack.c.bf16 %v2237, %v2236
    %v2342 = vpack.c.bf16 %v2238, %v2238
    %v2343 = vpack.c.bf16 %v2240, %v2239
    %v2344 = vpack.c.bf16 %v2242, %v2241
    %v2345 = vpack.c.bf16 %v2244, %v2243
    %v2346 = vpack.c.bf16 %v2246, %v2245
    %v2347 = vpack.c.bf16 %v2248, %v2247
    %v2348 = vpack.c.bf16 %v2250, %v2249
    %v2349 = vpack.c.bf16 %v2252, %v2251
    %v2350 = vpack.c.bf16 %v2254, %v2253
    %v2351 = vpack.c.bf16 %v2255, %v2255
    %v2352 = vpack.c.bf16 %v2257, %v2256
    %v2353 = vpack.c.bf16 %v2259, %v2258
    %v2354 = vpack.c.bf16 %v2261, %v2260
    %v2355 = vpack.c.bf16 %v2263, %v2262
    %v2356 = vpack.c.bf16 %v2265, %v2264
    %v2357 = vpack.c.bf16 %v2267, %v2266
    %v2358 = vpack.c.bf16 %v2269, %v2268
    %v2359 = vpack.c.bf16 %v2271, %v2270
    %v2360 = vpack.c.bf16 %v2272, %v2272
    %v2361 = vpack.c.bf16 %v2274, %v2273
    %v2362 = vpack.c.bf16 %v2276, %v2275
    %v2363 = vpack.c.bf16 %v2278, %v2277
    %v2364 = vpack.c.bf16 %v2280, %v2279
    %v2365 = vpack.c.bf16 %v2282, %v2281
    %v2366 = vpack.c.bf16 %v2284, %v2283
    %v2367 = vpack.c.bf16 %v2286, %v2285
    %v2368 = vpack.c.bf16 %v2288, %v2287
    %v2369 = vpack.c.bf16 %v2289, %v2289
    %v2370 = vpack.c.bf16 %v2291, %v2290
    %v2371 = vpack.c.bf16 %v2293, %v2292
    %v2372 = vpack.c.bf16 %v2295, %v2294
    %v2373 = vpack.c.bf16 %v2297, %v2296
    %v2374 = vpack.c.bf16 %v2299, %v2298
    %v2375 = vpack.c.bf16 %v2301, %v2300
    %v2376 = vpack.c.bf16 %v2303, %v2302
    %v2377 = vpack.c.bf16 %v2305, %v2304
    %v2378 = vpack.c.bf16 %v2306, %v2306
    %v2379 = vld [vmem:[#allocation5] sm:$0xf]
    %v2380 = vld [vmem:[#allocation5 + $0x4] sm:$0xf]
    %v2381 = vld [vmem:[#allocation5 + $0x8] sm:$0xf]
    %v2382 = vld [vmem:[#allocation5 + $0xc] sm:$0xf]
    %v2383 = vld [vmem:[#allocation5 + $0x10] sm:$0xf]
    %v2384 = vld [vmem:[#allocation5 + $0x14] sm:$0xf]
    %v2385 = vld [vmem:[#allocation5 + $0x18] sm:$0xf]
    %v2386 = vld [vmem:[#allocation5 + $0x1c] sm:$0xf]
    %v2387 = vld [vmem:[#allocation5 + $0x20] sm:$0xf]
    %v2388 = vld [vmem:[#allocation5 + $0x24] sm:$0xf]
    %v2389 = vld [vmem:[#allocation5 + $0x28] sm:$0xf]
    %v2390 = vld [vmem:[#allocation5 + $0x2c] sm:$0xf]
    %v2391 = vld [vmem:[#allocation5 + $0x30] sm:$0xf]
    %v2392 = vld [vmem:[#allocation5 + $0x34] sm:$0xf]
    %v2393 = vld [vmem:[#allocation5 + $0x38] sm:$0xf]
    %v2394 = vld [vmem:[#allocation5 + $0x3c] sm:$0xf]
    %v2411 = vunpack.c.l.b16 %v2379
    %v2412 = vunpack.c.l.b16 %v2380
    %v2413 = vunpack.c.l.b16 %v2381
    %v2414 = vunpack.c.l.b16 %v2382
    %v2415 = vunpack.c.l.b16 %v2383
    %v2416 = vunpack.c.l.b16 %v2384
    %v2417 = vunpack.c.l.b16 %v2385
    %v2418 = vunpack.c.l.b16 %v2386
    %v2419 = vunpack.c.l.b16 %v2387
    %v2420 = vunpack.c.l.b16 %v2388
    %v2421 = vunpack.c.l.b16 %v2389
    %v2422 = vunpack.c.l.b16 %v2390
    %v2423 = vunpack.c.l.b16 %v2391
    %v2424 = vunpack.c.l.b16 %v2392
    %v2425 = vunpack.c.l.b16 %v2393
    %v2426 = vunpack.c.l.b16 %v2394
    %v2427 = vpack.c.b16 %v2412, %v2411
    %v2428 = vpack.c.b16 %v2414, %v2413
    %v2429 = vpack.c.b16 %v2416, %v2415
    %v2430 = vpack.c.b16 %v2418, %v2417
    %v2431 = vpack.c.b16 %v2420, %v2419
    %v2432 = vpack.c.b16 %v2422, %v2421
    %v2433 = vpack.c.b16 %v2424, %v2423
    %v2434 = vpack.c.b16 %v2426, %v2425
    %2443 = vmatprep.subr.bf16.mxu0 0
    %2444 = vmatpush1.bf16.msra.mxu0 %v2427
    %2445 = vmatprep.subr.bf16.mxu0 0
    %2446 = vmatpush1.bf16.msra.mxu0 %v2428
    %2447 = vmatprep.subr.bf16.mxu0 0
    %2448 = vmatpush1.bf16.msra.mxu0 %v2429
    %2449 = vmatprep.subr.bf16.mxu0 0
    %2450 = vmatpush1.bf16.msra.mxu0 %v2430
    %2451 = vmatprep.subr.bf16.mxu0 0
    %2452 = vmatpush1.bf16.msra.mxu0 %v2431
    %2453 = vmatprep.subr.bf16.mxu0 0
    %2454 = vmatpush1.bf16.msra.mxu0 %v2432
    %2455 = vmatprep.subr.bf16.mxu0 0
    %2456 = vmatpush1.bf16.msra.mxu0 %v2433
    %2457 = vmatprep.subr.bf16.mxu0 0
    %2458 = vmatpush1.bf16.msra.mxu0 %v2434
    %2459 = vmatprep.subr.bf16.mxu0 0
    %2460 = vmatpush1.bf16.msra.mxu0 0
    %2461 = vmatprep.subr.bf16.mxu0 0
    %2462 = vmatpush1.bf16.msra.mxu0 0
    %2463 = vmatprep.subr.bf16.mxu0 0
    %2464 = vmatpush1.bf16.msra.mxu0 0
    %2465 = vmatprep.subr.bf16.mxu0 0
    %2466 = vmatpush1.bf16.msra.mxu0 0
    %2467 = vmatprep.subr.bf16.mxu0 0
    %2468 = vmatpush1.bf16.msra.mxu0 0
    %2469 = vmatprep.subr.bf16.mxu0 0
    %2470 = vmatpush1.bf16.msra.mxu0 0
    %2471 = vmatprep.subr.bf16.mxu0 0
    %2472 = vmatpush1.bf16.msra.mxu0 0
    %2473 = vmatprep.subr.bf16.mxu0 0
    %2474 = vmatpush1.bf16.msra.mxu0 0
    %2475 = vmatprep.mubr.bf16.mxu0 0
    %2476 = vmatmul.mubr.bf16.gmra.mrb[0].mxu0 %v250
    %v2477 = vpop.f32.mrb[0].mxu0
    %v2478 = vadd.f32 0.0, %v2477
    %v2479 = vpop.f32.mrb[0].mxu0
    %v2480 = vpop.f32.mrb[0].mxu0
    %v2481 = vadd.f32 0.0, %v2480
    %v2482 = vpop.f32.mrb[0].mxu0
    %2483 = vmatprep.mubr.bf16.mxu0 0
    %2484 = vmatmul.mubr.bf16.gmra.mrb[0].mxu0 %v251
    %v2485 = vpop.f32.mrb[0].mxu0
    %v2486 = vadd.f32 0.0, %v2485
    %v2487 = vpop.f32.mrb[0].mxu0
    %v2488 = vpop.f32.mrb[0].mxu0
    %v2489 = vadd.f32 0.0, %v2488
    %v2490 = vpop.f32.mrb[0].mxu0
    %2491 = vmatprep.mubr.bf16.mxu0 0
    %2492 = vmatmul.mubr.bf16.gmra.mrb[0].mxu0 %v252
    %v2493 = vpop.f32.mrb[0].mxu0
    %v2494 = vadd.f32 0.0, %v2493
    %v2495 = vpop.f32.mrb[0].mxu0
    %v2496 = vpop.f32.mrb[0].mxu0
    %v2497 = vadd.f32 0.0, %v2496
    %v2498 = vpop.f32.mrb[0].mxu0
    %2499 = vmatprep.mubr.bf16.mxu0 0
    %2500 = vmatmul.mubr.bf16.gmra.mrb[0].mxu0 %v253
    %v2501 = vpop.f32.mrb[0].mxu0
    %v2502 = vadd.f32 0.0, %v2501
    %v2503 = vpop.f32.mrb[0].mxu0
    %v2504 = vpop.f32.mrb[0].mxu0
    %v2505 = vadd.f32 0.0, %v2504
    %v2506 = vpop.f32.mrb[0].mxu0
    %2507 = vmatprep.mubr.bf16.mxu0 0
    %2508 = vmatmul.mubr.bf16.gmra.mrb[0].mxu0 %v254
    %v2509 = vpop.f32.mrb[0].mxu0
    %v2510 = vadd.f32 0.0, %v2509
    %v2511 = vpop.f32.mrb[0].mxu0
    %v2512 = vpop.f32.mrb[0].mxu0
    %v2513 = vadd.f32 0.0, %v2512
    %v2514 = vpop.f32.mrb[0].mxu0
    %2515 = vmatprep.mubr.bf16.mxu0 0
    %2516 = vmatmul.mubr.bf16.gmra.mrb[0].mxu0 %v255
    %v2517 = vpop.f32.mrb[0].mxu0
    %v2518 = vadd.f32 0.0, %v2517
    %v2519 = vpop.f32.mrb[0].mxu0
    %v2520 = vpop.f32.mrb[0].mxu0
    %v2521 = vadd.f32 0.0, %v2520
    %v2522 = vpop.f32.mrb[0].mxu0
    %2523 = vmatprep.mubr.bf16.mxu0 0
    %2524 = vmatmul.mubr.bf16.gmra.mrb[0].mxu0 %v256
    %v2525 = vpop.f32.mrb[0].mxu0
    %v2526 = vadd.f32 0.0, %v2525
    %v2527 = vpop.f32.mrb[0].mxu0
    %v2528 = vpop.f32.mrb[0].mxu0
    %v2529 = vadd.f32 0.0, %v2528
    %v2530 = vpop.f32.mrb[0].mxu0
    %2531 = vmatprep.mubr.bf16.mxu0 0
    %2532 = vmatmul.mubr.bf16.gmra.mrb[0].mxu0 %v257
    %v2533 = vpop.f32.mrb[0].mxu0
    %v2534 = vadd.f32 0.0, %v2533
    %v2535 = vpop.f32.mrb[0].mxu0
    %v2536 = vpop.f32.mrb[0].mxu0
    %v2537 = vadd.f32 0.0, %v2536
    %v2538 = vpop.f32.mrb[0].mxu0
    %2539 = vmatprep.mubr.bf16.mxu0 0
    %2540 = vmatmul.mubr.bf16.gmra.mrb[0].mxu0 %v258
    %v2541 = vpop.f32.mrb[0].mxu0
    %v2542 = vadd.f32 0.0, %v2541
    %v2543 = vpop.f32.mrb[0].mxu0
    %v2544 = vpop.f32.mrb[0].mxu0
    %v2545 = vadd.f32 0.0, %v2544
    %v2546 = vpop.f32.mrb[0].mxu0
    %2547 = vmatprep.mubr.bf16.mxu0 0
    %2548 = vmatmul.mubr.bf16.gmra.mrb[0].mxu0 %v259
    %v2549 = vpop.f32.mrb[0].mxu0
    %v2550 = vadd.f32 0.0, %v2549
    %v2551 = vpop.f32.mrb[0].mxu0
    %v2552 = vpop.f32.mrb[0].mxu0
    %v2553 = vadd.f32 0.0, %v2552
    %v2554 = vpop.f32.mrb[0].mxu0
    %2555 = vmatprep.mubr.bf16.mxu0 0
    %2556 = vmatmul.mubr.bf16.gmra.mrb[0].mxu0 %v260
    %v2557 = vpop.f32.mrb[0].mxu0
    %v2558 = vadd.f32 0.0, %v2557
    %v2559 = vpop.f32.mrb[0].mxu0
    %v2560 = vpop.f32.mrb[0].mxu0
    %v2561 = vadd.f32 0.0, %v2560
    %v2562 = vpop.f32.mrb[0].mxu0
    %2563 = vmatprep.mubr.bf16.mxu0 0
    %2564 = vmatmul.mubr.bf16.gmra.mrb[0].mxu0 %v261
    %v2565 = vpop.f32.mrb[0].mxu0
    %v2566 = vadd.f32 0.0, %v2565
    %v2567 = vpop.f32.mrb[0].mxu0
    %v2568 = vpop.f32.mrb[0].mxu0
    %v2569 = vadd.f32 0.0, %v2568
    %v2570 = vpop.f32.mrb[0].mxu0
    %2571 = vmatprep.mubr.bf16.mxu0 0
    %2572 = vmatmul.mubr.bf16.gmra.mrb[0].mxu0 %v262
    %v2573 = vpop.f32.mrb[0].mxu0
    %v2574 = vadd.f32 0.0, %v2573
    %v2575 = vpop.f32.mrb[0].mxu0
    %v2576 = vpop.f32.mrb[0].mxu0
    %v2577 = vadd.f32 0.0, %v2576
    %v2578 = vpop.f32.mrb[0].mxu0
    %2579 = vmatprep.mubr.bf16.mxu0 0
    %2580 = vmatmul.mubr.bf16.gmra.mrb[0].mxu0 %v263
    %v2581 = vpop.f32.mrb[0].mxu0
    %v2582 = vadd.f32 0.0, %v2581
    %v2583 = vpop.f32.mrb[0].mxu0
    %v2584 = vpop.f32.mrb[0].mxu0
    %v2585 = vadd.f32 0.0, %v2584
    %v2586 = vpop.f32.mrb[0].mxu0
    %2587 = vmatprep.mubr.bf16.mxu0 0
    %2588 = vmatmul.mubr.bf16.gmra.mrb[0].mxu0 %v264
    %v2589 = vpop.f32.mrb[0].mxu0
    %v2590 = vadd.f32 0.0, %v2589
    %v2591 = vpop.f32.mrb[0].mxu0
    %v2592 = vpop.f32.mrb[0].mxu0
    %v2593 = vadd.f32 0.0, %v2592
    %v2594 = vpop.f32.mrb[0].mxu0
    %2595 = vmatprep.mubr.bf16.mxu0 0
    %2596 = vmatmul.mubr.bf16.gmra.mrb[0].mxu0 %v265
    %v2597 = vpop.f32.mrb[0].mxu0
    %v2598 = vadd.f32 0.0, %v2597
    %v2599 = vpop.f32.mrb[0].mxu0
    %v2600 = vpop.f32.mrb[0].mxu0
    %v2601 = vadd.f32 0.0, %v2600
    %v2602 = vpop.f32.mrb[0].mxu0
    %2603 = vmatprep.mubr.bf16.mxu0 0
    %2604 = vmatmul.mubr.bf16.gmra.mrb[0].mxu0 %v266
    %v2605 = vpop.f32.mrb[0].mxu0
    %v2606 = vadd.f32 0.0, %v2605
    %v2607 = vpop.f32.mrb[0].mxu0
    %v2608 = vpop.f32.mrb[0].mxu0
    %v2609 = vadd.f32 0.0, %v2608
    %v2610 = vpop.f32.mrb[0].mxu0
    %2611 = vmatprep.mubr.bf16.mxu0 0
    %2612 = vmatmul.mubr.bf16.gmra.mrb[0].mxu0 %v267
    %v2613 = vpop.f32.mrb[0].mxu0
    %v2614 = vadd.f32 0.0, %v2613
    %v2615 = vpop.f32.mrb[0].mxu0
    %v2616 = vpop.f32.mrb[0].mxu0
    %v2617 = vadd.f32 0.0, %v2616
    %v2618 = vpop.f32.mrb[0].mxu0
    %2619 = vmatprep.mubr.bf16.mxu0 0
    %2620 = vmatmul.mubr.bf16.gmra.mrb[0].mxu0 %v268
    %v2621 = vpop.f32.mrb[0].mxu0
    %v2622 = vadd.f32 0.0, %v2621
    %v2623 = vpop.f32.mrb[0].mxu0
    %v2624 = vpop.f32.mrb[0].mxu0
    %v2625 = vadd.f32 0.0, %v2624
    %v2626 = vpop.f32.mrb[0].mxu0
    %2627 = vmatprep.mubr.bf16.mxu0 0
    %2628 = vmatmul.mubr.bf16.gmra.mrb[0].mxu0 %v269
    %v2629 = vpop.f32.mrb[0].mxu0
    %v2630 = vadd.f32 0.0, %v2629
    %v2631 = vpop.f32.mrb[0].mxu0
    %v2632 = vpop.f32.mrb[0].mxu0
    %v2633 = vadd.f32 0.0, %v2632
    %v2634 = vpop.f32.mrb[0].mxu0
    %2635 = vmatprep.mubr.bf16.mxu0 0
    %2636 = vmatmul.mubr.bf16.gmra.mrb[0].mxu0 %v270
    %v2637 = vpop.f32.mrb[0].mxu0
    %v2638 = vadd.f32 0.0, %v2637
    %v2639 = vpop.f32.mrb[0].mxu0
    %v2640 = vpop.f32.mrb[0].mxu0
    %v2641 = vadd.f32 0.0, %v2640
    %v2642 = vpop.f32.mrb[0].mxu0
    %2643 = vmatprep.mubr.bf16.mxu0 0
    %2644 = vmatmul.mubr.bf16.gmra.mrb[0].mxu0 %v271
    %v2645 = vpop.f32.mrb[0].mxu0
    %v2646 = vadd.f32 0.0, %v2645
    %v2647 = vpop.f32.mrb[0].mxu0
    %v2648 = vpop.f32.mrb[0].mxu0
    %v2649 = vadd.f32 0.0, %v2648
    %v2650 = vpop.f32.mrb[0].mxu0
    %2651 = vmatprep.mubr.bf16.mxu0 0
    %2652 = vmatmul.mubr.bf16.gmra.mrb[0].mxu0 %v272
    %v2653 = vpop.f32.mrb[0].mxu0
    %v2654 = vadd.f32 0.0, %v2653
    %v2655 = vpop.f32.mrb[0].mxu0
    %v2656 = vpop.f32.mrb[0].mxu0
    %v2657 = vadd.f32 0.0, %v2656
    %v2658 = vpop.f32.mrb[0].mxu0
    %2659 = vmatprep.mubr.bf16.mxu0 0
    %2660 = vmatmul.mubr.bf16.gmra.mrb[0].mxu0 %v273
    %v2661 = vpop.f32.mrb[0].mxu0
    %v2662 = vadd.f32 0.0, %v2661
    %v2663 = vpop.f32.mrb[0].mxu0
    %v2664 = vpop.f32.mrb[0].mxu0
    %v2665 = vadd.f32 0.0, %v2664
    %v2666 = vpop.f32.mrb[0].mxu0
    %2667 = vmatprep.mubr.bf16.mxu0 0
    %2668 = vmatmul.mubr.bf16.gmra.mrb[0].mxu0 %v274
    %v2669 = vpop.f32.mrb[0].mxu0
    %v2670 = vadd.f32 0.0, %v2669
    %v2671 = vpop.f32.mrb[0].mxu0
    %v2672 = vpop.f32.mrb[0].mxu0
    %v2673 = vadd.f32 0.0, %v2672
    %v2674 = vpop.f32.mrb[0].mxu0
    %2675 = vmatprep.mubr.bf16.mxu0 0
    %2676 = vmatmul.mubr.bf16.gmra.mrb[0].mxu0 %v275
    %v2677 = vpop.f32.mrb[0].mxu0
    %v2678 = vadd.f32 0.0, %v2677
    %v2679 = vpop.f32.mrb[0].mxu0
    %v2680 = vpop.f32.mrb[0].mxu0
    %v2681 = vadd.f32 0.0, %v2680
    %v2682 = vpop.f32.mrb[0].mxu0
    %2683 = vmatprep.mubr.bf16.mxu0 0
    %2684 = vmatmul.mubr.bf16.gmra.mrb[0].mxu0 %v276
    %v2685 = vpop.f32.mrb[0].mxu0
    %v2686 = vadd.f32 0.0, %v2685
    %v2687 = vpop.f32.mrb[0].mxu0
    %v2688 = vpop.f32.mrb[0].mxu0
    %v2689 = vadd.f32 0.0, %v2688
    %v2690 = vpop.f32.mrb[0].mxu0
    %2691 = vmatprep.mubr.bf16.mxu0 0
    %2692 = vmatmul.mubr.bf16.gmra.mrb[0].mxu0 %v277
    %v2693 = vpop.f32.mrb[0].mxu0
    %v2694 = vadd.f32 0.0, %v2693
    %v2695 = vpop.f32.mrb[0].mxu0
    %v2696 = vpop.f32.mrb[0].mxu0
    %v2697 = vadd.f32 0.0, %v2696
    %v2698 = vpop.f32.mrb[0].mxu0
    %2699 = vmatprep.mubr.bf16.mxu0 0
    %2700 = vmatmul.mubr.bf16.gmra.mrb[0].mxu0 %v278
    %v2701 = vpop.f32.mrb[0].mxu0
    %v2702 = vadd.f32 0.0, %v2701
    %v2703 = vpop.f32.mrb[0].mxu0
    %v2704 = vpop.f32.mrb[0].mxu0
    %v2705 = vadd.f32 0.0, %v2704
    %v2706 = vpop.f32.mrb[0].mxu0
    %2707 = vmatprep.mubr.bf16.mxu0 0
    %2708 = vmatmul.mubr.bf16.gmra.mrb[0].mxu0 %v279
    %v2709 = vpop.f32.mrb[0].mxu0
    %v2710 = vadd.f32 0.0, %v2709
    %v2711 = vpop.f32.mrb[0].mxu0
    %v2712 = vpop.f32.mrb[0].mxu0
    %v2713 = vadd.f32 0.0, %v2712
    %v2714 = vpop.f32.mrb[0].mxu0
    %2715 = vmatprep.mubr.bf16.mxu0 0
    %2716 = vmatmul.mubr.bf16.gmra.mrb[0].mxu0 %v280
    %v2717 = vpop.f32.mrb[0].mxu0
    %v2718 = vadd.f32 0.0, %v2717
    %v2719 = vpop.f32.mrb[0].mxu0
    %v2720 = vpop.f32.mrb[0].mxu0
    %v2721 = vadd.f32 0.0, %v2720
    %v2722 = vpop.f32.mrb[0].mxu0
    %2723 = vmatprep.mubr.bf16.mxu0 0
    %2724 = vmatmul.mubr.bf16.gmra.mrb[0].mxu0 %v281
    %v2725 = vpop.f32.mrb[0].mxu0
    %v2726 = vadd.f32 0.0, %v2725
    %v2727 = vpop.f32.mrb[0].mxu0
    %v2728 = vpop.f32.mrb[0].mxu0
    %v2729 = vadd.f32 0.0, %v2728
    %v2730 = vpop.f32.mrb[0].mxu0
    %2731 = vmatprep.mubr.bf16.mxu0 0
    %2732 = vmatmul.mubr.bf16.gmra.mrb[0].mxu0 %v282
    %v2733 = vpop.f32.mrb[0].mxu0
    %v2734 = vadd.f32 0.0, %v2733
    %v2735 = vpop.f32.mrb[0].mxu0
    %v2736 = vpop.f32.mrb[0].mxu0
    %v2737 = vadd.f32 0.0, %v2736
    %v2738 = vpop.f32.mrb[0].mxu0
    %2739 = vmatprep.mubr.bf16.mxu0 0
    %2740 = vmatmul.mubr.bf16.gmra.mrb[0].mxu0 %v283
    %v2741 = vpop.f32.mrb[0].mxu0
    %v2742 = vadd.f32 0.0, %v2741
    %v2743 = vpop.f32.mrb[0].mxu0
    %v2744 = vpop.f32.mrb[0].mxu0
    %v2745 = vadd.f32 0.0, %v2744
    %v2746 = vpop.f32.mrb[0].mxu0
    %2747 = vmatprep.mubr.bf16.mxu0 0
    %2748 = vmatmul.mubr.bf16.gmra.mrb[0].mxu0 %v284
    %v2749 = vpop.f32.mrb[0].mxu0
    %v2750 = vadd.f32 0.0, %v2749
    %v2751 = vpop.f32.mrb[0].mxu0
    %v2752 = vpop.f32.mrb[0].mxu0
    %v2753 = vadd.f32 0.0, %v2752
    %v2754 = vpop.f32.mrb[0].mxu0
    %2755 = vmatprep.mubr.bf16.mxu0 0
    %2756 = vmatmul.mubr.bf16.gmra.mrb[0].mxu0 %v285
    %v2757 = vpop.f32.mrb[0].mxu0
    %v2758 = vadd.f32 0.0, %v2757
    %v2759 = vpop.f32.mrb[0].mxu0
    %v2760 = vpop.f32.mrb[0].mxu0
    %v2761 = vadd.f32 0.0, %v2760
    %v2762 = vpop.f32.mrb[0].mxu0
    %2763 = vmatprep.mubr.bf16.mxu0 0
    %2764 = vmatmul.mubr.bf16.gmra.mrb[0].mxu0 %v286
    %v2765 = vpop.f32.mrb[0].mxu0
    %v2766 = vadd.f32 0.0, %v2765
    %v2767 = vpop.f32.mrb[0].mxu0
    %v2768 = vpop.f32.mrb[0].mxu0
    %v2769 = vadd.f32 0.0, %v2768
    %v2770 = vpop.f32.mrb[0].mxu0
    %2771 = vmatprep.mubr.bf16.mxu0 0
    %2772 = vmatmul.mubr.bf16.gmra.mrb[0].mxu0 %v287
    %v2773 = vpop.f32.mrb[0].mxu0
    %v2774 = vadd.f32 0.0, %v2773
    %v2775 = vpop.f32.mrb[0].mxu0
    %v2776 = vpop.f32.mrb[0].mxu0
    %v2777 = vadd.f32 0.0, %v2776
    %v2778 = vpop.f32.mrb[0].mxu0
    %2779 = vmatprep.mubr.bf16.mxu0 0
    %2780 = vmatmul.mubr.bf16.gmra.mrb[0].mxu0 %v288
    %v2781 = vpop.f32.mrb[0].mxu0
    %v2782 = vadd.f32 0.0, %v2781
    %v2783 = vpop.f32.mrb[0].mxu0
    %v2784 = vpop.f32.mrb[0].mxu0
    %v2785 = vadd.f32 0.0, %v2784
    %v2786 = vpop.f32.mrb[0].mxu0
    %2787 = vmatprep.mubr.bf16.mxu0 0
    %2788 = vmatmul.mubr.bf16.gmra.mrb[0].mxu0 %v289
    %v2789 = vpop.f32.mrb[0].mxu0
    %v2790 = vadd.f32 0.0, %v2789
    %v2791 = vpop.f32.mrb[0].mxu0
    %v2792 = vpop.f32.mrb[0].mxu0
    %v2793 = vadd.f32 0.0, %v2792
    %v2794 = vpop.f32.mrb[0].mxu0
    %2795 = vmatprep.mubr.bf16.mxu0 0
    %2796 = vmatmul.mubr.bf16.gmra.mrb[0].mxu0 %v290
    %v2797 = vpop.f32.mrb[0].mxu0
    %v2798 = vadd.f32 0.0, %v2797
    %v2799 = vpop.f32.mrb[0].mxu0
    %v2800 = vpop.f32.mrb[0].mxu0
    %v2801 = vadd.f32 0.0, %v2800
    %v2802 = vpop.f32.mrb[0].mxu0
    %2803 = vmatprep.mubr.bf16.mxu0 0
    %2804 = vmatmul.mubr.bf16.gmra.mrb[0].mxu0 %v291
    %v2805 = vpop.f32.mrb[0].mxu0
    %v2806 = vadd.f32 0.0, %v2805
    %v2807 = vpop.f32.mrb[0].mxu0
    %v2808 = vpop.f32.mrb[0].mxu0
    %v2809 = vadd.f32 0.0, %v2808
    %v2810 = vpop.f32.mrb[0].mxu0
    %2811 = vmatprep.mubr.bf16.mxu0 0
    %2812 = vmatmul.mubr.bf16.gmra.mrb[0].mxu0 %v292
    %v2813 = vpop.f32.mrb[0].mxu0
    %v2814 = vadd.f32 0.0, %v2813
    %v2815 = vpop.f32.mrb[0].mxu0
    %v2816 = vpop.f32.mrb[0].mxu0
    %v2817 = vadd.f32 0.0, %v2816
    %v2818 = vpop.f32.mrb[0].mxu0
    %2819 = vmatprep.mubr.bf16.mxu0 0
    %2820 = vmatmul.mubr.bf16.gmra.mrb[0].mxu0 %v293
    %v2821 = vpop.f32.mrb[0].mxu0
    %v2822 = vadd.f32 0.0, %v2821
    %v2823 = vpop.f32.mrb[0].mxu0
    %v2824 = vpop.f32.mrb[0].mxu0
    %v2825 = vadd.f32 0.0, %v2824
    %v2826 = vpop.f32.mrb[0].mxu0
    %2827 = vmatprep.mubr.bf16.mxu0 0
    %2828 = vmatmul.mubr.bf16.gmra.mrb[0].mxu0 %v294
    %v2829 = vpop.f32.mrb[0].mxu0
    %v2830 = vadd.f32 0.0, %v2829
    %v2831 = vpop.f32.mrb[0].mxu0
    %v2832 = vpop.f32.mrb[0].mxu0
    %v2833 = vadd.f32 0.0, %v2832
    %v2834 = vpop.f32.mrb[0].mxu0
    %2835 = vmatprep.mubr.bf16.mxu0 0
    %2836 = vmatmul.mubr.bf16.gmra.mrb[0].mxu0 %v295
    %v2837 = vpop.f32.mrb[0].mxu0
    %v2838 = vadd.f32 0.0, %v2837
    %v2839 = vpop.f32.mrb[0].mxu0
    %v2840 = vpop.f32.mrb[0].mxu0
    %v2841 = vadd.f32 0.0, %v2840
    %v2842 = vpop.f32.mrb[0].mxu0
    %2843 = vmatprep.mubr.bf16.mxu0 0
    %2844 = vmatmul.mubr.bf16.gmra.mrb[0].mxu0 %v296
    %v2845 = vpop.f32.mrb[0].mxu0
    %v2846 = vadd.f32 0.0, %v2845
    %v2847 = vpop.f32.mrb[0].mxu0
    %v2848 = vpop.f32.mrb[0].mxu0
    %v2849 = vadd.f32 0.0, %v2848
    %v2850 = vpop.f32.mrb[0].mxu0
    %2851 = vmatprep.mubr.bf16.mxu0 0
    %2852 = vmatmul.mubr.bf16.gmra.mrb[0].mxu0 %v297
    %v2853 = vpop.f32.mrb[0].mxu0
    %v2854 = vadd.f32 0.0, %v2853
    %v2855 = vpop.f32.mrb[0].mxu0
    %v2856 = vpop.f32.mrb[0].mxu0
    %v2857 = vadd.f32 0.0, %v2856
    %v2858 = vpop.f32.mrb[0].mxu0
    %2859 = vmatprep.mubr.bf16.mxu0 0
    %2860 = vmatmul.mubr.bf16.gmra.mrb[0].mxu0 %v298
    %v2861 = vpop.f32.mrb[0].mxu0
    %v2862 = vadd.f32 0.0, %v2861
    %v2863 = vpop.f32.mrb[0].mxu0
    %v2864 = vpop.f32.mrb[0].mxu0
    %v2865 = vadd.f32 0.0, %v2864
    %v2866 = vpop.f32.mrb[0].mxu0
    %2867 = vmatprep.mubr.bf16.mxu0 0
    %2868 = vmatmul.mubr.bf16.gmra.mrb[0].mxu0 %v299
    %v2869 = vpop.f32.mrb[0].mxu0
    %v2870 = vadd.f32 0.0, %v2869
    %v2871 = vpop.f32.mrb[0].mxu0
    %v2872 = vpop.f32.mrb[0].mxu0
    %v2873 = vadd.f32 0.0, %v2872
    %v2874 = vpop.f32.mrb[0].mxu0
    %2875 = vmatprep.mubr.bf16.mxu0 0
    %2876 = vmatmul.mubr.bf16.gmra.mrb[0].mxu0 %v300
    %v2877 = vpop.f32.mrb[0].mxu0
    %v2878 = vadd.f32 0.0, %v2877
    %v2879 = vpop.f32.mrb[0].mxu0
    %v2880 = vpop.f32.mrb[0].mxu0
    %v2881 = vadd.f32 0.0, %v2880
    %v2882 = vpop.f32.mrb[0].mxu0
    %2883 = vmatprep.mubr.bf16.mxu0 0
    %2884 = vmatmul.mubr.bf16.gmra.mrb[0].mxu0 %v301
    %v2885 = vpop.f32.mrb[0].mxu0
    %v2886 = vadd.f32 0.0, %v2885
    %v2887 = vpop.f32.mrb[0].mxu0
    %v2888 = vpop.f32.mrb[0].mxu0
    %v2889 = vadd.f32 0.0, %v2888
    %v2890 = vpop.f32.mrb[0].mxu0
    %2891 = vmatprep.mubr.bf16.mxu0 0
    %2892 = vmatmul.mubr.bf16.gmra.mrb[0].mxu0 %v302
    %v2893 = vpop.f32.mrb[0].mxu0
    %v2894 = vadd.f32 0.0, %v2893
    %v2895 = vpop.f32.mrb[0].mxu0
    %v2896 = vpop.f32.mrb[0].mxu0
    %v2897 = vadd.f32 0.0, %v2896
    %v2898 = vpop.f32.mrb[0].mxu0
    %2899 = vmatprep.mubr.bf16.mxu0 0
    %2900 = vmatmul.mubr.bf16.gmra.mrb[0].mxu0 %v303
    %v2901 = vpop.f32.mrb[0].mxu0
    %v2902 = vadd.f32 0.0, %v2901
    %v2903 = vpop.f32.mrb[0].mxu0
    %v2904 = vpop.f32.mrb[0].mxu0
    %v2905 = vadd.f32 0.0, %v2904
    %v2906 = vpop.f32.mrb[0].mxu0
    %2907 = vmatprep.mubr.bf16.mxu0 0
    %2908 = vmatmul.mubr.bf16.gmra.mrb[0].mxu0 %v304
    %v2909 = vpop.f32.mrb[0].mxu0
    %v2910 = vadd.f32 0.0, %v2909
    %v2911 = vpop.f32.mrb[0].mxu0
    %v2912 = vpop.f32.mrb[0].mxu0
    %v2913 = vadd.f32 0.0, %v2912
    %v2914 = vpop.f32.mrb[0].mxu0
    %2915 = vmatprep.mubr.bf16.mxu0 0
    %2916 = vmatmul.mubr.bf16.gmra.mrb[0].mxu0 %v305
    %v2917 = vpop.f32.mrb[0].mxu0
    %v2918 = vadd.f32 0.0, %v2917
    %v2919 = vpop.f32.mrb[0].mxu0
    %v2920 = vpop.f32.mrb[0].mxu0
    %v2921 = vadd.f32 0.0, %v2920
    %v2922 = vpop.f32.mrb[0].mxu0
    %2923 = vmatprep.mubr.bf16.mxu0 0
    %2924 = vmatmul.mubr.bf16.gmra.mrb[0].mxu0 %v306
    %v2925 = vpop.f32.mrb[0].mxu0
    %v2926 = vadd.f32 0.0, %v2925
    %v2927 = vpop.f32.mrb[0].mxu0
    %v2928 = vpop.f32.mrb[0].mxu0
    %v2929 = vadd.f32 0.0, %v2928
    %v2930 = vpop.f32.mrb[0].mxu0
    %2931 = vmatprep.mubr.bf16.mxu0 0
    %2932 = vmatmul.mubr.bf16.gmra.mrb[0].mxu0 %v307
    %v2933 = vpop.f32.mrb[0].mxu0
    %v2934 = vadd.f32 0.0, %v2933
    %v2935 = vpop.f32.mrb[0].mxu0
    %v2936 = vpop.f32.mrb[0].mxu0
    %v2937 = vadd.f32 0.0, %v2936
    %v2938 = vpop.f32.mrb[0].mxu0
    %2939 = vmatprep.mubr.bf16.mxu0 0
    %2940 = vmatmul.mubr.bf16.gmra.mrb[0].mxu0 %v308
    %v2941 = vpop.f32.mrb[0].mxu0
    %v2942 = vadd.f32 0.0, %v2941
    %v2943 = vpop.f32.mrb[0].mxu0
    %v2944 = vpop.f32.mrb[0].mxu0
    %v2945 = vadd.f32 0.0, %v2944
    %v2946 = vpop.f32.mrb[0].mxu0
    %2947 = vmatprep.mubr.bf16.mxu0 0
    %2948 = vmatmul.mubr.bf16.gmra.mrb[0].mxu0 %v309
    %v2949 = vpop.f32.mrb[0].mxu0
    %v2950 = vadd.f32 0.0, %v2949
    %v2951 = vpop.f32.mrb[0].mxu0
    %v2952 = vpop.f32.mrb[0].mxu0
    %v2953 = vadd.f32 0.0, %v2952
    %v2954 = vpop.f32.mrb[0].mxu0
    %2955 = vmatprep.mubr.bf16.mxu0 0
    %2956 = vmatmul.mubr.bf16.gmra.mrb[0].mxu0 %v310
    %v2957 = vpop.f32.mrb[0].mxu0
    %v2958 = vadd.f32 0.0, %v2957
    %v2959 = vpop.f32.mrb[0].mxu0
    %v2960 = vpop.f32.mrb[0].mxu0
    %v2961 = vadd.f32 0.0, %v2960
    %v2962 = vpop.f32.mrb[0].mxu0
    %2963 = vmatprep.mubr.bf16.mxu0 0
    %2964 = vmatmul.mubr.bf16.gmra.mrb[0].mxu0 %v311
    %v2965 = vpop.f32.mrb[0].mxu0
    %v2966 = vadd.f32 0.0, %v2965
    %v2967 = vpop.f32.mrb[0].mxu0
    %v2968 = vpop.f32.mrb[0].mxu0
    %v2969 = vadd.f32 0.0, %v2968
    %v2970 = vpop.f32.mrb[0].mxu0
    %2971 = vmatprep.mubr.bf16.mxu0 0
    %2972 = vmatmul.mubr.bf16.gmra.mrb[0].mxu0 %v312
    %v2973 = vpop.f32.mrb[0].mxu0
    %v2974 = vadd.f32 0.0, %v2973
    %v2975 = vpop.f32.mrb[0].mxu0
    %v2976 = vpop.f32.mrb[0].mxu0
    %v2977 = vadd.f32 0.0, %v2976
    %v2978 = vpop.f32.mrb[0].mxu0
    %2979 = vmatprep.mubr.bf16.mxu0 0
    %2980 = vmatmul.mubr.bf16.gmra.mrb[0].mxu0 %v313
    %v2981 = vpop.f32.mrb[0].mxu0
    %v2982 = vadd.f32 0.0, %v2981
    %v2983 = vpop.f32.mrb[0].mxu0
    %v2984 = vpop.f32.mrb[0].mxu0
    %v2985 = vadd.f32 0.0, %v2984
    %v2986 = vpop.f32.mrb[0].mxu0
    %2987 = vmatprep.mubr.bf16.mxu0 0
    %2988 = vmatmul.mubr.bf16.gmra.mrb[0].mxu0 %v314
    %v2989 = vpop.f32.mrb[0].mxu0
    %v2990 = vadd.f32 0.0, %v2989
    %v2991 = vpop.f32.mrb[0].mxu0
    %v2992 = vpop.f32.mrb[0].mxu0
    %v2993 = vadd.f32 0.0, %v2992
    %v2994 = vpop.f32.mrb[0].mxu0
    %2995 = vmatprep.mubr.bf16.mxu0 0
    %2996 = vmatmul.mubr.bf16.gmra.mrb[0].mxu0 %v315
    %v2997 = vpop.f32.mrb[0].mxu0
    %v2998 = vadd.f32 0.0, %v2997
    %v2999 = vpop.f32.mrb[0].mxu0
    %v3000 = vpop.f32.mrb[0].mxu0
    %v3001 = vadd.f32 0.0, %v3000
    %v3002 = vpop.f32.mrb[0].mxu0
    %3003 = vmatprep.mubr.bf16.mxu0 0
    %3004 = vmatmul.mubr.bf16.gmra.mrb[0].mxu0 %v316
    %v3005 = vpop.f32.mrb[0].mxu0
    %v3006 = vadd.f32 0.0, %v3005
    %v3007 = vpop.f32.mrb[0].mxu0
    %v3008 = vpop.f32.mrb[0].mxu0
    %v3009 = vadd.f32 0.0, %v3008
    %v3010 = vpop.f32.mrb[0].mxu0
    %3011 = vmatprep.mubr.bf16.mxu0 0
    %3012 = vmatmul.mubr.bf16.gmra.mrb[0].mxu0 %v317
    %v3013 = vpop.f32.mrb[0].mxu0
    %v3014 = vadd.f32 0.0, %v3013
    %v3015 = vpop.f32.mrb[0].mxu0
    %v3016 = vpop.f32.mrb[0].mxu0
    %v3017 = vadd.f32 0.0, %v3016
    %v3018 = vpop.f32.mrb[0].mxu0
    %3019 = vdwg.mxu0
    %v3020 = vpack.c.bf16 %v2481, %v2478
    %v3021 = vpack.c.bf16 %v2489, %v2486
    %v3022 = vpack.c.bf16 %v2497, %v2494
    %v3023 = vpack.c.bf16 %v2505, %v2502
    %v3024 = vpack.c.bf16 %v2513, %v2510
    %v3025 = vpack.c.bf16 %v2521, %v2518
    %v3026 = vpack.c.bf16 %v2529, %v2526
    %v3027 = vpack.c.bf16 %v2537, %v2534
    %v3028 = vpack.c.bf16 %v2545, %v2542
    %v3029 = vpack.c.bf16 %v2553, %v2550
    %v3030 = vpack.c.bf16 %v2561, %v2558
    %v3031 = vpack.c.bf16 %v2569, %v2566
    %v3032 = vpack.c.bf16 %v2577, %v2574
    %v3033 = vpack.c.bf16 %v2585, %v2582
    %v3034 = vpack.c.bf16 %v2593, %v2590
    %v3035 = vpack.c.bf16 %v2601, %v2598
    %v3036 = vpack.c.bf16 %v2609, %v2606
    %v3037 = vpack.c.bf16 %v2617, %v2614
    %v3038 = vpack.c.bf16 %v2625, %v2622
    %v3039 = vpack.c.bf16 %v2633, %v2630
    %v3040 = vpack.c.bf16 %v2641, %v2638
    %v3041 = vpack.c.bf16 %v2649, %v2646
    %v3042 = vpack.c.bf16 %v2657, %v2654
    %v3043 = vpack.c.bf16 %v2665, %v2662
    %v3044 = vpack.c.bf16 %v2673, %v2670
    %v3045 = vpack.c.bf16 %v2681, %v2678
    %v3046 = vpack.c.bf16 %v2689, %v2686
    %v3047 = vpack.c.bf16 %v2697, %v2694
    %v3048 = vpack.c.bf16 %v2705, %v2702
    %v3049 = vpack.c.bf16 %v2713, %v2710
    %v3050 = vpack.c.bf16 %v2721, %v2718
    %v3051 = vpack.c.bf16 %v2729, %v2726
    %v3052 = vpack.c.bf16 %v2737, %v2734
    %v3053 = vpack.c.bf16 %v2745, %v2742
    %v3054 = vpack.c.bf16 %v2753, %v2750
    %v3055 = vpack.c.bf16 %v2761, %v2758
    %v3056 = vpack.c.bf16 %v2769, %v2766
    %v3057 = vpack.c.bf16 %v2777, %v2774
    %v3058 = vpack.c.bf16 %v2785, %v2782
    %v3059 = vpack.c.bf16 %v2793, %v2790
    %v3060 = vpack.c.bf16 %v2801, %v2798
    %v3061 = vpack.c.bf16 %v2809, %v2806
    %v3062 = vpack.c.bf16 %v2817, %v2814
    %v3063 = vpack.c.bf16 %v2825, %v2822
    %v3064 = vpack.c.bf16 %v2833, %v2830
    %v3065 = vpack.c.bf16 %v2841, %v2838
    %v3066 = vpack.c.bf16 %v2849, %v2846
    %v3067 = vpack.c.bf16 %v2857, %v2854
    %v3068 = vpack.c.bf16 %v2865, %v2862
    %v3069 = vpack.c.bf16 %v2873, %v2870
    %v3070 = vpack.c.bf16 %v2881, %v2878
    %v3071 = vpack.c.bf16 %v2889, %v2886
    %v3072 = vpack.c.bf16 %v2897, %v2894
    %v3073 = vpack.c.bf16 %v2905, %v2902
    %v3074 = vpack.c.bf16 %v2913, %v2910
    %v3075 = vpack.c.bf16 %v2921, %v2918
    %v3076 = vpack.c.bf16 %v2929, %v2926
    %v3077 = vpack.c.bf16 %v2937, %v2934
    %v3078 = vpack.c.bf16 %v2945, %v2942
    %v3079 = vpack.c.bf16 %v2953, %v2950
    %v3080 = vpack.c.bf16 %v2961, %v2958
    %v3081 = vpack.c.bf16 %v2969, %v2966
    %v3082 = vpack.c.bf16 %v2977, %v2974
    %v3083 = vpack.c.bf16 %v2985, %v2982
    %v3084 = vpack.c.bf16 %v2993, %v2990
    %v3085 = vpack.c.bf16 %v3001, %v2998
    %v3086 = vpack.c.bf16 %v3009, %v3006
    %v3087 = vpack.c.bf16 %v3017, %v3014
    %v3156 = vunpack.c.l.b16 %v3020
    %v3157 = vunpack.c.h.b16 %v3020
    %v3158 = vunpack.c.l.b16 %v3021
    %v3159 = vunpack.c.h.b16 %v3021
    %v3160 = vunpack.c.l.b16 %v3022
    %v3161 = vunpack.c.h.b16 %v3022
    %v3162 = vunpack.c.l.b16 %v3023
    %v3163 = vunpack.c.h.b16 %v3023
    %v3164 = vunpack.c.l.b16 %v3024
    %v3165 = vunpack.c.h.b16 %v3024
    %v3166 = vunpack.c.l.b16 %v3025
    %v3167 = vunpack.c.h.b16 %v3025
    %v3168 = vunpack.c.l.b16 %v3026
    %v3169 = vunpack.c.h.b16 %v3026
    %v3170 = vunpack.c.l.b16 %v3027
    %v3171 = vunpack.c.h.b16 %v3027
    %v3172 = vunpack.c.l.b16 %v3028
    %v3173 = vunpack.c.h.b16 %v3028
    %v3174 = vunpack.c.l.b16 %v3029
    %v3175 = vunpack.c.h.b16 %v3029
    %v3176 = vunpack.c.l.b16 %v3030
    %v3177 = vunpack.c.h.b16 %v3030
    %v3178 = vunpack.c.l.b16 %v3031
    %v3179 = vunpack.c.h.b16 %v3031
    %v3180 = vunpack.c.l.b16 %v3032
    %v3181 = vunpack.c.h.b16 %v3032
    %v3182 = vunpack.c.l.b16 %v3033
    %v3183 = vunpack.c.h.b16 %v3033
    %v3184 = vunpack.c.l.b16 %v3034
    %v3185 = vunpack.c.h.b16 %v3034
    %v3186 = vunpack.c.l.b16 %v3035
    %v3187 = vunpack.c.h.b16 %v3035
    %v3188 = vunpack.c.l.b16 %v3036
    %v3189 = vunpack.c.h.b16 %v3036
    %v3190 = vunpack.c.l.b16 %v3037
    %v3191 = vunpack.c.h.b16 %v3037
    %v3192 = vunpack.c.l.b16 %v3038
    %v3193 = vunpack.c.h.b16 %v3038
    %v3194 = vunpack.c.l.b16 %v3039
    %v3195 = vunpack.c.h.b16 %v3039
    %v3196 = vunpack.c.l.b16 %v3040
    %v3197 = vunpack.c.h.b16 %v3040
    %v3198 = vunpack.c.l.b16 %v3041
    %v3199 = vunpack.c.h.b16 %v3041
    %v3200 = vunpack.c.l.b16 %v3042
    %v3201 = vunpack.c.h.b16 %v3042
    %v3202 = vunpack.c.l.b16 %v3043
    %v3203 = vunpack.c.h.b16 %v3043
    %v3204 = vunpack.c.l.b16 %v3044
    %v3205 = vunpack.c.h.b16 %v3044
    %v3206 = vunpack.c.l.b16 %v3045
    %v3207 = vunpack.c.h.b16 %v3045
    %v3208 = vunpack.c.l.b16 %v3046
    %v3209 = vunpack.c.h.b16 %v3046
    %v3210 = vunpack.c.l.b16 %v3047
    %v3211 = vunpack.c.h.b16 %v3047
    %v3212 = vunpack.c.l.b16 %v3048
    %v3213 = vunpack.c.h.b16 %v3048
    %v3214 = vunpack.c.l.b16 %v3049
    %v3215 = vunpack.c.h.b16 %v3049
    %v3216 = vunpack.c.l.b16 %v3050
    %v3217 = vunpack.c.h.b16 %v3050
    %v3218 = vunpack.c.l.b16 %v3051
    %v3219 = vunpack.c.h.b16 %v3051
    %v3220 = vunpack.c.l.b16 %v3052
    %v3221 = vunpack.c.h.b16 %v3052
    %v3222 = vunpack.c.l.b16 %v3053
    %v3223 = vunpack.c.h.b16 %v3053
    %v3224 = vunpack.c.l.b16 %v3054
    %v3225 = vunpack.c.h.b16 %v3054
    %v3226 = vunpack.c.l.b16 %v3055
    %v3227 = vunpack.c.h.b16 %v3055
    %v3228 = vunpack.c.l.b16 %v3056
    %v3229 = vunpack.c.h.b16 %v3056
    %v3230 = vunpack.c.l.b16 %v3057
    %v3231 = vunpack.c.h.b16 %v3057
    %v3232 = vunpack.c.l.b16 %v3058
    %v3233 = vunpack.c.h.b16 %v3058
    %v3234 = vunpack.c.l.b16 %v3059
    %v3235 = vunpack.c.h.b16 %v3059
    %v3236 = vunpack.c.l.b16 %v3060
    %v3237 = vunpack.c.h.b16 %v3060
    %v3238 = vunpack.c.l.b16 %v3061
    %v3239 = vunpack.c.h.b16 %v3061
    %v3240 = vunpack.c.l.b16 %v3062
    %v3241 = vunpack.c.h.b16 %v3062
    %v3242 = vunpack.c.l.b16 %v3063
    %v3243 = vunpack.c.h.b16 %v3063
    %v3244 = vunpack.c.l.b16 %v3064
    %v3245 = vunpack.c.h.b16 %v3064
    %v3246 = vunpack.c.l.b16 %v3065
    %v3247 = vunpack.c.h.b16 %v3065
    %v3248 = vunpack.c.l.b16 %v3066
    %v3249 = vunpack.c.h.b16 %v3066
    %v3250 = vunpack.c.l.b16 %v3067
    %v3251 = vunpack.c.h.b16 %v3067
    %v3252 = vunpack.c.l.b16 %v3068
    %v3253 = vunpack.c.h.b16 %v3068
    %v3254 = vunpack.c.l.b16 %v3069
    %v3255 = vunpack.c.h.b16 %v3069
    %v3256 = vunpack.c.l.b16 %v3070
    %v3257 = vunpack.c.h.b16 %v3070
    %v3258 = vunpack.c.l.b16 %v3071
    %v3259 = vunpack.c.h.b16 %v3071
    %v3260 = vunpack.c.l.b16 %v3072
    %v3261 = vunpack.c.h.b16 %v3072
    %v3262 = vunpack.c.l.b16 %v3073
    %v3263 = vunpack.c.h.b16 %v3073
    %v3264 = vunpack.c.l.b16 %v3074
    %v3265 = vunpack.c.h.b16 %v3074
    %v3266 = vunpack.c.l.b16 %v3075
    %v3267 = vunpack.c.h.b16 %v3075
    %v3268 = vunpack.c.l.b16 %v3076
    %v3269 = vunpack.c.h.b16 %v3076
    %v3270 = vunpack.c.l.b16 %v3077
    %v3271 = vunpack.c.h.b16 %v3077
    %v3272 = vunpack.c.l.b16 %v3078
    %v3273 = vunpack.c.h.b16 %v3078
    %v3274 = vunpack.c.l.b16 %v3079
    %v3275 = vunpack.c.h.b16 %v3079
    %v3276 = vunpack.c.l.b16 %v3080
    %v3277 = vunpack.c.h.b16 %v3080
    %v3278 = vunpack.c.l.b16 %v3081
    %v3279 = vunpack.c.h.b16 %v3081
    %v3280 = vunpack.c.l.b16 %v3082
    %v3281 = vunpack.c.h.b16 %v3082
    %v3282 = vunpack.c.l.b16 %v3083
    %v3283 = vunpack.c.h.b16 %v3083
    %v3284 = vunpack.c.l.b16 %v3084
    %v3285 = vunpack.c.h.b16 %v3084
    %v3286 = vunpack.c.l.b16 %v3085
    %v3287 = vunpack.c.h.b16 %v3085
    %v3288 = vunpack.c.l.b16 %v3086
    %v3289 = vunpack.c.h.b16 %v3086
    %v3290 = vunpack.c.l.b16 %v3087
    %v3291 = vunpack.c.h.b16 %v3087
    %v3292 = vld [vmem:[#allocation8] sm:$0xff]
    %v3293 = vld [vmem:[#allocation8 + $0x8] sm:$0xff]
    %v3294 = vld [vmem:[#allocation8 + $0x10] sm:$0xff]
    %v3295 = vld [vmem:[#allocation8 + $0x18] sm:$0xff]
    %v3296 = vld [vmem:[#allocation7] sm:$0xf]
    %v3297 = vld [vmem:[#allocation7 + $0x4] sm:$0xf]
    %v3298 = vld [vmem:[#allocation7 + $0x8] sm:$0xf]
    %v3299 = vld [vmem:[#allocation7 + $0xc] sm:$0xf]
    %v3300 = vld [vmem:[#allocation7 + $0x10] sm:$0xf]
    %v3301 = vld [vmem:[#allocation7 + $0x14] sm:$0xf]
    %v3302 = vld [vmem:[#allocation7 + $0x18] sm:$0xf]
    %v3303 = vld [vmem:[#allocation7 + $0x1c] sm:$0xf]
    %v3304 = vld [vmem:[#allocation7 + $0x20] sm:$0xf]
    %v3305 = vld [vmem:[#allocation7 + $0x24] sm:$0xf]
    %v3306 = vld [vmem:[#allocation7 + $0x28] sm:$0xf]
    %v3307 = vld [vmem:[#allocation7 + $0x2c] sm:$0xf]
    %v3308 = vld [vmem:[#allocation7 + $0x30] sm:$0xf]
    %v3309 = vld [vmem:[#allocation7 + $0x34] sm:$0xf]
    %v3310 = vld [vmem:[#allocation7 + $0x38] sm:$0xf]
    %v3311 = vld [vmem:[#allocation7 + $0x3c] sm:$0xf]
    %v3312 = vld [vmem:[%s4] sm:$0xf]
    %v3313 = vld [vmem:[%s4 + $0x4] sm:$0xf]
    %v3314 = vld [vmem:[%s4 + $0x8] sm:$0xf]
    %v3315 = vld [vmem:[%s4 + $0xc] sm:$0xf]
    %v3316 = vld [vmem:[%s4 + $0x10] sm:$0xf]
    %v3317 = vld [vmem:[%s4 + $0x14] sm:$0xf]
    %v3318 = vld [vmem:[%s4 + $0x18] sm:$0xf]
    %v3319 = vld [vmem:[%s4 + $0x1c] sm:$0xf]
    %v3320 = vld [vmem:[%s4 + $0x20] sm:$0xf]
    %v3321 = vld [vmem:[%s4 + $0x24] sm:$0xf]
    %v3322 = vld [vmem:[%s4 + $0x28] sm:$0xf]
    %v3323 = vld [vmem:[%s4 + $0x2c] sm:$0xf]
    %v3324 = vld [vmem:[%s4 + $0x30] sm:$0xf]
    %v3325 = vld [vmem:[%s4 + $0x34] sm:$0xf]
    %v3326 = vld [vmem:[%s4 + $0x38] sm:$0xf]
    %v3327 = vld [vmem:[%s4 + $0x3c] sm:$0xf]
    %v3328 = vld [vmem:[%s4 + $0x40] sm:$0xf]
    %v3329 = vld [vmem:[%s5] sm:$0xff]
    %v3330 = vld [vmem:[%s5 + $0x8] sm:$0xff]
    %v3331 = vld [vmem:[%s5 + $0x10] sm:$0xff]
    %v3332 = vld [vmem:[%s5 + $0x18] sm:$0xff]
    %v3333 = vld [vmem:[%s5 + $0x20] sm:$0xff]
    %v3334 = vld [vmem:[%s5 + $0x28] sm:$0xff]
    %v3335 = vld [vmem:[%s5 + $0x30] sm:$0xff]
    %v3336 = vld [vmem:[%s5 + $0x38] sm:$0xff]
    %v3337 = vld [vmem:[%s5 + $0x40] sm:$0xff]
    %v3338 = vld [vmem:[%s5 + $0x48] sm:$0xff]
    %v3339 = vld [vmem:[%s5 + $0x50] sm:$0xff]
    %v3340 = vld [vmem:[%s5 + $0x58] sm:$0xff]
    %v3341 = vld [vmem:[%s5 + $0x60] sm:$0xff]
    %v3342 = vld [vmem:[%s5 + $0x68] sm:$0xff]
    %v3343 = vld [vmem:[%s5 + $0x70] sm:$0xff]
    %v3344 = vld [vmem:[%s5 + $0x78] sm:$0xff]
    %v3345 = vld [vmem:[%s5 + $0x80] sm:$0xff]
    %3346 = vxpose.xlu0.c.b16.start [1/8] %v2307, 128
    %3347 = vxpose.xlu0.c.b16.cont [2/8] %v2308, 128
    %3348 = vxpose.xlu0.c.b16.cont [3/8] %v2309, 128
    %3349 = vxpose.xlu0.c.b16.cont [4/8] %v2310, 128
    %3350 = vxpose.xlu0.c.b16.cont [5/8] %v2311, 128
    %3351 = vxpose.xlu0.c.b16.cont [6/8] %v2312, 128
    %3352 = vxpose.xlu0.c.b16.cont [7/8] %v2313, 128
    %3353 = vxpose.xlu0.c.b16.end [8/8] %v2314, 128
    %v3354 = vpop.trf.xlu0
    %v3355 = vpop.trf.xlu0
    %v3356 = vpop.trf.xlu0
    %v3357 = vpop.trf.xlu0
    %v3358 = vpop.trf.xlu0
    %v3359 = vpop.trf.xlu0
    %v3360 = vpop.trf.xlu0
    %v3361 = vpop.trf.xlu0
    %3362 = vxpose.xlu0.c.b16.start [1/8] %v2315, 128
    %3363 = vxpose.xlu0.c.b16.cont [2/8] 0, 128
    %3364 = vxpose.xlu0.c.b16.cont [3/8] 0, 128
    %3365 = vxpose.xlu0.c.b16.cont [4/8] 0, 128
    %3366 = vxpose.xlu0.c.b16.cont [5/8] 0, 128
    %3367 = vxpose.xlu0.c.b16.cont [6/8] 0, 128
    %3368 = vxpose.xlu0.c.b16.cont [7/8] 0, 128
    %3369 = vxpose.xlu0.c.b16.end [8/8] 0, 128
    %v3370 = vpop.trf.xlu0
    %v3371 = vpop.trf.xlu0
    %v3372 = vpop.trf.xlu0
    %v3373 = vpop.trf.xlu0
    %v3374 = vpop.trf.xlu0
    %v3375 = vpop.trf.xlu0
    %v3376 = vpop.trf.xlu0
    %v3377 = vpop.trf.xlu0
    %v3378 = vpack.c.b16 %v3157, %v3156
    %v3379 = vpack.c.b16 %v3159, %v3158
    %v3380 = vpack.c.b16 %v3161, %v3160
    %v3381 = vpack.c.b16 %v3163, %v3162
    %v3382 = vpack.c.b16 %v3165, %v3164
    %v3383 = vpack.c.b16 %v3167, %v3166
    %v3384 = vpack.c.b16 %v3169, %v3168
    %v3385 = vpack.c.b16 %v3171, %v3170
    %v3386 = vpack.c.b16 %v3172, %v3172
    %vm3395 = vcmask 64512
    %v3397 = vsel %vm3395, %v3370, 0
    %v3400 = vsel %vm3395, %v3371, 0
    %vm3402 = vcmask 1043456
    %v3404 = vsel %vm3402, %v3386, 0
    %3406 = vmatprep.subr.bf16.mxu0 0
    %3407 = vmatpush1.bf16.msra.mxu0 %v3378
    %3408 = vmatprep.subr.bf16.mxu0 0
    %3409 = vmatpush1.bf16.msra.mxu0 %v3379
    %3410 = vmatprep.subr.bf16.mxu0 0
    %3411 = vmatpush1.bf16.msra.mxu0 %v3380
    %3412 = vmatprep.subr.bf16.mxu0 0
    %3413 = vmatpush1.bf16.msra.mxu0 %v3381
    %3414 = vmatprep.subr.bf16.mxu0 0
    %3415 = vmatpush1.bf16.msra.mxu0 %v3382
    %3416 = vmatprep.subr.bf16.mxu0 0
    %3417 = vmatpush1.bf16.msra.mxu0 %v3383
    %3418 = vmatprep.subr.bf16.mxu0 0
    %3419 = vmatpush1.bf16.msra.mxu0 %v3384
    %3420 = vmatprep.subr.bf16.mxu0 0
    %3421 = vmatpush1.bf16.msra.mxu0 %v3385
    %3422 = vmatprep.subr.bf16.mxu0 0
    %3423 = vmatpush1.bf16.msra.mxu0 %v3404
    %3424 = vmatprep.subr.bf16.mxu0 0
    %3425 = vmatpush1.bf16.msra.mxu0 0
    %3426 = vmatprep.subr.bf16.mxu0 0
    %3427 = vmatpush1.bf16.msra.mxu0 0
    %3428 = vmatprep.subr.bf16.mxu0 0
    %3429 = vmatpush1.bf16.msra.mxu0 0
    %3430 = vmatprep.subr.bf16.mxu0 0
    %3431 = vmatpush1.bf16.msra.mxu0 0
    %3432 = vmatprep.subr.bf16.mxu0 0
    %3433 = vmatpush1.bf16.msra.mxu0 0
    %3434 = vmatprep.subr.bf16.mxu0 0
    %3435 = vmatpush1.bf16.msra.mxu0 0
    %3436 = vmatprep.subr.bf16.mxu0 0
    %3437 = vmatpush1.bf16.msra.mxu0 0
    %3438 = vmatprep.mubr.bf16.mxu0 %v3397
    %3439 = vmatmul.mubr.bf16.gmra.mrb[0].mxu0 %v3354
    %v3440 = vpop.f32.mrb[0].mxu0
    %v3441 = vadd.f32 0.0, %v3440
    %v3442 = vpop.f32.mrb[0].mxu0
    %v3443 = vpop.f32.mrb[0].mxu0
    %v3444 = vadd.f32 0.0, %v3443
    %v3445 = vpop.f32.mrb[0].mxu0
    %3446 = vmatprep.mubr.bf16.mxu0 %v3400
    %3447 = vmatmul.mubr.bf16.gmra.mrb[0].mxu0 %v3355
    %v3448 = vpop.f32.mrb[0].mxu0
    %v3449 = vadd.f32 0.0, %v3448
    %v3450 = vpop.f32.mrb[0].mxu0
    %v3451 = vpop.f32.mrb[0].mxu0
    %v3452 = vadd.f32 0.0, %v3451
    %v3453 = vpop.f32.mrb[0].mxu0
    %3454 = vdwg.mxu0
    %v3455 = vmul.f32 %v3441, %v3292
    %v3456 = vmul.f32 %v3444, %v3293
    %v3457 = vmul.f32 %v3449, %v3294
    %v3458 = vmul.f32 %v3452, %v3295
    %v3459 = vpack.c.bf16 %v3456, %v3455
    %v3460 = vpack.c.bf16 %v3458, %v3457
    %v3477 = vunpack.c.l.b16 %v3296
    %v3478 = vunpack.c.l.b16 %v3297
    %v3479 = vunpack.c.l.b16 %v3298
    %v3480 = vunpack.c.l.b16 %v3299
    %v3481 = vunpack.c.l.b16 %v3300
    %v3482 = vunpack.c.l.b16 %v3301
    %v3483 = vunpack.c.l.b16 %v3302
    %v3484 = vunpack.c.l.b16 %v3303
    %v3485 = vunpack.c.l.b16 %v3304
    %v3486 = vunpack.c.l.b16 %v3305
    %v3487 = vunpack.c.l.b16 %v3306
    %v3488 = vunpack.c.l.b16 %v3307
    %v3489 = vunpack.c.l.b16 %v3308
    %v3490 = vunpack.c.l.b16 %v3309
    %v3491 = vunpack.c.l.b16 %v3310
    %v3492 = vunpack.c.l.b16 %v3311
    %v3493 = vpack.c.b16 %v3478, %v3477
    %v3494 = vpack.c.b16 %v3480, %v3479
    %v3495 = vpack.c.b16 %v3482, %v3481
    %v3496 = vpack.c.b16 %v3484, %v3483
    %v3497 = vpack.c.b16 %v3486, %v3485
    %v3498 = vpack.c.b16 %v3488, %v3487
    %v3499 = vpack.c.b16 %v3490, %v3489
    %v3500 = vpack.c.b16 %v3492, %v3491
    %3509 = vmatprep.subr.bf16.mxu0 0
    %3510 = vmatpush1.bf16.msra.mxu0 %v3493
    %3511 = vmatprep.subr.bf16.mxu0 0
    %3512 = vmatpush1.bf16.msra.mxu0 %v3494
    %3513 = vmatprep.subr.bf16.mxu0 0
    %3514 = vmatpush1.bf16.msra.mxu0 %v3495
    %3515 = vmatprep.subr.bf16.mxu0 0
    %3516 = vmatpush1.bf16.msra.mxu0 %v3496
    %3517 = vmatprep.subr.bf16.mxu0 0
    %3518 = vmatpush1.bf16.msra.mxu0 %v3497
    %3519 = vmatprep.subr.bf16.mxu0 0
    %3520 = vmatpush1.bf16.msra.mxu0 %v3498
    %3521 = vmatprep.subr.bf16.mxu0 0
    %3522 = vmatpush1.bf16.msra.mxu0 %v3499
    %3523 = vmatprep.subr.bf16.mxu0 0
    %3524 = vmatpush1.bf16.msra.mxu0 %v3500
    %3525 = vmatprep.subr.bf16.mxu0 0
    %3526 = vmatpush1.bf16.msra.mxu0 0
    %3527 = vmatprep.subr.bf16.mxu0 0
    %3528 = vmatpush1.bf16.msra.mxu0 0
    %3529 = vmatprep.subr.bf16.mxu0 0
    %3530 = vmatpush1.bf16.msra.mxu0 0
    %3531 = vmatprep.subr.bf16.mxu0 0
    %3532 = vmatpush1.bf16.msra.mxu0 0
    %3533 = vmatprep.subr.bf16.mxu0 0
    %3534 = vmatpush1.bf16.msra.mxu0 0
    %3535 = vmatprep.subr.bf16.mxu0 0
    %3536 = vmatpush1.bf16.msra.mxu0 0
    %3537 = vmatprep.subr.bf16.mxu0 0
    %3538 = vmatpush1.bf16.msra.mxu0 0
    %3539 = vmatprep.subr.bf16.mxu0 0
    %3540 = vmatpush1.bf16.msra.mxu0 0
    %3541 = vmatprep.mubr.bf16.mxu0 0
    %3542 = vmatmul.mubr.bf16.gmra.mrb[0].mxu0 %v3459
    %v3543 = vpop.f32.mrb[0].mxu0
    %v3544 = vadd.f32 0.0, %v3543
    %v3545 = vpop.f32.mrb[0].mxu0
    %v3546 = vpop.f32.mrb[0].mxu0
    %v3547 = vadd.f32 0.0, %v3546
    %v3548 = vpop.f32.mrb[0].mxu0
    %3549 = vmatprep.mubr.bf16.mxu0 0
    %3550 = vmatmul.mubr.bf16.gmra.mrb[0].mxu0 %v3460
    %v3551 = vpop.f32.mrb[0].mxu0
    %v3552 = vadd.f32 0.0, %v3551
    %v3553 = vpop.f32.mrb[0].mxu0
    %v3554 = vpop.f32.mrb[0].mxu0
    %v3555 = vadd.f32 0.0, %v3554
    %v3556 = vpop.f32.mrb[0].mxu0
    %3557 = vdwg.mxu0
    %v3558 = vpack.c.bf16 %v3547, %v3544
    %v3559 = vpack.c.bf16 %v3555, %v3552
    %v3577 = vunpack.c.l.b16 %v3312
    %v3578 = vunpack.c.l.b16 %v3313
    %v3579 = vunpack.c.l.b16 %v3314
    %v3580 = vunpack.c.l.b16 %v3315
    %v3581 = vunpack.c.l.b16 %v3316
    %v3582 = vunpack.c.l.b16 %v3317
    %v3583 = vunpack.c.l.b16 %v3318
    %v3584 = vunpack.c.l.b16 %v3319
    %v3585 = vunpack.c.l.b16 %v3320
    %v3586 = vunpack.c.l.b16 %v3321
    %v3587 = vunpack.c.l.b16 %v3322
    %v3588 = vunpack.c.l.b16 %v3323
    %v3589 = vunpack.c.l.b16 %v3324
    %v3590 = vunpack.c.l.b16 %v3325
    %v3591 = vunpack.c.l.b16 %v3326
    %v3592 = vunpack.c.l.b16 %v3327
    %v3593 = vunpack.c.l.b16 %v3328
    %v3594 = vpack.c.b16 %v3578, %v3577
    %v3595 = vpack.c.b16 %v3580, %v3579
    %v3596 = vpack.c.b16 %v3582, %v3581
    %v3597 = vpack.c.b16 %v3584, %v3583
    %v3598 = vpack.c.b16 %v3586, %v3585
    %v3599 = vpack.c.b16 %v3588, %v3587
    %v3600 = vpack.c.b16 %v3590, %v3589
    %v3601 = vpack.c.b16 %v3592, %v3591
    %v3602 = vpack.c.b16 %v3593, %v3593
    %v3604 = vsel %vm959, %v3594, 0
    %v3607 = vsel %vm959, %v3595, 0
    %v3610 = vsel %vm959, %v3596, 0
    %v3613 = vsel %vm959, %v3597, 0
    %v3616 = vsel %vm959, %v3598, 0
    %v3619 = vsel %vm959, %v3599, 0
    %v3622 = vsel %vm959, %v3600, 0
    %v3625 = vsel %vm959, %v3601, 0
    %v3628 = vsel %vm959, %v3602, 0
    %3630 = vmatprep.subr.bf16.mxu0 0
    %3631 = vmatpush1.bf16.msra.mxu0 %v3558
    %3632 = vmatprep.subr.bf16.mxu0 0
    %3633 = vmatpush1.bf16.msra.mxu0 %v3559
    %3634 = vmatprep.subr.bf16.mxu0 0
    %3635 = vmatpush1.bf16.msra.mxu0 0
    %3636 = vmatprep.subr.bf16.mxu0 0
    %3637 = vmatpush1.bf16.msra.mxu0 0
    %3638 = vmatprep.subr.bf16.mxu0 0
    %3639 = vmatpush1.bf16.msra.mxu0 0
    %3640 = vmatprep.subr.bf16.mxu0 0
    %3641 = vmatpush1.bf16.msra.mxu0 0
    %3642 = vmatprep.subr.bf16.mxu0 0
    %3643 = vmatpush1.bf16.msra.mxu0 0
    %3644 = vmatprep.subr.bf16.mxu0 0
    %3645 = vmatpush1.bf16.msra.mxu0 0
    %3646 = vmatprep.subr.bf16.mxu0 0
    %3647 = vmatpush1.bf16.msra.mxu0 0
    %3648 = vmatprep.subr.bf16.mxu0 0
    %3649 = vmatpush1.bf16.msra.mxu0 0
    %3650 = vmatprep.subr.bf16.mxu0 0
    %3651 = vmatpush1.bf16.msra.mxu0 0
    %3652 = vmatprep.subr.bf16.mxu0 0
    %3653 = vmatpush1.bf16.msra.mxu0 0
    %3654 = vmatprep.subr.bf16.mxu0 0
    %3655 = vmatpush1.bf16.msra.mxu0 0
    %3656 = vmatprep.subr.bf16.mxu0 0
    %3657 = vmatpush1.bf16.msra.mxu0 0
    %3658 = vmatprep.subr.bf16.mxu0 0
    %3659 = vmatpush1.bf16.msra.mxu0 0
    %3660 = vmatprep.subr.bf16.mxu0 0
    %3661 = vmatpush1.bf16.msra.mxu0 0
    %3662 = vmatprep.mubr.bf16.mxu0 0
    %3663 = vmatmul.mubr.bf16.gmra.mrb[0].mxu0 %v3604
    %v3664 = vpop.f32.mrb[0].mxu0
    %v3665 = vadd.f32 %v3329, %v3664
    %v3666 = vpop.f32.mrb[0].mxu0
    %v3667 = vpop.f32.mrb[0].mxu0
    %v3668 = vadd.f32 %v3330, %v3667
    %v3669 = vpop.f32.mrb[0].mxu0
    %3670 = vmatprep.mubr.bf16.mxu0 0
    %3671 = vmatmul.mubr.bf16.gmra.mrb[0].mxu0 %v3607
    %v3672 = vpop.f32.mrb[0].mxu0
    %v3673 = vadd.f32 %v3331, %v3672
    %v3674 = vpop.f32.mrb[0].mxu0
    %v3675 = vpop.f32.mrb[0].mxu0
    %v3676 = vadd.f32 %v3332, %v3675
    %v3677 = vpop.f32.mrb[0].mxu0
    %3678 = vmatprep.mubr.bf16.mxu0 0
    %3679 = vmatmul.mubr.bf16.gmra.mrb[0].mxu0 %v3610
    %v3680 = vpop.f32.mrb[0].mxu0
    %v3681 = vadd.f32 %v3333, %v3680
    %v3682 = vpop.f32.mrb[0].mxu0
    %v3683 = vpop.f32.mrb[0].mxu0
    %v3684 = vadd.f32 %v3334, %v3683
    %v3685 = vpop.f32.mrb[0].mxu0
    %3686 = vmatprep.mubr.bf16.mxu0 0
    %3687 = vmatmul.mubr.bf16.gmra.mrb[0].mxu0 %v3613
    %v3688 = vpop.f32.mrb[0].mxu0
    %v3689 = vadd.f32 %v3335, %v3688
    %v3690 = vpop.f32.mrb[0].mxu0
    %v3691 = vpop.f32.mrb[0].mxu0
    %v3692 = vadd.f32 %v3336, %v3691
    %v3693 = vpop.f32.mrb[0].mxu0
    %3694 = vmatprep.mubr.bf16.mxu0 0
    %3695 = vmatmul.mubr.bf16.gmra.mrb[0].mxu0 %v3616
    %v3696 = vpop.f32.mrb[0].mxu0
    %v3697 = vadd.f32 %v3337, %v3696
    %v3698 = vpop.f32.mrb[0].mxu0
    %v3699 = vpop.f32.mrb[0].mxu0
    %v3700 = vadd.f32 %v3338, %v3699
    %v3701 = vpop.f32.mrb[0].mxu0
    %3702 = vmatprep.mubr.bf16.mxu0 0
    %3703 = vmatmul.mubr.bf16.gmra.mrb[0].mxu0 %v3619
    %v3704 = vpop.f32.mrb[0].mxu0
    %v3705 = vadd.f32 %v3339, %v3704
    %v3706 = vpop.f32.mrb[0].mxu0
    %v3707 = vpop.f32.mrb[0].mxu0
    %v3708 = vadd.f32 %v3340, %v3707
    %v3709 = vpop.f32.mrb[0].mxu0
    %3710 = vmatprep.mubr.bf16.mxu0 0
    %3711 = vmatmul.mubr.bf16.gmra.mrb[0].mxu0 %v3622
    %v3712 = vpop.f32.mrb[0].mxu0
    %v3713 = vadd.f32 %v3341, %v3712
    %v3714 = vpop.f32.mrb[0].mxu0
    %v3715 = vpop.f32.mrb[0].mxu0
    %v3716 = vadd.f32 %v3342, %v3715
    %v3717 = vpop.f32.mrb[0].mxu0
    %3718 = vmatprep.mubr.bf16.mxu0 0
    %3719 = vmatmul.mubr.bf16.gmra.mrb[0].mxu0 %v3625
    %v3720 = vpop.f32.mrb[0].mxu0
    %v3721 = vadd.f32 %v3343, %v3720
    %v3722 = vpop.f32.mrb[0].mxu0
    %v3723 = vpop.f32.mrb[0].mxu0
    %v3724 = vadd.f32 %v3344, %v3723
    %v3725 = vpop.f32.mrb[0].mxu0
    %3726 = vmatprep.mubr.bf16.mxu0 0
    %3727 = vmatmul.mubr.bf16.gmra.mrb[0].mxu0 %v3628
    %v3728 = vpop.f32.mrb[0].mxu0
    %v3729 = vadd.f32 %v3345, %v3728
    %v3730 = vpop.f32.mrb[0].mxu0
    %v3731 = vpop.f32.mrb[0].mxu0
    %v3732 = vpop.f32.mrb[0].mxu0
    %3733 = vdwg.mxu0
    %v3734 = vadd.f32 %v114, %v3665
    %v3735 = vadd.f32 %v115, %v3668
    %v3736 = vadd.f32 %v116, %v3673
    %v3737 = vadd.f32 %v117, %v3676
    %v3738 = vadd.f32 %v118, %v3681
    %v3739 = vadd.f32 %v119, %v3684
    %v3740 = vadd.f32 %v120, %v3689
    %v3741 = vadd.f32 %v121, %v3692
    %v3742 = vadd.f32 %v122, %v3697
    %v3743 = vadd.f32 %v123, %v3700
    %v3744 = vadd.f32 %v124, %v3705
    %v3745 = vadd.f32 %v125, %v3708
    %v3746 = vadd.f32 %v126, %v3713
    %v3747 = vadd.f32 %v127, %v3716
    %v3748 = vadd.f32 %v128, %v3721
    %v3749 = vadd.f32 %v129, %v3724
    %v3750 = vadd.f32 %v130, %v3729
    %3751 = vst [vmem:[#allocation11] sm:$0xff] %v3734
    %3752 = vst [vmem:[#allocation11 + $0x8] sm:$0xff] %v3735
    %3753 = vst [vmem:[#allocation11 + $0x10] sm:$0xff] %v3736
    %3754 = vst [vmem:[#allocation11 + $0x18] sm:$0xff] %v3737
    %3755 = vst [vmem:[#allocation11 + $0x20] sm:$0xff] %v3738
    %3756 = vst [vmem:[#allocation11 + $0x28] sm:$0xff] %v3739
    %3757 = vst [vmem:[#allocation11 + $0x30] sm:$0xff] %v3740
    %3758 = vst [vmem:[#allocation11 + $0x38] sm:$0xff] %v3741
    %3759 = vst [vmem:[#allocation11 + $0x40] sm:$0xff] %v3742
    %3760 = vst [vmem:[#allocation11 + $0x48] sm:$0xff] %v3743
    %3761 = vst [vmem:[#allocation11 + $0x50] sm:$0xff] %v3744
    %3762 = vst [vmem:[#allocation11 + $0x58] sm:$0xff] %v3745
    %3763 = vst [vmem:[#allocation11 + $0x60] sm:$0xff] %v3746
    %3764 = vst [vmem:[#allocation11 + $0x68] sm:$0xff] %v3747
    %3765 = vst [vmem:[#allocation11 + $0x70] sm:$0xff] %v3748
    %3766 = vst [vmem:[#allocation11 + $0x78] sm:$0xff] %v3749
    %3767 = vst [vmem:[#allocation11 + $0x80] sm:$0xff] %v3750
    %3768 = vxpose.xlu0.c.b16.start [1/8] %v2316, 128
    %3769 = vxpose.xlu0.c.b16.cont [2/8] %v2317, 128
    %3770 = vxpose.xlu0.c.b16.cont [3/8] %v2318, 128
    %3771 = vxpose.xlu0.c.b16.cont [4/8] %v2319, 128
    %3772 = vxpose.xlu0.c.b16.cont [5/8] %v2320, 128
    %3773 = vxpose.xlu0.c.b16.cont [6/8] %v2321, 128
    %3774 = vxpose.xlu0.c.b16.cont [7/8] %v2322, 128
    %3775 = vxpose.xlu0.c.b16.end [8/8] %v2323, 128
    %v3776 = vpop.trf.xlu0
    %v3777 = vpop.trf.xlu0
    %v3778 = vpop.trf.xlu0
    %v3779 = vpop.trf.xlu0
    %v3780 = vpop.trf.xlu0
    %v3781 = vpop.trf.xlu0
    %v3782 = vpop.trf.xlu0
    %v3783 = vpop.trf.xlu0
    %3784 = vxpose.xlu0.c.b16.start [1/8] %v2324, 128
    %3785 = vxpose.xlu0.c.b16.cont [2/8] 0, 128
    %3786 = vxpose.xlu0.c.b16.cont [3/8] 0, 128
    %3787 = vxpose.xlu0.c.b16.cont [4/8] 0, 128
    %3788 = vxpose.xlu0.c.b16.cont [5/8] 0, 128
    %3789 = vxpose.xlu0.c.b16.cont [6/8] 0, 128
    %3790 = vxpose.xlu0.c.b16.cont [7/8] 0, 128
    %3791 = vxpose.xlu0.c.b16.end [8/8] 0, 128
    %v3792 = vpop.trf.xlu0
    %v3793 = vpop.trf.xlu0
    %v3794 = vpop.trf.xlu0
    %v3795 = vpop.trf.xlu0
    %v3796 = vpop.trf.xlu0
    %v3797 = vpop.trf.xlu0
    %v3798 = vpop.trf.xlu0
    %v3799 = vpop.trf.xlu0
    %v3800 = vpack.c.b16 %v3174, %v3173
    %v3801 = vpack.c.b16 %v3176, %v3175
    %v3802 = vpack.c.b16 %v3178, %v3177
    %v3803 = vpack.c.b16 %v3180, %v3179
    %v3804 = vpack.c.b16 %v3182, %v3181
    %v3805 = vpack.c.b16 %v3184, %v3183
    %v3806 = vpack.c.b16 %v3186, %v3185
    %v3807 = vpack.c.b16 %v3188, %v3187
    %v3808 = vpack.c.b16 %v3189, %v3189
    %v3818 = vsel %vm3395, %v3792, 0
    %v3821 = vsel %vm3395, %v3793, 0
    %v3824 = vsel %vm3402, %v3808, 0
    %3826 = vmatprep.subr.bf16.mxu0 0
    %3827 = vmatpush1.bf16.msra.mxu0 %v3800
    %3828 = vmatprep.subr.bf16.mxu0 0
    %3829 = vmatpush1.bf16.msra.mxu0 %v3801
    %3830 = vmatprep.subr.bf16.mxu0 0
    %3831 = vmatpush1.bf16.msra.mxu0 %v3802
    %3832 = vmatprep.subr.bf16.mxu0 0
    %3833 = vmatpush1.bf16.msra.mxu0 %v3803
    %3834 = vmatprep.subr.bf16.mxu0 0
    %3835 = vmatpush1.bf16.msra.mxu0 %v3804
    %3836 = vmatprep.subr.bf16.mxu0 0
    %3837 = vmatpush1.bf16.msra.mxu0 %v3805
    %3838 = vmatprep.subr.bf16.mxu0 0
    %3839 = vmatpush1.bf16.msra.mxu0 %v3806
    %3840 = vmatprep.subr.bf16.mxu0 0
    %3841 = vmatpush1.bf16.msra.mxu0 %v3807
    %3842 = vmatprep.subr.bf16.mxu0 0
    %3843 = vmatpush1.bf16.msra.mxu0 %v3824
    %3844 = vmatprep.subr.bf16.mxu0 0
    %3845 = vmatpush1.bf16.msra.mxu0 0
    %3846 = vmatprep.subr.bf16.mxu0 0
    %3847 = vmatpush1.bf16.msra.mxu0 0
    %3848 = vmatprep.subr.bf16.mxu0 0
    %3849 = vmatpush1.bf16.msra.mxu0 0
    %3850 = vmatprep.subr.bf16.mxu0 0
    %3851 = vmatpush1.bf16.msra.mxu0 0
    %3852 = vmatprep.subr.bf16.mxu0 0
    %3853 = vmatpush1.bf16.msra.mxu0 0
    %3854 = vmatprep.subr.bf16.mxu0 0
    %3855 = vmatpush1.bf16.msra.mxu0 0
    %3856 = vmatprep.subr.bf16.mxu0 0
    %3857 = vmatpush1.bf16.msra.mxu0 0
    %3858 = vmatprep.mubr.bf16.mxu0 %v3818
    %3859 = vmatmul.mubr.bf16.gmra.mrb[0].mxu0 %v3776
    %v3860 = vpop.f32.mrb[0].mxu0
    %v3861 = vadd.f32 0.0, %v3860
    %v3862 = vpop.f32.mrb[0].mxu0
    %v3863 = vpop.f32.mrb[0].mxu0
    %v3864 = vadd.f32 0.0, %v3863
    %v3865 = vpop.f32.mrb[0].mxu0
    %3866 = vmatprep.mubr.bf16.mxu0 %v3821
    %3867 = vmatmul.mubr.bf16.gmra.mrb[0].mxu0 %v3777
    %v3868 = vpop.f32.mrb[0].mxu0
    %v3869 = vadd.f32 0.0, %v3868
    %v3870 = vpop.f32.mrb[0].mxu0
    %v3871 = vpop.f32.mrb[0].mxu0
    %v3872 = vadd.f32 0.0, %v3871
    %v3873 = vpop.f32.mrb[0].mxu0
    %3874 = vdwg.mxu0
    %v3875 = vmul.f32 %v3861, %v3292
    %v3876 = vmul.f32 %v3864, %v3293
    %v3877 = vmul.f32 %v3869, %v3294
    %v3878 = vmul.f32 %v3872, %v3295
    %v3879 = vpack.c.bf16 %v3876, %v3875
    %v3880 = vpack.c.bf16 %v3878, %v3877
    %3881 = vmatprep.subr.bf16.mxu0 0
    %3882 = vmatpush1.bf16.msra.mxu0 %v3493
    %3883 = vmatprep.subr.bf16.mxu0 0
    %3884 = vmatpush1.bf16.msra.mxu0 %v3494
    %3885 = vmatprep.subr.bf16.mxu0 0
    %3886 = vmatpush1.bf16.msra.mxu0 %v3495
    %3887 = vmatprep.subr.bf16.mxu0 0
    %3888 = vmatpush1.bf16.msra.mxu0 %v3496
    %3889 = vmatprep.subr.bf16.mxu0 0
    %3890 = vmatpush1.bf16.msra.mxu0 %v3497
    %3891 = vmatprep.subr.bf16.mxu0 0
    %3892 = vmatpush1.bf16.msra.mxu0 %v3498
    %3893 = vmatprep.subr.bf16.mxu0 0
    %3894 = vmatpush1.bf16.msra.mxu0 %v3499
    %3895 = vmatprep.subr.bf16.mxu0 0
    %3896 = vmatpush1.bf16.msra.mxu0 %v3500
    %3897 = vmatprep.subr.bf16.mxu0 0
    %3898 = vmatpush1.bf16.msra.mxu0 0
    %3899 = vmatprep.subr.bf16.mxu0 0
    %3900 = vmatpush1.bf16.msra.mxu0 0
    %3901 = vmatprep.subr.bf16.mxu0 0
    %3902 = vmatpush1.bf16.msra.mxu0 0
    %3903 = vmatprep.subr.bf16.mxu0 0
    %3904 = vmatpush1.bf16.msra.mxu0 0
    %3905 = vmatprep.subr.bf16.mxu0 0
    %3906 = vmatpush1.bf16.msra.mxu0 0
    %3907 = vmatprep.subr.bf16.mxu0 0
    %3908 = vmatpush1.bf16.msra.mxu0 0
    %3909 = vmatprep.subr.bf16.mxu0 0
    %3910 = vmatpush1.bf16.msra.mxu0 0
    %3911 = vmatprep.subr.bf16.mxu0 0
    %3912 = vmatpush1.bf16.msra.mxu0 0
    %3913 = vmatprep.mubr.bf16.mxu0 0
    %3914 = vmatmul.mubr.bf16.gmra.mrb[0].mxu0 %v3879
    %v3915 = vpop.f32.mrb[0].mxu0
    %v3916 = vadd.f32 0.0, %v3915
    %v3917 = vpop.f32.mrb[0].mxu0
    %v3918 = vpop.f32.mrb[0].mxu0
    %v3919 = vadd.f32 0.0, %v3918
    %v3920 = vpop.f32.mrb[0].mxu0
    %3921 = vmatprep.mubr.bf16.mxu0 0
    %3922 = vmatmul.mubr.bf16.gmra.mrb[0].mxu0 %v3880
    %v3923 = vpop.f32.mrb[0].mxu0
    %v3924 = vadd.f32 0.0, %v3923
    %v3925 = vpop.f32.mrb[0].mxu0
    %v3926 = vpop.f32.mrb[0].mxu0
    %v3927 = vadd.f32 0.0, %v3926
    %v3928 = vpop.f32.mrb[0].mxu0
    %3929 = vdwg.mxu0
    %v3930 = vpack.c.bf16 %v3919, %v3916
    %v3931 = vpack.c.bf16 %v3927, %v3924
    %3932 = vmatprep.subr.bf16.mxu0 0
    %3933 = vmatpush1.bf16.msra.mxu0 %v3930
    %3934 = vmatprep.subr.bf16.mxu0 0
    %3935 = vmatpush1.bf16.msra.mxu0 %v3931
    %3936 = vmatprep.subr.bf16.mxu0 0
    %3937 = vmatpush1.bf16.msra.mxu0 0
    %3938 = vmatprep.subr.bf16.mxu0 0
    %3939 = vmatpush1.bf16.msra.mxu0 0
    %3940 = vmatprep.subr.bf16.mxu0 0
    %3941 = vmatpush1.bf16.msra.mxu0 0
    %3942 = vmatprep.subr.bf16.mxu0 0
    %3943 = vmatpush1.bf16.msra.mxu0 0
    %3944 = vmatprep.subr.bf16.mxu0 0
    %3945 = vmatpush1.bf16.msra.mxu0 0
    %3946 = vmatprep.subr.bf16.mxu0 0
    %3947 = vmatpush1.bf16.msra.mxu0 0
    %3948 = vmatprep.subr.bf16.mxu0 0
    %3949 = vmatpush1.bf16.msra.mxu0 0
    %3950 = vmatprep.subr.bf16.mxu0 0
    %3951 = vmatpush1.bf16.msra.mxu0 0
    %3952 = vmatprep.subr.bf16.mxu0 0
    %3953 = vmatpush1.bf16.msra.mxu0 0
    %3954 = vmatprep.subr.bf16.mxu0 0
    %3955 = vmatpush1.bf16.msra.mxu0 0
    %3956 = vmatprep.subr.bf16.mxu0 0
    %3957 = vmatpush1.bf16.msra.mxu0 0
    %3958 = vmatprep.subr.bf16.mxu0 0
    %3959 = vmatpush1.bf16.msra.mxu0 0
    %3960 = vmatprep.subr.bf16.mxu0 0
    %3961 = vmatpush1.bf16.msra.mxu0 0
    %3962 = vmatprep.subr.bf16.mxu0 0
    %3963 = vmatpush1.bf16.msra.mxu0 0
    %3964 = vmatprep.mubr.bf16.mxu0 0
    %3965 = vmatmul.mubr.bf16.gmra.mrb[0].mxu0 %v3604
    %v3966 = vpop.f32.mrb[0].mxu0
    %v3967 = vadd.f32 %v3329, %v3966
    %v3968 = vpop.f32.mrb[0].mxu0
    %v3969 = vpop.f32.mrb[0].mxu0
    %v3970 = vadd.f32 %v3330, %v3969
    %v3971 = vpop.f32.mrb[0].mxu0
    %3972 = vmatprep.mubr.bf16.mxu0 0
    %3973 = vmatmul.mubr.bf16.gmra.mrb[0].mxu0 %v3607
    %v3974 = vpop.f32.mrb[0].mxu0
    %v3975 = vadd.f32 %v3331, %v3974
    %v3976 = vpop.f32.mrb[0].mxu0
    %v3977 = vpop.f32.mrb[0].mxu0
    %v3978 = vadd.f32 %v3332, %v3977
    %v3979 = vpop.f32.mrb[0].mxu0
    %3980 = vmatprep.mubr.bf16.mxu0 0
    %3981 = vmatmul.mubr.bf16.gmra.mrb[0].mxu0 %v3610
    %v3982 = vpop.f32.mrb[0].mxu0
    %v3983 = vadd.f32 %v3333, %v3982
    %v3984 = vpop.f32.mrb[0].mxu0
    %v3985 = vpop.f32.mrb[0].mxu0
    %v3986 = vadd.f32 %v3334, %v3985
    %v3987 = vpop.f32.mrb[0].mxu0
    %3988 = vmatprep.mubr.bf16.mxu0 0
    %3989 = vmatmul.mubr.bf16.gmra.mrb[0].mxu0 %v3613
    %v3990 = vpop.f32.mrb[0].mxu0
    %v3991 = vadd.f32 %v3335, %v3990
    %v3992 = vpop.f32.mrb[0].mxu0
    %v3993 = vpop.f32.mrb[0].mxu0
    %v3994 = vadd.f32 %v3336, %v3993
    %v3995 = vpop.f32.mrb[0].mxu0
    %3996 = vmatprep.mubr.bf16.mxu0 0
    %3997 = vmatmul.mubr.bf16.gmra.mrb[0].mxu0 %v3616
    %v3998 = vpop.f32.mrb[0].mxu0
    %v3999 = vadd.f32 %v3337, %v3998
    %v4000 = vpop.f32.mrb[0].mxu0
    %v4001 = vpop.f32.mrb[0].mxu0
    %v4002 = vadd.f32 %v3338, %v4001
    %v4003 = vpop.f32.mrb[0].mxu0
    %4004 = vmatprep.mubr.bf16.mxu0 0
    %4005 = vmatmul.mubr.bf16.gmra.mrb[0].mxu0 %v3619
    %v4006 = vpop.f32.mrb[0].mxu0
    %v4007 = vadd.f32 %v3339, %v4006
    %v4008 = vpop.f32.mrb[0].mxu0
    %v4009 = vpop.f32.mrb[0].mxu0
    %v4010 = vadd.f32 %v3340, %v4009
    %v4011 = vpop.f32.mrb[0].mxu0
    %4012 = vmatprep.mubr.bf16.mxu0 0
    %4013 = vmatmul.mubr.bf16.gmra.mrb[0].mxu0 %v3622
    %v4014 = vpop.f32.mrb[0].mxu0
    %v4015 = vadd.f32 %v3341, %v4014
    %v4016 = vpop.f32.mrb[0].mxu0
    %v4017 = vpop.f32.mrb[0].mxu0
    %v4018 = vadd.f32 %v3342, %v4017
    %v4019 = vpop.f32.mrb[0].mxu0
    %4020 = vmatprep.mubr.bf16.mxu0 0
    %4021 = vmatmul.mubr.bf16.gmra.mrb[0].mxu0 %v3625
    %v4022 = vpop.f32.mrb[0].mxu0
    %v4023 = vadd.f32 %v3343, %v4022
    %v4024 = vpop.f32.mrb[0].mxu0
    %v4025 = vpop.f32.mrb[0].mxu0
    %v4026 = vadd.f32 %v3344, %v4025
    %v4027 = vpop.f32.mrb[0].mxu0
    %4028 = vmatprep.mubr.bf16.mxu0 0
    %4029 = vmatmul.mubr.bf16.gmra.mrb[0].mxu0 %v3628
    %v4030 = vpop.f32.mrb[0].mxu0
    %v4031 = vadd.f32 %v3345, %v4030
    %v4032 = vpop.f32.mrb[0].mxu0
    %v4033 = vpop.f32.mrb[0].mxu0
    %v4034 = vpop.f32.mrb[0].mxu0
    %4035 = vdwg.mxu0
    %v4036 = vadd.f32 %v131, %v3967
    %v4037 = vadd.f32 %v132, %v3970
    %v4038 = vadd.f32 %v133, %v3975
    %v4039 = vadd.f32 %v134, %v3978
    %v4040 = vadd.f32 %v135, %v3983
    %v4041 = vadd.f32 %v136, %v3986
    %v4042 = vadd.f32 %v137, %v3991
    %v4043 = vadd.f32 %v138, %v3994
    %v4044 = vadd.f32 %v139, %v3999
    %v4045 = vadd.f32 %v140, %v4002
    %v4046 = vadd.f32 %v141, %v4007
    %v4047 = vadd.f32 %v142, %v4010
    %v4048 = vadd.f32 %v143, %v4015
    %v4049 = vadd.f32 %v144, %v4018
    %v4050 = vadd.f32 %v145, %v4023
    %v4051 = vadd.f32 %v146, %v4026
    %v4052 = vadd.f32 %v147, %v4031
    %s4053 = scalar_lea.vmem [#allocation11], 136
    %4054 = vst [vmem:[%s4053] sm:$0xff] %v4036
    %4055 = vst [vmem:[%s4053 + $0x8] sm:$0xff] %v4037
    %4056 = vst [vmem:[%s4053 + $0x10] sm:$0xff] %v4038
    %4057 = vst [vmem:[%s4053 + $0x18] sm:$0xff] %v4039
    %4058 = vst [vmem:[%s4053 + $0x20] sm:$0xff] %v4040
    %4059 = vst [vmem:[%s4053 + $0x28] sm:$0xff] %v4041
    %4060 = vst [vmem:[%s4053 + $0x30] sm:$0xff] %v4042
    %4061 = vst [vmem:[%s4053 + $0x38] sm:$0xff] %v4043
    %4062 = vst [vmem:[%s4053 + $0x40] sm:$0xff] %v4044
    %4063 = vst [vmem:[%s4053 + $0x48] sm:$0xff] %v4045
    %4064 = vst [vmem:[%s4053 + $0x50] sm:$0xff] %v4046
    %4065 = vst [vmem:[%s4053 + $0x58] sm:$0xff] %v4047
    %4066 = vst [vmem:[%s4053 + $0x60] sm:$0xff] %v4048
    %4067 = vst [vmem:[%s4053 + $0x68] sm:$0xff] %v4049
    %4068 = vst [vmem:[%s4053 + $0x70] sm:$0xff] %v4050
    %4069 = vst [vmem:[%s4053 + $0x78] sm:$0xff] %v4051
    %4070 = vst [vmem:[%s4053 + $0x80] sm:$0xff] %v4052
    %4071 = vxpose.xlu0.c.b16.start [1/8] %v2325, 128
    %4072 = vxpose.xlu0.c.b16.cont [2/8] %v2326, 128
    %4073 = vxpose.xlu0.c.b16.cont [3/8] %v2327, 128
    %4074 = vxpose.xlu0.c.b16.cont [4/8] %v2328, 128
    %4075 = vxpose.xlu0.c.b16.cont [5/8] %v2329, 128
    %4076 = vxpose.xlu0.c.b16.cont [6/8] %v2330, 128
    %4077 = vxpose.xlu0.c.b16.cont [7/8] %v2331, 128
    %4078 = vxpose.xlu0.c.b16.end [8/8] %v2332, 128
    %v4079 = vpop.trf.xlu0
    %v4080 = vpop.trf.xlu0
    %v4081 = vpop.trf.xlu0
    %v4082 = vpop.trf.xlu0
    %v4083 = vpop.trf.xlu0
    %v4084 = vpop.trf.xlu0
    %v4085 = vpop.trf.xlu0
    %v4086 = vpop.trf.xlu0
    %4087 = vxpose.xlu0.c.b16.start [1/8] %v2333, 128
    %4088 = vxpose.xlu0.c.b16.cont [2/8] 0, 128
    %4089 = vxpose.xlu0.c.b16.cont [3/8] 0, 128
    %4090 = vxpose.xlu0.c.b16.cont [4/8] 0, 128
    %4091 = vxpose.xlu0.c.b16.cont [5/8] 0, 128
    %4092 = vxpose.xlu0.c.b16.cont [6/8] 0, 128
    %4093 = vxpose.xlu0.c.b16.cont [7/8] 0, 128
    %4094 = vxpose.xlu0.c.b16.end [8/8] 0, 128
    %v4095 = vpop.trf.xlu0
    %v4096 = vpop.trf.xlu0
    %v4097 = vpop.trf.xlu0
    %v4098 = vpop.trf.xlu0
    %v4099 = vpop.trf.xlu0
    %v4100 = vpop.trf.xlu0
    %v4101 = vpop.trf.xlu0
    %v4102 = vpop.trf.xlu0
    %v4103 = vpack.c.b16 %v3191, %v3190
    %v4104 = vpack.c.b16 %v3193, %v3192
    %v4105 = vpack.c.b16 %v3195, %v3194
    %v4106 = vpack.c.b16 %v3197, %v3196
    %v4107 = vpack.c.b16 %v3199, %v3198
    %v4108 = vpack.c.b16 %v3201, %v3200
    %v4109 = vpack.c.b16 %v3203, %v3202
    %v4110 = vpack.c.b16 %v3205, %v3204
    %v4111 = vpack.c.b16 %v3206, %v3206
    %v4121 = vsel %vm3395, %v4095, 0
    %v4124 = vsel %vm3395, %v4096, 0
    %v4127 = vsel %vm3402, %v4111, 0
    %4129 = vmatprep.subr.bf16.mxu0 0
    %4130 = vmatpush1.bf16.msra.mxu0 %v4103
    %4131 = vmatprep.subr.bf16.mxu0 0
    %4132 = vmatpush1.bf16.msra.mxu0 %v4104
    %4133 = vmatprep.subr.bf16.mxu0 0
    %4134 = vmatpush1.bf16.msra.mxu0 %v4105
    %4135 = vmatprep.subr.bf16.mxu0 0
    %4136 = vmatpush1.bf16.msra.mxu0 %v4106
    %4137 = vmatprep.subr.bf16.mxu0 0
    %4138 = vmatpush1.bf16.msra.mxu0 %v4107
    %4139 = vmatprep.subr.bf16.mxu0 0
    %4140 = vmatpush1.bf16.msra.mxu0 %v4108
    %4141 = vmatprep.subr.bf16.mxu0 0
    %4142 = vmatpush1.bf16.msra.mxu0 %v4109
    %4143 = vmatprep.subr.bf16.mxu0 0
    %4144 = vmatpush1.bf16.msra.mxu0 %v4110
    %4145 = vmatprep.subr.bf16.mxu0 0
    %4146 = vmatpush1.bf16.msra.mxu0 %v4127
    %4147 = vmatprep.subr.bf16.mxu0 0
    %4148 = vmatpush1.bf16.msra.mxu0 0
    %4149 = vmatprep.subr.bf16.mxu0 0
    %4150 = vmatpush1.bf16.msra.mxu0 0
    %4151 = vmatprep.subr.bf16.mxu0 0
    %4152 = vmatpush1.bf16.msra.mxu0 0
    %4153 = vmatprep.subr.bf16.mxu0 0
    %4154 = vmatpush1.bf16.msra.mxu0 0
    %4155 = vmatprep.subr.bf16.mxu0 0
    %4156 = vmatpush1.bf16.msra.mxu0 0
    %4157 = vmatprep.subr.bf16.mxu0 0
    %4158 = vmatpush1.bf16.msra.mxu0 0
    %4159 = vmatprep.subr.bf16.mxu0 0
    %4160 = vmatpush1.bf16.msra.mxu0 0
    %4161 = vmatprep.mubr.bf16.mxu0 %v4121
    %4162 = vmatmul.mubr.bf16.gmra.mrb[0].mxu0 %v4079
    %v4163 = vpop.f32.mrb[0].mxu0
    %v4164 = vadd.f32 0.0, %v4163
    %v4165 = vpop.f32.mrb[0].mxu0
    %v4166 = vpop.f32.mrb[0].mxu0
    %v4167 = vadd.f32 0.0, %v4166
    %v4168 = vpop.f32.mrb[0].mxu0
    %4169 = vmatprep.mubr.bf16.mxu0 %v4124
    %4170 = vmatmul.mubr.bf16.gmra.mrb[0].mxu0 %v4080
    %v4171 = vpop.f32.mrb[0].mxu0
    %v4172 = vadd.f32 0.0, %v4171
    %v4173 = vpop.f32.mrb[0].mxu0
    %v4174 = vpop.f32.mrb[0].mxu0
    %v4175 = vadd.f32 0.0, %v4174
    %v4176 = vpop.f32.mrb[0].mxu0
    %4177 = vdwg.mxu0
    %v4178 = vmul.f32 %v4164, %v3292
    %v4179 = vmul.f32 %v4167, %v3293
    %v4180 = vmul.f32 %v4172, %v3294
    %v4181 = vmul.f32 %v4175, %v3295
    %v4182 = vpack.c.bf16 %v4179, %v4178
    %v4183 = vpack.c.bf16 %v4181, %v4180
    %4184 = vmatprep.subr.bf16.mxu0 0
    %4185 = vmatpush1.bf16.msra.mxu0 %v3493
    %4186 = vmatprep.subr.bf16.mxu0 0
    %4187 = vmatpush1.bf16.msra.mxu0 %v3494
    %4188 = vmatprep.subr.bf16.mxu0 0
    %4189 = vmatpush1.bf16.msra.mxu0 %v3495
    %4190 = vmatprep.subr.bf16.mxu0 0
    %4191 = vmatpush1.bf16.msra.mxu0 %v3496
    %4192 = vmatprep.subr.bf16.mxu0 0
    %4193 = vmatpush1.bf16.msra.mxu0 %v3497
    %4194 = vmatprep.subr.bf16.mxu0 0
    %4195 = vmatpush1.bf16.msra.mxu0 %v3498
    %4196 = vmatprep.subr.bf16.mxu0 0
    %4197 = vmatpush1.bf16.msra.mxu0 %v3499
    %4198 = vmatprep.subr.bf16.mxu0 0
    %4199 = vmatpush1.bf16.msra.mxu0 %v3500
    %4200 = vmatprep.subr.bf16.mxu0 0
    %4201 = vmatpush1.bf16.msra.mxu0 0
    %4202 = vmatprep.subr.bf16.mxu0 0
    %4203 = vmatpush1.bf16.msra.mxu0 0
    %4204 = vmatprep.subr.bf16.mxu0 0
    %4205 = vmatpush1.bf16.msra.mxu0 0
    %4206 = vmatprep.subr.bf16.mxu0 0
    %4207 = vmatpush1.bf16.msra.mxu0 0
    %4208 = vmatprep.subr.bf16.mxu0 0
    %4209 = vmatpush1.bf16.msra.mxu0 0
    %4210 = vmatprep.subr.bf16.mxu0 0
    %4211 = vmatpush1.bf16.msra.mxu0 0
    %4212 = vmatprep.subr.bf16.mxu0 0
    %4213 = vmatpush1.bf16.msra.mxu0 0
    %4214 = vmatprep.subr.bf16.mxu0 0
    %4215 = vmatpush1.bf16.msra.mxu0 0
    %4216 = vmatprep.mubr.bf16.mxu0 0
    %4217 = vmatmul.mubr.bf16.gmra.mrb[0].mxu0 %v4182
    %v4218 = vpop.f32.mrb[0].mxu0
    %v4219 = vadd.f32 0.0, %v4218
    %v4220 = vpop.f32.mrb[0].mxu0
    %v4221 = vpop.f32.mrb[0].mxu0
    %v4222 = vadd.f32 0.0, %v4221
    %v4223 = vpop.f32.mrb[0].mxu0
    %4224 = vmatprep.mubr.bf16.mxu0 0
    %4225 = vmatmul.mubr.bf16.gmra.mrb[0].mxu0 %v4183
    %v4226 = vpop.f32.mrb[0].mxu0
    %v4227 = vadd.f32 0.0, %v4226
    %v4228 = vpop.f32.mrb[0].mxu0
    %v4229 = vpop.f32.mrb[0].mxu0
    %v4230 = vadd.f32 0.0, %v4229
    %v4231 = vpop.f32.mrb[0].mxu0
    %4232 = vdwg.mxu0
    %v4233 = vpack.c.bf16 %v4222, %v4219
    %v4234 = vpack.c.bf16 %v4230, %v4227
    %4235 = vmatprep.subr.bf16.mxu0 0
    %4236 = vmatpush1.bf16.msra.mxu0 %v4233
    %4237 = vmatprep.subr.bf16.mxu0 0
    %4238 = vmatpush1.bf16.msra.mxu0 %v4234
    %4239 = vmatprep.subr.bf16.mxu0 0
    %4240 = vmatpush1.bf16.msra.mxu0 0
    %4241 = vmatprep.subr.bf16.mxu0 0
    %4242 = vmatpush1.bf16.msra.mxu0 0
    %4243 = vmatprep.subr.bf16.mxu0 0
    %4244 = vmatpush1.bf16.msra.mxu0 0
    %4245 = vmatprep.subr.bf16.mxu0 0
    %4246 = vmatpush1.bf16.msra.mxu0 0
    %4247 = vmatprep.subr.bf16.mxu0 0
    %4248 = vmatpush1.bf16.msra.mxu0 0
    %4249 = vmatprep.subr.bf16.mxu0 0
    %4250 = vmatpush1.bf16.msra.mxu0 0
    %4251 = vmatprep.subr.bf16.mxu0 0
    %4252 = vmatpush1.bf16.msra.mxu0 0
    %4253 = vmatprep.subr.bf16.mxu0 0
    %4254 = vmatpush1.bf16.msra.mxu0 0
    %4255 = vmatprep.subr.bf16.mxu0 0
    %4256 = vmatpush1.bf16.msra.mxu0 0
    %4257 = vmatprep.subr.bf16.mxu0 0
    %4258 = vmatpush1.bf16.msra.mxu0 0
    %4259 = vmatprep.subr.bf16.mxu0 0
    %4260 = vmatpush1.bf16.msra.mxu0 0
    %4261 = vmatprep.subr.bf16.mxu0 0
    %4262 = vmatpush1.bf16.msra.mxu0 0
    %4263 = vmatprep.subr.bf16.mxu0 0
    %4264 = vmatpush1.bf16.msra.mxu0 0
    %4265 = vmatprep.subr.bf16.mxu0 0
    %4266 = vmatpush1.bf16.msra.mxu0 0
    %4267 = vmatprep.mubr.bf16.mxu0 0
    %4268 = vmatmul.mubr.bf16.gmra.mrb[0].mxu0 %v3604
    %v4269 = vpop.f32.mrb[0].mxu0
    %v4270 = vadd.f32 %v3329, %v4269
    %v4271 = vpop.f32.mrb[0].mxu0
    %v4272 = vpop.f32.mrb[0].mxu0
    %v4273 = vadd.f32 %v3330, %v4272
    %v4274 = vpop.f32.mrb[0].mxu0
    %4275 = vmatprep.mubr.bf16.mxu0 0
    %4276 = vmatmul.mubr.bf16.gmra.mrb[0].mxu0 %v3607
    %v4277 = vpop.f32.mrb[0].mxu0
    %v4278 = vadd.f32 %v3331, %v4277
    %v4279 = vpop.f32.mrb[0].mxu0
    %v4280 = vpop.f32.mrb[0].mxu0
    %v4281 = vadd.f32 %v3332, %v4280
    %v4282 = vpop.f32.mrb[0].mxu0
    %4283 = vmatprep.mubr.bf16.mxu0 0
    %4284 = vmatmul.mubr.bf16.gmra.mrb[0].mxu0 %v3610
    %v4285 = vpop.f32.mrb[0].mxu0
    %v4286 = vadd.f32 %v3333, %v4285
    %v4287 = vpop.f32.mrb[0].mxu0
    %v4288 = vpop.f32.mrb[0].mxu0
    %v4289 = vadd.f32 %v3334, %v4288
    %v4290 = vpop.f32.mrb[0].mxu0
    %4291 = vmatprep.mubr.bf16.mxu0 0
    %4292 = vmatmul.mubr.bf16.gmra.mrb[0].mxu0 %v3613
    %v4293 = vpop.f32.mrb[0].mxu0
    %v4294 = vadd.f32 %v3335, %v4293
    %v4295 = vpop.f32.mrb[0].mxu0
    %v4296 = vpop.f32.mrb[0].mxu0
    %v4297 = vadd.f32 %v3336, %v4296
    %v4298 = vpop.f32.mrb[0].mxu0
    %4299 = vmatprep.mubr.bf16.mxu0 0
    %4300 = vmatmul.mubr.bf16.gmra.mrb[0].mxu0 %v3616
    %v4301 = vpop.f32.mrb[0].mxu0
    %v4302 = vadd.f32 %v3337, %v4301
    %v4303 = vpop.f32.mrb[0].mxu0
    %v4304 = vpop.f32.mrb[0].mxu0
    %v4305 = vadd.f32 %v3338, %v4304
    %v4306 = vpop.f32.mrb[0].mxu0
    %4307 = vmatprep.mubr.bf16.mxu0 0
    %4308 = vmatmul.mubr.bf16.gmra.mrb[0].mxu0 %v3619
    %v4309 = vpop.f32.mrb[0].mxu0
    %v4310 = vadd.f32 %v3339, %v4309
    %v4311 = vpop.f32.mrb[0].mxu0
    %v4312 = vpop.f32.mrb[0].mxu0
    %v4313 = vadd.f32 %v3340, %v4312
    %v4314 = vpop.f32.mrb[0].mxu0
    %4315 = vmatprep.mubr.bf16.mxu0 0
    %4316 = vmatmul.mubr.bf16.gmra.mrb[0].mxu0 %v3622
    %v4317 = vpop.f32.mrb[0].mxu0
    %v4318 = vadd.f32 %v3341, %v4317
    %v4319 = vpop.f32.mrb[0].mxu0
    %v4320 = vpop.f32.mrb[0].mxu0
    %v4321 = vadd.f32 %v3342, %v4320
    %v4322 = vpop.f32.mrb[0].mxu0
    %4323 = vmatprep.mubr.bf16.mxu0 0
    %4324 = vmatmul.mubr.bf16.gmra.mrb[0].mxu0 %v3625
    %v4325 = vpop.f32.mrb[0].mxu0
    %v4326 = vadd.f32 %v3343, %v4325
    %v4327 = vpop.f32.mrb[0].mxu0
    %v4328 = vpop.f32.mrb[0].mxu0
    %v4329 = vadd.f32 %v3344, %v4328
    %v4330 = vpop.f32.mrb[0].mxu0
    %4331 = vmatprep.mubr.bf16.mxu0 0
    %4332 = vmatmul.mubr.bf16.gmra.mrb[0].mxu0 %v3628
    %v4333 = vpop.f32.mrb[0].mxu0
    %v4334 = vadd.f32 %v3345, %v4333
    %v4335 = vpop.f32.mrb[0].mxu0
    %v4336 = vpop.f32.mrb[0].mxu0
    %v4337 = vpop.f32.mrb[0].mxu0
    %4338 = vdwg.mxu0
    %v4339 = vadd.f32 %v148, %v4270
    %v4340 = vadd.f32 %v149, %v4273
    %v4341 = vadd.f32 %v150, %v4278
    %v4342 = vadd.f32 %v151, %v4281
    %v4343 = vadd.f32 %v152, %v4286
    %v4344 = vadd.f32 %v153, %v4289
    %v4345 = vadd.f32 %v154, %v4294
    %v4346 = vadd.f32 %v155, %v4297
    %v4347 = vadd.f32 %v156, %v4302
    %v4348 = vadd.f32 %v157, %v4305
    %v4349 = vadd.f32 %v158, %v4310
    %v4350 = vadd.f32 %v159, %v4313
    %v4351 = vadd.f32 %v160, %v4318
    %v4352 = vadd.f32 %v161, %v4321
    %v4353 = vadd.f32 %v162, %v4326
    %v4354 = vadd.f32 %v163, %v4329
    %v4355 = vadd.f32 %v164, %v4334
    %s4356 = scalar_lea.vmem [#allocation11], 272
    %4357 = vst [vmem:[%s4356] sm:$0xff] %v4339
    %4358 = vst [vmem:[%s4356 + $0x8] sm:$0xff] %v4340
    %4359 = vst [vmem:[%s4356 + $0x10] sm:$0xff] %v4341
    %4360 = vst [vmem:[%s4356 + $0x18] sm:$0xff] %v4342
    %4361 = vst [vmem:[%s4356 + $0x20] sm:$0xff] %v4343
    %4362 = vst [vmem:[%s4356 + $0x28] sm:$0xff] %v4344
    %4363 = vst [vmem:[%s4356 + $0x30] sm:$0xff] %v4345
    %4364 = vst [vmem:[%s4356 + $0x38] sm:$0xff] %v4346
    %4365 = vst [vmem:[%s4356 + $0x40] sm:$0xff] %v4347
    %4366 = vst [vmem:[%s4356 + $0x48] sm:$0xff] %v4348
    %4367 = vst [vmem:[%s4356 + $0x50] sm:$0xff] %v4349
    %4368 = vst [vmem:[%s4356 + $0x58] sm:$0xff] %v4350
    %4369 = vst [vmem:[%s4356 + $0x60] sm:$0xff] %v4351
    %4370 = vst [vmem:[%s4356 + $0x68] sm:$0xff] %v4352
    %4371 = vst [vmem:[%s4356 + $0x70] sm:$0xff] %v4353
    %4372 = vst [vmem:[%s4356 + $0x78] sm:$0xff] %v4354
    %4373 = vst [vmem:[%s4356 + $0x80] sm:$0xff] %v4355
    %4374 = vxpose.xlu0.c.b16.start [1/8] %v2334, 128
    %4375 = vxpose.xlu0.c.b16.cont [2/8] %v2335, 128
    %4376 = vxpose.xlu0.c.b16.cont [3/8] %v2336, 128
    %4377 = vxpose.xlu0.c.b16.cont [4/8] %v2337, 128
    %4378 = vxpose.xlu0.c.b16.cont [5/8] %v2338, 128
    %4379 = vxpose.xlu0.c.b16.cont [6/8] %v2339, 128
    %4380 = vxpose.xlu0.c.b16.cont [7/8] %v2340, 128
    %4381 = vxpose.xlu0.c.b16.end [8/8] %v2341, 128
    %v4382 = vpop.trf.xlu0
    %v4383 = vpop.trf.xlu0
    %v4384 = vpop.trf.xlu0
    %v4385 = vpop.trf.xlu0
    %v4386 = vpop.trf.xlu0
    %v4387 = vpop.trf.xlu0
    %v4388 = vpop.trf.xlu0
    %v4389 = vpop.trf.xlu0
    %4390 = vxpose.xlu0.c.b16.start [1/8] %v2342, 128
    %4391 = vxpose.xlu0.c.b16.cont [2/8] 0, 128
    %4392 = vxpose.xlu0.c.b16.cont [3/8] 0, 128
    %4393 = vxpose.xlu0.c.b16.cont [4/8] 0, 128
    %4394 = vxpose.xlu0.c.b16.cont [5/8] 0, 128
    %4395 = vxpose.xlu0.c.b16.cont [6/8] 0, 128
    %4396 = vxpose.xlu0.c.b16.cont [7/8] 0, 128
    %4397 = vxpose.xlu0.c.b16.end [8/8] 0, 128
    %v4398 = vpop.trf.xlu0
    %v4399 = vpop.trf.xlu0
    %v4400 = vpop.trf.xlu0
    %v4401 = vpop.trf.xlu0
    %v4402 = vpop.trf.xlu0
    %v4403 = vpop.trf.xlu0
    %v4404 = vpop.trf.xlu0
    %v4405 = vpop.trf.xlu0
    %v4406 = vpack.c.b16 %v3208, %v3207
    %v4407 = vpack.c.b16 %v3210, %v3209
    %v4408 = vpack.c.b16 %v3212, %v3211
    %v4409 = vpack.c.b16 %v3214, %v3213
    %v4410 = vpack.c.b16 %v3216, %v3215
    %v4411 = vpack.c.b16 %v3218, %v3217
    %v4412 = vpack.c.b16 %v3220, %v3219
    %v4413 = vpack.c.b16 %v3222, %v3221
    %v4414 = vpack.c.b16 %v3223, %v3223
    %v4424 = vsel %vm3395, %v4398, 0
    %v4427 = vsel %vm3395, %v4399, 0
    %v4430 = vsel %vm3402, %v4414, 0
    %4432 = vmatprep.subr.bf16.mxu0 0
    %4433 = vmatpush1.bf16.msra.mxu0 %v4406
    %4434 = vmatprep.subr.bf16.mxu0 0
    %4435 = vmatpush1.bf16.msra.mxu0 %v4407
    %4436 = vmatprep.subr.bf16.mxu0 0
    %4437 = vmatpush1.bf16.msra.mxu0 %v4408
    %4438 = vmatprep.subr.bf16.mxu0 0
    %4439 = vmatpush1.bf16.msra.mxu0 %v4409
    %4440 = vmatprep.subr.bf16.mxu0 0
    %4441 = vmatpush1.bf16.msra.mxu0 %v4410
    %4442 = vmatprep.subr.bf16.mxu0 0
    %4443 = vmatpush1.bf16.msra.mxu0 %v4411
    %4444 = vmatprep.subr.bf16.mxu0 0
    %4445 = vmatpush1.bf16.msra.mxu0 %v4412
    %4446 = vmatprep.subr.bf16.mxu0 0
    %4447 = vmatpush1.bf16.msra.mxu0 %v4413
    %4448 = vmatprep.subr.bf16.mxu0 0
    %4449 = vmatpush1.bf16.msra.mxu0 %v4430
    %4450 = vmatprep.subr.bf16.mxu0 0
    %4451 = vmatpush1.bf16.msra.mxu0 0
    %4452 = vmatprep.subr.bf16.mxu0 0
    %4453 = vmatpush1.bf16.msra.mxu0 0
    %4454 = vmatprep.subr.bf16.mxu0 0
    %4455 = vmatpush1.bf16.msra.mxu0 0
    %4456 = vmatprep.subr.bf16.mxu0 0
    %4457 = vmatpush1.bf16.msra.mxu0 0
    %4458 = vmatprep.subr.bf16.mxu0 0
    %4459 = vmatpush1.bf16.msra.mxu0 0
    %4460 = vmatprep.subr.bf16.mxu0 0
    %4461 = vmatpush1.bf16.msra.mxu0 0
    %4462 = vmatprep.subr.bf16.mxu0 0
    %4463 = vmatpush1.bf16.msra.mxu0 0
    %4464 = vmatprep.mubr.bf16.mxu0 %v4424
    %4465 = vmatmul.mubr.bf16.gmra.mrb[0].mxu0 %v4382
    %v4466 = vpop.f32.mrb[0].mxu0
    %v4467 = vadd.f32 0.0, %v4466
    %v4468 = vpop.f32.mrb[0].mxu0
    %v4469 = vpop.f32.mrb[0].mxu0
    %v4470 = vadd.f32 0.0, %v4469
    %v4471 = vpop.f32.mrb[0].mxu0
    %4472 = vmatprep.mubr.bf16.mxu0 %v4427
    %4473 = vmatmul.mubr.bf16.gmra.mrb[0].mxu0 %v4383
    %v4474 = vpop.f32.mrb[0].mxu0
    %v4475 = vadd.f32 0.0, %v4474
    %v4476 = vpop.f32.mrb[0].mxu0
    %v4477 = vpop.f32.mrb[0].mxu0
    %v4478 = vadd.f32 0.0, %v4477
    %v4479 = vpop.f32.mrb[0].mxu0
    %4480 = vdwg.mxu0
    %v4481 = vmul.f32 %v4467, %v3292
    %v4482 = vmul.f32 %v4470, %v3293
    %v4483 = vmul.f32 %v4475, %v3294
    %v4484 = vmul.f32 %v4478, %v3295
    %v4485 = vpack.c.bf16 %v4482, %v4481
    %v4486 = vpack.c.bf16 %v4484, %v4483
    %4487 = vmatprep.subr.bf16.mxu0 0
    %4488 = vmatpush1.bf16.msra.mxu0 %v3493
    %4489 = vmatprep.subr.bf16.mxu0 0
    %4490 = vmatpush1.bf16.msra.mxu0 %v3494
    %4491 = vmatprep.subr.bf16.mxu0 0
    %4492 = vmatpush1.bf16.msra.mxu0 %v3495
    %4493 = vmatprep.subr.bf16.mxu0 0
    %4494 = vmatpush1.bf16.msra.mxu0 %v3496
    %4495 = vmatprep.subr.bf16.mxu0 0
    %4496 = vmatpush1.bf16.msra.mxu0 %v3497
    %4497 = vmatprep.subr.bf16.mxu0 0
    %4498 = vmatpush1.bf16.msra.mxu0 %v3498
    %4499 = vmatprep.subr.bf16.mxu0 0
    %4500 = vmatpush1.bf16.msra.mxu0 %v3499
    %4501 = vmatprep.subr.bf16.mxu0 0
    %4502 = vmatpush1.bf16.msra.mxu0 %v3500
    %4503 = vmatprep.subr.bf16.mxu0 0
    %4504 = vmatpush1.bf16.msra.mxu0 0
    %4505 = vmatprep.subr.bf16.mxu0 0
    %4506 = vmatpush1.bf16.msra.mxu0 0
    %4507 = vmatprep.subr.bf16.mxu0 0
    %4508 = vmatpush1.bf16.msra.mxu0 0
    %4509 = vmatprep.subr.bf16.mxu0 0
    %4510 = vmatpush1.bf16.msra.mxu0 0
    %4511 = vmatprep.subr.bf16.mxu0 0
    %4512 = vmatpush1.bf16.msra.mxu0 0
    %4513 = vmatprep.subr.bf16.mxu0 0
    %4514 = vmatpush1.bf16.msra.mxu0 0
    %4515 = vmatprep.subr.bf16.mxu0 0
    %4516 = vmatpush1.bf16.msra.mxu0 0
    %4517 = vmatprep.subr.bf16.mxu0 0
    %4518 = vmatpush1.bf16.msra.mxu0 0
    %4519 = vmatprep.mubr.bf16.mxu0 0
    %4520 = vmatmul.mubr.bf16.gmra.mrb[0].mxu0 %v4485
    %v4521 = vpop.f32.mrb[0].mxu0
    %v4522 = vadd.f32 0.0, %v4521
    %v4523 = vpop.f32.mrb[0].mxu0
    %v4524 = vpop.f32.mrb[0].mxu0
    %v4525 = vadd.f32 0.0, %v4524
    %v4526 = vpop.f32.mrb[0].mxu0
    %4527 = vmatprep.mubr.bf16.mxu0 0
    %4528 = vmatmul.mubr.bf16.gmra.mrb[0].mxu0 %v4486
    %v4529 = vpop.f32.mrb[0].mxu0
    %v4530 = vadd.f32 0.0, %v4529
    %v4531 = vpop.f32.mrb[0].mxu0
    %v4532 = vpop.f32.mrb[0].mxu0
    %v4533 = vadd.f32 0.0, %v4532
    %v4534 = vpop.f32.mrb[0].mxu0
    %4535 = vdwg.mxu0
    %v4536 = vpack.c.bf16 %v4525, %v4522
    %v4537 = vpack.c.bf16 %v4533, %v4530
    %4538 = vmatprep.subr.bf16.mxu0 0
    %4539 = vmatpush1.bf16.msra.mxu0 %v4536
    %4540 = vmatprep.subr.bf16.mxu0 0
    %4541 = vmatpush1.bf16.msra.mxu0 %v4537
    %4542 = vmatprep.subr.bf16.mxu0 0
    %4543 = vmatpush1.bf16.msra.mxu0 0
    %4544 = vmatprep.subr.bf16.mxu0 0
    %4545 = vmatpush1.bf16.msra.mxu0 0
    %4546 = vmatprep.subr.bf16.mxu0 0
    %4547 = vmatpush1.bf16.msra.mxu0 0
    %4548 = vmatprep.subr.bf16.mxu0 0
    %4549 = vmatpush1.bf16.msra.mxu0 0
    %4550 = vmatprep.subr.bf16.mxu0 0
    %4551 = vmatpush1.bf16.msra.mxu0 0
    %4552 = vmatprep.subr.bf16.mxu0 0
    %4553 = vmatpush1.bf16.msra.mxu0 0
    %4554 = vmatprep.subr.bf16.mxu0 0
    %4555 = vmatpush1.bf16.msra.mxu0 0
    %4556 = vmatprep.subr.bf16.mxu0 0
    %4557 = vmatpush1.bf16.msra.mxu0 0
    %4558 = vmatprep.subr.bf16.mxu0 0
    %4559 = vmatpush1.bf16.msra.mxu0 0
    %4560 = vmatprep.subr.bf16.mxu0 0
    %4561 = vmatpush1.bf16.msra.mxu0 0
    %4562 = vmatprep.subr.bf16.mxu0 0
    %4563 = vmatpush1.bf16.msra.mxu0 0
    %4564 = vmatprep.subr.bf16.mxu0 0
    %4565 = vmatpush1.bf16.msra.mxu0 0
    %4566 = vmatprep.subr.bf16.mxu0 0
    %4567 = vmatpush1.bf16.msra.mxu0 0
    %4568 = vmatprep.subr.bf16.mxu0 0
    %4569 = vmatpush1.bf16.msra.mxu0 0
    %4570 = vmatprep.mubr.bf16.mxu0 0
    %4571 = vmatmul.mubr.bf16.gmra.mrb[0].mxu0 %v3604
    %v4572 = vpop.f32.mrb[0].mxu0
    %v4573 = vadd.f32 %v3329, %v4572
    %v4574 = vpop.f32.mrb[0].mxu0
    %v4575 = vpop.f32.mrb[0].mxu0
    %v4576 = vadd.f32 %v3330, %v4575
    %v4577 = vpop.f32.mrb[0].mxu0
    %4578 = vmatprep.mubr.bf16.mxu0 0
    %4579 = vmatmul.mubr.bf16.gmra.mrb[0].mxu0 %v3607
    %v4580 = vpop.f32.mrb[0].mxu0
    %v4581 = vadd.f32 %v3331, %v4580
    %v4582 = vpop.f32.mrb[0].mxu0
    %v4583 = vpop.f32.mrb[0].mxu0
    %v4584 = vadd.f32 %v3332, %v4583
    %v4585 = vpop.f32.mrb[0].mxu0
    %4586 = vmatprep.mubr.bf16.mxu0 0
    %4587 = vmatmul.mubr.bf16.gmra.mrb[0].mxu0 %v3610
    %v4588 = vpop.f32.mrb[0].mxu0
    %v4589 = vadd.f32 %v3333, %v4588
    %v4590 = vpop.f32.mrb[0].mxu0
    %v4591 = vpop.f32.mrb[0].mxu0
    %v4592 = vadd.f32 %v3334, %v4591
    %v4593 = vpop.f32.mrb[0].mxu0
    %4594 = vmatprep.mubr.bf16.mxu0 0
    %4595 = vmatmul.mubr.bf16.gmra.mrb[0].mxu0 %v3613
    %v4596 = vpop.f32.mrb[0].mxu0
    %v4597 = vadd.f32 %v3335, %v4596
    %v4598 = vpop.f32.mrb[0].mxu0
    %v4599 = vpop.f32.mrb[0].mxu0
    %v4600 = vadd.f32 %v3336, %v4599
    %v4601 = vpop.f32.mrb[0].mxu0
    %4602 = vmatprep.mubr.bf16.mxu0 0
    %4603 = vmatmul.mubr.bf16.gmra.mrb[0].mxu0 %v3616
    %v4604 = vpop.f32.mrb[0].mxu0
    %v4605 = vadd.f32 %v3337, %v4604
    %v4606 = vpop.f32.mrb[0].mxu0
    %v4607 = vpop.f32.mrb[0].mxu0
    %v4608 = vadd.f32 %v3338, %v4607
    %v4609 = vpop.f32.mrb[0].mxu0
    %4610 = vmatprep.mubr.bf16.mxu0 0
    %4611 = vmatmul.mubr.bf16.gmra.mrb[0].mxu0 %v3619
    %v4612 = vpop.f32.mrb[0].mxu0
    %v4613 = vadd.f32 %v3339, %v4612
    %v4614 = vpop.f32.mrb[0].mxu0
    %v4615 = vpop.f32.mrb[0].mxu0
    %v4616 = vadd.f32 %v3340, %v4615
    %v4617 = vpop.f32.mrb[0].mxu0
    %4618 = vmatprep.mubr.bf16.mxu0 0
    %4619 = vmatmul.mubr.bf16.gmra.mrb[0].mxu0 %v3622
    %v4620 = vpop.f32.mrb[0].mxu0
    %v4621 = vadd.f32 %v3341, %v4620
    %v4622 = vpop.f32.mrb[0].mxu0
    %v4623 = vpop.f32.mrb[0].mxu0
    %v4624 = vadd.f32 %v3342, %v4623
    %v4625 = vpop.f32.mrb[0].mxu0
    %4626 = vmatprep.mubr.bf16.mxu0 0
    %4627 = vmatmul.mubr.bf16.gmra.mrb[0].mxu0 %v3625
    %v4628 = vpop.f32.mrb[0].mxu0
    %v4629 = vadd.f32 %v3343, %v4628
    %v4630 = vpop.f32.mrb[0].mxu0
    %v4631 = vpop.f32.mrb[0].mxu0
    %v4632 = vadd.f32 %v3344, %v4631
    %v4633 = vpop.f32.mrb[0].mxu0
    %4634 = vmatprep.mubr.bf16.mxu0 0
    %4635 = vmatmul.mubr.bf16.gmra.mrb[0].mxu0 %v3628
    %v4636 = vpop.f32.mrb[0].mxu0
    %v4637 = vadd.f32 %v3345, %v4636
    %v4638 = vpop.f32.mrb[0].mxu0
    %v4639 = vpop.f32.mrb[0].mxu0
    %v4640 = vpop.f32.mrb[0].mxu0
    %4641 = vdwg.mxu0
    %v4642 = vadd.f32 %v165, %v4573
    %v4643 = vadd.f32 %v166, %v4576
    %v4644 = vadd.f32 %v167, %v4581
    %v4645 = vadd.f32 %v168, %v4584
    %v4646 = vadd.f32 %v169, %v4589
    %v4647 = vadd.f32 %v170, %v4592
    %v4648 = vadd.f32 %v171, %v4597
    %v4649 = vadd.f32 %v172, %v4600
    %v4650 = vadd.f32 %v173, %v4605
    %v4651 = vadd.f32 %v174, %v4608
    %v4652 = vadd.f32 %v175, %v4613
    %v4653 = vadd.f32 %v176, %v4616
    %v4654 = vadd.f32 %v177, %v4621
    %v4655 = vadd.f32 %v178, %v4624
    %v4656 = vadd.f32 %v179, %v4629
    %v4657 = vadd.f32 %v180, %v4632
    %v4658 = vadd.f32 %v181, %v4637
    %s4659 = scalar_lea.vmem [#allocation11], 408
    %4660 = vst [vmem:[%s4659] sm:$0xff] %v4642
    %4661 = vst [vmem:[%s4659 + $0x8] sm:$0xff] %v4643
    %4662 = vst [vmem:[%s4659 + $0x10] sm:$0xff] %v4644
    %4663 = vst [vmem:[%s4659 + $0x18] sm:$0xff] %v4645
    %4664 = vst [vmem:[%s4659 + $0x20] sm:$0xff] %v4646
    %4665 = vst [vmem:[%s4659 + $0x28] sm:$0xff] %v4647
    %4666 = vst [vmem:[%s4659 + $0x30] sm:$0xff] %v4648
    %4667 = vst [vmem:[%s4659 + $0x38] sm:$0xff] %v4649
    %4668 = vst [vmem:[%s4659 + $0x40] sm:$0xff] %v4650
    %4669 = vst [vmem:[%s4659 + $0x48] sm:$0xff] %v4651
    %4670 = vst [vmem:[%s4659 + $0x50] sm:$0xff] %v4652
    %4671 = vst [vmem:[%s4659 + $0x58] sm:$0xff] %v4653
    %4672 = vst [vmem:[%s4659 + $0x60] sm:$0xff] %v4654
    %4673 = vst [vmem:[%s4659 + $0x68] sm:$0xff] %v4655
    %4674 = vst [vmem:[%s4659 + $0x70] sm:$0xff] %v4656
    %4675 = vst [vmem:[%s4659 + $0x78] sm:$0xff] %v4657
    %4676 = vst [vmem:[%s4659 + $0x80] sm:$0xff] %v4658
    %4677 = vxpose.xlu0.c.b16.start [1/8] %v2343, 128
    %4678 = vxpose.xlu0.c.b16.cont [2/8] %v2344, 128
    %4679 = vxpose.xlu0.c.b16.cont [3/8] %v2345, 128
    %4680 = vxpose.xlu0.c.b16.cont [4/8] %v2346, 128
    %4681 = vxpose.xlu0.c.b16.cont [5/8] %v2347, 128
    %4682 = vxpose.xlu0.c.b16.cont [6/8] %v2348, 128
    %4683 = vxpose.xlu0.c.b16.cont [7/8] %v2349, 128
    %4684 = vxpose.xlu0.c.b16.end [8/8] %v2350, 128
    %v4685 = vpop.trf.xlu0
    %v4686 = vpop.trf.xlu0
    %v4687 = vpop.trf.xlu0
    %v4688 = vpop.trf.xlu0
    %v4689 = vpop.trf.xlu0
    %v4690 = vpop.trf.xlu0
    %v4691 = vpop.trf.xlu0
    %v4692 = vpop.trf.xlu0
    %4693 = vxpose.xlu0.c.b16.start [1/8] %v2351, 128
    %4694 = vxpose.xlu0.c.b16.cont [2/8] 0, 128
    %4695 = vxpose.xlu0.c.b16.cont [3/8] 0, 128
    %4696 = vxpose.xlu0.c.b16.cont [4/8] 0, 128
    %4697 = vxpose.xlu0.c.b16.cont [5/8] 0, 128
    %4698 = vxpose.xlu0.c.b16.cont [6/8] 0, 128
    %4699 = vxpose.xlu0.c.b16.cont [7/8] 0, 128
    %4700 = vxpose.xlu0.c.b16.end [8/8] 0, 128
    %v4701 = vpop.trf.xlu0
    %v4702 = vpop.trf.xlu0
    %v4703 = vpop.trf.xlu0
    %v4704 = vpop.trf.xlu0
    %v4705 = vpop.trf.xlu0
    %v4706 = vpop.trf.xlu0
    %v4707 = vpop.trf.xlu0
    %v4708 = vpop.trf.xlu0
    %v4709 = vpack.c.b16 %v3225, %v3224
    %v4710 = vpack.c.b16 %v3227, %v3226
    %v4711 = vpack.c.b16 %v3229, %v3228
    %v4712 = vpack.c.b16 %v3231, %v3230
    %v4713 = vpack.c.b16 %v3233, %v3232
    %v4714 = vpack.c.b16 %v3235, %v3234
    %v4715 = vpack.c.b16 %v3237, %v3236
    %v4716 = vpack.c.b16 %v3239, %v3238
    %v4717 = vpack.c.b16 %v3240, %v3240
    %v4727 = vsel %vm3395, %v4701, 0
    %v4730 = vsel %vm3395, %v4702, 0
    %v4733 = vsel %vm3402, %v4717, 0
    %4735 = vmatprep.subr.bf16.mxu0 0
    %4736 = vmatpush1.bf16.msra.mxu0 %v4709
    %4737 = vmatprep.subr.bf16.mxu0 0
    %4738 = vmatpush1.bf16.msra.mxu0 %v4710
    %4739 = vmatprep.subr.bf16.mxu0 0
    %4740 = vmatpush1.bf16.msra.mxu0 %v4711
    %4741 = vmatprep.subr.bf16.mxu0 0
    %4742 = vmatpush1.bf16.msra.mxu0 %v4712
    %4743 = vmatprep.subr.bf16.mxu0 0
    %4744 = vmatpush1.bf16.msra.mxu0 %v4713
    %4745 = vmatprep.subr.bf16.mxu0 0
    %4746 = vmatpush1.bf16.msra.mxu0 %v4714
    %4747 = vmatprep.subr.bf16.mxu0 0
    %4748 = vmatpush1.bf16.msra.mxu0 %v4715
    %4749 = vmatprep.subr.bf16.mxu0 0
    %4750 = vmatpush1.bf16.msra.mxu0 %v4716
    %4751 = vmatprep.subr.bf16.mxu0 0
    %4752 = vmatpush1.bf16.msra.mxu0 %v4733
    %4753 = vmatprep.subr.bf16.mxu0 0
    %4754 = vmatpush1.bf16.msra.mxu0 0
    %4755 = vmatprep.subr.bf16.mxu0 0
    %4756 = vmatpush1.bf16.msra.mxu0 0
    %4757 = vmatprep.subr.bf16.mxu0 0
    %4758 = vmatpush1.bf16.msra.mxu0 0
    %4759 = vmatprep.subr.bf16.mxu0 0
    %4760 = vmatpush1.bf16.msra.mxu0 0
    %4761 = vmatprep.subr.bf16.mxu0 0
    %4762 = vmatpush1.bf16.msra.mxu0 0
    %4763 = vmatprep.subr.bf16.mxu0 0
    %4764 = vmatpush1.bf16.msra.mxu0 0
    %4765 = vmatprep.subr.bf16.mxu0 0
    %4766 = vmatpush1.bf16.msra.mxu0 0
    %4767 = vmatprep.mubr.bf16.mxu0 %v4727
    %4768 = vmatmul.mubr.bf16.gmra.mrb[0].mxu0 %v4685
    %v4769 = vpop.f32.mrb[0].mxu0
    %v4770 = vadd.f32 0.0, %v4769
    %v4771 = vpop.f32.mrb[0].mxu0
    %v4772 = vpop.f32.mrb[0].mxu0
    %v4773 = vadd.f32 0.0, %v4772
    %v4774 = vpop.f32.mrb[0].mxu0
    %4775 = vmatprep.mubr.bf16.mxu0 %v4730
    %4776 = vmatmul.mubr.bf16.gmra.mrb[0].mxu0 %v4686
    %v4777 = vpop.f32.mrb[0].mxu0
    %v4778 = vadd.f32 0.0, %v4777
    %v4779 = vpop.f32.mrb[0].mxu0
    %v4780 = vpop.f32.mrb[0].mxu0
    %v4781 = vadd.f32 0.0, %v4780
    %v4782 = vpop.f32.mrb[0].mxu0
    %4783 = vdwg.mxu0
    %v4784 = vmul.f32 %v4770, %v3292
    %v4785 = vmul.f32 %v4773, %v3293
    %v4786 = vmul.f32 %v4778, %v3294
    %v4787 = vmul.f32 %v4781, %v3295
    %v4788 = vpack.c.bf16 %v4785, %v4784
    %v4789 = vpack.c.bf16 %v4787, %v4786
    %4790 = vmatprep.subr.bf16.mxu0 0
    %4791 = vmatpush1.bf16.msra.mxu0 %v3493
    %4792 = vmatprep.subr.bf16.mxu0 0
    %4793 = vmatpush1.bf16.msra.mxu0 %v3494
    %4794 = vmatprep.subr.bf16.mxu0 0
    %4795 = vmatpush1.bf16.msra.mxu0 %v3495
    %4796 = vmatprep.subr.bf16.mxu0 0
    %4797 = vmatpush1.bf16.msra.mxu0 %v3496
    %4798 = vmatprep.subr.bf16.mxu0 0
    %4799 = vmatpush1.bf16.msra.mxu0 %v3497
    %4800 = vmatprep.subr.bf16.mxu0 0
    %4801 = vmatpush1.bf16.msra.mxu0 %v3498
    %4802 = vmatprep.subr.bf16.mxu0 0
    %4803 = vmatpush1.bf16.msra.mxu0 %v3499
    %4804 = vmatprep.subr.bf16.mxu0 0
    %4805 = vmatpush1.bf16.msra.mxu0 %v3500
    %4806 = vmatprep.subr.bf16.mxu0 0
    %4807 = vmatpush1.bf16.msra.mxu0 0
    %4808 = vmatprep.subr.bf16.mxu0 0
    %4809 = vmatpush1.bf16.msra.mxu0 0
    %4810 = vmatprep.subr.bf16.mxu0 0
    %4811 = vmatpush1.bf16.msra.mxu0 0
    %4812 = vmatprep.subr.bf16.mxu0 0
    %4813 = vmatpush1.bf16.msra.mxu0 0
    %4814 = vmatprep.subr.bf16.mxu0 0
    %4815 = vmatpush1.bf16.msra.mxu0 0
    %4816 = vmatprep.subr.bf16.mxu0 0
    %4817 = vmatpush1.bf16.msra.mxu0 0
    %4818 = vmatprep.subr.bf16.mxu0 0
    %4819 = vmatpush1.bf16.msra.mxu0 0
    %4820 = vmatprep.subr.bf16.mxu0 0
    %4821 = vmatpush1.bf16.msra.mxu0 0
    %4822 = vmatprep.mubr.bf16.mxu0 0
    %4823 = vmatmul.mubr.bf16.gmra.mrb[0].mxu0 %v4788
    %v4824 = vpop.f32.mrb[0].mxu0
    %v4825 = vadd.f32 0.0, %v4824
    %v4826 = vpop.f32.mrb[0].mxu0
    %v4827 = vpop.f32.mrb[0].mxu0
    %v4828 = vadd.f32 0.0, %v4827
    %v4829 = vpop.f32.mrb[0].mxu0
    %4830 = vmatprep.mubr.bf16.mxu0 0
    %4831 = vmatmul.mubr.bf16.gmra.mrb[0].mxu0 %v4789
    %v4832 = vpop.f32.mrb[0].mxu0
    %v4833 = vadd.f32 0.0, %v4832
    %v4834 = vpop.f32.mrb[0].mxu0
    %v4835 = vpop.f32.mrb[0].mxu0
    %v4836 = vadd.f32 0.0, %v4835
    %v4837 = vpop.f32.mrb[0].mxu0
    %4838 = vdwg.mxu0
    %v4839 = vpack.c.bf16 %v4828, %v4825
    %v4840 = vpack.c.bf16 %v4836, %v4833
    %4841 = vmatprep.subr.bf16.mxu0 0
    %4842 = vmatpush1.bf16.msra.mxu0 %v4839
    %4843 = vmatprep.subr.bf16.mxu0 0
    %4844 = vmatpush1.bf16.msra.mxu0 %v4840
    %4845 = vmatprep.subr.bf16.mxu0 0
    %4846 = vmatpush1.bf16.msra.mxu0 0
    %4847 = vmatprep.subr.bf16.mxu0 0
    %4848 = vmatpush1.bf16.msra.mxu0 0
    %4849 = vmatprep.subr.bf16.mxu0 0
    %4850 = vmatpush1.bf16.msra.mxu0 0
    %4851 = vmatprep.subr.bf16.mxu0 0
    %4852 = vmatpush1.bf16.msra.mxu0 0
    %4853 = vmatprep.subr.bf16.mxu0 0
    %4854 = vmatpush1.bf16.msra.mxu0 0
    %4855 = vmatprep.subr.bf16.mxu0 0
    %4856 = vmatpush1.bf16.msra.mxu0 0
    %4857 = vmatprep.subr.bf16.mxu0 0
    %4858 = vmatpush1.bf16.msra.mxu0 0
    %4859 = vmatprep.subr.bf16.mxu0 0
    %4860 = vmatpush1.bf16.msra.mxu0 0
    %4861 = vmatprep.subr.bf16.mxu0 0
    %4862 = vmatpush1.bf16.msra.mxu0 0
    %4863 = vmatprep.subr.bf16.mxu0 0
    %4864 = vmatpush1.bf16.msra.mxu0 0
    %4865 = vmatprep.subr.bf16.mxu0 0
    %4866 = vmatpush1.bf16.msra.mxu0 0
    %4867 = vmatprep.subr.bf16.mxu0 0
    %4868 = vmatpush1.bf16.msra.mxu0 0
    %4869 = vmatprep.subr.bf16.mxu0 0
    %4870 = vmatpush1.bf16.msra.mxu0 0
    %4871 = vmatprep.subr.bf16.mxu0 0
    %4872 = vmatpush1.bf16.msra.mxu0 0
    %4873 = vmatprep.mubr.bf16.mxu0 0
    %4874 = vmatmul.mubr.bf16.gmra.mrb[0].mxu0 %v3604
    %v4875 = vpop.f32.mrb[0].mxu0
    %v4876 = vadd.f32 %v3329, %v4875
    %v4877 = vpop.f32.mrb[0].mxu0
    %v4878 = vpop.f32.mrb[0].mxu0
    %v4879 = vadd.f32 %v3330, %v4878
    %v4880 = vpop.f32.mrb[0].mxu0
    %4881 = vmatprep.mubr.bf16.mxu0 0
    %4882 = vmatmul.mubr.bf16.gmra.mrb[0].mxu0 %v3607
    %v4883 = vpop.f32.mrb[0].mxu0
    %v4884 = vadd.f32 %v3331, %v4883
    %v4885 = vpop.f32.mrb[0].mxu0
    %v4886 = vpop.f32.mrb[0].mxu0
    %v4887 = vadd.f32 %v3332, %v4886
    %v4888 = vpop.f32.mrb[0].mxu0
    %4889 = vmatprep.mubr.bf16.mxu0 0
    %4890 = vmatmul.mubr.bf16.gmra.mrb[0].mxu0 %v3610
    %v4891 = vpop.f32.mrb[0].mxu0
    %v4892 = vadd.f32 %v3333, %v4891
    %v4893 = vpop.f32.mrb[0].mxu0
    %v4894 = vpop.f32.mrb[0].mxu0
    %v4895 = vadd.f32 %v3334, %v4894
    %v4896 = vpop.f32.mrb[0].mxu0
    %4897 = vmatprep.mubr.bf16.mxu0 0
    %4898 = vmatmul.mubr.bf16.gmra.mrb[0].mxu0 %v3613
    %v4899 = vpop.f32.mrb[0].mxu0
    %v4900 = vadd.f32 %v3335, %v4899
    %v4901 = vpop.f32.mrb[0].mxu0
    %v4902 = vpop.f32.mrb[0].mxu0
    %v4903 = vadd.f32 %v3336, %v4902
    %v4904 = vpop.f32.mrb[0].mxu0
    %4905 = vmatprep.mubr.bf16.mxu0 0
    %4906 = vmatmul.mubr.bf16.gmra.mrb[0].mxu0 %v3616
    %v4907 = vpop.f32.mrb[0].mxu0
    %v4908 = vadd.f32 %v3337, %v4907
    %v4909 = vpop.f32.mrb[0].mxu0
    %v4910 = vpop.f32.mrb[0].mxu0
    %v4911 = vadd.f32 %v3338, %v4910
    %v4912 = vpop.f32.mrb[0].mxu0
    %4913 = vmatprep.mubr.bf16.mxu0 0
    %4914 = vmatmul.mubr.bf16.gmra.mrb[0].mxu0 %v3619
    %v4915 = vpop.f32.mrb[0].mxu0
    %v4916 = vadd.f32 %v3339, %v4915
    %v4917 = vpop.f32.mrb[0].mxu0
    %v4918 = vpop.f32.mrb[0].mxu0
    %v4919 = vadd.f32 %v3340, %v4918
    %v4920 = vpop.f32.mrb[0].mxu0
    %4921 = vmatprep.mubr.bf16.mxu0 0
    %4922 = vmatmul.mubr.bf16.gmra.mrb[0].mxu0 %v3622
    %v4923 = vpop.f32.mrb[0].mxu0
    %v4924 = vadd.f32 %v3341, %v4923
    %v4925 = vpop.f32.mrb[0].mxu0
    %v4926 = vpop.f32.mrb[0].mxu0
    %v4927 = vadd.f32 %v3342, %v4926
    %v4928 = vpop.f32.mrb[0].mxu0
    %4929 = vmatprep.mubr.bf16.mxu0 0
    %4930 = vmatmul.mubr.bf16.gmra.mrb[0].mxu0 %v3625
    %v4931 = vpop.f32.mrb[0].mxu0
    %v4932 = vadd.f32 %v3343, %v4931
    %v4933 = vpop.f32.mrb[0].mxu0
    %v4934 = vpop.f32.mrb[0].mxu0
    %v4935 = vadd.f32 %v3344, %v4934
    %v4936 = vpop.f32.mrb[0].mxu0
    %4937 = vmatprep.mubr.bf16.mxu0 0
    %4938 = vmatmul.mubr.bf16.gmra.mrb[0].mxu0 %v3628
    %v4939 = vpop.f32.mrb[0].mxu0
    %v4940 = vadd.f32 %v3345, %v4939
    %v4941 = vpop.f32.mrb[0].mxu0
    %v4942 = vpop.f32.mrb[0].mxu0
    %v4943 = vpop.f32.mrb[0].mxu0
    %4944 = vdwg.mxu0
    %v4945 = vadd.f32 %v182, %v4876
    %v4946 = vadd.f32 %v183, %v4879
    %v4947 = vadd.f32 %v184, %v4884
    %v4948 = vadd.f32 %v185, %v4887
    %v4949 = vadd.f32 %v186, %v4892
    %v4950 = vadd.f32 %v187, %v4895
    %v4951 = vadd.f32 %v188, %v4900
    %v4952 = vadd.f32 %v189, %v4903
    %v4953 = vadd.f32 %v190, %v4908
    %v4954 = vadd.f32 %v191, %v4911
    %v4955 = vadd.f32 %v192, %v4916
    %v4956 = vadd.f32 %v193, %v4919
    %v4957 = vadd.f32 %v194, %v4924
    %v4958 = vadd.f32 %v195, %v4927
    %v4959 = vadd.f32 %v196, %v4932
    %v4960 = vadd.f32 %v197, %v4935
    %v4961 = vadd.f32 %v198, %v4940
    %s4962 = scalar_lea.vmem [#allocation11], 544
    %4963 = vst [vmem:[%s4962] sm:$0xff] %v4945
    %4964 = vst [vmem:[%s4962 + $0x8] sm:$0xff] %v4946
    %4965 = vst [vmem:[%s4962 + $0x10] sm:$0xff] %v4947
    %4966 = vst [vmem:[%s4962 + $0x18] sm:$0xff] %v4948
    %4967 = vst [vmem:[%s4962 + $0x20] sm:$0xff] %v4949
    %4968 = vst [vmem:[%s4962 + $0x28] sm:$0xff] %v4950
    %4969 = vst [vmem:[%s4962 + $0x30] sm:$0xff] %v4951
    %4970 = vst [vmem:[%s4962 + $0x38] sm:$0xff] %v4952
    %4971 = vst [vmem:[%s4962 + $0x40] sm:$0xff] %v4953
    %4972 = vst [vmem:[%s4962 + $0x48] sm:$0xff] %v4954
    %4973 = vst [vmem:[%s4962 + $0x50] sm:$0xff] %v4955
    %4974 = vst [vmem:[%s4962 + $0x58] sm:$0xff] %v4956
    %4975 = vst [vmem:[%s4962 + $0x60] sm:$0xff] %v4957
    %4976 = vst [vmem:[%s4962 + $0x68] sm:$0xff] %v4958
    %4977 = vst [vmem:[%s4962 + $0x70] sm:$0xff] %v4959
    %4978 = vst [vmem:[%s4962 + $0x78] sm:$0xff] %v4960
    %4979 = vst [vmem:[%s4962 + $0x80] sm:$0xff] %v4961
    %4980 = vxpose.xlu0.c.b16.start [1/8] %v2352, 128
    %4981 = vxpose.xlu0.c.b16.cont [2/8] %v2353, 128
    %4982 = vxpose.xlu0.c.b16.cont [3/8] %v2354, 128
    %4983 = vxpose.xlu0.c.b16.cont [4/8] %v2355, 128
    %4984 = vxpose.xlu0.c.b16.cont [5/8] %v2356, 128
    %4985 = vxpose.xlu0.c.b16.cont [6/8] %v2357, 128
    %4986 = vxpose.xlu0.c.b16.cont [7/8] %v2358, 128
    %4987 = vxpose.xlu0.c.b16.end [8/8] %v2359, 128
    %v4988 = vpop.trf.xlu0
    %v4989 = vpop.trf.xlu0
    %v4990 = vpop.trf.xlu0
    %v4991 = vpop.trf.xlu0
    %v4992 = vpop.trf.xlu0
    %v4993 = vpop.trf.xlu0
    %v4994 = vpop.trf.xlu0
    %v4995 = vpop.trf.xlu0
    %4996 = vxpose.xlu0.c.b16.start [1/8] %v2360, 128
    %4997 = vxpose.xlu0.c.b16.cont [2/8] 0, 128
    %4998 = vxpose.xlu0.c.b16.cont [3/8] 0, 128
    %4999 = vxpose.xlu0.c.b16.cont [4/8] 0, 128
    %5000 = vxpose.xlu0.c.b16.cont [5/8] 0, 128
    %5001 = vxpose.xlu0.c.b16.cont [6/8] 0, 128
    %5002 = vxpose.xlu0.c.b16.cont [7/8] 0, 128
    %5003 = vxpose.xlu0.c.b16.end [8/8] 0, 128
    %v5004 = vpop.trf.xlu0
    %v5005 = vpop.trf.xlu0
    %v5006 = vpop.trf.xlu0
    %v5007 = vpop.trf.xlu0
    %v5008 = vpop.trf.xlu0
    %v5009 = vpop.trf.xlu0
    %v5010 = vpop.trf.xlu0
    %v5011 = vpop.trf.xlu0
    %v5012 = vpack.c.b16 %v3242, %v3241
    %v5013 = vpack.c.b16 %v3244, %v3243
    %v5014 = vpack.c.b16 %v3246, %v3245
    %v5015 = vpack.c.b16 %v3248, %v3247
    %v5016 = vpack.c.b16 %v3250, %v3249
    %v5017 = vpack.c.b16 %v3252, %v3251
    %v5018 = vpack.c.b16 %v3254, %v3253
    %v5019 = vpack.c.b16 %v3256, %v3255
    %v5020 = vpack.c.b16 %v3257, %v3257
    %v5030 = vsel %vm3395, %v5004, 0
    %v5033 = vsel %vm3395, %v5005, 0
    %v5036 = vsel %vm3402, %v5020, 0
    %5038 = vmatprep.subr.bf16.mxu0 0
    %5039 = vmatpush1.bf16.msra.mxu0 %v5012
    %5040 = vmatprep.subr.bf16.mxu0 0
    %5041 = vmatpush1.bf16.msra.mxu0 %v5013
    %5042 = vmatprep.subr.bf16.mxu0 0
    %5043 = vmatpush1.bf16.msra.mxu0 %v5014
    %5044 = vmatprep.subr.bf16.mxu0 0
    %5045 = vmatpush1.bf16.msra.mxu0 %v5015
    %5046 = vmatprep.subr.bf16.mxu0 0
    %5047 = vmatpush1.bf16.msra.mxu0 %v5016
    %5048 = vmatprep.subr.bf16.mxu0 0
    %5049 = vmatpush1.bf16.msra.mxu0 %v5017
    %5050 = vmatprep.subr.bf16.mxu0 0
    %5051 = vmatpush1.bf16.msra.mxu0 %v5018
    %5052 = vmatprep.subr.bf16.mxu0 0
    %5053 = vmatpush1.bf16.msra.mxu0 %v5019
    %5054 = vmatprep.subr.bf16.mxu0 0
    %5055 = vmatpush1.bf16.msra.mxu0 %v5036
    %5056 = vmatprep.subr.bf16.mxu0 0
    %5057 = vmatpush1.bf16.msra.mxu0 0
    %5058 = vmatprep.subr.bf16.mxu0 0
    %5059 = vmatpush1.bf16.msra.mxu0 0
    %5060 = vmatprep.subr.bf16.mxu0 0
    %5061 = vmatpush1.bf16.msra.mxu0 0
    %5062 = vmatprep.subr.bf16.mxu0 0
    %5063 = vmatpush1.bf16.msra.mxu0 0
    %5064 = vmatprep.subr.bf16.mxu0 0
    %5065 = vmatpush1.bf16.msra.mxu0 0
    %5066 = vmatprep.subr.bf16.mxu0 0
    %5067 = vmatpush1.bf16.msra.mxu0 0
    %5068 = vmatprep.subr.bf16.mxu0 0
    %5069 = vmatpush1.bf16.msra.mxu0 0
    %5070 = vmatprep.mubr.bf16.mxu0 %v5030
    %5071 = vmatmul.mubr.bf16.gmra.mrb[0].mxu0 %v4988
    %v5072 = vpop.f32.mrb[0].mxu0
    %v5073 = vadd.f32 0.0, %v5072
    %v5074 = vpop.f32.mrb[0].mxu0
    %v5075 = vpop.f32.mrb[0].mxu0
    %v5076 = vadd.f32 0.0, %v5075
    %v5077 = vpop.f32.mrb[0].mxu0
    %5078 = vmatprep.mubr.bf16.mxu0 %v5033
    %5079 = vmatmul.mubr.bf16.gmra.mrb[0].mxu0 %v4989
    %v5080 = vpop.f32.mrb[0].mxu0
    %v5081 = vadd.f32 0.0, %v5080
    %v5082 = vpop.f32.mrb[0].mxu0
    %v5083 = vpop.f32.mrb[0].mxu0
    %v5084 = vadd.f32 0.0, %v5083
    %v5085 = vpop.f32.mrb[0].mxu0
    %5086 = vdwg.mxu0
    %v5087 = vmul.f32 %v5073, %v3292
    %v5088 = vmul.f32 %v5076, %v3293
    %v5089 = vmul.f32 %v5081, %v3294
    %v5090 = vmul.f32 %v5084, %v3295
    %v5091 = vpack.c.bf16 %v5088, %v5087
    %v5092 = vpack.c.bf16 %v5090, %v5089
    %5093 = vmatprep.subr.bf16.mxu0 0
    %5094 = vmatpush1.bf16.msra.mxu0 %v3493
    %5095 = vmatprep.subr.bf16.mxu0 0
    %5096 = vmatpush1.bf16.msra.mxu0 %v3494
    %5097 = vmatprep.subr.bf16.mxu0 0
    %5098 = vmatpush1.bf16.msra.mxu0 %v3495
    %5099 = vmatprep.subr.bf16.mxu0 0
    %5100 = vmatpush1.bf16.msra.mxu0 %v3496
    %5101 = vmatprep.subr.bf16.mxu0 0
    %5102 = vmatpush1.bf16.msra.mxu0 %v3497
    %5103 = vmatprep.subr.bf16.mxu0 0
    %5104 = vmatpush1.bf16.msra.mxu0 %v3498
    %5105 = vmatprep.subr.bf16.mxu0 0
    %5106 = vmatpush1.bf16.msra.mxu0 %v3499
    %5107 = vmatprep.subr.bf16.mxu0 0
    %5108 = vmatpush1.bf16.msra.mxu0 %v3500
    %5109 = vmatprep.subr.bf16.mxu0 0
    %5110 = vmatpush1.bf16.msra.mxu0 0
    %5111 = vmatprep.subr.bf16.mxu0 0
    %5112 = vmatpush1.bf16.msra.mxu0 0
    %5113 = vmatprep.subr.bf16.mxu0 0
    %5114 = vmatpush1.bf16.msra.mxu0 0
    %5115 = vmatprep.subr.bf16.mxu0 0
    %5116 = vmatpush1.bf16.msra.mxu0 0
    %5117 = vmatprep.subr.bf16.mxu0 0
    %5118 = vmatpush1.bf16.msra.mxu0 0
    %5119 = vmatprep.subr.bf16.mxu0 0
    %5120 = vmatpush1.bf16.msra.mxu0 0
    %5121 = vmatprep.subr.bf16.mxu0 0
    %5122 = vmatpush1.bf16.msra.mxu0 0
    %5123 = vmatprep.subr.bf16.mxu0 0
    %5124 = vmatpush1.bf16.msra.mxu0 0
    %5125 = vmatprep.mubr.bf16.mxu0 0
    %5126 = vmatmul.mubr.bf16.gmra.mrb[0].mxu0 %v5091
    %v5127 = vpop.f32.mrb[0].mxu0
    %v5128 = vadd.f32 0.0, %v5127
    %v5129 = vpop.f32.mrb[0].mxu0
    %v5130 = vpop.f32.mrb[0].mxu0
    %v5131 = vadd.f32 0.0, %v5130
    %v5132 = vpop.f32.mrb[0].mxu0
    %5133 = vmatprep.mubr.bf16.mxu0 0
    %5134 = vmatmul.mubr.bf16.gmra.mrb[0].mxu0 %v5092
    %v5135 = vpop.f32.mrb[0].mxu0
    %v5136 = vadd.f32 0.0, %v5135
    %v5137 = vpop.f32.mrb[0].mxu0
    %v5138 = vpop.f32.mrb[0].mxu0
    %v5139 = vadd.f32 0.0, %v5138
    %v5140 = vpop.f32.mrb[0].mxu0
    %5141 = vdwg.mxu0
    %v5142 = vpack.c.bf16 %v5131, %v5128
    %v5143 = vpack.c.bf16 %v5139, %v5136
    %5144 = vmatprep.subr.bf16.mxu0 0
    %5145 = vmatpush1.bf16.msra.mxu0 %v5142
    %5146 = vmatprep.subr.bf16.mxu0 0
    %5147 = vmatpush1.bf16.msra.mxu0 %v5143
    %5148 = vmatprep.subr.bf16.mxu0 0
    %5149 = vmatpush1.bf16.msra.mxu0 0
    %5150 = vmatprep.subr.bf16.mxu0 0
    %5151 = vmatpush1.bf16.msra.mxu0 0
    %5152 = vmatprep.subr.bf16.mxu0 0
    %5153 = vmatpush1.bf16.msra.mxu0 0
    %5154 = vmatprep.subr.bf16.mxu0 0
    %5155 = vmatpush1.bf16.msra.mxu0 0
    %5156 = vmatprep.subr.bf16.mxu0 0
    %5157 = vmatpush1.bf16.msra.mxu0 0
    %5158 = vmatprep.subr.bf16.mxu0 0
    %5159 = vmatpush1.bf16.msra.mxu0 0
    %5160 = vmatprep.subr.bf16.mxu0 0
    %5161 = vmatpush1.bf16.msra.mxu0 0
    %5162 = vmatprep.subr.bf16.mxu0 0
    %5163 = vmatpush1.bf16.msra.mxu0 0
    %5164 = vmatprep.subr.bf16.mxu0 0
    %5165 = vmatpush1.bf16.msra.mxu0 0
    %5166 = vmatprep.subr.bf16.mxu0 0
    %5167 = vmatpush1.bf16.msra.mxu0 0
    %5168 = vmatprep.subr.bf16.mxu0 0
    %5169 = vmatpush1.bf16.msra.mxu0 0
    %5170 = vmatprep.subr.bf16.mxu0 0
    %5171 = vmatpush1.bf16.msra.mxu0 0
    %5172 = vmatprep.subr.bf16.mxu0 0
    %5173 = vmatpush1.bf16.msra.mxu0 0
    %5174 = vmatprep.subr.bf16.mxu0 0
    %5175 = vmatpush1.bf16.msra.mxu0 0
    %5176 = vmatprep.mubr.bf16.mxu0 0
    %5177 = vmatmul.mubr.bf16.gmra.mrb[0].mxu0 %v3604
    %v5178 = vpop.f32.mrb[0].mxu0
    %v5179 = vadd.f32 %v3329, %v5178
    %v5180 = vpop.f32.mrb[0].mxu0
    %v5181 = vpop.f32.mrb[0].mxu0
    %v5182 = vadd.f32 %v3330, %v5181
    %v5183 = vpop.f32.mrb[0].mxu0
    %5184 = vmatprep.mubr.bf16.mxu0 0
    %5185 = vmatmul.mubr.bf16.gmra.mrb[0].mxu0 %v3607
    %v5186 = vpop.f32.mrb[0].mxu0
    %v5187 = vadd.f32 %v3331, %v5186
    %v5188 = vpop.f32.mrb[0].mxu0
    %v5189 = vpop.f32.mrb[0].mxu0
    %v5190 = vadd.f32 %v3332, %v5189
    %v5191 = vpop.f32.mrb[0].mxu0
    %5192 = vmatprep.mubr.bf16.mxu0 0
    %5193 = vmatmul.mubr.bf16.gmra.mrb[0].mxu0 %v3610
    %v5194 = vpop.f32.mrb[0].mxu0
    %v5195 = vadd.f32 %v3333, %v5194
    %v5196 = vpop.f32.mrb[0].mxu0
    %v5197 = vpop.f32.mrb[0].mxu0
    %v5198 = vadd.f32 %v3334, %v5197
    %v5199 = vpop.f32.mrb[0].mxu0
    %5200 = vmatprep.mubr.bf16.mxu0 0
    %5201 = vmatmul.mubr.bf16.gmra.mrb[0].mxu0 %v3613
    %v5202 = vpop.f32.mrb[0].mxu0
    %v5203 = vadd.f32 %v3335, %v5202
    %v5204 = vpop.f32.mrb[0].mxu0
    %v5205 = vpop.f32.mrb[0].mxu0
    %v5206 = vadd.f32 %v3336, %v5205
    %v5207 = vpop.f32.mrb[0].mxu0
    %5208 = vmatprep.mubr.bf16.mxu0 0
    %5209 = vmatmul.mubr.bf16.gmra.mrb[0].mxu0 %v3616
    %v5210 = vpop.f32.mrb[0].mxu0
    %v5211 = vadd.f32 %v3337, %v5210
    %v5212 = vpop.f32.mrb[0].mxu0
    %v5213 = vpop.f32.mrb[0].mxu0
    %v5214 = vadd.f32 %v3338, %v5213
    %v5215 = vpop.f32.mrb[0].mxu0
    %5216 = vmatprep.mubr.bf16.mxu0 0
    %5217 = vmatmul.mubr.bf16.gmra.mrb[0].mxu0 %v3619
    %v5218 = vpop.f32.mrb[0].mxu0
    %v5219 = vadd.f32 %v3339, %v5218
    %v5220 = vpop.f32.mrb[0].mxu0
    %v5221 = vpop.f32.mrb[0].mxu0
    %v5222 = vadd.f32 %v3340, %v5221
    %v5223 = vpop.f32.mrb[0].mxu0
    %5224 = vmatprep.mubr.bf16.mxu0 0
    %5225 = vmatmul.mubr.bf16.gmra.mrb[0].mxu0 %v3622
    %v5226 = vpop.f32.mrb[0].mxu0
    %v5227 = vadd.f32 %v3341, %v5226
    %v5228 = vpop.f32.mrb[0].mxu0
    %v5229 = vpop.f32.mrb[0].mxu0
    %v5230 = vadd.f32 %v3342, %v5229
    %v5231 = vpop.f32.mrb[0].mxu0
    %5232 = vmatprep.mubr.bf16.mxu0 0
    %5233 = vmatmul.mubr.bf16.gmra.mrb[0].mxu0 %v3625
    %v5234 = vpop.f32.mrb[0].mxu0
    %v5235 = vadd.f32 %v3343, %v5234
    %v5236 = vpop.f32.mrb[0].mxu0
    %v5237 = vpop.f32.mrb[0].mxu0
    %v5238 = vadd.f32 %v3344, %v5237
    %v5239 = vpop.f32.mrb[0].mxu0
    %5240 = vmatprep.mubr.bf16.mxu0 0
    %5241 = vmatmul.mubr.bf16.gmra.mrb[0].mxu0 %v3628
    %v5242 = vpop.f32.mrb[0].mxu0
    %v5243 = vadd.f32 %v3345, %v5242
    %v5244 = vpop.f32.mrb[0].mxu0
    %v5245 = vpop.f32.mrb[0].mxu0
    %v5246 = vpop.f32.mrb[0].mxu0
    %5247 = vdwg.mxu0
    %v5248 = vadd.f32 %v199, %v5179
    %v5249 = vadd.f32 %v200, %v5182
    %v5250 = vadd.f32 %v201, %v5187
    %v5251 = vadd.f32 %v202, %v5190
    %v5252 = vadd.f32 %v203, %v5195
    %v5253 = vadd.f32 %v204, %v5198
    %v5254 = vadd.f32 %v205, %v5203
    %v5255 = vadd.f32 %v206, %v5206
    %v5256 = vadd.f32 %v207, %v5211
    %v5257 = vadd.f32 %v208, %v5214
    %v5258 = vadd.f32 %v209, %v5219
    %v5259 = vadd.f32 %v210, %v5222
    %v5260 = vadd.f32 %v211, %v5227
    %v5261 = vadd.f32 %v212, %v5230
    %v5262 = vadd.f32 %v213, %v5235
    %v5263 = vadd.f32 %v214, %v5238
    %v5264 = vadd.f32 %v215, %v5243
    %s5265 = scalar_lea.vmem [#allocation11], 680
    %5266 = vst [vmem:[%s5265] sm:$0xff] %v5248
    %5267 = vst [vmem:[%s5265 + $0x8] sm:$0xff] %v5249
    %5268 = vst [vmem:[%s5265 + $0x10] sm:$0xff] %v5250
    %5269 = vst [vmem:[%s5265 + $0x18] sm:$0xff] %v5251
    %5270 = vst [vmem:[%s5265 + $0x20] sm:$0xff] %v5252
    %5271 = vst [vmem:[%s5265 + $0x28] sm:$0xff] %v5253
    %5272 = vst [vmem:[%s5265 + $0x30] sm:$0xff] %v5254
    %5273 = vst [vmem:[%s5265 + $0x38] sm:$0xff] %v5255
    %5274 = vst [vmem:[%s5265 + $0x40] sm:$0xff] %v5256
    %5275 = vst [vmem:[%s5265 + $0x48] sm:$0xff] %v5257
    %5276 = vst [vmem:[%s5265 + $0x50] sm:$0xff] %v5258
    %5277 = vst [vmem:[%s5265 + $0x58] sm:$0xff] %v5259
    %5278 = vst [vmem:[%s5265 + $0x60] sm:$0xff] %v5260
    %5279 = vst [vmem:[%s5265 + $0x68] sm:$0xff] %v5261
    %5280 = vst [vmem:[%s5265 + $0x70] sm:$0xff] %v5262
    %5281 = vst [vmem:[%s5265 + $0x78] sm:$0xff] %v5263
    %5282 = vst [vmem:[%s5265 + $0x80] sm:$0xff] %v5264
    %5283 = vxpose.xlu0.c.b16.start [1/8] %v2361, 128
    %5284 = vxpose.xlu0.c.b16.cont [2/8] %v2362, 128
    %5285 = vxpose.xlu0.c.b16.cont [3/8] %v2363, 128
    %5286 = vxpose.xlu0.c.b16.cont [4/8] %v2364, 128
    %5287 = vxpose.xlu0.c.b16.cont [5/8] %v2365, 128
    %5288 = vxpose.xlu0.c.b16.cont [6/8] %v2366, 128
    %5289 = vxpose.xlu0.c.b16.cont [7/8] %v2367, 128
    %5290 = vxpose.xlu0.c.b16.end [8/8] %v2368, 128
    %v5291 = vpop.trf.xlu0
    %v5292 = vpop.trf.xlu0
    %v5293 = vpop.trf.xlu0
    %v5294 = vpop.trf.xlu0
    %v5295 = vpop.trf.xlu0
    %v5296 = vpop.trf.xlu0
    %v5297 = vpop.trf.xlu0
    %v5298 = vpop.trf.xlu0
    %5299 = vxpose.xlu0.c.b16.start [1/8] %v2369, 128
    %5300 = vxpose.xlu0.c.b16.cont [2/8] 0, 128
    %5301 = vxpose.xlu0.c.b16.cont [3/8] 0, 128
    %5302 = vxpose.xlu0.c.b16.cont [4/8] 0, 128
    %5303 = vxpose.xlu0.c.b16.cont [5/8] 0, 128
    %5304 = vxpose.xlu0.c.b16.cont [6/8] 0, 128
    %5305 = vxpose.xlu0.c.b16.cont [7/8] 0, 128
    %5306 = vxpose.xlu0.c.b16.end [8/8] 0, 128
    %v5307 = vpop.trf.xlu0
    %v5308 = vpop.trf.xlu0
    %v5309 = vpop.trf.xlu0
    %v5310 = vpop.trf.xlu0
    %v5311 = vpop.trf.xlu0
    %v5312 = vpop.trf.xlu0
    %v5313 = vpop.trf.xlu0
    %v5314 = vpop.trf.xlu0
    %v5315 = vpack.c.b16 %v3259, %v3258
    %v5316 = vpack.c.b16 %v3261, %v3260
    %v5317 = vpack.c.b16 %v3263, %v3262
    %v5318 = vpack.c.b16 %v3265, %v3264
    %v5319 = vpack.c.b16 %v3267, %v3266
    %v5320 = vpack.c.b16 %v3269, %v3268
    %v5321 = vpack.c.b16 %v3271, %v3270
    %v5322 = vpack.c.b16 %v3273, %v3272
    %v5323 = vpack.c.b16 %v3274, %v3274
    %v5333 = vsel %vm3395, %v5307, 0
    %v5336 = vsel %vm3395, %v5308, 0
    %v5339 = vsel %vm3402, %v5323, 0
    %5341 = vmatprep.subr.bf16.mxu0 0
    %5342 = vmatpush1.bf16.msra.mxu0 %v5315
    %5343 = vmatprep.subr.bf16.mxu0 0
    %5344 = vmatpush1.bf16.msra.mxu0 %v5316
    %5345 = vmatprep.subr.bf16.mxu0 0
    %5346 = vmatpush1.bf16.msra.mxu0 %v5317
    %5347 = vmatprep.subr.bf16.mxu0 0
    %5348 = vmatpush1.bf16.msra.mxu0 %v5318
    %5349 = vmatprep.subr.bf16.mxu0 0
    %5350 = vmatpush1.bf16.msra.mxu0 %v5319
    %5351 = vmatprep.subr.bf16.mxu0 0
    %5352 = vmatpush1.bf16.msra.mxu0 %v5320
    %5353 = vmatprep.subr.bf16.mxu0 0
    %5354 = vmatpush1.bf16.msra.mxu0 %v5321
    %5355 = vmatprep.subr.bf16.mxu0 0
    %5356 = vmatpush1.bf16.msra.mxu0 %v5322
    %5357 = vmatprep.subr.bf16.mxu0 0
    %5358 = vmatpush1.bf16.msra.mxu0 %v5339
    %5359 = vmatprep.subr.bf16.mxu0 0
    %5360 = vmatpush1.bf16.msra.mxu0 0
    %5361 = vmatprep.subr.bf16.mxu0 0
    %5362 = vmatpush1.bf16.msra.mxu0 0
    %5363 = vmatprep.subr.bf16.mxu0 0
    %5364 = vmatpush1.bf16.msra.mxu0 0
    %5365 = vmatprep.subr.bf16.mxu0 0
    %5366 = vmatpush1.bf16.msra.mxu0 0
    %5367 = vmatprep.subr.bf16.mxu0 0
    %5368 = vmatpush1.bf16.msra.mxu0 0
    %5369 = vmatprep.subr.bf16.mxu0 0
    %5370 = vmatpush1.bf16.msra.mxu0 0
    %5371 = vmatprep.subr.bf16.mxu0 0
    %5372 = vmatpush1.bf16.msra.mxu0 0
    %5373 = vmatprep.mubr.bf16.mxu0 %v5333
    %5374 = vmatmul.mubr.bf16.gmra.mrb[0].mxu0 %v5291
    %v5375 = vpop.f32.mrb[0].mxu0
    %v5376 = vadd.f32 0.0, %v5375
    %v5377 = vpop.f32.mrb[0].mxu0
    %v5378 = vpop.f32.mrb[0].mxu0
    %v5379 = vadd.f32 0.0, %v5378
    %v5380 = vpop.f32.mrb[0].mxu0
    %5381 = vmatprep.mubr.bf16.mxu0 %v5336
    %5382 = vmatmul.mubr.bf16.gmra.mrb[0].mxu0 %v5292
    %v5383 = vpop.f32.mrb[0].mxu0
    %v5384 = vadd.f32 0.0, %v5383
    %v5385 = vpop.f32.mrb[0].mxu0
    %v5386 = vpop.f32.mrb[0].mxu0
    %v5387 = vadd.f32 0.0, %v5386
    %v5388 = vpop.f32.mrb[0].mxu0
    %5389 = vdwg.mxu0
    %v5390 = vmul.f32 %v5376, %v3292
    %v5391 = vmul.f32 %v5379, %v3293
    %v5392 = vmul.f32 %v5384, %v3294
    %v5393 = vmul.f32 %v5387, %v3295
    %v5394 = vpack.c.bf16 %v5391, %v5390
    %v5395 = vpack.c.bf16 %v5393, %v5392
    %5396 = vmatprep.subr.bf16.mxu0 0
    %5397 = vmatpush1.bf16.msra.mxu0 %v3493
    %5398 = vmatprep.subr.bf16.mxu0 0
    %5399 = vmatpush1.bf16.msra.mxu0 %v3494
    %5400 = vmatprep.subr.bf16.mxu0 0
    %5401 = vmatpush1.bf16.msra.mxu0 %v3495
    %5402 = vmatprep.subr.bf16.mxu0 0
    %5403 = vmatpush1.bf16.msra.mxu0 %v3496
    %5404 = vmatprep.subr.bf16.mxu0 0
    %5405 = vmatpush1.bf16.msra.mxu0 %v3497
    %5406 = vmatprep.subr.bf16.mxu0 0
    %5407 = vmatpush1.bf16.msra.mxu0 %v3498
    %5408 = vmatprep.subr.bf16.mxu0 0
    %5409 = vmatpush1.bf16.msra.mxu0 %v3499
    %5410 = vmatprep.subr.bf16.mxu0 0
    %5411 = vmatpush1.bf16.msra.mxu0 %v3500
    %5412 = vmatprep.subr.bf16.mxu0 0
    %5413 = vmatpush1.bf16.msra.mxu0 0
    %5414 = vmatprep.subr.bf16.mxu0 0
    %5415 = vmatpush1.bf16.msra.mxu0 0
    %5416 = vmatprep.subr.bf16.mxu0 0
    %5417 = vmatpush1.bf16.msra.mxu0 0
    %5418 = vmatprep.subr.bf16.mxu0 0
    %5419 = vmatpush1.bf16.msra.mxu0 0
    %5420 = vmatprep.subr.bf16.mxu0 0
    %5421 = vmatpush1.bf16.msra.mxu0 0
    %5422 = vmatprep.subr.bf16.mxu0 0
    %5423 = vmatpush1.bf16.msra.mxu0 0
    %5424 = vmatprep.subr.bf16.mxu0 0
    %5425 = vmatpush1.bf16.msra.mxu0 0
    %5426 = vmatprep.subr.bf16.mxu0 0
    %5427 = vmatpush1.bf16.msra.mxu0 0
    %5428 = vmatprep.mubr.bf16.mxu0 0
    %5429 = vmatmul.mubr.bf16.gmra.mrb[0].mxu0 %v5394
    %v5430 = vpop.f32.mrb[0].mxu0
    %v5431 = vadd.f32 0.0, %v5430
    %v5432 = vpop.f32.mrb[0].mxu0
    %v5433 = vpop.f32.mrb[0].mxu0
    %v5434 = vadd.f32 0.0, %v5433
    %v5435 = vpop.f32.mrb[0].mxu0
    %5436 = vmatprep.mubr.bf16.mxu0 0
    %5437 = vmatmul.mubr.bf16.gmra.mrb[0].mxu0 %v5395
    %v5438 = vpop.f32.mrb[0].mxu0
    %v5439 = vadd.f32 0.0, %v5438
    %v5440 = vpop.f32.mrb[0].mxu0
    %v5441 = vpop.f32.mrb[0].mxu0
    %v5442 = vadd.f32 0.0, %v5441
    %v5443 = vpop.f32.mrb[0].mxu0
    %5444 = vdwg.mxu0
    %v5445 = vpack.c.bf16 %v5434, %v5431
    %v5446 = vpack.c.bf16 %v5442, %v5439
    %5447 = vmatprep.subr.bf16.mxu0 0
    %5448 = vmatpush1.bf16.msra.mxu0 %v5445
    %5449 = vmatprep.subr.bf16.mxu0 0
    %5450 = vmatpush1.bf16.msra.mxu0 %v5446
    %5451 = vmatprep.subr.bf16.mxu0 0
    %5452 = vmatpush1.bf16.msra.mxu0 0
    %5453 = vmatprep.subr.bf16.mxu0 0
    %5454 = vmatpush1.bf16.msra.mxu0 0
    %5455 = vmatprep.subr.bf16.mxu0 0
    %5456 = vmatpush1.bf16.msra.mxu0 0
    %5457 = vmatprep.subr.bf16.mxu0 0
    %5458 = vmatpush1.bf16.msra.mxu0 0
    %5459 = vmatprep.subr.bf16.mxu0 0
    %5460 = vmatpush1.bf16.msra.mxu0 0
    %5461 = vmatprep.subr.bf16.mxu0 0
    %5462 = vmatpush1.bf16.msra.mxu0 0
    %5463 = vmatprep.subr.bf16.mxu0 0
    %5464 = vmatpush1.bf16.msra.mxu0 0
    %5465 = vmatprep.subr.bf16.mxu0 0
    %5466 = vmatpush1.bf16.msra.mxu0 0
    %5467 = vmatprep.subr.bf16.mxu0 0
    %5468 = vmatpush1.bf16.msra.mxu0 0
    %5469 = vmatprep.subr.bf16.mxu0 0
    %5470 = vmatpush1.bf16.msra.mxu0 0
    %5471 = vmatprep.subr.bf16.mxu0 0
    %5472 = vmatpush1.bf16.msra.mxu0 0
    %5473 = vmatprep.subr.bf16.mxu0 0
    %5474 = vmatpush1.bf16.msra.mxu0 0
    %5475 = vmatprep.subr.bf16.mxu0 0
    %5476 = vmatpush1.bf16.msra.mxu0 0
    %5477 = vmatprep.subr.bf16.mxu0 0
    %5478 = vmatpush1.bf16.msra.mxu0 0
    %5479 = vmatprep.mubr.bf16.mxu0 0
    %5480 = vmatmul.mubr.bf16.gmra.mrb[0].mxu0 %v3604
    %v5481 = vpop.f32.mrb[0].mxu0
    %v5482 = vadd.f32 %v3329, %v5481
    %v5483 = vpop.f32.mrb[0].mxu0
    %v5484 = vpop.f32.mrb[0].mxu0
    %v5485 = vadd.f32 %v3330, %v5484
    %v5486 = vpop.f32.mrb[0].mxu0
    %5487 = vmatprep.mubr.bf16.mxu0 0
    %5488 = vmatmul.mubr.bf16.gmra.mrb[0].mxu0 %v3607
    %v5489 = vpop.f32.mrb[0].mxu0
    %v5490 = vadd.f32 %v3331, %v5489
    %v5491 = vpop.f32.mrb[0].mxu0
    %v5492 = vpop.f32.mrb[0].mxu0
    %v5493 = vadd.f32 %v3332, %v5492
    %v5494 = vpop.f32.mrb[0].mxu0
    %5495 = vmatprep.mubr.bf16.mxu0 0
    %5496 = vmatmul.mubr.bf16.gmra.mrb[0].mxu0 %v3610
    %v5497 = vpop.f32.mrb[0].mxu0
    %v5498 = vadd.f32 %v3333, %v5497
    %v5499 = vpop.f32.mrb[0].mxu0
    %v5500 = vpop.f32.mrb[0].mxu0
    %v5501 = vadd.f32 %v3334, %v5500
    %v5502 = vpop.f32.mrb[0].mxu0
    %5503 = vmatprep.mubr.bf16.mxu0 0
    %5504 = vmatmul.mubr.bf16.gmra.mrb[0].mxu0 %v3613
    %v5505 = vpop.f32.mrb[0].mxu0
    %v5506 = vadd.f32 %v3335, %v5505
    %v5507 = vpop.f32.mrb[0].mxu0
    %v5508 = vpop.f32.mrb[0].mxu0
    %v5509 = vadd.f32 %v3336, %v5508
    %v5510 = vpop.f32.mrb[0].mxu0
    %5511 = vmatprep.mubr.bf16.mxu0 0
    %5512 = vmatmul.mubr.bf16.gmra.mrb[0].mxu0 %v3616
    %v5513 = vpop.f32.mrb[0].mxu0
    %v5514 = vadd.f32 %v3337, %v5513
    %v5515 = vpop.f32.mrb[0].mxu0
    %v5516 = vpop.f32.mrb[0].mxu0
    %v5517 = vadd.f32 %v3338, %v5516
    %v5518 = vpop.f32.mrb[0].mxu0
    %5519 = vmatprep.mubr.bf16.mxu0 0
    %5520 = vmatmul.mubr.bf16.gmra.mrb[0].mxu0 %v3619
    %v5521 = vpop.f32.mrb[0].mxu0
    %v5522 = vadd.f32 %v3339, %v5521
    %v5523 = vpop.f32.mrb[0].mxu0
    %v5524 = vpop.f32.mrb[0].mxu0
    %v5525 = vadd.f32 %v3340, %v5524
    %v5526 = vpop.f32.mrb[0].mxu0
    %5527 = vmatprep.mubr.bf16.mxu0 0
    %5528 = vmatmul.mubr.bf16.gmra.mrb[0].mxu0 %v3622
    %v5529 = vpop.f32.mrb[0].mxu0
    %v5530 = vadd.f32 %v3341, %v5529
    %v5531 = vpop.f32.mrb[0].mxu0
    %v5532 = vpop.f32.mrb[0].mxu0
    %v5533 = vadd.f32 %v3342, %v5532
    %v5534 = vpop.f32.mrb[0].mxu0
    %5535 = vmatprep.mubr.bf16.mxu0 0
    %5536 = vmatmul.mubr.bf16.gmra.mrb[0].mxu0 %v3625
    %v5537 = vpop.f32.mrb[0].mxu0
    %v5538 = vadd.f32 %v3343, %v5537
    %v5539 = vpop.f32.mrb[0].mxu0
    %v5540 = vpop.f32.mrb[0].mxu0
    %v5541 = vadd.f32 %v3344, %v5540
    %v5542 = vpop.f32.mrb[0].mxu0
    %5543 = vmatprep.mubr.bf16.mxu0 0
    %5544 = vmatmul.mubr.bf16.gmra.mrb[0].mxu0 %v3628
    %v5545 = vpop.f32.mrb[0].mxu0
    %v5546 = vadd.f32 %v3345, %v5545
    %v5547 = vpop.f32.mrb[0].mxu0
    %v5548 = vpop.f32.mrb[0].mxu0
    %v5549 = vpop.f32.mrb[0].mxu0
    %5550 = vdwg.mxu0
    %v5551 = vadd.f32 %v216, %v5482
    %v5552 = vadd.f32 %v217, %v5485
    %v5553 = vadd.f32 %v218, %v5490
    %v5554 = vadd.f32 %v219, %v5493
    %v5555 = vadd.f32 %v220, %v5498
    %v5556 = vadd.f32 %v221, %v5501
    %v5557 = vadd.f32 %v222, %v5506
    %v5558 = vadd.f32 %v223, %v5509
    %v5559 = vadd.f32 %v224, %v5514
    %v5560 = vadd.f32 %v225, %v5517
    %v5561 = vadd.f32 %v226, %v5522
    %v5562 = vadd.f32 %v227, %v5525
    %v5563 = vadd.f32 %v228, %v5530
    %v5564 = vadd.f32 %v229, %v5533
    %v5565 = vadd.f32 %v230, %v5538
    %v5566 = vadd.f32 %v231, %v5541
    %v5567 = vadd.f32 %v232, %v5546
    %s5568 = scalar_lea.vmem [#allocation11], 816
    %5569 = vst [vmem:[%s5568] sm:$0xff] %v5551
    %5570 = vst [vmem:[%s5568 + $0x8] sm:$0xff] %v5552
    %5571 = vst [vmem:[%s5568 + $0x10] sm:$0xff] %v5553
    %5572 = vst [vmem:[%s5568 + $0x18] sm:$0xff] %v5554
    %5573 = vst [vmem:[%s5568 + $0x20] sm:$0xff] %v5555
    %5574 = vst [vmem:[%s5568 + $0x28] sm:$0xff] %v5556
    %5575 = vst [vmem:[%s5568 + $0x30] sm:$0xff] %v5557
    %5576 = vst [vmem:[%s5568 + $0x38] sm:$0xff] %v5558
    %5577 = vst [vmem:[%s5568 + $0x40] sm:$0xff] %v5559
    %5578 = vst [vmem:[%s5568 + $0x48] sm:$0xff] %v5560
    %5579 = vst [vmem:[%s5568 + $0x50] sm:$0xff] %v5561
    %5580 = vst [vmem:[%s5568 + $0x58] sm:$0xff] %v5562
    %5581 = vst [vmem:[%s5568 + $0x60] sm:$0xff] %v5563
    %5582 = vst [vmem:[%s5568 + $0x68] sm:$0xff] %v5564
    %5583 = vst [vmem:[%s5568 + $0x70] sm:$0xff] %v5565
    %5584 = vst [vmem:[%s5568 + $0x78] sm:$0xff] %v5566
    %5585 = vst [vmem:[%s5568 + $0x80] sm:$0xff] %v5567
    %5586 = vxpose.xlu0.c.b16.start [1/8] %v2370, 128
    %5587 = vxpose.xlu0.c.b16.cont [2/8] %v2371, 128
    %5588 = vxpose.xlu0.c.b16.cont [3/8] %v2372, 128
    %5589 = vxpose.xlu0.c.b16.cont [4/8] %v2373, 128
    %5590 = vxpose.xlu0.c.b16.cont [5/8] %v2374, 128
    %5591 = vxpose.xlu0.c.b16.cont [6/8] %v2375, 128
    %5592 = vxpose.xlu0.c.b16.cont [7/8] %v2376, 128
    %5593 = vxpose.xlu0.c.b16.end [8/8] %v2377, 128
    %v5594 = vpop.trf.xlu0
    %v5595 = vpop.trf.xlu0
    %v5596 = vpop.trf.xlu0
    %v5597 = vpop.trf.xlu0
    %v5598 = vpop.trf.xlu0
    %v5599 = vpop.trf.xlu0
    %v5600 = vpop.trf.xlu0
    %v5601 = vpop.trf.xlu0
    %5602 = vxpose.xlu0.c.b16.start [1/8] %v2378, 128
    %5603 = vxpose.xlu0.c.b16.cont [2/8] 0, 128
    %5604 = vxpose.xlu0.c.b16.cont [3/8] 0, 128
    %5605 = vxpose.xlu0.c.b16.cont [4/8] 0, 128
    %5606 = vxpose.xlu0.c.b16.cont [5/8] 0, 128
    %5607 = vxpose.xlu0.c.b16.cont [6/8] 0, 128
    %5608 = vxpose.xlu0.c.b16.cont [7/8] 0, 128
    %5609 = vxpose.xlu0.c.b16.end [8/8] 0, 128
    %v5610 = vpop.trf.xlu0
    %v5611 = vpop.trf.xlu0
    %v5612 = vpop.trf.xlu0
    %v5613 = vpop.trf.xlu0
    %v5614 = vpop.trf.xlu0
    %v5615 = vpop.trf.xlu0
    %v5616 = vpop.trf.xlu0
    %v5617 = vpop.trf.xlu0
    %v5618 = vpack.c.b16 %v3276, %v3275
    %v5619 = vpack.c.b16 %v3278, %v3277
    %v5620 = vpack.c.b16 %v3280, %v3279
    %v5621 = vpack.c.b16 %v3282, %v3281
    %v5622 = vpack.c.b16 %v3284, %v3283
    %v5623 = vpack.c.b16 %v3286, %v3285
    %v5624 = vpack.c.b16 %v3288, %v3287
    %v5625 = vpack.c.b16 %v3290, %v3289
    %v5626 = vpack.c.b16 %v3291, %v3291
    %v5636 = vsel %vm3395, %v5610, 0
    %v5639 = vsel %vm3395, %v5611, 0
    %v5642 = vsel %vm3402, %v5626, 0
    %5644 = vmatprep.subr.bf16.mxu0 0
    %5645 = vmatpush1.bf16.msra.mxu0 %v5618
    %5646 = vmatprep.subr.bf16.mxu0 0
    %5647 = vmatpush1.bf16.msra.mxu0 %v5619
    %5648 = vmatprep.subr.bf16.mxu0 0
    %5649 = vmatpush1.bf16.msra.mxu0 %v5620
    %5650 = vmatprep.subr.bf16.mxu0 0
    %5651 = vmatpush1.bf16.msra.mxu0 %v5621
    %5652 = vmatprep.subr.bf16.mxu0 0
    %5653 = vmatpush1.bf16.msra.mxu0 %v5622
    %5654 = vmatprep.subr.bf16.mxu0 0
    %5655 = vmatpush1.bf16.msra.mxu0 %v5623
    %5656 = vmatprep.subr.bf16.mxu0 0
    %5657 = vmatpush1.bf16.msra.mxu0 %v5624
    %5658 = vmatprep.subr.bf16.mxu0 0
    %5659 = vmatpush1.bf16.msra.mxu0 %v5625
    %5660 = vmatprep.subr.bf16.mxu0 0
    %5661 = vmatpush1.bf16.msra.mxu0 %v5642
    %5662 = vmatprep.subr.bf16.mxu0 0
    %5663 = vmatpush1.bf16.msra.mxu0 0
    %5664 = vmatprep.subr.bf16.mxu0 0
    %5665 = vmatpush1.bf16.msra.mxu0 0
    %5666 = vmatprep.subr.bf16.mxu0 0
    %5667 = vmatpush1.bf16.msra.mxu0 0
    %5668 = vmatprep.subr.bf16.mxu0 0
    %5669 = vmatpush1.bf16.msra.mxu0 0
    %5670 = vmatprep.subr.bf16.mxu0 0
    %5671 = vmatpush1.bf16.msra.mxu0 0
    %5672 = vmatprep.subr.bf16.mxu0 0
    %5673 = vmatpush1.bf16.msra.mxu0 0
    %5674 = vmatprep.subr.bf16.mxu0 0
    %5675 = vmatpush1.bf16.msra.mxu0 0
    %5676 = vmatprep.mubr.bf16.mxu0 %v5636
    %5677 = vmatmul.mubr.bf16.gmra.mrb[0].mxu0 %v5594
    %v5678 = vpop.f32.mrb[0].mxu0
    %v5679 = vadd.f32 0.0, %v5678
    %v5680 = vpop.f32.mrb[0].mxu0
    %v5681 = vpop.f32.mrb[0].mxu0
    %v5682 = vadd.f32 0.0, %v5681
    %v5683 = vpop.f32.mrb[0].mxu0
    %5684 = vmatprep.mubr.bf16.mxu0 %v5639
    %5685 = vmatmul.mubr.bf16.gmra.mrb[0].mxu0 %v5595
    %v5686 = vpop.f32.mrb[0].mxu0
    %v5687 = vadd.f32 0.0, %v5686
    %v5688 = vpop.f32.mrb[0].mxu0
    %v5689 = vpop.f32.mrb[0].mxu0
    %v5690 = vadd.f32 0.0, %v5689
    %v5691 = vpop.f32.mrb[0].mxu0
    %5692 = vdwg.mxu0
    %v5693 = vmul.f32 %v5679, %v3292
    %v5694 = vmul.f32 %v5682, %v3293
    %v5695 = vmul.f32 %v5687, %v3294
    %v5696 = vmul.f32 %v5690, %v3295
    %v5697 = vpack.c.bf16 %v5694, %v5693
    %v5698 = vpack.c.bf16 %v5696, %v5695
    %5699 = vmatprep.subr.bf16.mxu0 0
    %5700 = vmatpush1.bf16.msra.mxu0 %v3493
    %5701 = vmatprep.subr.bf16.mxu0 0
    %5702 = vmatpush1.bf16.msra.mxu0 %v3494
    %5703 = vmatprep.subr.bf16.mxu0 0
    %5704 = vmatpush1.bf16.msra.mxu0 %v3495
    %5705 = vmatprep.subr.bf16.mxu0 0
    %5706 = vmatpush1.bf16.msra.mxu0 %v3496
    %5707 = vmatprep.subr.bf16.mxu0 0
    %5708 = vmatpush1.bf16.msra.mxu0 %v3497
    %5709 = vmatprep.subr.bf16.mxu0 0
    %5710 = vmatpush1.bf16.msra.mxu0 %v3498
    %5711 = vmatprep.subr.bf16.mxu0 0
    %5712 = vmatpush1.bf16.msra.mxu0 %v3499
    %5713 = vmatprep.subr.bf16.mxu0 0
    %5714 = vmatpush1.bf16.msra.mxu0 %v3500
    %5715 = vmatprep.subr.bf16.mxu0 0
    %5716 = vmatpush1.bf16.msra.mxu0 0
    %5717 = vmatprep.subr.bf16.mxu0 0
    %5718 = vmatpush1.bf16.msra.mxu0 0
    %5719 = vmatprep.subr.bf16.mxu0 0
    %5720 = vmatpush1.bf16.msra.mxu0 0
    %5721 = vmatprep.subr.bf16.mxu0 0
    %5722 = vmatpush1.bf16.msra.mxu0 0
    %5723 = vmatprep.subr.bf16.mxu0 0
    %5724 = vmatpush1.bf16.msra.mxu0 0
    %5725 = vmatprep.subr.bf16.mxu0 0
    %5726 = vmatpush1.bf16.msra.mxu0 0
    %5727 = vmatprep.subr.bf16.mxu0 0
    %5728 = vmatpush1.bf16.msra.mxu0 0
    %5729 = vmatprep.subr.bf16.mxu0 0
    %5730 = vmatpush1.bf16.msra.mxu0 0
    %5731 = vmatprep.mubr.bf16.mxu0 0
    %5732 = vmatmul.mubr.bf16.gmra.mrb[0].mxu0 %v5697
    %v5733 = vpop.f32.mrb[0].mxu0
    %v5734 = vadd.f32 0.0, %v5733
    %v5735 = vpop.f32.mrb[0].mxu0
    %v5736 = vpop.f32.mrb[0].mxu0
    %v5737 = vadd.f32 0.0, %v5736
    %v5738 = vpop.f32.mrb[0].mxu0
    %5739 = vmatprep.mubr.bf16.mxu0 0
    %5740 = vmatmul.mubr.bf16.gmra.mrb[0].mxu0 %v5698
    %v5741 = vpop.f32.mrb[0].mxu0
    %v5742 = vadd.f32 0.0, %v5741
    %v5743 = vpop.f32.mrb[0].mxu0
    %v5744 = vpop.f32.mrb[0].mxu0
    %v5745 = vadd.f32 0.0, %v5744
    %v5746 = vpop.f32.mrb[0].mxu0
    %5747 = vdwg.mxu0
    %v5748 = vpack.c.bf16 %v5737, %v5734
    %v5749 = vpack.c.bf16 %v5745, %v5742
    %5750 = vmatprep.subr.bf16.mxu0 0
    %5751 = vmatpush1.bf16.msra.mxu0 %v5748
    %5752 = vmatprep.subr.bf16.mxu0 0
    %5753 = vmatpush1.bf16.msra.mxu0 %v5749
    %5754 = vmatprep.subr.bf16.mxu0 0
    %5755 = vmatpush1.bf16.msra.mxu0 0
    %5756 = vmatprep.subr.bf16.mxu0 0
    %5757 = vmatpush1.bf16.msra.mxu0 0
    %5758 = vmatprep.subr.bf16.mxu0 0
    %5759 = vmatpush1.bf16.msra.mxu0 0
    %5760 = vmatprep.subr.bf16.mxu0 0
    %5761 = vmatpush1.bf16.msra.mxu0 0
    %5762 = vmatprep.subr.bf16.mxu0 0
    %5763 = vmatpush1.bf16.msra.mxu0 0
    %5764 = vmatprep.subr.bf16.mxu0 0
    %5765 = vmatpush1.bf16.msra.mxu0 0
    %5766 = vmatprep.subr.bf16.mxu0 0
    %5767 = vmatpush1.bf16.msra.mxu0 0
    %5768 = vmatprep.subr.bf16.mxu0 0
    %5769 = vmatpush1.bf16.msra.mxu0 0
    %5770 = vmatprep.subr.bf16.mxu0 0
    %5771 = vmatpush1.bf16.msra.mxu0 0
    %5772 = vmatprep.subr.bf16.mxu0 0
    %5773 = vmatpush1.bf16.msra.mxu0 0
    %5774 = vmatprep.subr.bf16.mxu0 0
    %5775 = vmatpush1.bf16.msra.mxu0 0
    %5776 = vmatprep.subr.bf16.mxu0 0
    %5777 = vmatpush1.bf16.msra.mxu0 0
    %5778 = vmatprep.subr.bf16.mxu0 0
    %5779 = vmatpush1.bf16.msra.mxu0 0
    %5780 = vmatprep.subr.bf16.mxu0 0
    %5781 = vmatpush1.bf16.msra.mxu0 0
    %5782 = vmatprep.mubr.bf16.mxu0 0
    %5783 = vmatmul.mubr.bf16.gmra.mrb[0].mxu0 %v3604
    %v5784 = vpop.f32.mrb[0].mxu0
    %v5785 = vadd.f32 %v3329, %v5784
    %v5786 = vpop.f32.mrb[0].mxu0
    %v5787 = vpop.f32.mrb[0].mxu0
    %v5788 = vadd.f32 %v3330, %v5787
    %v5789 = vpop.f32.mrb[0].mxu0
    %5790 = vmatprep.mubr.bf16.mxu0 0
    %5791 = vmatmul.mubr.bf16.gmra.mrb[0].mxu0 %v3607
    %v5792 = vpop.f32.mrb[0].mxu0
    %v5793 = vadd.f32 %v3331, %v5792
    %v5794 = vpop.f32.mrb[0].mxu0
    %v5795 = vpop.f32.mrb[0].mxu0
    %v5796 = vadd.f32 %v3332, %v5795
    %v5797 = vpop.f32.mrb[0].mxu0
    %5798 = vmatprep.mubr.bf16.mxu0 0
    %5799 = vmatmul.mubr.bf16.gmra.mrb[0].mxu0 %v3610
    %v5800 = vpop.f32.mrb[0].mxu0
    %v5801 = vadd.f32 %v3333, %v5800
    %v5802 = vpop.f32.mrb[0].mxu0
    %v5803 = vpop.f32.mrb[0].mxu0
    %v5804 = vadd.f32 %v3334, %v5803
    %v5805 = vpop.f32.mrb[0].mxu0
    %5806 = vmatprep.mubr.bf16.mxu0 0
    %5807 = vmatmul.mubr.bf16.gmra.mrb[0].mxu0 %v3613
    %v5808 = vpop.f32.mrb[0].mxu0
    %v5809 = vadd.f32 %v3335, %v5808
    %v5810 = vpop.f32.mrb[0].mxu0
    %v5811 = vpop.f32.mrb[0].mxu0
    %v5812 = vadd.f32 %v3336, %v5811
    %v5813 = vpop.f32.mrb[0].mxu0
    %5814 = vmatprep.mubr.bf16.mxu0 0
    %5815 = vmatmul.mubr.bf16.gmra.mrb[0].mxu0 %v3616
    %v5816 = vpop.f32.mrb[0].mxu0
    %v5817 = vadd.f32 %v3337, %v5816
    %v5818 = vpop.f32.mrb[0].mxu0
    %v5819 = vpop.f32.mrb[0].mxu0
    %v5820 = vadd.f32 %v3338, %v5819
    %v5821 = vpop.f32.mrb[0].mxu0
    %5822 = vmatprep.mubr.bf16.mxu0 0
    %5823 = vmatmul.mubr.bf16.gmra.mrb[0].mxu0 %v3619
    %v5824 = vpop.f32.mrb[0].mxu0
    %v5825 = vadd.f32 %v3339, %v5824
    %v5826 = vpop.f32.mrb[0].mxu0
    %v5827 = vpop.f32.mrb[0].mxu0
    %v5828 = vadd.f32 %v3340, %v5827
    %v5829 = vpop.f32.mrb[0].mxu0
    %5830 = vmatprep.mubr.bf16.mxu0 0
    %5831 = vmatmul.mubr.bf16.gmra.mrb[0].mxu0 %v3622
    %v5832 = vpop.f32.mrb[0].mxu0
    %v5833 = vadd.f32 %v3341, %v5832
    %v5834 = vpop.f32.mrb[0].mxu0
    %v5835 = vpop.f32.mrb[0].mxu0
    %v5836 = vadd.f32 %v3342, %v5835
    %v5837 = vpop.f32.mrb[0].mxu0
    %5838 = vmatprep.mubr.bf16.mxu0 0
    %5839 = vmatmul.mubr.bf16.gmra.mrb[0].mxu0 %v3625
    %v5840 = vpop.f32.mrb[0].mxu0
    %v5841 = vadd.f32 %v3343, %v5840
    %v5842 = vpop.f32.mrb[0].mxu0
    %v5843 = vpop.f32.mrb[0].mxu0
    %v5844 = vadd.f32 %v3344, %v5843
    %v5845 = vpop.f32.mrb[0].mxu0
    %5846 = vmatprep.mubr.bf16.mxu0 0
    %5847 = vmatmul.mubr.bf16.gmra.mrb[0].mxu0 %v3628
    %v5848 = vpop.f32.mrb[0].mxu0
    %v5849 = vadd.f32 %v3345, %v5848
    %v5850 = vpop.f32.mrb[0].mxu0
    %v5851 = vpop.f32.mrb[0].mxu0
    %v5852 = vpop.f32.mrb[0].mxu0
    %5853 = vdwg.mxu0
    %v5854 = vadd.f32 %v233, %v5785
    %v5855 = vadd.f32 %v234, %v5788
    %v5856 = vadd.f32 %v235, %v5793
    %v5857 = vadd.f32 %v236, %v5796
    %v5858 = vadd.f32 %v237, %v5801
    %v5859 = vadd.f32 %v238, %v5804
    %v5860 = vadd.f32 %v239, %v5809
    %v5861 = vadd.f32 %v240, %v5812
    %v5862 = vadd.f32 %v241, %v5817
    %v5863 = vadd.f32 %v242, %v5820
    %v5864 = vadd.f32 %v243, %v5825
    %v5865 = vadd.f32 %v244, %v5828
    %v5866 = vadd.f32 %v245, %v5833
    %v5867 = vadd.f32 %v246, %v5836
    %v5868 = vadd.f32 %v247, %v5841
    %v5869 = vadd.f32 %v248, %v5844
    %v5870 = vadd.f32 %v249, %v5849
    %s5871 = scalar_lea.vmem [#allocation11], 952
    %5872 = vst [vmem:[%s5871] sm:$0xff] %v5854
    %5873 = vst [vmem:[%s5871 + $0x8] sm:$0xff] %v5855
    %5874 = vst [vmem:[%s5871 + $0x10] sm:$0xff] %v5856
    %5875 = vst [vmem:[%s5871 + $0x18] sm:$0xff] %v5857
    %5876 = vst [vmem:[%s5871 + $0x20] sm:$0xff] %v5858
    %5877 = vst [vmem:[%s5871 + $0x28] sm:$0xff] %v5859
    %5878 = vst [vmem:[%s5871 + $0x30] sm:$0xff] %v5860
    %5879 = vst [vmem:[%s5871 + $0x38] sm:$0xff] %v5861
    %5880 = vst [vmem:[%s5871 + $0x40] sm:$0xff] %v5862
    %5881 = vst [vmem:[%s5871 + $0x48] sm:$0xff] %v5863
    %5882 = vst [vmem:[%s5871 + $0x50] sm:$0xff] %v5864
    %5883 = vst [vmem:[%s5871 + $0x58] sm:$0xff] %v5865
    %5884 = vst [vmem:[%s5871 + $0x60] sm:$0xff] %v5866
    %5885 = vst [vmem:[%s5871 + $0x68] sm:$0xff] %v5867
    %5886 = vst [vmem:[%s5871 + $0x70] sm:$0xff] %v5868
    %5887 = vst [vmem:[%s5871 + $0x78] sm:$0xff] %v5869
    %5888 = vst [vmem:[%s5871 + $0x80] sm:$0xff] %v5870
    %v5889 = vld [vmem:[#allocation11] sm:$0xff]
    %v5890 = vld [vmem:[#allocation11 + $0x8] sm:$0xff]
    %v5891 = vld [vmem:[#allocation11 + $0x10] sm:$0xff]
    %v5892 = vld [vmem:[#allocation11 + $0x18] sm:$0xff]
    %v5893 = vld [vmem:[#allocation11 + $0x20] sm:$0xff]
    %v5894 = vld [vmem:[#allocation11 + $0x28] sm:$0xff]
    %v5895 = vld [vmem:[#allocation11 + $0x30] sm:$0xff]
    %v5896 = vld [vmem:[#allocation11 + $0x38] sm:$0xff]
    %v5897 = vld [vmem:[#allocation11 + $0x40] sm:$0xff]
    %v5898 = vld [vmem:[#allocation11 + $0x48] sm:$0xff]
    %v5899 = vld [vmem:[#allocation11 + $0x50] sm:$0xff]
    %v5900 = vld [vmem:[#allocation11 + $0x58] sm:$0xff]
    %v5901 = vld [vmem:[#allocation11 + $0x60] sm:$0xff]
    %v5902 = vld [vmem:[#allocation11 + $0x68] sm:$0xff]
    %v5903 = vld [vmem:[#allocation11 + $0x70] sm:$0xff]
    %v5904 = vld [vmem:[#allocation11 + $0x78] sm:$0xff]
    %v5905 = vld [vmem:[#allocation11 + $0x80] sm:$0xff]
    %v5906 = vld [vmem:[#allocation11 + $0x88] sm:$0xff]
    %v5907 = vld [vmem:[#allocation11 + $0x90] sm:$0xff]
    %v5908 = vld [vmem:[#allocation11 + $0x98] sm:$0xff]
    %v5909 = vld [vmem:[#allocation11 + $0xa0] sm:$0xff]
    %v5910 = vld [vmem:[#allocation11 + $0xa8] sm:$0xff]
    %v5911 = vld [vmem:[#allocation11 + $0xb0] sm:$0xff]
    %v5912 = vld [vmem:[#allocation11 + $0xb8] sm:$0xff]
    %v5913 = vld [vmem:[#allocation11 + $0xc0] sm:$0xff]
    %v5914 = vld [vmem:[#allocation11 + $0xc8] sm:$0xff]
    %v5915 = vld [vmem:[#allocation11 + $0xd0] sm:$0xff]
    %v5916 = vld [vmem:[#allocation11 + $0xd8] sm:$0xff]
    %v5917 = vld [vmem:[#allocation11 + $0xe0] sm:$0xff]
    %v5918 = vld [vmem:[#allocation11 + $0xe8] sm:$0xff]
    %v5919 = vld [vmem:[#allocation11 + $0xf0] sm:$0xff]
    %v5920 = vld [vmem:[#allocation11 + $0xf8] sm:$0xff]
    %v5921 = vld [vmem:[#allocation11 + $0x100] sm:$0xff]
    %v5922 = vld [vmem:[#allocation11 + $0x108] sm:$0xff]
    %v5923 = vld [vmem:[#allocation11 + $0x110] sm:$0xff]
    %v5924 = vld [vmem:[#allocation11 + $0x118] sm:$0xff]
    %v5925 = vld [vmem:[#allocation11 + $0x120] sm:$0xff]
    %v5926 = vld [vmem:[#allocation11 + $0x128] sm:$0xff]
    %v5927 = vld [vmem:[#allocation11 + $0x130] sm:$0xff]
    %v5928 = vld [vmem:[#allocation11 + $0x138] sm:$0xff]
    %v5929 = vld [vmem:[#allocation11 + $0x140] sm:$0xff]
    %v5930 = vld [vmem:[#allocation11 + $0x148] sm:$0xff]
    %v5931 = vld [vmem:[#allocation11 + $0x150] sm:$0xff]
    %v5932 = vld [vmem:[#allocation11 + $0x158] sm:$0xff]
    %v5933 = vld [vmem:[#allocation11 + $0x160] sm:$0xff]
    %v5934 = vld [vmem:[#allocation11 + $0x168] sm:$0xff]
    %v5935 = vld [vmem:[#allocation11 + $0x170] sm:$0xff]
    %v5936 = vld [vmem:[#allocation11 + $0x178] sm:$0xff]
    %v5937 = vld [vmem:[#allocation11 + $0x180] sm:$0xff]
    %v5938 = vld [vmem:[#allocation11 + $0x188] sm:$0xff]
    %v5939 = vld [vmem:[#allocation11 + $0x190] sm:$0xff]
    %v5940 = vld [vmem:[#allocation11 + $0x198] sm:$0xff]
    %v5941 = vld [vmem:[#allocation11 + $0x1a0] sm:$0xff]
    %v5942 = vld [vmem:[#allocation11 + $0x1a8] sm:$0xff]
    %v5943 = vld [vmem:[#allocation11 + $0x1b0] sm:$0xff]
    %v5944 = vld [vmem:[#allocation11 + $0x1b8] sm:$0xff]
    %v5945 = vld [vmem:[#allocation11 + $0x1c0] sm:$0xff]
    %v5946 = vld [vmem:[#allocation11 + $0x1c8] sm:$0xff]
    %v5947 = vld [vmem:[#allocation11 + $0x1d0] sm:$0xff]
    %v5948 = vld [vmem:[#allocation11 + $0x1d8] sm:$0xff]
    %v5949 = vld [vmem:[#allocation11 + $0x1e0] sm:$0xff]
    %v5950 = vld [vmem:[#allocation11 + $0x1e8] sm:$0xff]
    %v5951 = vld [vmem:[#allocation11 + $0x1f0] sm:$0xff]
    %v5952 = vld [vmem:[#allocation11 + $0x1f8] sm:$0xff]
    %v5953 = vld [vmem:[#allocation11 + $0x200] sm:$0xff]
    %v5954 = vld [vmem:[#allocation11 + $0x208] sm:$0xff]
    %v5955 = vld [vmem:[#allocation11 + $0x210] sm:$0xff]
    %v5956 = vld [vmem:[#allocation11 + $0x218] sm:$0xff]
    %v5957 = vld [vmem:[#allocation11 + $0x220] sm:$0xff]
    %v5958 = vld [vmem:[#allocation11 + $0x228] sm:$0xff]
    %v5959 = vld [vmem:[#allocation11 + $0x230] sm:$0xff]
    %v5960 = vld [vmem:[#allocation11 + $0x238] sm:$0xff]
    %v5961 = vld [vmem:[#allocation11 + $0x240] sm:$0xff]
    %v5962 = vld [vmem:[#allocation11 + $0x248] sm:$0xff]
    %v5963 = vld [vmem:[#allocation11 + $0x250] sm:$0xff]
    %v5964 = vld [vmem:[#allocation11 + $0x258] sm:$0xff]
    %v5965 = vld [vmem:[#allocation11 + $0x260] sm:$0xff]
    %v5966 = vld [vmem:[#allocation11 + $0x268] sm:$0xff]
    %v5967 = vld [vmem:[#allocation11 + $0x270] sm:$0xff]
    %v5968 = vld [vmem:[#allocation11 + $0x278] sm:$0xff]
    %v5969 = vld [vmem:[#allocation11 + $0x280] sm:$0xff]
    %v5970 = vld [vmem:[#allocation11 + $0x288] sm:$0xff]
    %v5971 = vld [vmem:[#allocation11 + $0x290] sm:$0xff]
    %v5972 = vld [vmem:[#allocation11 + $0x298] sm:$0xff]
    %v5973 = vld [vmem:[#allocation11 + $0x2a0] sm:$0xff]
    %v5974 = vld [vmem:[#allocation11 + $0x2a8] sm:$0xff]
    %v5975 = vld [vmem:[#allocation11 + $0x2b0] sm:$0xff]
    %v5976 = vld [vmem:[#allocation11 + $0x2b8] sm:$0xff]
    %v5977 = vld [vmem:[#allocation11 + $0x2c0] sm:$0xff]
    %v5978 = vld [vmem:[#allocation11 + $0x2c8] sm:$0xff]
    %v5979 = vld [vmem:[#allocation11 + $0x2d0] sm:$0xff]
    %v5980 = vld [vmem:[#allocation11 + $0x2d8] sm:$0xff]
    %v5981 = vld [vmem:[#allocation11 + $0x2e0] sm:$0xff]
    %v5982 = vld [vmem:[#allocation11 + $0x2e8] sm:$0xff]
    %v5983 = vld [vmem:[#allocation11 + $0x2f0] sm:$0xff]
    %v5984 = vld [vmem:[#allocation11 + $0x2f8] sm:$0xff]
    %v5985 = vld [vmem:[#allocation11 + $0x300] sm:$0xff]
    %v5986 = vld [vmem:[#allocation11 + $0x308] sm:$0xff]
    %v5987 = vld [vmem:[#allocation11 + $0x310] sm:$0xff]
    %v5988 = vld [vmem:[#allocation11 + $0x318] sm:$0xff]
    %v5989 = vld [vmem:[#allocation11 + $0x320] sm:$0xff]
    %v5990 = vld [vmem:[#allocation11 + $0x328] sm:$0xff]
    %v5991 = vld [vmem:[#allocation11 + $0x330] sm:$0xff]
    %v5992 = vld [vmem:[#allocation11 + $0x338] sm:$0xff]
    %v5993 = vld [vmem:[#allocation11 + $0x340] sm:$0xff]
    %v5994 = vld [vmem:[#allocation11 + $0x348] sm:$0xff]
    %v5995 = vld [vmem:[#allocation11 + $0x350] sm:$0xff]
    %v5996 = vld [vmem:[#allocation11 + $0x358] sm:$0xff]
    %v5997 = vld [vmem:[#allocation11 + $0x360] sm:$0xff]
    %v5998 = vld [vmem:[#allocation11 + $0x368] sm:$0xff]
    %v5999 = vld [vmem:[#allocation11 + $0x370] sm:$0xff]
    %v6000 = vld [vmem:[#allocation11 + $0x378] sm:$0xff]
    %v6001 = vld [vmem:[#allocation11 + $0x380] sm:$0xff]
    %v6002 = vld [vmem:[#allocation11 + $0x388] sm:$0xff]
    %v6003 = vld [vmem:[#allocation11 + $0x390] sm:$0xff]
    %v6004 = vld [vmem:[#allocation11 + $0x398] sm:$0xff]
    %v6005 = vld [vmem:[#allocation11 + $0x3a0] sm:$0xff]
    %v6006 = vld [vmem:[#allocation11 + $0x3a8] sm:$0xff]
    %v6007 = vld [vmem:[#allocation11 + $0x3b0] sm:$0xff]
    %v6008 = vld [vmem:[#allocation11 + $0x3b8] sm:$0xff]
    %v6009 = vld [vmem:[#allocation11 + $0x3c0] sm:$0xff]
    %v6010 = vld [vmem:[#allocation11 + $0x3c8] sm:$0xff]
    %v6011 = vld [vmem:[#allocation11 + $0x3d0] sm:$0xff]
    %v6012 = vld [vmem:[#allocation11 + $0x3d8] sm:$0xff]
    %v6013 = vld [vmem:[#allocation11 + $0x3e0] sm:$0xff]
    %v6014 = vld [vmem:[#allocation11 + $0x3e8] sm:$0xff]
    %v6015 = vld [vmem:[#allocation11 + $0x3f0] sm:$0xff]
    %v6016 = vld [vmem:[#allocation11 + $0x3f8] sm:$0xff]
    %v6017 = vld [vmem:[#allocation11 + $0x400] sm:$0xff]
    %v6018 = vld [vmem:[#allocation11 + $0x408] sm:$0xff]
    %v6019 = vld [vmem:[#allocation11 + $0x410] sm:$0xff]
    %v6020 = vld [vmem:[#allocation11 + $0x418] sm:$0xff]
    %v6021 = vld [vmem:[#allocation11 + $0x420] sm:$0xff]
    %v6022 = vld [vmem:[#allocation11 + $0x428] sm:$0xff]
    %v6023 = vld [vmem:[#allocation11 + $0x430] sm:$0xff]
    %v6024 = vld [vmem:[#allocation11 + $0x438] sm:$0xff]
    %6025 = vadd.xlane.f32.xlu0 %v5889
    %v6026 = vpop.xlane.xlu0 %6025
    %6027 = vadd.xlane.f32.xlu0 %v5890
    %v6028 = vpop.xlane.xlu0 %6027
    %6029 = vadd.xlane.f32.xlu0 %v5891
    %v6030 = vpop.xlane.xlu0 %6029
    %6031 = vadd.xlane.f32.xlu0 %v5892
    %v6032 = vpop.xlane.xlu0 %6031
    %6033 = vadd.xlane.f32.xlu0 %v5893
    %v6034 = vpop.xlane.xlu0 %6033
    %6035 = vadd.xlane.f32.xlu0 %v5894
    %v6036 = vpop.xlane.xlu0 %6035
    %6037 = vadd.xlane.f32.xlu0 %v5895
    %v6038 = vpop.xlane.xlu0 %6037
    %6039 = vadd.xlane.f32.xlu0 %v5896
    %v6040 = vpop.xlane.xlu0 %6039
    %6041 = vadd.xlane.f32.xlu0 %v5897
    %v6042 = vpop.xlane.xlu0 %6041
    %6043 = vadd.xlane.f32.xlu0 %v5898
    %v6044 = vpop.xlane.xlu0 %6043
    %6045 = vadd.xlane.f32.xlu0 %v5899
    %v6046 = vpop.xlane.xlu0 %6045
    %6047 = vadd.xlane.f32.xlu0 %v5900
    %v6048 = vpop.xlane.xlu0 %6047
    %6049 = vadd.xlane.f32.xlu0 %v5901
    %v6050 = vpop.xlane.xlu0 %6049
    %6051 = vadd.xlane.f32.xlu0 %v5902
    %v6052 = vpop.xlane.xlu0 %6051
    %6053 = vadd.xlane.f32.xlu0 %v5903
    %v6054 = vpop.xlane.xlu0 %6053
    %6055 = vadd.xlane.f32.xlu0 %v5904
    %v6056 = vpop.xlane.xlu0 %6055
    %6057 = vadd.xlane.f32.xlu0 %v5905
    %v6058 = vpop.xlane.xlu0 %6057
    %6059 = vadd.xlane.f32.xlu0 %v5906
    %v6060 = vpop.xlane.xlu0 %6059
    %6061 = vadd.xlane.f32.xlu0 %v5907
    %v6062 = vpop.xlane.xlu0 %6061
    %6063 = vadd.xlane.f32.xlu0 %v5908
    %v6064 = vpop.xlane.xlu0 %6063
    %6065 = vadd.xlane.f32.xlu0 %v5909
    %v6066 = vpop.xlane.xlu0 %6065
    %6067 = vadd.xlane.f32.xlu0 %v5910
    %v6068 = vpop.xlane.xlu0 %6067
    %6069 = vadd.xlane.f32.xlu0 %v5911
    %v6070 = vpop.xlane.xlu0 %6069
    %6071 = vadd.xlane.f32.xlu0 %v5912
    %v6072 = vpop.xlane.xlu0 %6071
    %6073 = vadd.xlane.f32.xlu0 %v5913
    %v6074 = vpop.xlane.xlu0 %6073
    %6075 = vadd.xlane.f32.xlu0 %v5914
    %v6076 = vpop.xlane.xlu0 %6075
    %6077 = vadd.xlane.f32.xlu0 %v5915
    %v6078 = vpop.xlane.xlu0 %6077
    %6079 = vadd.xlane.f32.xlu0 %v5916
    %v6080 = vpop.xlane.xlu0 %6079
    %6081 = vadd.xlane.f32.xlu0 %v5917
    %v6082 = vpop.xlane.xlu0 %6081
    %6083 = vadd.xlane.f32.xlu0 %v5918
    %v6084 = vpop.xlane.xlu0 %6083
    %6085 = vadd.xlane.f32.xlu0 %v5919
    %v6086 = vpop.xlane.xlu0 %6085
    %6087 = vadd.xlane.f32.xlu0 %v5920
    %v6088 = vpop.xlane.xlu0 %6087
    %6089 = vadd.xlane.f32.xlu0 %v5921
    %v6090 = vpop.xlane.xlu0 %6089
    %6091 = vadd.xlane.f32.xlu0 %v5922
    %v6092 = vpop.xlane.xlu0 %6091
    %6093 = vadd.xlane.f32.xlu0 %v5923
    %v6094 = vpop.xlane.xlu0 %6093
    %6095 = vadd.xlane.f32.xlu0 %v5924
    %v6096 = vpop.xlane.xlu0 %6095
    %6097 = vadd.xlane.f32.xlu0 %v5925
    %v6098 = vpop.xlane.xlu0 %6097
    %6099 = vadd.xlane.f32.xlu0 %v5926
    %v6100 = vpop.xlane.xlu0 %6099
    %6101 = vadd.xlane.f32.xlu0 %v5927
    %v6102 = vpop.xlane.xlu0 %6101
    %6103 = vadd.xlane.f32.xlu0 %v5928
    %v6104 = vpop.xlane.xlu0 %6103
    %6105 = vadd.xlane.f32.xlu0 %v5929
    %v6106 = vpop.xlane.xlu0 %6105
    %6107 = vadd.xlane.f32.xlu0 %v5930
    %v6108 = vpop.xlane.xlu0 %6107
    %6109 = vadd.xlane.f32.xlu0 %v5931
    %v6110 = vpop.xlane.xlu0 %6109
    %6111 = vadd.xlane.f32.xlu0 %v5932
    %v6112 = vpop.xlane.xlu0 %6111
    %6113 = vadd.xlane.f32.xlu0 %v5933
    %v6114 = vpop.xlane.xlu0 %6113
    %6115 = vadd.xlane.f32.xlu0 %v5934
    %v6116 = vpop.xlane.xlu0 %6115
    %6117 = vadd.xlane.f32.xlu0 %v5935
    %v6118 = vpop.xlane.xlu0 %6117
    %6119 = vadd.xlane.f32.xlu0 %v5936
    %v6120 = vpop.xlane.xlu0 %6119
    %6121 = vadd.xlane.f32.xlu0 %v5937
    %v6122 = vpop.xlane.xlu0 %6121
    %6123 = vadd.xlane.f32.xlu0 %v5938
    %v6124 = vpop.xlane.xlu0 %6123
    %6125 = vadd.xlane.f32.xlu0 %v5939
    %v6126 = vpop.xlane.xlu0 %6125
    %6127 = vadd.xlane.f32.xlu0 %v5940
    %v6128 = vpop.xlane.xlu0 %6127
    %6129 = vadd.xlane.f32.xlu0 %v5941
    %v6130 = vpop.xlane.xlu0 %6129
    %6131 = vadd.xlane.f32.xlu0 %v5942
    %v6132 = vpop.xlane.xlu0 %6131
    %6133 = vadd.xlane.f32.xlu0 %v5943
    %v6134 = vpop.xlane.xlu0 %6133
    %6135 = vadd.xlane.f32.xlu0 %v5944
    %v6136 = vpop.xlane.xlu0 %6135
    %6137 = vadd.xlane.f32.xlu0 %v5945
    %v6138 = vpop.xlane.xlu0 %6137
    %6139 = vadd.xlane.f32.xlu0 %v5946
    %v6140 = vpop.xlane.xlu0 %6139
    %6141 = vadd.xlane.f32.xlu0 %v5947
    %v6142 = vpop.xlane.xlu0 %6141
    %6143 = vadd.xlane.f32.xlu0 %v5948
    %v6144 = vpop.xlane.xlu0 %6143
    %6145 = vadd.xlane.f32.xlu0 %v5949
    %v6146 = vpop.xlane.xlu0 %6145
    %6147 = vadd.xlane.f32.xlu0 %v5950
    %v6148 = vpop.xlane.xlu0 %6147
    %6149 = vadd.xlane.f32.xlu0 %v5951
    %v6150 = vpop.xlane.xlu0 %6149
    %6151 = vadd.xlane.f32.xlu0 %v5952
    %v6152 = vpop.xlane.xlu0 %6151
    %6153 = vadd.xlane.f32.xlu0 %v5953
    %v6154 = vpop.xlane.xlu0 %6153
    %6155 = vadd.xlane.f32.xlu0 %v5954
    %v6156 = vpop.xlane.xlu0 %6155
    %6157 = vadd.xlane.f32.xlu0 %v5955
    %v6158 = vpop.xlane.xlu0 %6157
    %6159 = vadd.xlane.f32.xlu0 %v5956
    %v6160 = vpop.xlane.xlu0 %6159
    %6161 = vadd.xlane.f32.xlu0 %v5957
    %v6162 = vpop.xlane.xlu0 %6161
    %6163 = vadd.xlane.f32.xlu0 %v5958
    %v6164 = vpop.xlane.xlu0 %6163
    %6165 = vadd.xlane.f32.xlu0 %v5959
    %v6166 = vpop.xlane.xlu0 %6165
    %6167 = vadd.xlane.f32.xlu0 %v5960
    %v6168 = vpop.xlane.xlu0 %6167
    %6169 = vadd.xlane.f32.xlu0 %v5961
    %v6170 = vpop.xlane.xlu0 %6169
    %6171 = vadd.xlane.f32.xlu0 %v5962
    %v6172 = vpop.xlane.xlu0 %6171
    %6173 = vadd.xlane.f32.xlu0 %v5963
    %v6174 = vpop.xlane.xlu0 %6173
    %6175 = vadd.xlane.f32.xlu0 %v5964
    %v6176 = vpop.xlane.xlu0 %6175
    %6177 = vadd.xlane.f32.xlu0 %v5965
    %v6178 = vpop.xlane.xlu0 %6177
    %6179 = vadd.xlane.f32.xlu0 %v5966
    %v6180 = vpop.xlane.xlu0 %6179
    %6181 = vadd.xlane.f32.xlu0 %v5967
    %v6182 = vpop.xlane.xlu0 %6181
    %6183 = vadd.xlane.f32.xlu0 %v5968
    %v6184 = vpop.xlane.xlu0 %6183
    %6185 = vadd.xlane.f32.xlu0 %v5969
    %v6186 = vpop.xlane.xlu0 %6185
    %6187 = vadd.xlane.f32.xlu0 %v5970
    %v6188 = vpop.xlane.xlu0 %6187
    %6189 = vadd.xlane.f32.xlu0 %v5971
    %v6190 = vpop.xlane.xlu0 %6189
    %6191 = vadd.xlane.f32.xlu0 %v5972
    %v6192 = vpop.xlane.xlu0 %6191
    %6193 = vadd.xlane.f32.xlu0 %v5973
    %v6194 = vpop.xlane.xlu0 %6193
    %6195 = vadd.xlane.f32.xlu0 %v5974
    %v6196 = vpop.xlane.xlu0 %6195
    %6197 = vadd.xlane.f32.xlu0 %v5975
    %v6198 = vpop.xlane.xlu0 %6197
    %6199 = vadd.xlane.f32.xlu0 %v5976
    %v6200 = vpop.xlane.xlu0 %6199
    %6201 = vadd.xlane.f32.xlu0 %v5977
    %v6202 = vpop.xlane.xlu0 %6201
    %6203 = vadd.xlane.f32.xlu0 %v5978
    %v6204 = vpop.xlane.xlu0 %6203
    %6205 = vadd.xlane.f32.xlu0 %v5979
    %v6206 = vpop.xlane.xlu0 %6205
    %6207 = vadd.xlane.f32.xlu0 %v5980
    %v6208 = vpop.xlane.xlu0 %6207
    %6209 = vadd.xlane.f32.xlu0 %v5981
    %v6210 = vpop.xlane.xlu0 %6209
    %6211 = vadd.xlane.f32.xlu0 %v5982
    %v6212 = vpop.xlane.xlu0 %6211
    %6213 = vadd.xlane.f32.xlu0 %v5983
    %v6214 = vpop.xlane.xlu0 %6213
    %6215 = vadd.xlane.f32.xlu0 %v5984
    %v6216 = vpop.xlane.xlu0 %6215
    %6217 = vadd.xlane.f32.xlu0 %v5985
    %v6218 = vpop.xlane.xlu0 %6217
    %6219 = vadd.xlane.f32.xlu0 %v5986
    %v6220 = vpop.xlane.xlu0 %6219
    %6221 = vadd.xlane.f32.xlu0 %v5987
    %v6222 = vpop.xlane.xlu0 %6221
    %6223 = vadd.xlane.f32.xlu0 %v5988
    %v6224 = vpop.xlane.xlu0 %6223
    %6225 = vadd.xlane.f32.xlu0 %v5989
    %v6226 = vpop.xlane.xlu0 %6225
    %6227 = vadd.xlane.f32.xlu0 %v5990
    %v6228 = vpop.xlane.xlu0 %6227
    %6229 = vadd.xlane.f32.xlu0 %v5991
    %v6230 = vpop.xlane.xlu0 %6229
    %6231 = vadd.xlane.f32.xlu0 %v5992
    %v6232 = vpop.xlane.xlu0 %6231
    %6233 = vadd.xlane.f32.xlu0 %v5993
    %v6234 = vpop.xlane.xlu0 %6233
    %6235 = vadd.xlane.f32.xlu0 %v5994
    %v6236 = vpop.xlane.xlu0 %6235
    %6237 = vadd.xlane.f32.xlu0 %v5995
    %v6238 = vpop.xlane.xlu0 %6237
    %6239 = vadd.xlane.f32.xlu0 %v5996
    %v6240 = vpop.xlane.xlu0 %6239
    %6241 = vadd.xlane.f32.xlu0 %v5997
    %v6242 = vpop.xlane.xlu0 %6241
    %6243 = vadd.xlane.f32.xlu0 %v5998
    %v6244 = vpop.xlane.xlu0 %6243
    %6245 = vadd.xlane.f32.xlu0 %v5999
    %v6246 = vpop.xlane.xlu0 %6245
    %6247 = vadd.xlane.f32.xlu0 %v6000
    %v6248 = vpop.xlane.xlu0 %6247
    %6249 = vadd.xlane.f32.xlu0 %v6001
    %v6250 = vpop.xlane.xlu0 %6249
    %6251 = vadd.xlane.f32.xlu0 %v6002
    %v6252 = vpop.xlane.xlu0 %6251
    %6253 = vadd.xlane.f32.xlu0 %v6003
    %v6254 = vpop.xlane.xlu0 %6253
    %6255 = vadd.xlane.f32.xlu0 %v6004
    %v6256 = vpop.xlane.xlu0 %6255
    %6257 = vadd.xlane.f32.xlu0 %v6005
    %v6258 = vpop.xlane.xlu0 %6257
    %6259 = vadd.xlane.f32.xlu0 %v6006
    %v6260 = vpop.xlane.xlu0 %6259
    %6261 = vadd.xlane.f32.xlu0 %v6007
    %v6262 = vpop.xlane.xlu0 %6261
    %6263 = vadd.xlane.f32.xlu0 %v6008
    %v6264 = vpop.xlane.xlu0 %6263
    %6265 = vadd.xlane.f32.xlu0 %v6009
    %v6266 = vpop.xlane.xlu0 %6265
    %6267 = vadd.xlane.f32.xlu0 %v6010
    %v6268 = vpop.xlane.xlu0 %6267
    %6269 = vadd.xlane.f32.xlu0 %v6011
    %v6270 = vpop.xlane.xlu0 %6269
    %6271 = vadd.xlane.f32.xlu0 %v6012
    %v6272 = vpop.xlane.xlu0 %6271
    %6273 = vadd.xlane.f32.xlu0 %v6013
    %v6274 = vpop.xlane.xlu0 %6273
    %6275 = vadd.xlane.f32.xlu0 %v6014
    %v6276 = vpop.xlane.xlu0 %6275
    %6277 = vadd.xlane.f32.xlu0 %v6015
    %v6278 = vpop.xlane.xlu0 %6277
    %6279 = vadd.xlane.f32.xlu0 %v6016
    %v6280 = vpop.xlane.xlu0 %6279
    %6281 = vadd.xlane.f32.xlu0 %v6017
    %v6282 = vpop.xlane.xlu0 %6281
    %6283 = vadd.xlane.f32.xlu0 %v6018
    %v6284 = vpop.xlane.xlu0 %6283
    %6285 = vadd.xlane.f32.xlu0 %v6019
    %v6286 = vpop.xlane.xlu0 %6285
    %6287 = vadd.xlane.f32.xlu0 %v6020
    %v6288 = vpop.xlane.xlu0 %6287
    %6289 = vadd.xlane.f32.xlu0 %v6021
    %v6290 = vpop.xlane.xlu0 %6289
    %6291 = vadd.xlane.f32.xlu0 %v6022
    %v6292 = vpop.xlane.xlu0 %6291
    %6293 = vadd.xlane.f32.xlu0 %v6023
    %v6294 = vpop.xlane.xlu0 %6293
    %6295 = vadd.xlane.f32.xlu0 %v6024
    %v6296 = vpop.xlane.xlu0 %6295
    %v6297 = vmul.f32 %v6026, 0.03125
    %v6298 = vmul.f32 %v6028, 0.03125
    %v6299 = vmul.f32 %v6030, 0.03125
    %v6300 = vmul.f32 %v6032, 0.03125
    %v6301 = vmul.f32 %v6034, 0.03125
    %v6302 = vmul.f32 %v6036, 0.03125
    %v6303 = vmul.f32 %v6038, 0.03125
    %v6304 = vmul.f32 %v6040, 0.03125
    %v6305 = vmul.f32 %v6042, 0.03125
    %v6306 = vmul.f32 %v6044, 0.03125
    %v6307 = vmul.f32 %v6046, 0.03125
    %v6308 = vmul.f32 %v6048, 0.03125
    %v6309 = vmul.f32 %v6050, 0.03125
    %v6310 = vmul.f32 %v6052, 0.03125
    %v6311 = vmul.f32 %v6054, 0.03125
    %v6312 = vmul.f32 %v6056, 0.03125
    %v6313 = vmul.f32 %v6058, 0.03125
    %v6314 = vmul.f32 %v6060, 0.03125
    %v6315 = vmul.f32 %v6062, 0.03125
    %v6316 = vmul.f32 %v6064, 0.03125
    %v6317 = vmul.f32 %v6066, 0.03125
    %v6318 = vmul.f32 %v6068, 0.03125
    %v6319 = vmul.f32 %v6070, 0.03125
    %v6320 = vmul.f32 %v6072, 0.03125
    %v6321 = vmul.f32 %v6074, 0.03125
    %v6322 = vmul.f32 %v6076, 0.03125
    %v6323 = vmul.f32 %v6078, 0.03125
    %v6324 = vmul.f32 %v6080, 0.03125
    %v6325 = vmul.f32 %v6082, 0.03125
    %v6326 = vmul.f32 %v6084, 0.03125
    %v6327 = vmul.f32 %v6086, 0.03125
    %v6328 = vmul.f32 %v6088, 0.03125
    %v6329 = vmul.f32 %v6090, 0.03125
    %v6330 = vmul.f32 %v6092, 0.03125
    %v6331 = vmul.f32 %v6094, 0.03125
    %v6332 = vmul.f32 %v6096, 0.03125
    %v6333 = vmul.f32 %v6098, 0.03125
    %v6334 = vmul.f32 %v6100, 0.03125
    %v6335 = vmul.f32 %v6102, 0.03125
    %v6336 = vmul.f32 %v6104, 0.03125
    %v6337 = vmul.f32 %v6106, 0.03125
    %v6338 = vmul.f32 %v6108, 0.03125
    %v6339 = vmul.f32 %v6110, 0.03125
    %v6340 = vmul.f32 %v6112, 0.03125
    %v6341 = vmul.f32 %v6114, 0.03125
    %v6342 = vmul.f32 %v6116, 0.03125
    %v6343 = vmul.f32 %v6118, 0.03125
    %v6344 = vmul.f32 %v6120, 0.03125
    %v6345 = vmul.f32 %v6122, 0.03125
    %v6346 = vmul.f32 %v6124, 0.03125
    %v6347 = vmul.f32 %v6126, 0.03125
    %v6348 = vmul.f32 %v6128, 0.03125
    %v6349 = vmul.f32 %v6130, 0.03125
    %v6350 = vmul.f32 %v6132, 0.03125
    %v6351 = vmul.f32 %v6134, 0.03125
    %v6352 = vmul.f32 %v6136, 0.03125
    %v6353 = vmul.f32 %v6138, 0.03125
    %v6354 = vmul.f32 %v6140, 0.03125
    %v6355 = vmul.f32 %v6142, 0.03125
    %v6356 = vmul.f32 %v6144, 0.03125
    %v6357 = vmul.f32 %v6146, 0.03125
    %v6358 = vmul.f32 %v6148, 0.03125
    %v6359 = vmul.f32 %v6150, 0.03125
    %v6360 = vmul.f32 %v6152, 0.03125
    %v6361 = vmul.f32 %v6154, 0.03125
    %v6362 = vmul.f32 %v6156, 0.03125
    %v6363 = vmul.f32 %v6158, 0.03125
    %v6364 = vmul.f32 %v6160, 0.03125
    %v6365 = vmul.f32 %v6162, 0.03125
    %v6366 = vmul.f32 %v6164, 0.03125
    %v6367 = vmul.f32 %v6166, 0.03125
    %v6368 = vmul.f32 %v6168, 0.03125
    %v6369 = vmul.f32 %v6170, 0.03125
    %v6370 = vmul.f32 %v6172, 0.03125
    %v6371 = vmul.f32 %v6174, 0.03125
    %v6372 = vmul.f32 %v6176, 0.03125
    %v6373 = vmul.f32 %v6178, 0.03125
    %v6374 = vmul.f32 %v6180, 0.03125
    %v6375 = vmul.f32 %v6182, 0.03125
    %v6376 = vmul.f32 %v6184, 0.03125
    %v6377 = vmul.f32 %v6186, 0.03125
    %v6378 = vmul.f32 %v6188, 0.03125
    %v6379 = vmul.f32 %v6190, 0.03125
    %v6380 = vmul.f32 %v6192, 0.03125
    %v6381 = vmul.f32 %v6194, 0.03125
    %v6382 = vmul.f32 %v6196, 0.03125
    %v6383 = vmul.f32 %v6198, 0.03125
    %v6384 = vmul.f32 %v6200, 0.03125
    %v6385 = vmul.f32 %v6202, 0.03125
    %v6386 = vmul.f32 %v6204, 0.03125
    %v6387 = vmul.f32 %v6206, 0.03125
    %v6388 = vmul.f32 %v6208, 0.03125
    %v6389 = vmul.f32 %v6210, 0.03125
    %v6390 = vmul.f32 %v6212, 0.03125
    %v6391 = vmul.f32 %v6214, 0.03125
    %v6392 = vmul.f32 %v6216, 0.03125
    %v6393 = vmul.f32 %v6218, 0.03125
    %v6394 = vmul.f32 %v6220, 0.03125
    %v6395 = vmul.f32 %v6222, 0.03125
    %v6396 = vmul.f32 %v6224, 0.03125
    %v6397 = vmul.f32 %v6226, 0.03125
    %v6398 = vmul.f32 %v6228, 0.03125
    %v6399 = vmul.f32 %v6230, 0.03125
    %v6400 = vmul.f32 %v6232, 0.03125
    %v6401 = vmul.f32 %v6234, 0.03125
    %v6402 = vmul.f32 %v6236, 0.03125
    %v6403 = vmul.f32 %v6238, 0.03125
    %v6404 = vmul.f32 %v6240, 0.03125
    %v6405 = vmul.f32 %v6242, 0.03125
    %v6406 = vmul.f32 %v6244, 0.03125
    %v6407 = vmul.f32 %v6246, 0.03125
    %v6408 = vmul.f32 %v6248, 0.03125
    %v6409 = vmul.f32 %v6250, 0.03125
    %v6410 = vmul.f32 %v6252, 0.03125
    %v6411 = vmul.f32 %v6254, 0.03125
    %v6412 = vmul.f32 %v6256, 0.03125
    %v6413 = vmul.f32 %v6258, 0.03125
    %v6414 = vmul.f32 %v6260, 0.03125
    %v6415 = vmul.f32 %v6262, 0.03125
    %v6416 = vmul.f32 %v6264, 0.03125
    %v6417 = vmul.f32 %v6266, 0.03125
    %v6418 = vmul.f32 %v6268, 0.03125
    %v6419 = vmul.f32 %v6270, 0.03125
    %v6420 = vmul.f32 %v6272, 0.03125
    %v6421 = vmul.f32 %v6274, 0.03125
    %v6422 = vmul.f32 %v6276, 0.03125
    %v6423 = vmul.f32 %v6278, 0.03125
    %v6424 = vmul.f32 %v6280, 0.03125
    %v6425 = vmul.f32 %v6282, 0.03125
    %v6426 = vmul.f32 %v6284, 0.03125
    %v6427 = vmul.f32 %v6286, 0.03125
    %v6428 = vmul.f32 %v6288, 0.03125
    %v6429 = vmul.f32 %v6290, 0.03125
    %v6430 = vmul.f32 %v6292, 0.03125
    %v6431 = vmul.f32 %v6294, 0.03125
    %v6432 = vmul.f32 %v6296, 0.03125
    %v6433 = vmul.f32 %v5889, %v5889
    %v6434 = vmul.f32 %v5890, %v5890
    %v6435 = vmul.f32 %v5891, %v5891
    %v6436 = vmul.f32 %v5892, %v5892
    %v6437 = vmul.f32 %v5893, %v5893
    %v6438 = vmul.f32 %v5894, %v5894
    %v6439 = vmul.f32 %v5895, %v5895
    %v6440 = vmul.f32 %v5896, %v5896
    %v6441 = vmul.f32 %v5897, %v5897
    %v6442 = vmul.f32 %v5898, %v5898
    %v6443 = vmul.f32 %v5899, %v5899
    %v6444 = vmul.f32 %v5900, %v5900
    %v6445 = vmul.f32 %v5901, %v5901
    %v6446 = vmul.f32 %v5902, %v5902
    %v6447 = vmul.f32 %v5903, %v5903
    %v6448 = vmul.f32 %v5904, %v5904
    %v6449 = vmul.f32 %v5905, %v5905
    %v6450 = vmul.f32 %v5906, %v5906
    %v6451 = vmul.f32 %v5907, %v5907
    %v6452 = vmul.f32 %v5908, %v5908
    %v6453 = vmul.f32 %v5909, %v5909
    %v6454 = vmul.f32 %v5910, %v5910
    %v6455 = vmul.f32 %v5911, %v5911
    %v6456 = vmul.f32 %v5912, %v5912
    %v6457 = vmul.f32 %v5913, %v5913
    %v6458 = vmul.f32 %v5914, %v5914
    %v6459 = vmul.f32 %v5915, %v5915
    %v6460 = vmul.f32 %v5916, %v5916
    %v6461 = vmul.f32 %v5917, %v5917
    %v6462 = vmul.f32 %v5918, %v5918
    %v6463 = vmul.f32 %v5919, %v5919
    %v6464 = vmul.f32 %v5920, %v5920
    %v6465 = vmul.f32 %v5921, %v5921
    %v6466 = vmul.f32 %v5922, %v5922
    %v6467 = vmul.f32 %v5923, %v5923
    %v6468 = vmul.f32 %v5924, %v5924
    %v6469 = vmul.f32 %v5925, %v5925
    %v6470 = vmul.f32 %v5926, %v5926
    %v6471 = vmul.f32 %v5927, %v5927
    %v6472 = vmul.f32 %v5928, %v5928
    %v6473 = vmul.f32 %v5929, %v5929
    %v6474 = vmul.f32 %v5930, %v5930
    %v6475 = vmul.f32 %v5931, %v5931
    %v6476 = vmul.f32 %v5932, %v5932
    %v6477 = vmul.f32 %v5933, %v5933
    %v6478 = vmul.f32 %v5934, %v5934
    %v6479 = vmul.f32 %v5935, %v5935
    %v6480 = vmul.f32 %v5936, %v5936
    %v6481 = vmul.f32 %v5937, %v5937
    %v6482 = vmul.f32 %v5938, %v5938
    %v6483 = vmul.f32 %v5939, %v5939
    %v6484 = vmul.f32 %v5940, %v5940
    %v6485 = vmul.f32 %v5941, %v5941
    %v6486 = vmul.f32 %v5942, %v5942
    %v6487 = vmul.f32 %v5943, %v5943
    %v6488 = vmul.f32 %v5944, %v5944
    %v6489 = vmul.f32 %v5945, %v5945
    %v6490 = vmul.f32 %v5946, %v5946
    %v6491 = vmul.f32 %v5947, %v5947
    %v6492 = vmul.f32 %v5948, %v5948
    %v6493 = vmul.f32 %v5949, %v5949
    %v6494 = vmul.f32 %v5950, %v5950
    %v6495 = vmul.f32 %v5951, %v5951
    %v6496 = vmul.f32 %v5952, %v5952
    %v6497 = vmul.f32 %v5953, %v5953
    %v6498 = vmul.f32 %v5954, %v5954
    %v6499 = vmul.f32 %v5955, %v5955
    %v6500 = vmul.f32 %v5956, %v5956
    %v6501 = vmul.f32 %v5957, %v5957
    %v6502 = vmul.f32 %v5958, %v5958
    %v6503 = vmul.f32 %v5959, %v5959
    %v6504 = vmul.f32 %v5960, %v5960
    %v6505 = vmul.f32 %v5961, %v5961
    %v6506 = vmul.f32 %v5962, %v5962
    %v6507 = vmul.f32 %v5963, %v5963
    %v6508 = vmul.f32 %v5964, %v5964
    %v6509 = vmul.f32 %v5965, %v5965
    %v6510 = vmul.f32 %v5966, %v5966
    %v6511 = vmul.f32 %v5967, %v5967
    %v6512 = vmul.f32 %v5968, %v5968
    %v6513 = vmul.f32 %v5969, %v5969
    %v6514 = vmul.f32 %v5970, %v5970
    %v6515 = vmul.f32 %v5971, %v5971
    %v6516 = vmul.f32 %v5972, %v5972
    %v6517 = vmul.f32 %v5973, %v5973
    %v6518 = vmul.f32 %v5974, %v5974
    %v6519 = vmul.f32 %v5975, %v5975
    %v6520 = vmul.f32 %v5976, %v5976
    %v6521 = vmul.f32 %v5977, %v5977
    %v6522 = vmul.f32 %v5978, %v5978
    %v6523 = vmul.f32 %v5979, %v5979
    %v6524 = vmul.f32 %v5980, %v5980
    %v6525 = vmul.f32 %v5981, %v5981
    %v6526 = vmul.f32 %v5982, %v5982
    %v6527 = vmul.f32 %v5983, %v5983
    %v6528 = vmul.f32 %v5984, %v5984
    %v6529 = vmul.f32 %v5985, %v5985
    %v6530 = vmul.f32 %v5986, %v5986
    %v6531 = vmul.f32 %v5987, %v5987
    %v6532 = vmul.f32 %v5988, %v5988
    %v6533 = vmul.f32 %v5989, %v5989
    %v6534 = vmul.f32 %v5990, %v5990
    %v6535 = vmul.f32 %v5991, %v5991
    %v6536 = vmul.f32 %v5992, %v5992
    %v6537 = vmul.f32 %v5993, %v5993
    %v6538 = vmul.f32 %v5994, %v5994
    %v6539 = vmul.f32 %v5995, %v5995
    %v6540 = vmul.f32 %v5996, %v5996
    %v6541 = vmul.f32 %v5997, %v5997
    %v6542 = vmul.f32 %v5998, %v5998
    %v6543 = vmul.f32 %v5999, %v5999
    %v6544 = vmul.f32 %v6000, %v6000
    %v6545 = vmul.f32 %v6001, %v6001
    %v6546 = vmul.f32 %v6002, %v6002
    %v6547 = vmul.f32 %v6003, %v6003
    %v6548 = vmul.f32 %v6004, %v6004
    %v6549 = vmul.f32 %v6005, %v6005
    %v6550 = vmul.f32 %v6006, %v6006
    %v6551 = vmul.f32 %v6007, %v6007
    %v6552 = vmul.f32 %v6008, %v6008
    %v6553 = vmul.f32 %v6009, %v6009
    %v6554 = vmul.f32 %v6010, %v6010
    %v6555 = vmul.f32 %v6011, %v6011
    %v6556 = vmul.f32 %v6012, %v6012
    %v6557 = vmul.f32 %v6013, %v6013
    %v6558 = vmul.f32 %v6014, %v6014
    %v6559 = vmul.f32 %v6015, %v6015
    %v6560 = vmul.f32 %v6016, %v6016
    %v6561 = vmul.f32 %v6017, %v6017
    %v6562 = vmul.f32 %v6018, %v6018
    %v6563 = vmul.f32 %v6019, %v6019
    %v6564 = vmul.f32 %v6020, %v6020
    %v6565 = vmul.f32 %v6021, %v6021
    %v6566 = vmul.f32 %v6022, %v6022
    %v6567 = vmul.f32 %v6023, %v6023
    %v6568 = vmul.f32 %v6024, %v6024
    %6569 = vadd.xlane.f32.xlu0 %v6433
    %v6570 = vpop.xlane.xlu0 %6569
    %6571 = vadd.xlane.f32.xlu0 %v6434
    %v6572 = vpop.xlane.xlu0 %6571
    %6573 = vadd.xlane.f32.xlu0 %v6435
    %v6574 = vpop.xlane.xlu0 %6573
    %6575 = vadd.xlane.f32.xlu0 %v6436
    %v6576 = vpop.xlane.xlu0 %6575
    %6577 = vadd.xlane.f32.xlu0 %v6437
    %v6578 = vpop.xlane.xlu0 %6577
    %6579 = vadd.xlane.f32.xlu0 %v6438
    %v6580 = vpop.xlane.xlu0 %6579
    %6581 = vadd.xlane.f32.xlu0 %v6439
    %v6582 = vpop.xlane.xlu0 %6581
    %6583 = vadd.xlane.f32.xlu0 %v6440
    %v6584 = vpop.xlane.xlu0 %6583
    %6585 = vadd.xlane.f32.xlu0 %v6441
    %v6586 = vpop.xlane.xlu0 %6585
    %6587 = vadd.xlane.f32.xlu0 %v6442
    %v6588 = vpop.xlane.xlu0 %6587
    %6589 = vadd.xlane.f32.xlu0 %v6443
    %v6590 = vpop.xlane.xlu0 %6589
    %6591 = vadd.xlane.f32.xlu0 %v6444
    %v6592 = vpop.xlane.xlu0 %6591
    %6593 = vadd.xlane.f32.xlu0 %v6445
    %v6594 = vpop.xlane.xlu0 %6593
    %6595 = vadd.xlane.f32.xlu0 %v6446
    %v6596 = vpop.xlane.xlu0 %6595
    %6597 = vadd.xlane.f32.xlu0 %v6447
    %v6598 = vpop.xlane.xlu0 %6597
    %6599 = vadd.xlane.f32.xlu0 %v6448
    %v6600 = vpop.xlane.xlu0 %6599
    %6601 = vadd.xlane.f32.xlu0 %v6449
    %v6602 = vpop.xlane.xlu0 %6601
    %6603 = vadd.xlane.f32.xlu0 %v6450
    %v6604 = vpop.xlane.xlu0 %6603
    %6605 = vadd.xlane.f32.xlu0 %v6451
    %v6606 = vpop.xlane.xlu0 %6605
    %6607 = vadd.xlane.f32.xlu0 %v6452
    %v6608 = vpop.xlane.xlu0 %6607
    %6609 = vadd.xlane.f32.xlu0 %v6453
    %v6610 = vpop.xlane.xlu0 %6609
    %6611 = vadd.xlane.f32.xlu0 %v6454
    %v6612 = vpop.xlane.xlu0 %6611
    %6613 = vadd.xlane.f32.xlu0 %v6455
    %v6614 = vpop.xlane.xlu0 %6613
    %6615 = vadd.xlane.f32.xlu0 %v6456
    %v6616 = vpop.xlane.xlu0 %6615
    %6617 = vadd.xlane.f32.xlu0 %v6457
    %v6618 = vpop.xlane.xlu0 %6617
    %6619 = vadd.xlane.f32.xlu0 %v6458
    %v6620 = vpop.xlane.xlu0 %6619
    %6621 = vadd.xlane.f32.xlu0 %v6459
    %v6622 = vpop.xlane.xlu0 %6621
    %6623 = vadd.xlane.f32.xlu0 %v6460
    %v6624 = vpop.xlane.xlu0 %6623
    %6625 = vadd.xlane.f32.xlu0 %v6461
    %v6626 = vpop.xlane.xlu0 %6625
    %6627 = vadd.xlane.f32.xlu0 %v6462
    %v6628 = vpop.xlane.xlu0 %6627
    %6629 = vadd.xlane.f32.xlu0 %v6463
    %v6630 = vpop.xlane.xlu0 %6629
    %6631 = vadd.xlane.f32.xlu0 %v6464
    %v6632 = vpop.xlane.xlu0 %6631
    %6633 = vadd.xlane.f32.xlu0 %v6465
    %v6634 = vpop.xlane.xlu0 %6633
    %6635 = vadd.xlane.f32.xlu0 %v6466
    %v6636 = vpop.xlane.xlu0 %6635
    %6637 = vadd.xlane.f32.xlu0 %v6467
    %v6638 = vpop.xlane.xlu0 %6637
    %6639 = vadd.xlane.f32.xlu0 %v6468
    %v6640 = vpop.xlane.xlu0 %6639
    %6641 = vadd.xlane.f32.xlu0 %v6469
    %v6642 = vpop.xlane.xlu0 %6641
    %6643 = vadd.xlane.f32.xlu0 %v6470
    %v6644 = vpop.xlane.xlu0 %6643
    %6645 = vadd.xlane.f32.xlu0 %v6471
    %v6646 = vpop.xlane.xlu0 %6645
    %6647 = vadd.xlane.f32.xlu0 %v6472
    %v6648 = vpop.xlane.xlu0 %6647
    %6649 = vadd.xlane.f32.xlu0 %v6473
    %v6650 = vpop.xlane.xlu0 %6649
    %6651 = vadd.xlane.f32.xlu0 %v6474
    %v6652 = vpop.xlane.xlu0 %6651
    %6653 = vadd.xlane.f32.xlu0 %v6475
    %v6654 = vpop.xlane.xlu0 %6653
    %6655 = vadd.xlane.f32.xlu0 %v6476
    %v6656 = vpop.xlane.xlu0 %6655
    %6657 = vadd.xlane.f32.xlu0 %v6477
    %v6658 = vpop.xlane.xlu0 %6657
    %6659 = vadd.xlane.f32.xlu0 %v6478
    %v6660 = vpop.xlane.xlu0 %6659
    %6661 = vadd.xlane.f32.xlu0 %v6479
    %v6662 = vpop.xlane.xlu0 %6661
    %6663 = vadd.xlane.f32.xlu0 %v6480
    %v6664 = vpop.xlane.xlu0 %6663
    %6665 = vadd.xlane.f32.xlu0 %v6481
    %v6666 = vpop.xlane.xlu0 %6665
    %6667 = vadd.xlane.f32.xlu0 %v6482
    %v6668 = vpop.xlane.xlu0 %6667
    %6669 = vadd.xlane.f32.xlu0 %v6483
    %v6670 = vpop.xlane.xlu0 %6669
    %6671 = vadd.xlane.f32.xlu0 %v6484
    %v6672 = vpop.xlane.xlu0 %6671
    %6673 = vadd.xlane.f32.xlu0 %v6485
    %v6674 = vpop.xlane.xlu0 %6673
    %6675 = vadd.xlane.f32.xlu0 %v6486
    %v6676 = vpop.xlane.xlu0 %6675
    %6677 = vadd.xlane.f32.xlu0 %v6487
    %v6678 = vpop.xlane.xlu0 %6677
    %6679 = vadd.xlane.f32.xlu0 %v6488
    %v6680 = vpop.xlane.xlu0 %6679
    %6681 = vadd.xlane.f32.xlu0 %v6489
    %v6682 = vpop.xlane.xlu0 %6681
    %6683 = vadd.xlane.f32.xlu0 %v6490
    %v6684 = vpop.xlane.xlu0 %6683
    %6685 = vadd.xlane.f32.xlu0 %v6491
    %v6686 = vpop.xlane.xlu0 %6685
    %6687 = vadd.xlane.f32.xlu0 %v6492
    %v6688 = vpop.xlane.xlu0 %6687
    %6689 = vadd.xlane.f32.xlu0 %v6493
    %v6690 = vpop.xlane.xlu0 %6689
    %6691 = vadd.xlane.f32.xlu0 %v6494
    %v6692 = vpop.xlane.xlu0 %6691
    %6693 = vadd.xlane.f32.xlu0 %v6495
    %v6694 = vpop.xlane.xlu0 %6693
    %6695 = vadd.xlane.f32.xlu0 %v6496
    %v6696 = vpop.xlane.xlu0 %6695
    %6697 = vadd.xlane.f32.xlu0 %v6497
    %v6698 = vpop.xlane.xlu0 %6697
    %6699 = vadd.xlane.f32.xlu0 %v6498
    %v6700 = vpop.xlane.xlu0 %6699
    %6701 = vadd.xlane.f32.xlu0 %v6499
    %v6702 = vpop.xlane.xlu0 %6701
    %6703 = vadd.xlane.f32.xlu0 %v6500
    %v6704 = vpop.xlane.xlu0 %6703
    %6705 = vadd.xlane.f32.xlu0 %v6501
    %v6706 = vpop.xlane.xlu0 %6705
    %6707 = vadd.xlane.f32.xlu0 %v6502
    %v6708 = vpop.xlane.xlu0 %6707
    %6709 = vadd.xlane.f32.xlu0 %v6503
    %v6710 = vpop.xlane.xlu0 %6709
    %6711 = vadd.xlane.f32.xlu0 %v6504
    %v6712 = vpop.xlane.xlu0 %6711
    %6713 = vadd.xlane.f32.xlu0 %v6505
    %v6714 = vpop.xlane.xlu0 %6713
    %6715 = vadd.xlane.f32.xlu0 %v6506
    %v6716 = vpop.xlane.xlu0 %6715
    %6717 = vadd.xlane.f32.xlu0 %v6507
    %v6718 = vpop.xlane.xlu0 %6717
    %6719 = vadd.xlane.f32.xlu0 %v6508
    %v6720 = vpop.xlane.xlu0 %6719
    %6721 = vadd.xlane.f32.xlu0 %v6509
    %v6722 = vpop.xlane.xlu0 %6721
    %6723 = vadd.xlane.f32.xlu0 %v6510
    %v6724 = vpop.xlane.xlu0 %6723
    %6725 = vadd.xlane.f32.xlu0 %v6511
    %v6726 = vpop.xlane.xlu0 %6725
    %6727 = vadd.xlane.f32.xlu0 %v6512
    %v6728 = vpop.xlane.xlu0 %6727
    %6729 = vadd.xlane.f32.xlu0 %v6513
    %v6730 = vpop.xlane.xlu0 %6729
    %6731 = vadd.xlane.f32.xlu0 %v6514
    %v6732 = vpop.xlane.xlu0 %6731
    %6733 = vadd.xlane.f32.xlu0 %v6515
    %v6734 = vpop.xlane.xlu0 %6733
    %6735 = vadd.xlane.f32.xlu0 %v6516
    %v6736 = vpop.xlane.xlu0 %6735
    %6737 = vadd.xlane.f32.xlu0 %v6517
    %v6738 = vpop.xlane.xlu0 %6737
    %6739 = vadd.xlane.f32.xlu0 %v6518
    %v6740 = vpop.xlane.xlu0 %6739
    %6741 = vadd.xlane.f32.xlu0 %v6519
    %v6742 = vpop.xlane.xlu0 %6741
    %6743 = vadd.xlane.f32.xlu0 %v6520
    %v6744 = vpop.xlane.xlu0 %6743
    %6745 = vadd.xlane.f32.xlu0 %v6521
    %v6746 = vpop.xlane.xlu0 %6745
    %6747 = vadd.xlane.f32.xlu0 %v6522
    %v6748 = vpop.xlane.xlu0 %6747
    %6749 = vadd.xlane.f32.xlu0 %v6523
    %v6750 = vpop.xlane.xlu0 %6749
    %6751 = vadd.xlane.f32.xlu0 %v6524
    %v6752 = vpop.xlane.xlu0 %6751
    %6753 = vadd.xlane.f32.xlu0 %v6525
    %v6754 = vpop.xlane.xlu0 %6753
    %6755 = vadd.xlane.f32.xlu0 %v6526
    %v6756 = vpop.xlane.xlu0 %6755
    %6757 = vadd.xlane.f32.xlu0 %v6527
    %v6758 = vpop.xlane.xlu0 %6757
    %6759 = vadd.xlane.f32.xlu0 %v6528
    %v6760 = vpop.xlane.xlu0 %6759
    %6761 = vadd.xlane.f32.xlu0 %v6529
    %v6762 = vpop.xlane.xlu0 %6761
    %6763 = vadd.xlane.f32.xlu0 %v6530
    %v6764 = vpop.xlane.xlu0 %6763
    %6765 = vadd.xlane.f32.xlu0 %v6531
    %v6766 = vpop.xlane.xlu0 %6765
    %6767 = vadd.xlane.f32.xlu0 %v6532
    %v6768 = vpop.xlane.xlu0 %6767
    %6769 = vadd.xlane.f32.xlu0 %v6533
    %v6770 = vpop.xlane.xlu0 %6769
    %6771 = vadd.xlane.f32.xlu0 %v6534
    %v6772 = vpop.xlane.xlu0 %6771
    %6773 = vadd.xlane.f32.xlu0 %v6535
    %v6774 = vpop.xlane.xlu0 %6773
    %6775 = vadd.xlane.f32.xlu0 %v6536
    %v6776 = vpop.xlane.xlu0 %6775
    %6777 = vadd.xlane.f32.xlu0 %v6537
    %v6778 = vpop.xlane.xlu0 %6777
    %6779 = vadd.xlane.f32.xlu0 %v6538
    %v6780 = vpop.xlane.xlu0 %6779
    %6781 = vadd.xlane.f32.xlu0 %v6539
    %v6782 = vpop.xlane.xlu0 %6781
    %6783 = vadd.xlane.f32.xlu0 %v6540
    %v6784 = vpop.xlane.xlu0 %6783
    %6785 = vadd.xlane.f32.xlu0 %v6541
    %v6786 = vpop.xlane.xlu0 %6785
    %6787 = vadd.xlane.f32.xlu0 %v6542
    %v6788 = vpop.xlane.xlu0 %6787
    %6789 = vadd.xlane.f32.xlu0 %v6543
    %v6790 = vpop.xlane.xlu0 %6789
    %6791 = vadd.xlane.f32.xlu0 %v6544
    %v6792 = vpop.xlane.xlu0 %6791
    %6793 = vadd.xlane.f32.xlu0 %v6545
    %v6794 = vpop.xlane.xlu0 %6793
    %6795 = vadd.xlane.f32.xlu0 %v6546
    %v6796 = vpop.xlane.xlu0 %6795
    %6797 = vadd.xlane.f32.xlu0 %v6547
    %v6798 = vpop.xlane.xlu0 %6797
    %6799 = vadd.xlane.f32.xlu0 %v6548
    %v6800 = vpop.xlane.xlu0 %6799
    %6801 = vadd.xlane.f32.xlu0 %v6549
    %v6802 = vpop.xlane.xlu0 %6801
    %6803 = vadd.xlane.f32.xlu0 %v6550
    %v6804 = vpop.xlane.xlu0 %6803
    %6805 = vadd.xlane.f32.xlu0 %v6551
    %v6806 = vpop.xlane.xlu0 %6805
    %6807 = vadd.xlane.f32.xlu0 %v6552
    %v6808 = vpop.xlane.xlu0 %6807
    %6809 = vadd.xlane.f32.xlu0 %v6553
    %v6810 = vpop.xlane.xlu0 %6809
    %6811 = vadd.xlane.f32.xlu0 %v6554
    %v6812 = vpop.xlane.xlu0 %6811
    %6813 = vadd.xlane.f32.xlu0 %v6555
    %v6814 = vpop.xlane.xlu0 %6813
    %6815 = vadd.xlane.f32.xlu0 %v6556
    %v6816 = vpop.xlane.xlu0 %6815
    %6817 = vadd.xlane.f32.xlu0 %v6557
    %v6818 = vpop.xlane.xlu0 %6817
    %6819 = vadd.xlane.f32.xlu0 %v6558
    %v6820 = vpop.xlane.xlu0 %6819
    %6821 = vadd.xlane.f32.xlu0 %v6559
    %v6822 = vpop.xlane.xlu0 %6821
    %6823 = vadd.xlane.f32.xlu0 %v6560
    %v6824 = vpop.xlane.xlu0 %6823
    %6825 = vadd.xlane.f32.xlu0 %v6561
    %v6826 = vpop.xlane.xlu0 %6825
    %6827 = vadd.xlane.f32.xlu0 %v6562
    %v6828 = vpop.xlane.xlu0 %6827
    %6829 = vadd.xlane.f32.xlu0 %v6563
    %v6830 = vpop.xlane.xlu0 %6829
    %6831 = vadd.xlane.f32.xlu0 %v6564
    %v6832 = vpop.xlane.xlu0 %6831
    %6833 = vadd.xlane.f32.xlu0 %v6565
    %v6834 = vpop.xlane.xlu0 %6833
    %6835 = vadd.xlane.f32.xlu0 %v6566
    %v6836 = vpop.xlane.xlu0 %6835
    %6837 = vadd.xlane.f32.xlu0 %v6567
    %v6838 = vpop.xlane.xlu0 %6837
    %6839 = vadd.xlane.f32.xlu0 %v6568
    %v6840 = vpop.xlane.xlu0 %6839
    %v6841 = vmul.f32 %v6570, 0.03125
    %v6842 = vmul.f32 %v6572, 0.03125
    %v6843 = vmul.f32 %v6574, 0.03125
    %v6844 = vmul.f32 %v6576, 0.03125
    %v6845 = vmul.f32 %v6578, 0.03125
    %v6846 = vmul.f32 %v6580, 0.03125
    %v6847 = vmul.f32 %v6582, 0.03125
    %v6848 = vmul.f32 %v6584, 0.03125
    %v6849 = vmul.f32 %v6586, 0.03125
    %v6850 = vmul.f32 %v6588, 0.03125
    %v6851 = vmul.f32 %v6590, 0.03125
    %v6852 = vmul.f32 %v6592, 0.03125
    %v6853 = vmul.f32 %v6594, 0.03125
    %v6854 = vmul.f32 %v6596, 0.03125
    %v6855 = vmul.f32 %v6598, 0.03125
    %v6856 = vmul.f32 %v6600, 0.03125
    %v6857 = vmul.f32 %v6602, 0.03125
    %v6858 = vmul.f32 %v6604, 0.03125
    %v6859 = vmul.f32 %v6606, 0.03125
    %v6860 = vmul.f32 %v6608, 0.03125
    %v6861 = vmul.f32 %v6610, 0.03125
    %v6862 = vmul.f32 %v6612, 0.03125
    %v6863 = vmul.f32 %v6614, 0.03125
    %v6864 = vmul.f32 %v6616, 0.03125
    %v6865 = vmul.f32 %v6618, 0.03125
    %v6866 = vmul.f32 %v6620, 0.03125
    %v6867 = vmul.f32 %v6622, 0.03125
    %v6868 = vmul.f32 %v6624, 0.03125
    %v6869 = vmul.f32 %v6626, 0.03125
    %v6870 = vmul.f32 %v6628, 0.03125
    %v6871 = vmul.f32 %v6630, 0.03125
    %v6872 = vmul.f32 %v6632, 0.03125
    %v6873 = vmul.f32 %v6634, 0.03125
    %v6874 = vmul.f32 %v6636, 0.03125
    %v6875 = vmul.f32 %v6638, 0.03125
    %v6876 = vmul.f32 %v6640, 0.03125
    %v6877 = vmul.f32 %v6642, 0.03125
    %v6878 = vmul.f32 %v6644, 0.03125
    %v6879 = vmul.f32 %v6646, 0.03125
    %v6880 = vmul.f32 %v6648, 0.03125
    %v6881 = vmul.f32 %v6650, 0.03125
    %v6882 = vmul.f32 %v6652, 0.03125
    %v6883 = vmul.f32 %v6654, 0.03125
    %v6884 = vmul.f32 %v6656, 0.03125
    %v6885 = vmul.f32 %v6658, 0.03125
    %v6886 = vmul.f32 %v6660, 0.03125
    %v6887 = vmul.f32 %v6662, 0.03125
    %v6888 = vmul.f32 %v6664, 0.03125
    %v6889 = vmul.f32 %v6666, 0.03125
    %v6890 = vmul.f32 %v6668, 0.03125
    %v6891 = vmul.f32 %v6670, 0.03125
    %v6892 = vmul.f32 %v6672, 0.03125
    %v6893 = vmul.f32 %v6674, 0.03125
    %v6894 = vmul.f32 %v6676, 0.03125
    %v6895 = vmul.f32 %v6678, 0.03125
    %v6896 = vmul.f32 %v6680, 0.03125
    %v6897 = vmul.f32 %v6682, 0.03125
    %v6898 = vmul.f32 %v6684, 0.03125
    %v6899 = vmul.f32 %v6686, 0.03125
    %v6900 = vmul.f32 %v6688, 0.03125
    %v6901 = vmul.f32 %v6690, 0.03125
    %v6902 = vmul.f32 %v6692, 0.03125
    %v6903 = vmul.f32 %v6694, 0.03125
    %v6904 = vmul.f32 %v6696, 0.03125
    %v6905 = vmul.f32 %v6698, 0.03125
    %v6906 = vmul.f32 %v6700, 0.03125
    %v6907 = vmul.f32 %v6702, 0.03125
    %v6908 = vmul.f32 %v6704, 0.03125
    %v6909 = vmul.f32 %v6706, 0.03125
    %v6910 = vmul.f32 %v6708, 0.03125
    %v6911 = vmul.f32 %v6710, 0.03125
    %v6912 = vmul.f32 %v6712, 0.03125
    %v6913 = vmul.f32 %v6714, 0.03125
    %v6914 = vmul.f32 %v6716, 0.03125
    %v6915 = vmul.f32 %v6718, 0.03125
    %v6916 = vmul.f32 %v6720, 0.03125
    %v6917 = vmul.f32 %v6722, 0.03125
    %v6918 = vmul.f32 %v6724, 0.03125
    %v6919 = vmul.f32 %v6726, 0.03125
    %v6920 = vmul.f32 %v6728, 0.03125
    %v6921 = vmul.f32 %v6730, 0.03125
    %v6922 = vmul.f32 %v6732, 0.03125
    %v6923 = vmul.f32 %v6734, 0.03125
    %v6924 = vmul.f32 %v6736, 0.03125
    %v6925 = vmul.f32 %v6738, 0.03125
    %v6926 = vmul.f32 %v6740, 0.03125
    %v6927 = vmul.f32 %v6742, 0.03125
    %v6928 = vmul.f32 %v6744, 0.03125
    %v6929 = vmul.f32 %v6746, 0.03125
    %v6930 = vmul.f32 %v6748, 0.03125
    %v6931 = vmul.f32 %v6750, 0.03125
    %v6932 = vmul.f32 %v6752, 0.03125
    %v6933 = vmul.f32 %v6754, 0.03125
    %v6934 = vmul.f32 %v6756, 0.03125
    %v6935 = vmul.f32 %v6758, 0.03125
    %v6936 = vmul.f32 %v6760, 0.03125
    %v6937 = vmul.f32 %v6762, 0.03125
    %v6938 = vmul.f32 %v6764, 0.03125
    %v6939 = vmul.f32 %v6766, 0.03125
    %v6940 = vmul.f32 %v6768, 0.03125
    %v6941 = vmul.f32 %v6770, 0.03125
    %v6942 = vmul.f32 %v6772, 0.03125
    %v6943 = vmul.f32 %v6774, 0.03125
    %v6944 = vmul.f32 %v6776, 0.03125
    %v6945 = vmul.f32 %v6778, 0.03125
    %v6946 = vmul.f32 %v6780, 0.03125
    %v6947 = vmul.f32 %v6782, 0.03125
    %v6948 = vmul.f32 %v6784, 0.03125
    %v6949 = vmul.f32 %v6786, 0.03125
    %v6950 = vmul.f32 %v6788, 0.03125
    %v6951 = vmul.f32 %v6790, 0.03125
    %v6952 = vmul.f32 %v6792, 0.03125
    %v6953 = vmul.f32 %v6794, 0.03125
    %v6954 = vmul.f32 %v6796, 0.03125
    %v6955 = vmul.f32 %v6798, 0.03125
    %v6956 = vmul.f32 %v6800, 0.03125
    %v6957 = vmul.f32 %v6802, 0.03125
    %v6958 = vmul.f32 %v6804, 0.03125
    %v6959 = vmul.f32 %v6806, 0.03125
    %v6960 = vmul.f32 %v6808, 0.03125
    %v6961 = vmul.f32 %v6810, 0.03125
    %v6962 = vmul.f32 %v6812, 0.03125
    %v6963 = vmul.f32 %v6814, 0.03125
    %v6964 = vmul.f32 %v6816, 0.03125
    %v6965 = vmul.f32 %v6818, 0.03125
    %v6966 = vmul.f32 %v6820, 0.03125
    %v6967 = vmul.f32 %v6822, 0.03125
    %v6968 = vmul.f32 %v6824, 0.03125
    %v6969 = vmul.f32 %v6826, 0.03125
    %v6970 = vmul.f32 %v6828, 0.03125
    %v6971 = vmul.f32 %v6830, 0.03125
    %v6972 = vmul.f32 %v6832, 0.03125
    %v6973 = vmul.f32 %v6834, 0.03125
    %v6974 = vmul.f32 %v6836, 0.03125
    %v6975 = vmul.f32 %v6838, 0.03125
    %v6976 = vmul.f32 %v6840, 0.03125
    %v6977 = vmul.f32 %v6297, %v6297
    %v6978 = vmul.f32 %v6298, %v6298
    %v6979 = vmul.f32 %v6299, %v6299
    %v6980 = vmul.f32 %v6300, %v6300
    %v6981 = vmul.f32 %v6301, %v6301
    %v6982 = vmul.f32 %v6302, %v6302
    %v6983 = vmul.f32 %v6303, %v6303
    %v6984 = vmul.f32 %v6304, %v6304
    %v6985 = vmul.f32 %v6305, %v6305
    %v6986 = vmul.f32 %v6306, %v6306
    %v6987 = vmul.f32 %v6307, %v6307
    %v6988 = vmul.f32 %v6308, %v6308
    %v6989 = vmul.f32 %v6309, %v6309
    %v6990 = vmul.f32 %v6310, %v6310
    %v6991 = vmul.f32 %v6311, %v6311
    %v6992 = vmul.f32 %v6312, %v6312
    %v6993 = vmul.f32 %v6313, %v6313
    %v6994 = vmul.f32 %v6314, %v6314
    %v6995 = vmul.f32 %v6315, %v6315
    %v6996 = vmul.f32 %v6316, %v6316
    %v6997 = vmul.f32 %v6317, %v6317
    %v6998 = vmul.f32 %v6318, %v6318
    %v6999 = vmul.f32 %v6319, %v6319
    %v7000 = vmul.f32 %v6320, %v6320
    %v7001 = vmul.f32 %v6321, %v6321
    %v7002 = vmul.f32 %v6322, %v6322
    %v7003 = vmul.f32 %v6323, %v6323
    %v7004 = vmul.f32 %v6324, %v6324
    %v7005 = vmul.f32 %v6325, %v6325
    %v7006 = vmul.f32 %v6326, %v6326
    %v7007 = vmul.f32 %v6327, %v6327
    %v7008 = vmul.f32 %v6328, %v6328
    %v7009 = vmul.f32 %v6329, %v6329
    %v7010 = vmul.f32 %v6330, %v6330
    %v7011 = vmul.f32 %v6331, %v6331
    %v7012 = vmul.f32 %v6332, %v6332
    %v7013 = vmul.f32 %v6333, %v6333
    %v7014 = vmul.f32 %v6334, %v6334
    %v7015 = vmul.f32 %v6335, %v6335
    %v7016 = vmul.f32 %v6336, %v6336
    %v7017 = vmul.f32 %v6337, %v6337
    %v7018 = vmul.f32 %v6338, %v6338
    %v7019 = vmul.f32 %v6339, %v6339
    %v7020 = vmul.f32 %v6340, %v6340
    %v7021 = vmul.f32 %v6341, %v6341
    %v7022 = vmul.f32 %v6342, %v6342
    %v7023 = vmul.f32 %v6343, %v6343
    %v7024 = vmul.f32 %v6344, %v6344
    %v7025 = vmul.f32 %v6345, %v6345
    %v7026 = vmul.f32 %v6346, %v6346
    %v7027 = vmul.f32 %v6347, %v6347
    %v7028 = vmul.f32 %v6348, %v6348
    %v7029 = vmul.f32 %v6349, %v6349
    %v7030 = vmul.f32 %v6350, %v6350
    %v7031 = vmul.f32 %v6351, %v6351
    %v7032 = vmul.f32 %v6352, %v6352
    %v7033 = vmul.f32 %v6353, %v6353
    %v7034 = vmul.f32 %v6354, %v6354
    %v7035 = vmul.f32 %v6355, %v6355
    %v7036 = vmul.f32 %v6356, %v6356
    %v7037 = vmul.f32 %v6357, %v6357
    %v7038 = vmul.f32 %v6358, %v6358
    %v7039 = vmul.f32 %v6359, %v6359
    %v7040 = vmul.f32 %v6360, %v6360
    %v7041 = vmul.f32 %v6361, %v6361
    %v7042 = vmul.f32 %v6362, %v6362
    %v7043 = vmul.f32 %v6363, %v6363
    %v7044 = vmul.f32 %v6364, %v6364
    %v7045 = vmul.f32 %v6365, %v6365
    %v7046 = vmul.f32 %v6366, %v6366
    %v7047 = vmul.f32 %v6367, %v6367
    %v7048 = vmul.f32 %v6368, %v6368
    %v7049 = vmul.f32 %v6369, %v6369
    %v7050 = vmul.f32 %v6370, %v6370
    %v7051 = vmul.f32 %v6371, %v6371
    %v7052 = vmul.f32 %v6372, %v6372
    %v7053 = vmul.f32 %v6373, %v6373
    %v7054 = vmul.f32 %v6374, %v6374
    %v7055 = vmul.f32 %v6375, %v6375
    %v7056 = vmul.f32 %v6376, %v6376
    %v7057 = vmul.f32 %v6377, %v6377
    %v7058 = vmul.f32 %v6378, %v6378
    %v7059 = vmul.f32 %v6379, %v6379
    %v7060 = vmul.f32 %v6380, %v6380
    %v7061 = vmul.f32 %v6381, %v6381
    %v7062 = vmul.f32 %v6382, %v6382
    %v7063 = vmul.f32 %v6383, %v6383
    %v7064 = vmul.f32 %v6384, %v6384
    %v7065 = vmul.f32 %v6385, %v6385
    %v7066 = vmul.f32 %v6386, %v6386
    %v7067 = vmul.f32 %v6387, %v6387
    %v7068 = vmul.f32 %v6388, %v6388
    %v7069 = vmul.f32 %v6389, %v6389
    %v7070 = vmul.f32 %v6390, %v6390
    %v7071 = vmul.f32 %v6391, %v6391
    %v7072 = vmul.f32 %v6392, %v6392
    %v7073 = vmul.f32 %v6393, %v6393
    %v7074 = vmul.f32 %v6394, %v6394
    %v7075 = vmul.f32 %v6395, %v6395
    %v7076 = vmul.f32 %v6396, %v6396
    %v7077 = vmul.f32 %v6397, %v6397
    %v7078 = vmul.f32 %v6398, %v6398
    %v7079 = vmul.f32 %v6399, %v6399
    %v7080 = vmul.f32 %v6400, %v6400
    %v7081 = vmul.f32 %v6401, %v6401
    %v7082 = vmul.f32 %v6402, %v6402
    %v7083 = vmul.f32 %v6403, %v6403
    %v7084 = vmul.f32 %v6404, %v6404
    %v7085 = vmul.f32 %v6405, %v6405
    %v7086 = vmul.f32 %v6406, %v6406
    %v7087 = vmul.f32 %v6407, %v6407
    %v7088 = vmul.f32 %v6408, %v6408
    %v7089 = vmul.f32 %v6409, %v6409
    %v7090 = vmul.f32 %v6410, %v6410
    %v7091 = vmul.f32 %v6411, %v6411
    %v7092 = vmul.f32 %v6412, %v6412
    %v7093 = vmul.f32 %v6413, %v6413
    %v7094 = vmul.f32 %v6414, %v6414
    %v7095 = vmul.f32 %v6415, %v6415
    %v7096 = vmul.f32 %v6416, %v6416
    %v7097 = vmul.f32 %v6417, %v6417
    %v7098 = vmul.f32 %v6418, %v6418
    %v7099 = vmul.f32 %v6419, %v6419
    %v7100 = vmul.f32 %v6420, %v6420
    %v7101 = vmul.f32 %v6421, %v6421
    %v7102 = vmul.f32 %v6422, %v6422
    %v7103 = vmul.f32 %v6423, %v6423
    %v7104 = vmul.f32 %v6424, %v6424
    %v7105 = vmul.f32 %v6425, %v6425
    %v7106 = vmul.f32 %v6426, %v6426
    %v7107 = vmul.f32 %v6427, %v6427
    %v7108 = vmul.f32 %v6428, %v6428
    %v7109 = vmul.f32 %v6429, %v6429
    %v7110 = vmul.f32 %v6430, %v6430
    %v7111 = vmul.f32 %v6431, %v6431
    %v7112 = vmul.f32 %v6432, %v6432
    %v7113 = vsub.f32 %v6841, %v6977
    %v7114 = vsub.f32 %v6842, %v6978
    %v7115 = vsub.f32 %v6843, %v6979
    %v7116 = vsub.f32 %v6844, %v6980
    %v7117 = vsub.f32 %v6845, %v6981
    %v7118 = vsub.f32 %v6846, %v6982
    %v7119 = vsub.f32 %v6847, %v6983
    %v7120 = vsub.f32 %v6848, %v6984
    %v7121 = vsub.f32 %v6849, %v6985
    %v7122 = vsub.f32 %v6850, %v6986
    %v7123 = vsub.f32 %v6851, %v6987
    %v7124 = vsub.f32 %v6852, %v6988
    %v7125 = vsub.f32 %v6853, %v6989
    %v7126 = vsub.f32 %v6854, %v6990
    %v7127 = vsub.f32 %v6855, %v6991
    %v7128 = vsub.f32 %v6856, %v6992
    %v7129 = vsub.f32 %v6857, %v6993
    %v7130 = vsub.f32 %v6858, %v6994
    %v7131 = vsub.f32 %v6859, %v6995
    %v7132 = vsub.f32 %v6860, %v6996
    %v7133 = vsub.f32 %v6861, %v6997
    %v7134 = vsub.f32 %v6862, %v6998
    %v7135 = vsub.f32 %v6863, %v6999
    %v7136 = vsub.f32 %v6864, %v7000
    %v7137 = vsub.f32 %v6865, %v7001
    %v7138 = vsub.f32 %v6866, %v7002
    %v7139 = vsub.f32 %v6867, %v7003
    %v7140 = vsub.f32 %v6868, %v7004
    %v7141 = vsub.f32 %v6869, %v7005
    %v7142 = vsub.f32 %v6870, %v7006
    %v7143 = vsub.f32 %v6871, %v7007
    %v7144 = vsub.f32 %v6872, %v7008
    %v7145 = vsub.f32 %v6873, %v7009
    %v7146 = vsub.f32 %v6874, %v7010
    %v7147 = vsub.f32 %v6875, %v7011
    %v7148 = vsub.f32 %v6876, %v7012
    %v7149 = vsub.f32 %v6877, %v7013
    %v7150 = vsub.f32 %v6878, %v7014
    %v7151 = vsub.f32 %v6879, %v7015
    %v7152 = vsub.f32 %v6880, %v7016
    %v7153 = vsub.f32 %v6881, %v7017
    %v7154 = vsub.f32 %v6882, %v7018
    %v7155 = vsub.f32 %v6883, %v7019
    %v7156 = vsub.f32 %v6884, %v7020
    %v7157 = vsub.f32 %v6885, %v7021
    %v7158 = vsub.f32 %v6886, %v7022
    %v7159 = vsub.f32 %v6887, %v7023
    %v7160 = vsub.f32 %v6888, %v7024
    %v7161 = vsub.f32 %v6889, %v7025
    %v7162 = vsub.f32 %v6890, %v7026
    %v7163 = vsub.f32 %v6891, %v7027
    %v7164 = vsub.f32 %v6892, %v7028
    %v7165 = vsub.f32 %v6893, %v7029
    %v7166 = vsub.f32 %v6894, %v7030
    %v7167 = vsub.f32 %v6895, %v7031
    %v7168 = vsub.f32 %v6896, %v7032
    %v7169 = vsub.f32 %v6897, %v7033
    %v7170 = vsub.f32 %v6898, %v7034
    %v7171 = vsub.f32 %v6899, %v7035
    %v7172 = vsub.f32 %v6900, %v7036
    %v7173 = vsub.f32 %v6901, %v7037
    %v7174 = vsub.f32 %v6902, %v7038
    %v7175 = vsub.f32 %v6903, %v7039
    %v7176 = vsub.f32 %v6904, %v7040
    %v7177 = vsub.f32 %v6905, %v7041
    %v7178 = vsub.f32 %v6906, %v7042
    %v7179 = vsub.f32 %v6907, %v7043
    %v7180 = vsub.f32 %v6908, %v7044
    %v7181 = vsub.f32 %v6909, %v7045
    %v7182 = vsub.f32 %v6910, %v7046
    %v7183 = vsub.f32 %v6911, %v7047
    %v7184 = vsub.f32 %v6912, %v7048
    %v7185 = vsub.f32 %v6913, %v7049
    %v7186 = vsub.f32 %v6914, %v7050
    %v7187 = vsub.f32 %v6915, %v7051
    %v7188 = vsub.f32 %v6916, %v7052
    %v7189 = vsub.f32 %v6917, %v7053
    %v7190 = vsub.f32 %v6918, %v7054
    %v7191 = vsub.f32 %v6919, %v7055
    %v7192 = vsub.f32 %v6920, %v7056
    %v7193 = vsub.f32 %v6921, %v7057
    %v7194 = vsub.f32 %v6922, %v7058
    %v7195 = vsub.f32 %v6923, %v7059
    %v7196 = vsub.f32 %v6924, %v7060
    %v7197 = vsub.f32 %v6925, %v7061
    %v7198 = vsub.f32 %v6926, %v7062
    %v7199 = vsub.f32 %v6927, %v7063
    %v7200 = vsub.f32 %v6928, %v7064
    %v7201 = vsub.f32 %v6929, %v7065
    %v7202 = vsub.f32 %v6930, %v7066
    %v7203 = vsub.f32 %v6931, %v7067
    %v7204 = vsub.f32 %v6932, %v7068
    %v7205 = vsub.f32 %v6933, %v7069
    %v7206 = vsub.f32 %v6934, %v7070
    %v7207 = vsub.f32 %v6935, %v7071
    %v7208 = vsub.f32 %v6936, %v7072
    %v7209 = vsub.f32 %v6937, %v7073
    %v7210 = vsub.f32 %v6938, %v7074
    %v7211 = vsub.f32 %v6939, %v7075
    %v7212 = vsub.f32 %v6940, %v7076
    %v7213 = vsub.f32 %v6941, %v7077
    %v7214 = vsub.f32 %v6942, %v7078
    %v7215 = vsub.f32 %v6943, %v7079
    %v7216 = vsub.f32 %v6944, %v7080
    %v7217 = vsub.f32 %v6945, %v7081
    %v7218 = vsub.f32 %v6946, %v7082
    %v7219 = vsub.f32 %v6947, %v7083
    %v7220 = vsub.f32 %v6948, %v7084
    %v7221 = vsub.f32 %v6949, %v7085
    %v7222 = vsub.f32 %v6950, %v7086
    %v7223 = vsub.f32 %v6951, %v7087
    %v7224 = vsub.f32 %v6952, %v7088
    %v7225 = vsub.f32 %v6953, %v7089
    %v7226 = vsub.f32 %v6954, %v7090
    %v7227 = vsub.f32 %v6955, %v7091
    %v7228 = vsub.f32 %v6956, %v7092
    %v7229 = vsub.f32 %v6957, %v7093
    %v7230 = vsub.f32 %v6958, %v7094
    %v7231 = vsub.f32 %v6959, %v7095
    %v7232 = vsub.f32 %v6960, %v7096
    %v7233 = vsub.f32 %v6961, %v7097
    %v7234 = vsub.f32 %v6962, %v7098
    %v7235 = vsub.f32 %v6963, %v7099
    %v7236 = vsub.f32 %v6964, %v7100
    %v7237 = vsub.f32 %v6965, %v7101
    %v7238 = vsub.f32 %v6966, %v7102
    %v7239 = vsub.f32 %v6967, %v7103
    %v7240 = vsub.f32 %v6968, %v7104
    %v7241 = vsub.f32 %v6969, %v7105
    %v7242 = vsub.f32 %v6970, %v7106
    %v7243 = vsub.f32 %v6971, %v7107
    %v7244 = vsub.f32 %v6972, %v7108
    %v7245 = vsub.f32 %v6973, %v7109
    %v7246 = vsub.f32 %v6974, %v7110
    %v7247 = vsub.f32 %v6975, %v7111
    %v7248 = vsub.f32 %v6976, %v7112
    %v7249 = vsub.f32 %v5889, %v6297
    %v7250 = vsub.f32 %v5890, %v6298
    %v7251 = vsub.f32 %v5891, %v6299
    %v7252 = vsub.f32 %v5892, %v6300
    %v7253 = vsub.f32 %v5893, %v6301
    %v7254 = vsub.f32 %v5894, %v6302
    %v7255 = vsub.f32 %v5895, %v6303
    %v7256 = vsub.f32 %v5896, %v6304
    %v7257 = vsub.f32 %v5897, %v6305
    %v7258 = vsub.f32 %v5898, %v6306
    %v7259 = vsub.f32 %v5899, %v6307
    %v7260 = vsub.f32 %v5900, %v6308
    %v7261 = vsub.f32 %v5901, %v6309
    %v7262 = vsub.f32 %v5902, %v6310
    %v7263 = vsub.f32 %v5903, %v6311
    %v7264 = vsub.f32 %v5904, %v6312
    %v7265 = vsub.f32 %v5905, %v6313
    %v7266 = vsub.f32 %v5906, %v6314
    %v7267 = vsub.f32 %v5907, %v6315
    %v7268 = vsub.f32 %v5908, %v6316
    %v7269 = vsub.f32 %v5909, %v6317
    %v7270 = vsub.f32 %v5910, %v6318
    %v7271 = vsub.f32 %v5911, %v6319
    %v7272 = vsub.f32 %v5912, %v6320
    %v7273 = vsub.f32 %v5913, %v6321
    %v7274 = vsub.f32 %v5914, %v6322
    %v7275 = vsub.f32 %v5915, %v6323
    %v7276 = vsub.f32 %v5916, %v6324
    %v7277 = vsub.f32 %v5917, %v6325
    %v7278 = vsub.f32 %v5918, %v6326
    %v7279 = vsub.f32 %v5919, %v6327
    %v7280 = vsub.f32 %v5920, %v6328
    %v7281 = vsub.f32 %v5921, %v6329
    %v7282 = vsub.f32 %v5922, %v6330
    %v7283 = vsub.f32 %v5923, %v6331
    %v7284 = vsub.f32 %v5924, %v6332
    %v7285 = vsub.f32 %v5925, %v6333
    %v7286 = vsub.f32 %v5926, %v6334
    %v7287 = vsub.f32 %v5927, %v6335
    %v7288 = vsub.f32 %v5928, %v6336
    %v7289 = vsub.f32 %v5929, %v6337
    %v7290 = vsub.f32 %v5930, %v6338
    %v7291 = vsub.f32 %v5931, %v6339
    %v7292 = vsub.f32 %v5932, %v6340
    %v7293 = vsub.f32 %v5933, %v6341
    %v7294 = vsub.f32 %v5934, %v6342
    %v7295 = vsub.f32 %v5935, %v6343
    %v7296 = vsub.f32 %v5936, %v6344
    %v7297 = vsub.f32 %v5937, %v6345
    %v7298 = vsub.f32 %v5938, %v6346
    %v7299 = vsub.f32 %v5939, %v6347
    %v7300 = vsub.f32 %v5940, %v6348
    %v7301 = vsub.f32 %v5941, %v6349
    %v7302 = vsub.f32 %v5942, %v6350
    %v7303 = vsub.f32 %v5943, %v6351
    %v7304 = vsub.f32 %v5944, %v6352
    %v7305 = vsub.f32 %v5945, %v6353
    %v7306 = vsub.f32 %v5946, %v6354
    %v7307 = vsub.f32 %v5947, %v6355
    %v7308 = vsub.f32 %v5948, %v6356
    %v7309 = vsub.f32 %v5949, %v6357
    %v7310 = vsub.f32 %v5950, %v6358
    %v7311 = vsub.f32 %v5951, %v6359
    %v7312 = vsub.f32 %v5952, %v6360
    %v7313 = vsub.f32 %v5953, %v6361
    %v7314 = vsub.f32 %v5954, %v6362
    %v7315 = vsub.f32 %v5955, %v6363
    %v7316 = vsub.f32 %v5956, %v6364
    %v7317 = vsub.f32 %v5957, %v6365
    %v7318 = vsub.f32 %v5958, %v6366
    %v7319 = vsub.f32 %v5959, %v6367
    %v7320 = vsub.f32 %v5960, %v6368
    %v7321 = vsub.f32 %v5961, %v6369
    %v7322 = vsub.f32 %v5962, %v6370
    %v7323 = vsub.f32 %v5963, %v6371
    %v7324 = vsub.f32 %v5964, %v6372
    %v7325 = vsub.f32 %v5965, %v6373
    %v7326 = vsub.f32 %v5966, %v6374
    %v7327 = vsub.f32 %v5967, %v6375
    %v7328 = vsub.f32 %v5968, %v6376
    %v7329 = vsub.f32 %v5969, %v6377
    %v7330 = vsub.f32 %v5970, %v6378
    %v7331 = vsub.f32 %v5971, %v6379
    %v7332 = vsub.f32 %v5972, %v6380
    %v7333 = vsub.f32 %v5973, %v6381
    %v7334 = vsub.f32 %v5974, %v6382
    %v7335 = vsub.f32 %v5975, %v6383
    %v7336 = vsub.f32 %v5976, %v6384
    %v7337 = vsub.f32 %v5977, %v6385
    %v7338 = vsub.f32 %v5978, %v6386
    %v7339 = vsub.f32 %v5979, %v6387
    %v7340 = vsub.f32 %v5980, %v6388
    %v7341 = vsub.f32 %v5981, %v6389
    %v7342 = vsub.f32 %v5982, %v6390
    %v7343 = vsub.f32 %v5983, %v6391
    %v7344 = vsub.f32 %v5984, %v6392
    %v7345 = vsub.f32 %v5985, %v6393
    %v7346 = vsub.f32 %v5986, %v6394
    %v7347 = vsub.f32 %v5987, %v6395
    %v7348 = vsub.f32 %v5988, %v6396
    %v7349 = vsub.f32 %v5989, %v6397
    %v7350 = vsub.f32 %v5990, %v6398
    %v7351 = vsub.f32 %v5991, %v6399
    %v7352 = vsub.f32 %v5992, %v6400
    %v7353 = vsub.f32 %v5993, %v6401
    %v7354 = vsub.f32 %v5994, %v6402
    %v7355 = vsub.f32 %v5995, %v6403
    %v7356 = vsub.f32 %v5996, %v6404
    %v7357 = vsub.f32 %v5997, %v6405
    %v7358 = vsub.f32 %v5998, %v6406
    %v7359 = vsub.f32 %v5999, %v6407
    %v7360 = vsub.f32 %v6000, %v6408
    %v7361 = vsub.f32 %v6001, %v6409
    %v7362 = vsub.f32 %v6002, %v6410
    %v7363 = vsub.f32 %v6003, %v6411
    %v7364 = vsub.f32 %v6004, %v6412
    %v7365 = vsub.f32 %v6005, %v6413
    %v7366 = vsub.f32 %v6006, %v6414
    %v7367 = vsub.f32 %v6007, %v6415
    %v7368 = vsub.f32 %v6008, %v6416
    %v7369 = vsub.f32 %v6009, %v6417
    %v7370 = vsub.f32 %v6010, %v6418
    %v7371 = vsub.f32 %v6011, %v6419
    %v7372 = vsub.f32 %v6012, %v6420
    %v7373 = vsub.f32 %v6013, %v6421
    %v7374 = vsub.f32 %v6014, %v6422
    %v7375 = vsub.f32 %v6015, %v6423
    %v7376 = vsub.f32 %v6016, %v6424
    %v7377 = vsub.f32 %v6017, %v6425
    %v7378 = vsub.f32 %v6018, %v6426
    %v7379 = vsub.f32 %v6019, %v6427
    %v7380 = vsub.f32 %v6020, %v6428
    %v7381 = vsub.f32 %v6021, %v6429
    %v7382 = vsub.f32 %v6022, %v6430
    %v7383 = vsub.f32 %v6023, %v6431
    %v7384 = vsub.f32 %v6024, %v6432
    %v7385 = vadd.f32 %v7113, 1e-05
    %v7386 = vadd.f32 %v7114, 1e-05
    %v7387 = vadd.f32 %v7115, 1e-05
    %v7388 = vadd.f32 %v7116, 1e-05
    %v7389 = vadd.f32 %v7117, 1e-05
    %v7390 = vadd.f32 %v7118, 1e-05
    %v7391 = vadd.f32 %v7119, 1e-05
    %v7392 = vadd.f32 %v7120, 1e-05
    %v7393 = vadd.f32 %v7121, 1e-05
    %v7394 = vadd.f32 %v7122, 1e-05
    %v7395 = vadd.f32 %v7123, 1e-05
    %v7396 = vadd.f32 %v7124, 1e-05
    %v7397 = vadd.f32 %v7125, 1e-05
    %v7398 = vadd.f32 %v7126, 1e-05
    %v7399 = vadd.f32 %v7127, 1e-05
    %v7400 = vadd.f32 %v7128, 1e-05
    %v7401 = vadd.f32 %v7129, 1e-05
    %v7402 = vadd.f32 %v7130, 1e-05
    %v7403 = vadd.f32 %v7131, 1e-05
    %v7404 = vadd.f32 %v7132, 1e-05
    %v7405 = vadd.f32 %v7133, 1e-05
    %v7406 = vadd.f32 %v7134, 1e-05
    %v7407 = vadd.f32 %v7135, 1e-05
    %v7408 = vadd.f32 %v7136, 1e-05
    %v7409 = vadd.f32 %v7137, 1e-05
    %v7410 = vadd.f32 %v7138, 1e-05
    %v7411 = vadd.f32 %v7139, 1e-05
    %v7412 = vadd.f32 %v7140, 1e-05
    %v7413 = vadd.f32 %v7141, 1e-05
    %v7414 = vadd.f32 %v7142, 1e-05
    %v7415 = vadd.f32 %v7143, 1e-05
    %v7416 = vadd.f32 %v7144, 1e-05
    %v7417 = vadd.f32 %v7145, 1e-05
    %v7418 = vadd.f32 %v7146, 1e-05
    %v7419 = vadd.f32 %v7147, 1e-05
    %v7420 = vadd.f32 %v7148, 1e-05
    %v7421 = vadd.f32 %v7149, 1e-05
    %v7422 = vadd.f32 %v7150, 1e-05
    %v7423 = vadd.f32 %v7151, 1e-05
    %v7424 = vadd.f32 %v7152, 1e-05
    %v7425 = vadd.f32 %v7153, 1e-05
    %v7426 = vadd.f32 %v7154, 1e-05
    %v7427 = vadd.f32 %v7155, 1e-05
    %v7428 = vadd.f32 %v7156, 1e-05
    %v7429 = vadd.f32 %v7157, 1e-05
    %v7430 = vadd.f32 %v7158, 1e-05
    %v7431 = vadd.f32 %v7159, 1e-05
    %v7432 = vadd.f32 %v7160, 1e-05
    %v7433 = vadd.f32 %v7161, 1e-05
    %v7434 = vadd.f32 %v7162, 1e-05
    %v7435 = vadd.f32 %v7163, 1e-05
    %v7436 = vadd.f32 %v7164, 1e-05
    %v7437 = vadd.f32 %v7165, 1e-05
    %v7438 = vadd.f32 %v7166, 1e-05
    %v7439 = vadd.f32 %v7167, 1e-05
    %v7440 = vadd.f32 %v7168, 1e-05
    %v7441 = vadd.f32 %v7169, 1e-05
    %v7442 = vadd.f32 %v7170, 1e-05
    %v7443 = vadd.f32 %v7171, 1e-05
    %v7444 = vadd.f32 %v7172, 1e-05
    %v7445 = vadd.f32 %v7173, 1e-05
    %v7446 = vadd.f32 %v7174, 1e-05
    %v7447 = vadd.f32 %v7175, 1e-05
    %v7448 = vadd.f32 %v7176, 1e-05
    %v7449 = vadd.f32 %v7177, 1e-05
    %v7450 = vadd.f32 %v7178, 1e-05
    %v7451 = vadd.f32 %v7179, 1e-05
    %v7452 = vadd.f32 %v7180, 1e-05
    %v7453 = vadd.f32 %v7181, 1e-05
    %v7454 = vadd.f32 %v7182, 1e-05
    %v7455 = vadd.f32 %v7183, 1e-05
    %v7456 = vadd.f32 %v7184, 1e-05
    %v7457 = vadd.f32 %v7185, 1e-05
    %v7458 = vadd.f32 %v7186, 1e-05
    %v7459 = vadd.f32 %v7187, 1e-05
    %v7460 = vadd.f32 %v7188, 1e-05
    %v7461 = vadd.f32 %v7189, 1e-05
    %v7462 = vadd.f32 %v7190, 1e-05
    %v7463 = vadd.f32 %v7191, 1e-05
    %v7464 = vadd.f32 %v7192, 1e-05
    %v7465 = vadd.f32 %v7193, 1e-05
    %v7466 = vadd.f32 %v7194, 1e-05
    %v7467 = vadd.f32 %v7195, 1e-05
    %v7468 = vadd.f32 %v7196, 1e-05
    %v7469 = vadd.f32 %v7197, 1e-05
    %v7470 = vadd.f32 %v7198, 1e-05
    %v7471 = vadd.f32 %v7199, 1e-05
    %v7472 = vadd.f32 %v7200, 1e-05
    %v7473 = vadd.f32 %v7201, 1e-05
    %v7474 = vadd.f32 %v7202, 1e-05
    %v7475 = vadd.f32 %v7203, 1e-05
    %v7476 = vadd.f32 %v7204, 1e-05
    %v7477 = vadd.f32 %v7205, 1e-05
    %v7478 = vadd.f32 %v7206, 1e-05
    %v7479 = vadd.f32 %v7207, 1e-05
    %v7480 = vadd.f32 %v7208, 1e-05
    %v7481 = vadd.f32 %v7209, 1e-05
    %v7482 = vadd.f32 %v7210, 1e-05
    %v7483 = vadd.f32 %v7211, 1e-05
    %v7484 = vadd.f32 %v7212, 1e-05
    %v7485 = vadd.f32 %v7213, 1e-05
    %v7486 = vadd.f32 %v7214, 1e-05
    %v7487 = vadd.f32 %v7215, 1e-05
    %v7488 = vadd.f32 %v7216, 1e-05
    %v7489 = vadd.f32 %v7217, 1e-05
    %v7490 = vadd.f32 %v7218, 1e-05
    %v7491 = vadd.f32 %v7219, 1e-05
    %v7492 = vadd.f32 %v7220, 1e-05
    %v7493 = vadd.f32 %v7221, 1e-05
    %v7494 = vadd.f32 %v7222, 1e-05
    %v7495 = vadd.f32 %v7223, 1e-05
    %v7496 = vadd.f32 %v7224, 1e-05
    %v7497 = vadd.f32 %v7225, 1e-05
    %v7498 = vadd.f32 %v7226, 1e-05
    %v7499 = vadd.f32 %v7227, 1e-05
    %v7500 = vadd.f32 %v7228, 1e-05
    %v7501 = vadd.f32 %v7229, 1e-05
    %v7502 = vadd.f32 %v7230, 1e-05
    %v7503 = vadd.f32 %v7231, 1e-05
    %v7504 = vadd.f32 %v7232, 1e-05
    %v7505 = vadd.f32 %v7233, 1e-05
    %v7506 = vadd.f32 %v7234, 1e-05
    %v7507 = vadd.f32 %v7235, 1e-05
    %v7508 = vadd.f32 %v7236, 1e-05
    %v7509 = vadd.f32 %v7237, 1e-05
    %v7510 = vadd.f32 %v7238, 1e-05
    %v7511 = vadd.f32 %v7239, 1e-05
    %v7512 = vadd.f32 %v7240, 1e-05
    %v7513 = vadd.f32 %v7241, 1e-05
    %v7514 = vadd.f32 %v7242, 1e-05
    %v7515 = vadd.f32 %v7243, 1e-05
    %v7516 = vadd.f32 %v7244, 1e-05
    %v7517 = vadd.f32 %v7245, 1e-05
    %v7518 = vadd.f32 %v7246, 1e-05
    %v7519 = vadd.f32 %v7247, 1e-05
    %v7520 = vadd.f32 %v7248, 1e-05
    %v7521 = vrsqrt.pop %v7385
    %v7522 = vrsqrt.pop %v7386
    %v7523 = vrsqrt.pop %v7387
    %v7524 = vrsqrt.pop %v7388
    %v7525 = vrsqrt.pop %v7389
    %v7526 = vrsqrt.pop %v7390
    %v7527 = vrsqrt.pop %v7391
    %v7528 = vrsqrt.pop %v7392
    %v7529 = vrsqrt.pop %v7393
    %v7530 = vrsqrt.pop %v7394
    %v7531 = vrsqrt.pop %v7395
    %v7532 = vrsqrt.pop %v7396
    %v7533 = vrsqrt.pop %v7397
    %v7534 = vrsqrt.pop %v7398
    %v7535 = vrsqrt.pop %v7399
    %v7536 = vrsqrt.pop %v7400
    %v7537 = vrsqrt.pop %v7401
    %v7538 = vrsqrt.pop %v7402
    %v7539 = vrsqrt.pop %v7403
    %v7540 = vrsqrt.pop %v7404
    %v7541 = vrsqrt.pop %v7405
    %v7542 = vrsqrt.pop %v7406
    %v7543 = vrsqrt.pop %v7407
    %v7544 = vrsqrt.pop %v7408
    %v7545 = vrsqrt.pop %v7409
    %v7546 = vrsqrt.pop %v7410
    %v7547 = vrsqrt.pop %v7411
    %v7548 = vrsqrt.pop %v7412
    %v7549 = vrsqrt.pop %v7413
    %v7550 = vrsqrt.pop %v7414
    %v7551 = vrsqrt.pop %v7415
    %v7552 = vrsqrt.pop %v7416
    %v7553 = vrsqrt.pop %v7417
    %v7554 = vrsqrt.pop %v7418
    %v7555 = vrsqrt.pop %v7419
    %v7556 = vrsqrt.pop %v7420
    %v7557 = vrsqrt.pop %v7421
    %v7558 = vrsqrt.pop %v7422
    %v7559 = vrsqrt.pop %v7423
    %v7560 = vrsqrt.pop %v7424
    %v7561 = vrsqrt.pop %v7425
    %v7562 = vrsqrt.pop %v7426
    %v7563 = vrsqrt.pop %v7427
    %v7564 = vrsqrt.pop %v7428
    %v7565 = vrsqrt.pop %v7429
    %v7566 = vrsqrt.pop %v7430
    %v7567 = vrsqrt.pop %v7431
    %v7568 = vrsqrt.pop %v7432
    %v7569 = vrsqrt.pop %v7433
    %v7570 = vrsqrt.pop %v7434
    %v7571 = vrsqrt.pop %v7435
    %v7572 = vrsqrt.pop %v7436
    %v7573 = vrsqrt.pop %v7437
    %v7574 = vrsqrt.pop %v7438
    %v7575 = vrsqrt.pop %v7439
    %v7576 = vrsqrt.pop %v7440
    %v7577 = vrsqrt.pop %v7441
    %v7578 = vrsqrt.pop %v7442
    %v7579 = vrsqrt.pop %v7443
    %v7580 = vrsqrt.pop %v7444
    %v7581 = vrsqrt.pop %v7445
    %v7582 = vrsqrt.pop %v7446
    %v7583 = vrsqrt.pop %v7447
    %v7584 = vrsqrt.pop %v7448
    %v7585 = vrsqrt.pop %v7449
    %v7586 = vrsqrt.pop %v7450
    %v7587 = vrsqrt.pop %v7451
    %v7588 = vrsqrt.pop %v7452
    %v7589 = vrsqrt.pop %v7453
    %v7590 = vrsqrt.pop %v7454
    %v7591 = vrsqrt.pop %v7455
    %v7592 = vrsqrt.pop %v7456
    %v7593 = vrsqrt.pop %v7457
    %v7594 = vrsqrt.pop %v7458
    %v7595 = vrsqrt.pop %v7459
    %v7596 = vrsqrt.pop %v7460
    %v7597 = vrsqrt.pop %v7461
    %v7598 = vrsqrt.pop %v7462
    %v7599 = vrsqrt.pop %v7463
    %v7600 = vrsqrt.pop %v7464
    %v7601 = vrsqrt.pop %v7465
    %v7602 = vrsqrt.pop %v7466
    %v7603 = vrsqrt.pop %v7467
    %v7604 = vrsqrt.pop %v7468
    %v7605 = vrsqrt.pop %v7469
    %v7606 = vrsqrt.pop %v7470
    %v7607 = vrsqrt.pop %v7471
    %v7608 = vrsqrt.pop %v7472
    %v7609 = vrsqrt.pop %v7473
    %v7610 = vrsqrt.pop %v7474
    %v7611 = vrsqrt.pop %v7475
    %v7612 = vrsqrt.pop %v7476
    %v7613 = vrsqrt.pop %v7477
    %v7614 = vrsqrt.pop %v7478
    %v7615 = vrsqrt.pop %v7479
    %v7616 = vrsqrt.pop %v7480
    %v7617 = vrsqrt.pop %v7481
    %v7618 = vrsqrt.pop %v7482
    %v7619 = vrsqrt.pop %v7483
    %v7620 = vrsqrt.pop %v7484
    %v7621 = vrsqrt.pop %v7485
    %v7622 = vrsqrt.pop %v7486
    %v7623 = vrsqrt.pop %v7487
    %v7624 = vrsqrt.pop %v7488
    %v7625 = vrsqrt.pop %v7489
    %v7626 = vrsqrt.pop %v7490
    %v7627 = vrsqrt.pop %v7491
    %v7628 = vrsqrt.pop %v7492
    %v7629 = vrsqrt.pop %v7493
    %v7630 = vrsqrt.pop %v7494
    %v7631 = vrsqrt.pop %v7495
    %v7632 = vrsqrt.pop %v7496
    %v7633 = vrsqrt.pop %v7497
    %v7634 = vrsqrt.pop %v7498
    %v7635 = vrsqrt.pop %v7499
    %v7636 = vrsqrt.pop %v7500
    %v7637 = vrsqrt.pop %v7501
    %v7638 = vrsqrt.pop %v7502
    %v7639 = vrsqrt.pop %v7503
    %v7640 = vrsqrt.pop %v7504
    %v7641 = vrsqrt.pop %v7505
    %v7642 = vrsqrt.pop %v7506
    %v7643 = vrsqrt.pop %v7507
    %v7644 = vrsqrt.pop %v7508
    %v7645 = vrsqrt.pop %v7509
    %v7646 = vrsqrt.pop %v7510
    %v7647 = vrsqrt.pop %v7511
    %v7648 = vrsqrt.pop %v7512
    %v7649 = vrsqrt.pop %v7513
    %v7650 = vrsqrt.pop %v7514
    %v7651 = vrsqrt.pop %v7515
    %v7652 = vrsqrt.pop %v7516
    %v7653 = vrsqrt.pop %v7517
    %v7654 = vrsqrt.pop %v7518
    %v7655 = vrsqrt.pop %v7519
    %v7656 = vrsqrt.pop %v7520
    %v7657 = vmul.f32 %v7249, %v7521
    %v7658 = vmul.f32 %v7250, %v7522
    %v7659 = vmul.f32 %v7251, %v7523
    %v7660 = vmul.f32 %v7252, %v7524
    %v7661 = vmul.f32 %v7253, %v7525
    %v7662 = vmul.f32 %v7254, %v7526
    %v7663 = vmul.f32 %v7255, %v7527
    %v7664 = vmul.f32 %v7256, %v7528
    %v7665 = vmul.f32 %v7257, %v7529
    %v7666 = vmul.f32 %v7258, %v7530
    %v7667 = vmul.f32 %v7259, %v7531
    %v7668 = vmul.f32 %v7260, %v7532
    %v7669 = vmul.f32 %v7261, %v7533
    %v7670 = vmul.f32 %v7262, %v7534
    %v7671 = vmul.f32 %v7263, %v7535
    %v7672 = vmul.f32 %v7264, %v7536
    %v7673 = vmul.f32 %v7265, %v7537
    %v7674 = vmul.f32 %v7266, %v7538
    %v7675 = vmul.f32 %v7267, %v7539
    %v7676 = vmul.f32 %v7268, %v7540
    %v7677 = vmul.f32 %v7269, %v7541
    %v7678 = vmul.f32 %v7270, %v7542
    %v7679 = vmul.f32 %v7271, %v7543
    %v7680 = vmul.f32 %v7272, %v7544
    %v7681 = vmul.f32 %v7273, %v7545
    %v7682 = vmul.f32 %v7274, %v7546
    %v7683 = vmul.f32 %v7275, %v7547
    %v7684 = vmul.f32 %v7276, %v7548
    %v7685 = vmul.f32 %v7277, %v7549
    %v7686 = vmul.f32 %v7278, %v7550
    %v7687 = vmul.f32 %v7279, %v7551
    %v7688 = vmul.f32 %v7280, %v7552
    %v7689 = vmul.f32 %v7281, %v7553
    %v7690 = vmul.f32 %v7282, %v7554
    %v7691 = vmul.f32 %v7283, %v7555
    %v7692 = vmul.f32 %v7284, %v7556
    %v7693 = vmul.f32 %v7285, %v7557
    %v7694 = vmul.f32 %v7286, %v7558
    %v7695 = vmul.f32 %v7287, %v7559
    %v7696 = vmul.f32 %v7288, %v7560
    %v7697 = vmul.f32 %v7289, %v7561
    %v7698 = vmul.f32 %v7290, %v7562
    %v7699 = vmul.f32 %v7291, %v7563
    %v7700 = vmul.f32 %v7292, %v7564
    %v7701 = vmul.f32 %v7293, %v7565
    %v7702 = vmul.f32 %v7294, %v7566
    %v7703 = vmul.f32 %v7295, %v7567
    %v7704 = vmul.f32 %v7296, %v7568
    %v7705 = vmul.f32 %v7297, %v7569
    %v7706 = vmul.f32 %v7298, %v7570
    %v7707 = vmul.f32 %v7299, %v7571
    %v7708 = vmul.f32 %v7300, %v7572
    %v7709 = vmul.f32 %v7301, %v7573
    %v7710 = vmul.f32 %v7302, %v7574
    %v7711 = vmul.f32 %v7303, %v7575
    %v7712 = vmul.f32 %v7304, %v7576
    %v7713 = vmul.f32 %v7305, %v7577
    %v7714 = vmul.f32 %v7306, %v7578
    %v7715 = vmul.f32 %v7307, %v7579
    %v7716 = vmul.f32 %v7308, %v7580
    %v7717 = vmul.f32 %v7309, %v7581
    %v7718 = vmul.f32 %v7310, %v7582
    %v7719 = vmul.f32 %v7311, %v7583
    %v7720 = vmul.f32 %v7312, %v7584
    %v7721 = vmul.f32 %v7313, %v7585
    %v7722 = vmul.f32 %v7314, %v7586
    %v7723 = vmul.f32 %v7315, %v7587
    %v7724 = vmul.f32 %v7316, %v7588
    %v7725 = vmul.f32 %v7317, %v7589
    %v7726 = vmul.f32 %v7318, %v7590
    %v7727 = vmul.f32 %v7319, %v7591
    %v7728 = vmul.f32 %v7320, %v7592
    %v7729 = vmul.f32 %v7321, %v7593
    %v7730 = vmul.f32 %v7322, %v7594
    %v7731 = vmul.f32 %v7323, %v7595
    %v7732 = vmul.f32 %v7324, %v7596
    %v7733 = vmul.f32 %v7325, %v7597
    %v7734 = vmul.f32 %v7326, %v7598
    %v7735 = vmul.f32 %v7327, %v7599
    %v7736 = vmul.f32 %v7328, %v7600
    %v7737 = vmul.f32 %v7329, %v7601
    %v7738 = vmul.f32 %v7330, %v7602
    %v7739 = vmul.f32 %v7331, %v7603
    %v7740 = vmul.f32 %v7332, %v7604
    %v7741 = vmul.f32 %v7333, %v7605
    %v7742 = vmul.f32 %v7334, %v7606
    %v7743 = vmul.f32 %v7335, %v7607
    %v7744 = vmul.f32 %v7336, %v7608
    %v7745 = vmul.f32 %v7337, %v7609
    %v7746 = vmul.f32 %v7338, %v7610
    %v7747 = vmul.f32 %v7339, %v7611
    %v7748 = vmul.f32 %v7340, %v7612
    %v7749 = vmul.f32 %v7341, %v7613
    %v7750 = vmul.f32 %v7342, %v7614
    %v7751 = vmul.f32 %v7343, %v7615
    %v7752 = vmul.f32 %v7344, %v7616
    %v7753 = vmul.f32 %v7345, %v7617
    %v7754 = vmul.f32 %v7346, %v7618
    %v7755 = vmul.f32 %v7347, %v7619
    %v7756 = vmul.f32 %v7348, %v7620
    %v7757 = vmul.f32 %v7349, %v7621
    %v7758 = vmul.f32 %v7350, %v7622
    %v7759 = vmul.f32 %v7351, %v7623
    %v7760 = vmul.f32 %v7352, %v7624
    %v7761 = vmul.f32 %v7353, %v7625
    %v7762 = vmul.f32 %v7354, %v7626
    %v7763 = vmul.f32 %v7355, %v7627
    %v7764 = vmul.f32 %v7356, %v7628
    %v7765 = vmul.f32 %v7357, %v7629
    %v7766 = vmul.f32 %v7358, %v7630
    %v7767 = vmul.f32 %v7359, %v7631
    %v7768 = vmul.f32 %v7360, %v7632
    %v7769 = vmul.f32 %v7361, %v7633
    %v7770 = vmul.f32 %v7362, %v7634
    %v7771 = vmul.f32 %v7363, %v7635
    %v7772 = vmul.f32 %v7364, %v7636
    %v7773 = vmul.f32 %v7365, %v7637
    %v7774 = vmul.f32 %v7366, %v7638
    %v7775 = vmul.f32 %v7367, %v7639
    %v7776 = vmul.f32 %v7368, %v7640
    %v7777 = vmul.f32 %v7369, %v7641
    %v7778 = vmul.f32 %v7370, %v7642
    %v7779 = vmul.f32 %v7371, %v7643
    %v7780 = vmul.f32 %v7372, %v7644
    %v7781 = vmul.f32 %v7373, %v7645
    %v7782 = vmul.f32 %v7374, %v7646
    %v7783 = vmul.f32 %v7375, %v7647
    %v7784 = vmul.f32 %v7376, %v7648
    %v7785 = vmul.f32 %v7377, %v7649
    %v7786 = vmul.f32 %v7378, %v7650
    %v7787 = vmul.f32 %v7379, %v7651
    %v7788 = vmul.f32 %v7380, %v7652
    %v7789 = vmul.f32 %v7381, %v7653
    %v7790 = vmul.f32 %v7382, %v7654
    %v7791 = vmul.f32 %v7383, %v7655
    %v7792 = vmul.f32 %v7384, %v7656
    %v7793 = vld [vmem:[%s7] sm:$0x1]
    %v7795 = vlaneseq
    %v7796 = vshrl.u32 %v7795, 7
    %v7797 = vsub.s32 0, %v7796
    %v7798 = vrot.slane %v7793, %v7797
    %v7800 = vmul.f32 %v7657, %v7798
    %v7801 = vmul.f32 %v7658, %v7798
    %v7802 = vmul.f32 %v7659, %v7798
    %v7803 = vmul.f32 %v7660, %v7798
    %v7804 = vmul.f32 %v7661, %v7798
    %v7805 = vmul.f32 %v7662, %v7798
    %v7806 = vmul.f32 %v7663, %v7798
    %v7807 = vmul.f32 %v7664, %v7798
    %v7808 = vmul.f32 %v7665, %v7798
    %v7809 = vmul.f32 %v7666, %v7798
    %v7810 = vmul.f32 %v7667, %v7798
    %v7811 = vmul.f32 %v7668, %v7798
    %v7812 = vmul.f32 %v7669, %v7798
    %v7813 = vmul.f32 %v7670, %v7798
    %v7814 = vmul.f32 %v7671, %v7798
    %v7815 = vmul.f32 %v7672, %v7798
    %v7816 = vmul.f32 %v7673, %v7798
    %v7817 = vmul.f32 %v7674, %v7798
    %v7818 = vmul.f32 %v7675, %v7798
    %v7819 = vmul.f32 %v7676, %v7798
    %v7820 = vmul.f32 %v7677, %v7798
    %v7821 = vmul.f32 %v7678, %v7798
    %v7822 = vmul.f32 %v7679, %v7798
    %v7823 = vmul.f32 %v7680, %v7798
    %v7824 = vmul.f32 %v7681, %v7798
    %v7825 = vmul.f32 %v7682, %v7798
    %v7826 = vmul.f32 %v7683, %v7798
    %v7827 = vmul.f32 %v7684, %v7798
    %v7828 = vmul.f32 %v7685, %v7798
    %v7829 = vmul.f32 %v7686, %v7798
    %v7830 = vmul.f32 %v7687, %v7798
    %v7831 = vmul.f32 %v7688, %v7798
    %v7832 = vmul.f32 %v7689, %v7798
    %v7833 = vmul.f32 %v7690, %v7798
    %v7834 = vmul.f32 %v7691, %v7798
    %v7835 = vmul.f32 %v7692, %v7798
    %v7836 = vmul.f32 %v7693, %v7798
    %v7837 = vmul.f32 %v7694, %v7798
    %v7838 = vmul.f32 %v7695, %v7798
    %v7839 = vmul.f32 %v7696, %v7798
    %v7840 = vmul.f32 %v7697, %v7798
    %v7841 = vmul.f32 %v7698, %v7798
    %v7842 = vmul.f32 %v7699, %v7798
    %v7843 = vmul.f32 %v7700, %v7798
    %v7844 = vmul.f32 %v7701, %v7798
    %v7845 = vmul.f32 %v7702, %v7798
    %v7846 = vmul.f32 %v7703, %v7798
    %v7847 = vmul.f32 %v7704, %v7798
    %v7848 = vmul.f32 %v7705, %v7798
    %v7849 = vmul.f32 %v7706, %v7798
    %v7850 = vmul.f32 %v7707, %v7798
    %v7851 = vmul.f32 %v7708, %v7798
    %v7852 = vmul.f32 %v7709, %v7798
    %v7853 = vmul.f32 %v7710, %v7798
    %v7854 = vmul.f32 %v7711, %v7798
    %v7855 = vmul.f32 %v7712, %v7798
    %v7856 = vmul.f32 %v7713, %v7798
    %v7857 = vmul.f32 %v7714, %v7798
    %v7858 = vmul.f32 %v7715, %v7798
    %v7859 = vmul.f32 %v7716, %v7798
    %v7860 = vmul.f32 %v7717, %v7798
    %v7861 = vmul.f32 %v7718, %v7798
    %v7862 = vmul.f32 %v7719, %v7798
    %v7863 = vmul.f32 %v7720, %v7798
    %v7864 = vmul.f32 %v7721, %v7798
    %v7865 = vmul.f32 %v7722, %v7798
    %v7866 = vmul.f32 %v7723, %v7798
    %v7867 = vmul.f32 %v7724, %v7798
    %v7868 = vmul.f32 %v7725, %v7798
    %v7869 = vmul.f32 %v7726, %v7798
    %v7870 = vmul.f32 %v7727, %v7798
    %v7871 = vmul.f32 %v7728, %v7798
    %v7872 = vmul.f32 %v7729, %v7798
    %v7873 = vmul.f32 %v7730, %v7798
    %v7874 = vmul.f32 %v7731, %v7798
    %v7875 = vmul.f32 %v7732, %v7798
    %v7876 = vmul.f32 %v7733, %v7798
    %v7877 = vmul.f32 %v7734, %v7798
    %v7878 = vmul.f32 %v7735, %v7798
    %v7879 = vmul.f32 %v7736, %v7798
    %v7880 = vmul.f32 %v7737, %v7798
    %v7881 = vmul.f32 %v7738, %v7798
    %v7882 = vmul.f32 %v7739, %v7798
    %v7883 = vmul.f32 %v7740, %v7798
    %v7884 = vmul.f32 %v7741, %v7798
    %v7885 = vmul.f32 %v7742, %v7798
    %v7886 = vmul.f32 %v7743, %v7798
    %v7887 = vmul.f32 %v7744, %v7798
    %v7888 = vmul.f32 %v7745, %v7798
    %v7889 = vmul.f32 %v7746, %v7798
    %v7890 = vmul.f32 %v7747, %v7798
    %v7891 = vmul.f32 %v7748, %v7798
    %v7892 = vmul.f32 %v7749, %v7798
    %v7893 = vmul.f32 %v7750, %v7798
    %v7894 = vmul.f32 %v7751, %v7798
    %v7895 = vmul.f32 %v7752, %v7798
    %v7896 = vmul.f32 %v7753, %v7798
    %v7897 = vmul.f32 %v7754, %v7798
    %v7898 = vmul.f32 %v7755, %v7798
    %v7899 = vmul.f32 %v7756, %v7798
    %v7900 = vmul.f32 %v7757, %v7798
    %v7901 = vmul.f32 %v7758, %v7798
    %v7902 = vmul.f32 %v7759, %v7798
    %v7903 = vmul.f32 %v7760, %v7798
    %v7904 = vmul.f32 %v7761, %v7798
    %v7905 = vmul.f32 %v7762, %v7798
    %v7906 = vmul.f32 %v7763, %v7798
    %v7907 = vmul.f32 %v7764, %v7798
    %v7908 = vmul.f32 %v7765, %v7798
    %v7909 = vmul.f32 %v7766, %v7798
    %v7910 = vmul.f32 %v7767, %v7798
    %v7911 = vmul.f32 %v7768, %v7798
    %v7912 = vmul.f32 %v7769, %v7798
    %v7913 = vmul.f32 %v7770, %v7798
    %v7914 = vmul.f32 %v7771, %v7798
    %v7915 = vmul.f32 %v7772, %v7798
    %v7916 = vmul.f32 %v7773, %v7798
    %v7917 = vmul.f32 %v7774, %v7798
    %v7918 = vmul.f32 %v7775, %v7798
    %v7919 = vmul.f32 %v7776, %v7798
    %v7920 = vmul.f32 %v7777, %v7798
    %v7921 = vmul.f32 %v7778, %v7798
    %v7922 = vmul.f32 %v7779, %v7798
    %v7923 = vmul.f32 %v7780, %v7798
    %v7924 = vmul.f32 %v7781, %v7798
    %v7925 = vmul.f32 %v7782, %v7798
    %v7926 = vmul.f32 %v7783, %v7798
    %v7927 = vmul.f32 %v7784, %v7798
    %v7928 = vmul.f32 %v7785, %v7798
    %v7929 = vmul.f32 %v7786, %v7798
    %v7930 = vmul.f32 %v7787, %v7798
    %v7931 = vmul.f32 %v7788, %v7798
    %v7932 = vmul.f32 %v7789, %v7798
    %v7933 = vmul.f32 %v7790, %v7798
    %v7934 = vmul.f32 %v7791, %v7798
    %v7935 = vmul.f32 %v7792, %v7798
    %v7936 = vld [vmem:[%s8] sm:$0x1]
    %v7938 = vlaneseq
    %v7939 = vshrl.u32 %v7938, 7
    %v7940 = vsub.s32 0, %v7939
    %v7941 = vrot.slane %v7936, %v7940
    %v7943 = vadd.f32 %v7800, %v7941
    %v7944 = vadd.f32 %v7801, %v7941
    %v7945 = vadd.f32 %v7802, %v7941
    %v7946 = vadd.f32 %v7803, %v7941
    %v7947 = vadd.f32 %v7804, %v7941
    %v7948 = vadd.f32 %v7805, %v7941
    %v7949 = vadd.f32 %v7806, %v7941
    %v7950 = vadd.f32 %v7807, %v7941
    %v7951 = vadd.f32 %v7808, %v7941
    %v7952 = vadd.f32 %v7809, %v7941
    %v7953 = vadd.f32 %v7810, %v7941
    %v7954 = vadd.f32 %v7811, %v7941
    %v7955 = vadd.f32 %v7812, %v7941
    %v7956 = vadd.f32 %v7813, %v7941
    %v7957 = vadd.f32 %v7814, %v7941
    %v7958 = vadd.f32 %v7815, %v7941
    %v7959 = vadd.f32 %v7816, %v7941
    %v7960 = vadd.f32 %v7817, %v7941
    %v7961 = vadd.f32 %v7818, %v7941
    %v7962 = vadd.f32 %v7819, %v7941
    %v7963 = vadd.f32 %v7820, %v7941
    %v7964 = vadd.f32 %v7821, %v7941
    %v7965 = vadd.f32 %v7822, %v7941
    %v7966 = vadd.f32 %v7823, %v7941
    %v7967 = vadd.f32 %v7824, %v7941
    %v7968 = vadd.f32 %v7825, %v7941
    %v7969 = vadd.f32 %v7826, %v7941
    %v7970 = vadd.f32 %v7827, %v7941
    %v7971 = vadd.f32 %v7828, %v7941
    %v7972 = vadd.f32 %v7829, %v7941
    %v7973 = vadd.f32 %v7830, %v7941
    %v7974 = vadd.f32 %v7831, %v7941
    %v7975 = vadd.f32 %v7832, %v7941
    %v7976 = vadd.f32 %v7833, %v7941
    %v7977 = vadd.f32 %v7834, %v7941
    %v7978 = vadd.f32 %v7835, %v7941
    %v7979 = vadd.f32 %v7836, %v7941
    %v7980 = vadd.f32 %v7837, %v7941
    %v7981 = vadd.f32 %v7838, %v7941
    %v7982 = vadd.f32 %v7839, %v7941
    %v7983 = vadd.f32 %v7840, %v7941
    %v7984 = vadd.f32 %v7841, %v7941
    %v7985 = vadd.f32 %v7842, %v7941
    %v7986 = vadd.f32 %v7843, %v7941
    %v7987 = vadd.f32 %v7844, %v7941
    %v7988 = vadd.f32 %v7845, %v7941
    %v7989 = vadd.f32 %v7846, %v7941
    %v7990 = vadd.f32 %v7847, %v7941
    %v7991 = vadd.f32 %v7848, %v7941
    %v7992 = vadd.f32 %v7849, %v7941
    %v7993 = vadd.f32 %v7850, %v7941
    %v7994 = vadd.f32 %v7851, %v7941
    %v7995 = vadd.f32 %v7852, %v7941
    %v7996 = vadd.f32 %v7853, %v7941
    %v7997 = vadd.f32 %v7854, %v7941
    %v7998 = vadd.f32 %v7855, %v7941
    %v7999 = vadd.f32 %v7856, %v7941
    %v8000 = vadd.f32 %v7857, %v7941
    %v8001 = vadd.f32 %v7858, %v7941
    %v8002 = vadd.f32 %v7859, %v7941
    %v8003 = vadd.f32 %v7860, %v7941
    %v8004 = vadd.f32 %v7861, %v7941
    %v8005 = vadd.f32 %v7862, %v7941
    %v8006 = vadd.f32 %v7863, %v7941
    %v8007 = vadd.f32 %v7864, %v7941
    %v8008 = vadd.f32 %v7865, %v7941
    %v8009 = vadd.f32 %v7866, %v7941
    %v8010 = vadd.f32 %v7867, %v7941
    %v8011 = vadd.f32 %v7868, %v7941
    %v8012 = vadd.f32 %v7869, %v7941
    %v8013 = vadd.f32 %v7870, %v7941
    %v8014 = vadd.f32 %v7871, %v7941
    %v8015 = vadd.f32 %v7872, %v7941
    %v8016 = vadd.f32 %v7873, %v7941
    %v8017 = vadd.f32 %v7874, %v7941
    %v8018 = vadd.f32 %v7875, %v7941
    %v8019 = vadd.f32 %v7876, %v7941
    %v8020 = vadd.f32 %v7877, %v7941
    %v8021 = vadd.f32 %v7878, %v7941
    %v8022 = vadd.f32 %v7879, %v7941
    %v8023 = vadd.f32 %v7880, %v7941
    %v8024 = vadd.f32 %v7881, %v7941
    %v8025 = vadd.f32 %v7882, %v7941
    %v8026 = vadd.f32 %v7883, %v7941
    %v8027 = vadd.f32 %v7884, %v7941
    %v8028 = vadd.f32 %v7885, %v7941
    %v8029 = vadd.f32 %v7886, %v7941
    %v8030 = vadd.f32 %v7887, %v7941
    %v8031 = vadd.f32 %v7888, %v7941
    %v8032 = vadd.f32 %v7889, %v7941
    %v8033 = vadd.f32 %v7890, %v7941
    %v8034 = vadd.f32 %v7891, %v7941
    %v8035 = vadd.f32 %v7892, %v7941
    %v8036 = vadd.f32 %v7893, %v7941
    %v8037 = vadd.f32 %v7894, %v7941
    %v8038 = vadd.f32 %v7895, %v7941
    %v8039 = vadd.f32 %v7896, %v7941
    %v8040 = vadd.f32 %v7897, %v7941
    %v8041 = vadd.f32 %v7898, %v7941
    %v8042 = vadd.f32 %v7899, %v7941
    %v8043 = vadd.f32 %v7900, %v7941
    %v8044 = vadd.f32 %v7901, %v7941
    %v8045 = vadd.f32 %v7902, %v7941
    %v8046 = vadd.f32 %v7903, %v7941
    %v8047 = vadd.f32 %v7904, %v7941
    %v8048 = vadd.f32 %v7905, %v7941
    %v8049 = vadd.f32 %v7906, %v7941
    %v8050 = vadd.f32 %v7907, %v7941
    %v8051 = vadd.f32 %v7908, %v7941
    %v8052 = vadd.f32 %v7909, %v7941
    %v8053 = vadd.f32 %v7910, %v7941
    %v8054 = vadd.f32 %v7911, %v7941
    %v8055 = vadd.f32 %v7912, %v7941
    %v8056 = vadd.f32 %v7913, %v7941
    %v8057 = vadd.f32 %v7914, %v7941
    %v8058 = vadd.f32 %v7915, %v7941
    %v8059 = vadd.f32 %v7916, %v7941
    %v8060 = vadd.f32 %v7917, %v7941
    %v8061 = vadd.f32 %v7918, %v7941
    %v8062 = vadd.f32 %v7919, %v7941
    %v8063 = vadd.f32 %v7920, %v7941
    %v8064 = vadd.f32 %v7921, %v7941
    %v8065 = vadd.f32 %v7922, %v7941
    %v8066 = vadd.f32 %v7923, %v7941
    %v8067 = vadd.f32 %v7924, %v7941
    %v8068 = vadd.f32 %v7925, %v7941
    %v8069 = vadd.f32 %v7926, %v7941
    %v8070 = vadd.f32 %v7927, %v7941
    %v8071 = vadd.f32 %v7928, %v7941
    %v8072 = vadd.f32 %v7929, %v7941
    %v8073 = vadd.f32 %v7930, %v7941
    %v8074 = vadd.f32 %v7931, %v7941
    %v8075 = vadd.f32 %v7932, %v7941
    %v8076 = vadd.f32 %v7933, %v7941
    %v8077 = vadd.f32 %v7934, %v7941
    %v8078 = vadd.f32 %v7935, %v7941
    %v8079 = vpack.c.bf16 %v7944, %v7943
    %v8080 = vpack.c.bf16 %v7946, %v7945
    %v8081 = vpack.c.bf16 %v7948, %v7947
    %v8082 = vpack.c.bf16 %v7950, %v7949
    %v8083 = vpack.c.bf16 %v7952, %v7951
    %v8084 = vpack.c.bf16 %v7954, %v7953
    %v8085 = vpack.c.bf16 %v7956, %v7955
    %v8086 = vpack.c.bf16 %v7958, %v7957
    %v8087 = vpack.c.bf16 %v7960, %v7959
    %v8088 = vpack.c.bf16 %v7962, %v7961
    %v8089 = vpack.c.bf16 %v7964, %v7963
    %v8090 = vpack.c.bf16 %v7966, %v7965
    %v8091 = vpack.c.bf16 %v7968, %v7967
    %v8092 = vpack.c.bf16 %v7970, %v7969
    %v8093 = vpack.c.bf16 %v7972, %v7971
    %v8094 = vpack.c.bf16 %v7974, %v7973
    %v8095 = vpack.c.bf16 %v7976, %v7975
    %v8096 = vpack.c.bf16 %v7978, %v7977
    %v8097 = vpack.c.bf16 %v7980, %v7979
    %v8098 = vpack.c.bf16 %v7982, %v7981
    %v8099 = vpack.c.bf16 %v7984, %v7983
    %v8100 = vpack.c.bf16 %v7986, %v7985
    %v8101 = vpack.c.bf16 %v7988, %v7987
    %v8102 = vpack.c.bf16 %v7990, %v7989
    %v8103 = vpack.c.bf16 %v7992, %v7991
    %v8104 = vpack.c.bf16 %v7994, %v7993
    %v8105 = vpack.c.bf16 %v7996, %v7995
    %v8106 = vpack.c.bf16 %v7998, %v7997
    %v8107 = vpack.c.bf16 %v8000, %v7999
    %v8108 = vpack.c.bf16 %v8002, %v8001
    %v8109 = vpack.c.bf16 %v8004, %v8003
    %v8110 = vpack.c.bf16 %v8006, %v8005
    %v8111 = vpack.c.bf16 %v8008, %v8007
    %v8112 = vpack.c.bf16 %v8010, %v8009
    %v8113 = vpack.c.bf16 %v8012, %v8011
    %v8114 = vpack.c.bf16 %v8014, %v8013
    %v8115 = vpack.c.bf16 %v8016, %v8015
    %v8116 = vpack.c.bf16 %v8018, %v8017
    %v8117 = vpack.c.bf16 %v8020, %v8019
    %v8118 = vpack.c.bf16 %v8022, %v8021
    %v8119 = vpack.c.bf16 %v8024, %v8023
    %v8120 = vpack.c.bf16 %v8026, %v8025
    %v8121 = vpack.c.bf16 %v8028, %v8027
    %v8122 = vpack.c.bf16 %v8030, %v8029
    %v8123 = vpack.c.bf16 %v8032, %v8031
    %v8124 = vpack.c.bf16 %v8034, %v8033
    %v8125 = vpack.c.bf16 %v8036, %v8035
    %v8126 = vpack.c.bf16 %v8038, %v8037
    %v8127 = vpack.c.bf16 %v8040, %v8039
    %v8128 = vpack.c.bf16 %v8042, %v8041
    %v8129 = vpack.c.bf16 %v8044, %v8043
    %v8130 = vpack.c.bf16 %v8046, %v8045
    %v8131 = vpack.c.bf16 %v8048, %v8047
    %v8132 = vpack.c.bf16 %v8050, %v8049
    %v8133 = vpack.c.bf16 %v8052, %v8051
    %v8134 = vpack.c.bf16 %v8054, %v8053
    %v8135 = vpack.c.bf16 %v8056, %v8055
    %v8136 = vpack.c.bf16 %v8058, %v8057
    %v8137 = vpack.c.bf16 %v8060, %v8059
    %v8138 = vpack.c.bf16 %v8062, %v8061
    %v8139 = vpack.c.bf16 %v8064, %v8063
    %v8140 = vpack.c.bf16 %v8066, %v8065
    %v8141 = vpack.c.bf16 %v8068, %v8067
    %v8142 = vpack.c.bf16 %v8070, %v8069
    %v8143 = vpack.c.bf16 %v8072, %v8071
    %v8144 = vpack.c.bf16 %v8074, %v8073
    %v8145 = vpack.c.bf16 %v8076, %v8075
    %v8146 = vpack.c.bf16 %v8078, %v8077
    %v8147 = vld [vmem:[%s9] sm:$0xf]
    %v8148 = vld [vmem:[%s9 + $0x4] sm:$0xf]
    %v8149 = vld [vmem:[%s9 + $0x8] sm:$0xf]
    %v8150 = vld [vmem:[%s9 + $0xc] sm:$0xf]
    %v8151 = vld [vmem:[%s9 + $0x10] sm:$0xf]
    %v8152 = vld [vmem:[%s9 + $0x14] sm:$0xf]
    %v8153 = vld [vmem:[%s9 + $0x18] sm:$0xf]
    %v8154 = vld [vmem:[%s9 + $0x1c] sm:$0xf]
    %v8155 = vld [vmem:[%s9 + $0x20] sm:$0xf]
    %v8156 = vld [vmem:[%s9 + $0x24] sm:$0xf]
    %v8157 = vld [vmem:[%s9 + $0x28] sm:$0xf]
    %v8158 = vld [vmem:[%s9 + $0x2c] sm:$0xf]
    %v8159 = vld [vmem:[%s9 + $0x30] sm:$0xf]
    %v8160 = vld [vmem:[%s9 + $0x34] sm:$0xf]
    %v8161 = vld [vmem:[%s9 + $0x38] sm:$0xf]
    %v8162 = vld [vmem:[%s9 + $0x3c] sm:$0xf]
    %v8163 = vld [vmem:[%s10] sm:$0x1]
    %v8165 = vlaneseq
    %v8166 = vshrl.u32 %v8165, 7
    %v8167 = vsub.s32 0, %v8166
    %v8168 = vrot.slane %v8163, %v8167
    %v8186 = vunpack.c.l.b16 %v8147
    %v8187 = vunpack.c.l.b16 %v8148
    %v8188 = vunpack.c.l.b16 %v8149
    %v8189 = vunpack.c.l.b16 %v8150
    %v8190 = vunpack.c.l.b16 %v8151
    %v8191 = vunpack.c.l.b16 %v8152
    %v8192 = vunpack.c.l.b16 %v8153
    %v8193 = vunpack.c.l.b16 %v8154
    %v8194 = vunpack.c.l.b16 %v8155
    %v8195 = vunpack.c.l.b16 %v8156
    %v8196 = vunpack.c.l.b16 %v8157
    %v8197 = vunpack.c.l.b16 %v8158
    %v8198 = vunpack.c.l.b16 %v8159
    %v8199 = vunpack.c.l.b16 %v8160
    %v8200 = vunpack.c.l.b16 %v8161
    %v8201 = vunpack.c.l.b16 %v8162
    %v8202 = vpack.c.b16 %v8187, %v8186
    %v8203 = vpack.c.b16 %v8189, %v8188
    %v8204 = vpack.c.b16 %v8191, %v8190
    %v8205 = vpack.c.b16 %v8193, %v8192
    %v8206 = vpack.c.b16 %v8195, %v8194
    %v8207 = vpack.c.b16 %v8197, %v8196
    %v8208 = vpack.c.b16 %v8199, %v8198
    %v8209 = vpack.c.b16 %v8201, %v8200
    %8218 = vmatprep.subr.bf16.mxu0 0
    %8219 = vmatpush1.bf16.msra.mxu0 %v8202
    %8220 = vmatprep.subr.bf16.mxu0 0
    %8221 = vmatpush1.bf16.msra.mxu0 %v8203
    %8222 = vmatprep.subr.bf16.mxu0 0
    %8223 = vmatpush1.bf16.msra.mxu0 %v8204
    %8224 = vmatprep.subr.bf16.mxu0 0
    %8225 = vmatpush1.bf16.msra.mxu0 %v8205
    %8226 = vmatprep.subr.bf16.mxu0 0
    %8227 = vmatpush1.bf16.msra.mxu0 %v8206
    %8228 = vmatprep.subr.bf16.mxu0 0
    %8229 = vmatpush1.bf16.msra.mxu0 %v8207
    %8230 = vmatprep.subr.bf16.mxu0 0
    %8231 = vmatpush1.bf16.msra.mxu0 %v8208
    %8232 = vmatprep.subr.bf16.mxu0 0
    %8233 = vmatpush1.bf16.msra.mxu0 %v8209
    %8234 = vmatprep.subr.bf16.mxu0 0
    %8235 = vmatpush1.bf16.msra.mxu0 0
    %8236 = vmatprep.subr.bf16.mxu0 0
    %8237 = vmatpush1.bf16.msra.mxu0 0
    %8238 = vmatprep.subr.bf16.mxu0 0
    %8239 = vmatpush1.bf16.msra.mxu0 0
    %8240 = vmatprep.subr.bf16.mxu0 0
    %8241 = vmatpush1.bf16.msra.mxu0 0
    %8242 = vmatprep.subr.bf16.mxu0 0
    %8243 = vmatpush1.bf16.msra.mxu0 0
    %8244 = vmatprep.subr.bf16.mxu0 0
    %8245 = vmatpush1.bf16.msra.mxu0 0
    %8246 = vmatprep.subr.bf16.mxu0 0
    %8247 = vmatpush1.bf16.msra.mxu0 0
    %8248 = vmatprep.subr.bf16.mxu0 0
    %8249 = vmatpush1.bf16.msra.mxu0 0
    %8250 = vmatprep.mubr.bf16.mxu0 0
    %8251 = vmatmul.mubr.bf16.gmra.mrb[0].mxu0 %v8079
    %v8252 = vpop.f32.mrb[0].mxu0
    %v8253 = vadd.f32 %v8168, %v8252
    %v8254 = vpop.f32.mrb[0].mxu0
    %v8255 = vpop.f32.mrb[0].mxu0
    %v8256 = vadd.f32 %v8168, %v8255
    %v8257 = vpop.f32.mrb[0].mxu0
    %8258 = vmatprep.mubr.bf16.mxu0 0
    %8259 = vmatmul.mubr.bf16.gmra.mrb[0].mxu0 %v8080
    %v8260 = vpop.f32.mrb[0].mxu0
    %v8261 = vadd.f32 %v8168, %v8260
    %v8262 = vpop.f32.mrb[0].mxu0
    %v8263 = vpop.f32.mrb[0].mxu0
    %v8264 = vadd.f32 %v8168, %v8263
    %v8265 = vpop.f32.mrb[0].mxu0
    %8266 = vmatprep.mubr.bf16.mxu0 0
    %8267 = vmatmul.mubr.bf16.gmra.mrb[0].mxu0 %v8081
    %v8268 = vpop.f32.mrb[0].mxu0
    %v8269 = vadd.f32 %v8168, %v8268
    %v8270 = vpop.f32.mrb[0].mxu0
    %v8271 = vpop.f32.mrb[0].mxu0
    %v8272 = vadd.f32 %v8168, %v8271
    %v8273 = vpop.f32.mrb[0].mxu0
    %8274 = vmatprep.mubr.bf16.mxu0 0
    %8275 = vmatmul.mubr.bf16.gmra.mrb[0].mxu0 %v8082
    %v8276 = vpop.f32.mrb[0].mxu0
    %v8277 = vadd.f32 %v8168, %v8276
    %v8278 = vpop.f32.mrb[0].mxu0
    %v8279 = vpop.f32.mrb[0].mxu0
    %v8280 = vadd.f32 %v8168, %v8279
    %v8281 = vpop.f32.mrb[0].mxu0
    %8282 = vmatprep.mubr.bf16.mxu0 0
    %8283 = vmatmul.mubr.bf16.gmra.mrb[0].mxu0 %v8083
    %v8284 = vpop.f32.mrb[0].mxu0
    %v8285 = vadd.f32 %v8168, %v8284
    %v8286 = vpop.f32.mrb[0].mxu0
    %v8287 = vpop.f32.mrb[0].mxu0
    %v8288 = vadd.f32 %v8168, %v8287
    %v8289 = vpop.f32.mrb[0].mxu0
    %8290 = vmatprep.mubr.bf16.mxu0 0
    %8291 = vmatmul.mubr.bf16.gmra.mrb[0].mxu0 %v8084
    %v8292 = vpop.f32.mrb[0].mxu0
    %v8293 = vadd.f32 %v8168, %v8292
    %v8294 = vpop.f32.mrb[0].mxu0
    %v8295 = vpop.f32.mrb[0].mxu0
    %v8296 = vadd.f32 %v8168, %v8295
    %v8297 = vpop.f32.mrb[0].mxu0
    %8298 = vmatprep.mubr.bf16.mxu0 0
    %8299 = vmatmul.mubr.bf16.gmra.mrb[0].mxu0 %v8085
    %v8300 = vpop.f32.mrb[0].mxu0
    %v8301 = vadd.f32 %v8168, %v8300
    %v8302 = vpop.f32.mrb[0].mxu0
    %v8303 = vpop.f32.mrb[0].mxu0
    %v8304 = vadd.f32 %v8168, %v8303
    %v8305 = vpop.f32.mrb[0].mxu0
    %8306 = vmatprep.mubr.bf16.mxu0 0
    %8307 = vmatmul.mubr.bf16.gmra.mrb[0].mxu0 %v8086
    %v8308 = vpop.f32.mrb[0].mxu0
    %v8309 = vadd.f32 %v8168, %v8308
    %v8310 = vpop.f32.mrb[0].mxu0
    %v8311 = vpop.f32.mrb[0].mxu0
    %v8312 = vadd.f32 %v8168, %v8311
    %v8313 = vpop.f32.mrb[0].mxu0
    %8314 = vmatprep.mubr.bf16.mxu0 0
    %8315 = vmatmul.mubr.bf16.gmra.mrb[0].mxu0 %v8087
    %v8316 = vpop.f32.mrb[0].mxu0
    %v8317 = vadd.f32 %v8168, %v8316
    %v8318 = vpop.f32.mrb[0].mxu0
    %v8319 = vpop.f32.mrb[0].mxu0
    %v8320 = vadd.f32 %v8168, %v8319
    %v8321 = vpop.f32.mrb[0].mxu0
    %8322 = vmatprep.mubr.bf16.mxu0 0
    %8323 = vmatmul.mubr.bf16.gmra.mrb[0].mxu0 %v8088
    %v8324 = vpop.f32.mrb[0].mxu0
    %v8325 = vadd.f32 %v8168, %v8324
    %v8326 = vpop.f32.mrb[0].mxu0
    %v8327 = vpop.f32.mrb[0].mxu0
    %v8328 = vadd.f32 %v8168, %v8327
    %v8329 = vpop.f32.mrb[0].mxu0
    %8330 = vmatprep.mubr.bf16.mxu0 0
    %8331 = vmatmul.mubr.bf16.gmra.mrb[0].mxu0 %v8089
    %v8332 = vpop.f32.mrb[0].mxu0
    %v8333 = vadd.f32 %v8168, %v8332
    %v8334 = vpop.f32.mrb[0].mxu0
    %v8335 = vpop.f32.mrb[0].mxu0
    %v8336 = vadd.f32 %v8168, %v8335
    %v8337 = vpop.f32.mrb[0].mxu0
    %8338 = vmatprep.mubr.bf16.mxu0 0
    %8339 = vmatmul.mubr.bf16.gmra.mrb[0].mxu0 %v8090
    %v8340 = vpop.f32.mrb[0].mxu0
    %v8341 = vadd.f32 %v8168, %v8340
    %v8342 = vpop.f32.mrb[0].mxu0
    %v8343 = vpop.f32.mrb[0].mxu0
    %v8344 = vadd.f32 %v8168, %v8343
    %v8345 = vpop.f32.mrb[0].mxu0
    %8346 = vmatprep.mubr.bf16.mxu0 0
    %8347 = vmatmul.mubr.bf16.gmra.mrb[0].mxu0 %v8091
    %v8348 = vpop.f32.mrb[0].mxu0
    %v8349 = vadd.f32 %v8168, %v8348
    %v8350 = vpop.f32.mrb[0].mxu0
    %v8351 = vpop.f32.mrb[0].mxu0
    %v8352 = vadd.f32 %v8168, %v8351
    %v8353 = vpop.f32.mrb[0].mxu0
    %8354 = vmatprep.mubr.bf16.mxu0 0
    %8355 = vmatmul.mubr.bf16.gmra.mrb[0].mxu0 %v8092
    %v8356 = vpop.f32.mrb[0].mxu0
    %v8357 = vadd.f32 %v8168, %v8356
    %v8358 = vpop.f32.mrb[0].mxu0
    %v8359 = vpop.f32.mrb[0].mxu0
    %v8360 = vadd.f32 %v8168, %v8359
    %v8361 = vpop.f32.mrb[0].mxu0
    %8362 = vmatprep.mubr.bf16.mxu0 0
    %8363 = vmatmul.mubr.bf16.gmra.mrb[0].mxu0 %v8093
    %v8364 = vpop.f32.mrb[0].mxu0
    %v8365 = vadd.f32 %v8168, %v8364
    %v8366 = vpop.f32.mrb[0].mxu0
    %v8367 = vpop.f32.mrb[0].mxu0
    %v8368 = vadd.f32 %v8168, %v8367
    %v8369 = vpop.f32.mrb[0].mxu0
    %8370 = vmatprep.mubr.bf16.mxu0 0
    %8371 = vmatmul.mubr.bf16.gmra.mrb[0].mxu0 %v8094
    %v8372 = vpop.f32.mrb[0].mxu0
    %v8373 = vadd.f32 %v8168, %v8372
    %v8374 = vpop.f32.mrb[0].mxu0
    %v8375 = vpop.f32.mrb[0].mxu0
    %v8376 = vadd.f32 %v8168, %v8375
    %v8377 = vpop.f32.mrb[0].mxu0
    %8378 = vmatprep.mubr.bf16.mxu0 0
    %8379 = vmatmul.mubr.bf16.gmra.mrb[0].mxu0 %v8095
    %v8380 = vpop.f32.mrb[0].mxu0
    %v8381 = vadd.f32 %v8168, %v8380
    %v8382 = vpop.f32.mrb[0].mxu0
    %v8383 = vpop.f32.mrb[0].mxu0
    %v8384 = vadd.f32 %v8168, %v8383
    %v8385 = vpop.f32.mrb[0].mxu0
    %8386 = vmatprep.mubr.bf16.mxu0 0
    %8387 = vmatmul.mubr.bf16.gmra.mrb[0].mxu0 %v8096
    %v8388 = vpop.f32.mrb[0].mxu0
    %v8389 = vadd.f32 %v8168, %v8388
    %v8390 = vpop.f32.mrb[0].mxu0
    %v8391 = vpop.f32.mrb[0].mxu0
    %v8392 = vadd.f32 %v8168, %v8391
    %v8393 = vpop.f32.mrb[0].mxu0
    %8394 = vmatprep.mubr.bf16.mxu0 0
    %8395 = vmatmul.mubr.bf16.gmra.mrb[0].mxu0 %v8097
    %v8396 = vpop.f32.mrb[0].mxu0
    %v8397 = vadd.f32 %v8168, %v8396
    %v8398 = vpop.f32.mrb[0].mxu0
    %v8399 = vpop.f32.mrb[0].mxu0
    %v8400 = vadd.f32 %v8168, %v8399
    %v8401 = vpop.f32.mrb[0].mxu0
    %8402 = vmatprep.mubr.bf16.mxu0 0
    %8403 = vmatmul.mubr.bf16.gmra.mrb[0].mxu0 %v8098
    %v8404 = vpop.f32.mrb[0].mxu0
    %v8405 = vadd.f32 %v8168, %v8404
    %v8406 = vpop.f32.mrb[0].mxu0
    %v8407 = vpop.f32.mrb[0].mxu0
    %v8408 = vadd.f32 %v8168, %v8407
    %v8409 = vpop.f32.mrb[0].mxu0
    %8410 = vmatprep.mubr.bf16.mxu0 0
    %8411 = vmatmul.mubr.bf16.gmra.mrb[0].mxu0 %v8099
    %v8412 = vpop.f32.mrb[0].mxu0
    %v8413 = vadd.f32 %v8168, %v8412
    %v8414 = vpop.f32.mrb[0].mxu0
    %v8415 = vpop.f32.mrb[0].mxu0
    %v8416 = vadd.f32 %v8168, %v8415
    %v8417 = vpop.f32.mrb[0].mxu0
    %8418 = vmatprep.mubr.bf16.mxu0 0
    %8419 = vmatmul.mubr.bf16.gmra.mrb[0].mxu0 %v8100
    %v8420 = vpop.f32.mrb[0].mxu0
    %v8421 = vadd.f32 %v8168, %v8420
    %v8422 = vpop.f32.mrb[0].mxu0
    %v8423 = vpop.f32.mrb[0].mxu0
    %v8424 = vadd.f32 %v8168, %v8423
    %v8425 = vpop.f32.mrb[0].mxu0
    %8426 = vmatprep.mubr.bf16.mxu0 0
    %8427 = vmatmul.mubr.bf16.gmra.mrb[0].mxu0 %v8101
    %v8428 = vpop.f32.mrb[0].mxu0
    %v8429 = vadd.f32 %v8168, %v8428
    %v8430 = vpop.f32.mrb[0].mxu0
    %v8431 = vpop.f32.mrb[0].mxu0
    %v8432 = vadd.f32 %v8168, %v8431
    %v8433 = vpop.f32.mrb[0].mxu0
    %8434 = vmatprep.mubr.bf16.mxu0 0
    %8435 = vmatmul.mubr.bf16.gmra.mrb[0].mxu0 %v8102
    %v8436 = vpop.f32.mrb[0].mxu0
    %v8437 = vadd.f32 %v8168, %v8436
    %v8438 = vpop.f32.mrb[0].mxu0
    %v8439 = vpop.f32.mrb[0].mxu0
    %v8440 = vadd.f32 %v8168, %v8439
    %v8441 = vpop.f32.mrb[0].mxu0
    %8442 = vmatprep.mubr.bf16.mxu0 0
    %8443 = vmatmul.mubr.bf16.gmra.mrb[0].mxu0 %v8103
    %v8444 = vpop.f32.mrb[0].mxu0
    %v8445 = vadd.f32 %v8168, %v8444
    %v8446 = vpop.f32.mrb[0].mxu0
    %v8447 = vpop.f32.mrb[0].mxu0
    %v8448 = vadd.f32 %v8168, %v8447
    %v8449 = vpop.f32.mrb[0].mxu0
    %8450 = vmatprep.mubr.bf16.mxu0 0
    %8451 = vmatmul.mubr.bf16.gmra.mrb[0].mxu0 %v8104
    %v8452 = vpop.f32.mrb[0].mxu0
    %v8453 = vadd.f32 %v8168, %v8452
    %v8454 = vpop.f32.mrb[0].mxu0
    %v8455 = vpop.f32.mrb[0].mxu0
    %v8456 = vadd.f32 %v8168, %v8455
    %v8457 = vpop.f32.mrb[0].mxu0
    %8458 = vmatprep.mubr.bf16.mxu0 0
    %8459 = vmatmul.mubr.bf16.gmra.mrb[0].mxu0 %v8105
    %v8460 = vpop.f32.mrb[0].mxu0
    %v8461 = vadd.f32 %v8168, %v8460
    %v8462 = vpop.f32.mrb[0].mxu0
    %v8463 = vpop.f32.mrb[0].mxu0
    %v8464 = vadd.f32 %v8168, %v8463
    %v8465 = vpop.f32.mrb[0].mxu0
    %8466 = vmatprep.mubr.bf16.mxu0 0
    %8467 = vmatmul.mubr.bf16.gmra.mrb[0].mxu0 %v8106
    %v8468 = vpop.f32.mrb[0].mxu0
    %v8469 = vadd.f32 %v8168, %v8468
    %v8470 = vpop.f32.mrb[0].mxu0
    %v8471 = vpop.f32.mrb[0].mxu0
    %v8472 = vadd.f32 %v8168, %v8471
    %v8473 = vpop.f32.mrb[0].mxu0
    %8474 = vmatprep.mubr.bf16.mxu0 0
    %8475 = vmatmul.mubr.bf16.gmra.mrb[0].mxu0 %v8107
    %v8476 = vpop.f32.mrb[0].mxu0
    %v8477 = vadd.f32 %v8168, %v8476
    %v8478 = vpop.f32.mrb[0].mxu0
    %v8479 = vpop.f32.mrb[0].mxu0
    %v8480 = vadd.f32 %v8168, %v8479
    %v8481 = vpop.f32.mrb[0].mxu0
    %8482 = vmatprep.mubr.bf16.mxu0 0
    %8483 = vmatmul.mubr.bf16.gmra.mrb[0].mxu0 %v8108
    %v8484 = vpop.f32.mrb[0].mxu0
    %v8485 = vadd.f32 %v8168, %v8484
    %v8486 = vpop.f32.mrb[0].mxu0
    %v8487 = vpop.f32.mrb[0].mxu0
    %v8488 = vadd.f32 %v8168, %v8487
    %v8489 = vpop.f32.mrb[0].mxu0
    %8490 = vmatprep.mubr.bf16.mxu0 0
    %8491 = vmatmul.mubr.bf16.gmra.mrb[0].mxu0 %v8109
    %v8492 = vpop.f32.mrb[0].mxu0
    %v8493 = vadd.f32 %v8168, %v8492
    %v8494 = vpop.f32.mrb[0].mxu0
    %v8495 = vpop.f32.mrb[0].mxu0
    %v8496 = vadd.f32 %v8168, %v8495
    %v8497 = vpop.f32.mrb[0].mxu0
    %8498 = vmatprep.mubr.bf16.mxu0 0
    %8499 = vmatmul.mubr.bf16.gmra.mrb[0].mxu0 %v8110
    %v8500 = vpop.f32.mrb[0].mxu0
    %v8501 = vadd.f32 %v8168, %v8500
    %v8502 = vpop.f32.mrb[0].mxu0
    %v8503 = vpop.f32.mrb[0].mxu0
    %v8504 = vadd.f32 %v8168, %v8503
    %v8505 = vpop.f32.mrb[0].mxu0
    %8506 = vmatprep.mubr.bf16.mxu0 0
    %8507 = vmatmul.mubr.bf16.gmra.mrb[0].mxu0 %v8111
    %v8508 = vpop.f32.mrb[0].mxu0
    %v8509 = vadd.f32 %v8168, %v8508
    %v8510 = vpop.f32.mrb[0].mxu0
    %v8511 = vpop.f32.mrb[0].mxu0
    %v8512 = vadd.f32 %v8168, %v8511
    %v8513 = vpop.f32.mrb[0].mxu0
    %8514 = vmatprep.mubr.bf16.mxu0 0
    %8515 = vmatmul.mubr.bf16.gmra.mrb[0].mxu0 %v8112
    %v8516 = vpop.f32.mrb[0].mxu0
    %v8517 = vadd.f32 %v8168, %v8516
    %v8518 = vpop.f32.mrb[0].mxu0
    %v8519 = vpop.f32.mrb[0].mxu0
    %v8520 = vadd.f32 %v8168, %v8519
    %v8521 = vpop.f32.mrb[0].mxu0
    %8522 = vmatprep.mubr.bf16.mxu0 0
    %8523 = vmatmul.mubr.bf16.gmra.mrb[0].mxu0 %v8113
    %v8524 = vpop.f32.mrb[0].mxu0
    %v8525 = vadd.f32 %v8168, %v8524
    %v8526 = vpop.f32.mrb[0].mxu0
    %v8527 = vpop.f32.mrb[0].mxu0
    %v8528 = vadd.f32 %v8168, %v8527
    %v8529 = vpop.f32.mrb[0].mxu0
    %8530 = vmatprep.mubr.bf16.mxu0 0
    %8531 = vmatmul.mubr.bf16.gmra.mrb[0].mxu0 %v8114
    %v8532 = vpop.f32.mrb[0].mxu0
    %v8533 = vadd.f32 %v8168, %v8532
    %v8534 = vpop.f32.mrb[0].mxu0
    %v8535 = vpop.f32.mrb[0].mxu0
    %v8536 = vadd.f32 %v8168, %v8535
    %v8537 = vpop.f32.mrb[0].mxu0
    %8538 = vmatprep.mubr.bf16.mxu0 0
    %8539 = vmatmul.mubr.bf16.gmra.mrb[0].mxu0 %v8115
    %v8540 = vpop.f32.mrb[0].mxu0
    %v8541 = vadd.f32 %v8168, %v8540
    %v8542 = vpop.f32.mrb[0].mxu0
    %v8543 = vpop.f32.mrb[0].mxu0
    %v8544 = vadd.f32 %v8168, %v8543
    %v8545 = vpop.f32.mrb[0].mxu0
    %8546 = vmatprep.mubr.bf16.mxu0 0
    %8547 = vmatmul.mubr.bf16.gmra.mrb[0].mxu0 %v8116
    %v8548 = vpop.f32.mrb[0].mxu0
    %v8549 = vadd.f32 %v8168, %v8548
    %v8550 = vpop.f32.mrb[0].mxu0
    %v8551 = vpop.f32.mrb[0].mxu0
    %v8552 = vadd.f32 %v8168, %v8551
    %v8553 = vpop.f32.mrb[0].mxu0
    %8554 = vmatprep.mubr.bf16.mxu0 0
    %8555 = vmatmul.mubr.bf16.gmra.mrb[0].mxu0 %v8117
    %v8556 = vpop.f32.mrb[0].mxu0
    %v8557 = vadd.f32 %v8168, %v8556
    %v8558 = vpop.f32.mrb[0].mxu0
    %v8559 = vpop.f32.mrb[0].mxu0
    %v8560 = vadd.f32 %v8168, %v8559
    %v8561 = vpop.f32.mrb[0].mxu0
    %8562 = vmatprep.mubr.bf16.mxu0 0
    %8563 = vmatmul.mubr.bf16.gmra.mrb[0].mxu0 %v8118
    %v8564 = vpop.f32.mrb[0].mxu0
    %v8565 = vadd.f32 %v8168, %v8564
    %v8566 = vpop.f32.mrb[0].mxu0
    %v8567 = vpop.f32.mrb[0].mxu0
    %v8568 = vadd.f32 %v8168, %v8567
    %v8569 = vpop.f32.mrb[0].mxu0
    %8570 = vmatprep.mubr.bf16.mxu0 0
    %8571 = vmatmul.mubr.bf16.gmra.mrb[0].mxu0 %v8119
    %v8572 = vpop.f32.mrb[0].mxu0
    %v8573 = vadd.f32 %v8168, %v8572
    %v8574 = vpop.f32.mrb[0].mxu0
    %v8575 = vpop.f32.mrb[0].mxu0
    %v8576 = vadd.f32 %v8168, %v8575
    %v8577 = vpop.f32.mrb[0].mxu0
    %8578 = vmatprep.mubr.bf16.mxu0 0
    %8579 = vmatmul.mubr.bf16.gmra.mrb[0].mxu0 %v8120
    %v8580 = vpop.f32.mrb[0].mxu0
    %v8581 = vadd.f32 %v8168, %v8580
    %v8582 = vpop.f32.mrb[0].mxu0
    %v8583 = vpop.f32.mrb[0].mxu0
    %v8584 = vadd.f32 %v8168, %v8583
    %v8585 = vpop.f32.mrb[0].mxu0
    %8586 = vmatprep.mubr.bf16.mxu0 0
    %8587 = vmatmul.mubr.bf16.gmra.mrb[0].mxu0 %v8121
    %v8588 = vpop.f32.mrb[0].mxu0
    %v8589 = vadd.f32 %v8168, %v8588
    %v8590 = vpop.f32.mrb[0].mxu0
    %v8591 = vpop.f32.mrb[0].mxu0
    %v8592 = vadd.f32 %v8168, %v8591
    %v8593 = vpop.f32.mrb[0].mxu0
    %8594 = vmatprep.mubr.bf16.mxu0 0
    %8595 = vmatmul.mubr.bf16.gmra.mrb[0].mxu0 %v8122
    %v8596 = vpop.f32.mrb[0].mxu0
    %v8597 = vadd.f32 %v8168, %v8596
    %v8598 = vpop.f32.mrb[0].mxu0
    %v8599 = vpop.f32.mrb[0].mxu0
    %v8600 = vadd.f32 %v8168, %v8599
    %v8601 = vpop.f32.mrb[0].mxu0
    %8602 = vmatprep.mubr.bf16.mxu0 0
    %8603 = vmatmul.mubr.bf16.gmra.mrb[0].mxu0 %v8123
    %v8604 = vpop.f32.mrb[0].mxu0
    %v8605 = vadd.f32 %v8168, %v8604
    %v8606 = vpop.f32.mrb[0].mxu0
    %v8607 = vpop.f32.mrb[0].mxu0
    %v8608 = vadd.f32 %v8168, %v8607
    %v8609 = vpop.f32.mrb[0].mxu0
    %8610 = vmatprep.mubr.bf16.mxu0 0
    %8611 = vmatmul.mubr.bf16.gmra.mrb[0].mxu0 %v8124
    %v8612 = vpop.f32.mrb[0].mxu0
    %v8613 = vadd.f32 %v8168, %v8612
    %v8614 = vpop.f32.mrb[0].mxu0
    %v8615 = vpop.f32.mrb[0].mxu0
    %v8616 = vadd.f32 %v8168, %v8615
    %v8617 = vpop.f32.mrb[0].mxu0
    %8618 = vmatprep.mubr.bf16.mxu0 0
    %8619 = vmatmul.mubr.bf16.gmra.mrb[0].mxu0 %v8125
    %v8620 = vpop.f32.mrb[0].mxu0
    %v8621 = vadd.f32 %v8168, %v8620
    %v8622 = vpop.f32.mrb[0].mxu0
    %v8623 = vpop.f32.mrb[0].mxu0
    %v8624 = vadd.f32 %v8168, %v8623
    %v8625 = vpop.f32.mrb[0].mxu0
    %8626 = vmatprep.mubr.bf16.mxu0 0
    %8627 = vmatmul.mubr.bf16.gmra.mrb[0].mxu0 %v8126
    %v8628 = vpop.f32.mrb[0].mxu0
    %v8629 = vadd.f32 %v8168, %v8628
    %v8630 = vpop.f32.mrb[0].mxu0
    %v8631 = vpop.f32.mrb[0].mxu0
    %v8632 = vadd.f32 %v8168, %v8631
    %v8633 = vpop.f32.mrb[0].mxu0
    %8634 = vmatprep.mubr.bf16.mxu0 0
    %8635 = vmatmul.mubr.bf16.gmra.mrb[0].mxu0 %v8127
    %v8636 = vpop.f32.mrb[0].mxu0
    %v8637 = vadd.f32 %v8168, %v8636
    %v8638 = vpop.f32.mrb[0].mxu0
    %v8639 = vpop.f32.mrb[0].mxu0
    %v8640 = vadd.f32 %v8168, %v8639
    %v8641 = vpop.f32.mrb[0].mxu0
    %8642 = vmatprep.mubr.bf16.mxu0 0
    %8643 = vmatmul.mubr.bf16.gmra.mrb[0].mxu0 %v8128
    %v8644 = vpop.f32.mrb[0].mxu0
    %v8645 = vadd.f32 %v8168, %v8644
    %v8646 = vpop.f32.mrb[0].mxu0
    %v8647 = vpop.f32.mrb[0].mxu0
    %v8648 = vadd.f32 %v8168, %v8647
    %v8649 = vpop.f32.mrb[0].mxu0
    %8650 = vmatprep.mubr.bf16.mxu0 0
    %8651 = vmatmul.mubr.bf16.gmra.mrb[0].mxu0 %v8129
    %v8652 = vpop.f32.mrb[0].mxu0
    %v8653 = vadd.f32 %v8168, %v8652
    %v8654 = vpop.f32.mrb[0].mxu0
    %v8655 = vpop.f32.mrb[0].mxu0
    %v8656 = vadd.f32 %v8168, %v8655
    %v8657 = vpop.f32.mrb[0].mxu0
    %8658 = vmatprep.mubr.bf16.mxu0 0
    %8659 = vmatmul.mubr.bf16.gmra.mrb[0].mxu0 %v8130
    %v8660 = vpop.f32.mrb[0].mxu0
    %v8661 = vadd.f32 %v8168, %v8660
    %v8662 = vpop.f32.mrb[0].mxu0
    %v8663 = vpop.f32.mrb[0].mxu0
    %v8664 = vadd.f32 %v8168, %v8663
    %v8665 = vpop.f32.mrb[0].mxu0
    %8666 = vmatprep.mubr.bf16.mxu0 0
    %8667 = vmatmul.mubr.bf16.gmra.mrb[0].mxu0 %v8131
    %v8668 = vpop.f32.mrb[0].mxu0
    %v8669 = vadd.f32 %v8168, %v8668
    %v8670 = vpop.f32.mrb[0].mxu0
    %v8671 = vpop.f32.mrb[0].mxu0
    %v8672 = vadd.f32 %v8168, %v8671
    %v8673 = vpop.f32.mrb[0].mxu0
    %8674 = vmatprep.mubr.bf16.mxu0 0
    %8675 = vmatmul.mubr.bf16.gmra.mrb[0].mxu0 %v8132
    %v8676 = vpop.f32.mrb[0].mxu0
    %v8677 = vadd.f32 %v8168, %v8676
    %v8678 = vpop.f32.mrb[0].mxu0
    %v8679 = vpop.f32.mrb[0].mxu0
    %v8680 = vadd.f32 %v8168, %v8679
    %v8681 = vpop.f32.mrb[0].mxu0
    %8682 = vmatprep.mubr.bf16.mxu0 0
    %8683 = vmatmul.mubr.bf16.gmra.mrb[0].mxu0 %v8133
    %v8684 = vpop.f32.mrb[0].mxu0
    %v8685 = vadd.f32 %v8168, %v8684
    %v8686 = vpop.f32.mrb[0].mxu0
    %v8687 = vpop.f32.mrb[0].mxu0
    %v8688 = vadd.f32 %v8168, %v8687
    %v8689 = vpop.f32.mrb[0].mxu0
    %8690 = vmatprep.mubr.bf16.mxu0 0
    %8691 = vmatmul.mubr.bf16.gmra.mrb[0].mxu0 %v8134
    %v8692 = vpop.f32.mrb[0].mxu0
    %v8693 = vadd.f32 %v8168, %v8692
    %v8694 = vpop.f32.mrb[0].mxu0
    %v8695 = vpop.f32.mrb[0].mxu0
    %v8696 = vadd.f32 %v8168, %v8695
    %v8697 = vpop.f32.mrb[0].mxu0
    %8698 = vmatprep.mubr.bf16.mxu0 0
    %8699 = vmatmul.mubr.bf16.gmra.mrb[0].mxu0 %v8135
    %v8700 = vpop.f32.mrb[0].mxu0
    %v8701 = vadd.f32 %v8168, %v8700
    %v8702 = vpop.f32.mrb[0].mxu0
    %v8703 = vpop.f32.mrb[0].mxu0
    %v8704 = vadd.f32 %v8168, %v8703
    %v8705 = vpop.f32.mrb[0].mxu0
    %8706 = vmatprep.mubr.bf16.mxu0 0
    %8707 = vmatmul.mubr.bf16.gmra.mrb[0].mxu0 %v8136
    %v8708 = vpop.f32.mrb[0].mxu0
    %v8709 = vadd.f32 %v8168, %v8708
    %v8710 = vpop.f32.mrb[0].mxu0
    %v8711 = vpop.f32.mrb[0].mxu0
    %v8712 = vadd.f32 %v8168, %v8711
    %v8713 = vpop.f32.mrb[0].mxu0
    %8714 = vmatprep.mubr.bf16.mxu0 0
    %8715 = vmatmul.mubr.bf16.gmra.mrb[0].mxu0 %v8137
    %v8716 = vpop.f32.mrb[0].mxu0
    %v8717 = vadd.f32 %v8168, %v8716
    %v8718 = vpop.f32.mrb[0].mxu0
    %v8719 = vpop.f32.mrb[0].mxu0
    %v8720 = vadd.f32 %v8168, %v8719
    %v8721 = vpop.f32.mrb[0].mxu0
    %8722 = vmatprep.mubr.bf16.mxu0 0
    %8723 = vmatmul.mubr.bf16.gmra.mrb[0].mxu0 %v8138
    %v8724 = vpop.f32.mrb[0].mxu0
    %v8725 = vadd.f32 %v8168, %v8724
    %v8726 = vpop.f32.mrb[0].mxu0
    %v8727 = vpop.f32.mrb[0].mxu0
    %v8728 = vadd.f32 %v8168, %v8727
    %v8729 = vpop.f32.mrb[0].mxu0
    %8730 = vmatprep.mubr.bf16.mxu0 0
    %8731 = vmatmul.mubr.bf16.gmra.mrb[0].mxu0 %v8139
    %v8732 = vpop.f32.mrb[0].mxu0
    %v8733 = vadd.f32 %v8168, %v8732
    %v8734 = vpop.f32.mrb[0].mxu0
    %v8735 = vpop.f32.mrb[0].mxu0
    %v8736 = vadd.f32 %v8168, %v8735
    %v8737 = vpop.f32.mrb[0].mxu0
    %8738 = vmatprep.mubr.bf16.mxu0 0
    %8739 = vmatmul.mubr.bf16.gmra.mrb[0].mxu0 %v8140
    %v8740 = vpop.f32.mrb[0].mxu0
    %v8741 = vadd.f32 %v8168, %v8740
    %v8742 = vpop.f32.mrb[0].mxu0
    %v8743 = vpop.f32.mrb[0].mxu0
    %v8744 = vadd.f32 %v8168, %v8743
    %v8745 = vpop.f32.mrb[0].mxu0
    %8746 = vmatprep.mubr.bf16.mxu0 0
    %8747 = vmatmul.mubr.bf16.gmra.mrb[0].mxu0 %v8141
    %v8748 = vpop.f32.mrb[0].mxu0
    %v8749 = vadd.f32 %v8168, %v8748
    %v8750 = vpop.f32.mrb[0].mxu0
    %v8751 = vpop.f32.mrb[0].mxu0
    %v8752 = vadd.f32 %v8168, %v8751
    %v8753 = vpop.f32.mrb[0].mxu0
    %8754 = vmatprep.mubr.bf16.mxu0 0
    %8755 = vmatmul.mubr.bf16.gmra.mrb[0].mxu0 %v8142
    %v8756 = vpop.f32.mrb[0].mxu0
    %v8757 = vadd.f32 %v8168, %v8756
    %v8758 = vpop.f32.mrb[0].mxu0
    %v8759 = vpop.f32.mrb[0].mxu0
    %v8760 = vadd.f32 %v8168, %v8759
    %v8761 = vpop.f32.mrb[0].mxu0
    %8762 = vmatprep.mubr.bf16.mxu0 0
    %8763 = vmatmul.mubr.bf16.gmra.mrb[0].mxu0 %v8143
    %v8764 = vpop.f32.mrb[0].mxu0
    %v8765 = vadd.f32 %v8168, %v8764
    %v8766 = vpop.f32.mrb[0].mxu0
    %v8767 = vpop.f32.mrb[0].mxu0
    %v8768 = vadd.f32 %v8168, %v8767
    %v8769 = vpop.f32.mrb[0].mxu0
    %8770 = vmatprep.mubr.bf16.mxu0 0
    %8771 = vmatmul.mubr.bf16.gmra.mrb[0].mxu0 %v8144
    %v8772 = vpop.f32.mrb[0].mxu0
    %v8773 = vadd.f32 %v8168, %v8772
    %v8774 = vpop.f32.mrb[0].mxu0
    %v8775 = vpop.f32.mrb[0].mxu0
    %v8776 = vadd.f32 %v8168, %v8775
    %v8777 = vpop.f32.mrb[0].mxu0
    %8778 = vmatprep.mubr.bf16.mxu0 0
    %8779 = vmatmul.mubr.bf16.gmra.mrb[0].mxu0 %v8145
    %v8780 = vpop.f32.mrb[0].mxu0
    %v8781 = vadd.f32 %v8168, %v8780
    %v8782 = vpop.f32.mrb[0].mxu0
    %v8783 = vpop.f32.mrb[0].mxu0
    %v8784 = vadd.f32 %v8168, %v8783
    %v8785 = vpop.f32.mrb[0].mxu0
    %8786 = vmatprep.mubr.bf16.mxu0 0
    %8787 = vmatmul.mubr.bf16.gmra.mrb[0].mxu0 %v8146
    %v8788 = vpop.f32.mrb[0].mxu0
    %v8789 = vadd.f32 %v8168, %v8788
    %v8790 = vpop.f32.mrb[0].mxu0
    %v8791 = vpop.f32.mrb[0].mxu0
    %v8792 = vadd.f32 %v8168, %v8791
    %v8793 = vpop.f32.mrb[0].mxu0
    %8794 = vdwg.mxu0
    %v8795 = vmul.f32 %v8253, 0.5
    %v8796 = vmul.f32 %v8256, 0.5
    %v8797 = vmul.f32 %v8261, 0.5
    %v8798 = vmul.f32 %v8264, 0.5
    %v8799 = vmul.f32 %v8269, 0.5
    %v8800 = vmul.f32 %v8272, 0.5
    %v8801 = vmul.f32 %v8277, 0.5
    %v8802 = vmul.f32 %v8280, 0.5
    %v8803 = vmul.f32 %v8285, 0.5
    %v8804 = vmul.f32 %v8288, 0.5
    %v8805 = vmul.f32 %v8293, 0.5
    %v8806 = vmul.f32 %v8296, 0.5
    %v8807 = vmul.f32 %v8301, 0.5
    %v8808 = vmul.f32 %v8304, 0.5
    %v8809 = vmul.f32 %v8309, 0.5
    %v8810 = vmul.f32 %v8312, 0.5
    %v8811 = vmul.f32 %v8317, 0.5
    %v8812 = vmul.f32 %v8320, 0.5
    %v8813 = vmul.f32 %v8325, 0.5
    %v8814 = vmul.f32 %v8328, 0.5
    %v8815 = vmul.f32 %v8333, 0.5
    %v8816 = vmul.f32 %v8336, 0.5
    %v8817 = vmul.f32 %v8341, 0.5
    %v8818 = vmul.f32 %v8344, 0.5
    %v8819 = vmul.f32 %v8349, 0.5
    %v8820 = vmul.f32 %v8352, 0.5
    %v8821 = vmul.f32 %v8357, 0.5
    %v8822 = vmul.f32 %v8360, 0.5
    %v8823 = vmul.f32 %v8365, 0.5
    %v8824 = vmul.f32 %v8368, 0.5
    %v8825 = vmul.f32 %v8373, 0.5
    %v8826 = vmul.f32 %v8376, 0.5
    %v8827 = vmul.f32 %v8381, 0.5
    %v8828 = vmul.f32 %v8384, 0.5
    %v8829 = vmul.f32 %v8389, 0.5
    %v8830 = vmul.f32 %v8392, 0.5
    %v8831 = vmul.f32 %v8397, 0.5
    %v8832 = vmul.f32 %v8400, 0.5
    %v8833 = vmul.f32 %v8405, 0.5
    %v8834 = vmul.f32 %v8408, 0.5
    %v8835 = vmul.f32 %v8413, 0.5
    %v8836 = vmul.f32 %v8416, 0.5
    %v8837 = vmul.f32 %v8421, 0.5
    %v8838 = vmul.f32 %v8424, 0.5
    %v8839 = vmul.f32 %v8429, 0.5
    %v8840 = vmul.f32 %v8432, 0.5
    %v8841 = vmul.f32 %v8437, 0.5
    %v8842 = vmul.f32 %v8440, 0.5
    %v8843 = vmul.f32 %v8445, 0.5
    %v8844 = vmul.f32 %v8448, 0.5
    %v8845 = vmul.f32 %v8453, 0.5
    %v8846 = vmul.f32 %v8456, 0.5
    %v8847 = vmul.f32 %v8461, 0.5
    %v8848 = vmul.f32 %v8464, 0.5
    %v8849 = vmul.f32 %v8469, 0.5
    %v8850 = vmul.f32 %v8472, 0.5
    %v8851 = vmul.f32 %v8477, 0.5
    %v8852 = vmul.f32 %v8480, 0.5
    %v8853 = vmul.f32 %v8485, 0.5
    %v8854 = vmul.f32 %v8488, 0.5
    %v8855 = vmul.f32 %v8493, 0.5
    %v8856 = vmul.f32 %v8496, 0.5
    %v8857 = vmul.f32 %v8501, 0.5
    %v8858 = vmul.f32 %v8504, 0.5
    %v8859 = vmul.f32 %v8509, 0.5
    %v8860 = vmul.f32 %v8512, 0.5
    %v8861 = vmul.f32 %v8517, 0.5
    %v8862 = vmul.f32 %v8520, 0.5
    %v8863 = vmul.f32 %v8525, 0.5
    %v8864 = vmul.f32 %v8528, 0.5
    %v8865 = vmul.f32 %v8533, 0.5
    %v8866 = vmul.f32 %v8536, 0.5
    %v8867 = vmul.f32 %v8541, 0.5
    %v8868 = vmul.f32 %v8544, 0.5
    %v8869 = vmul.f32 %v8549, 0.5
    %v8870 = vmul.f32 %v8552, 0.5
    %v8871 = vmul.f32 %v8557, 0.5
    %v8872 = vmul.f32 %v8560, 0.5
    %v8873 = vmul.f32 %v8565, 0.5
    %v8874 = vmul.f32 %v8568, 0.5
    %v8875 = vmul.f32 %v8573, 0.5
    %v8876 = vmul.f32 %v8576, 0.5
    %v8877 = vmul.f32 %v8581, 0.5
    %v8878 = vmul.f32 %v8584, 0.5
    %v8879 = vmul.f32 %v8589, 0.5
    %v8880 = vmul.f32 %v8592, 0.5
    %v8881 = vmul.f32 %v8597, 0.5
    %v8882 = vmul.f32 %v8600, 0.5
    %v8883 = vmul.f32 %v8605, 0.5
    %v8884 = vmul.f32 %v8608, 0.5
    %v8885 = vmul.f32 %v8613, 0.5
    %v8886 = vmul.f32 %v8616, 0.5
    %v8887 = vmul.f32 %v8621, 0.5
    %v8888 = vmul.f32 %v8624, 0.5
    %v8889 = vmul.f32 %v8629, 0.5
    %v8890 = vmul.f32 %v8632, 0.5
    %v8891 = vmul.f32 %v8637, 0.5
    %v8892 = vmul.f32 %v8640, 0.5
    %v8893 = vmul.f32 %v8645, 0.5
    %v8894 = vmul.f32 %v8648, 0.5
    %v8895 = vmul.f32 %v8653, 0.5
    %v8896 = vmul.f32 %v8656, 0.5
    %v8897 = vmul.f32 %v8661, 0.5
    %v8898 = vmul.f32 %v8664, 0.5
    %v8899 = vmul.f32 %v8669, 0.5
    %v8900 = vmul.f32 %v8672, 0.5
    %v8901 = vmul.f32 %v8677, 0.5
    %v8902 = vmul.f32 %v8680, 0.5
    %v8903 = vmul.f32 %v8685, 0.5
    %v8904 = vmul.f32 %v8688, 0.5
    %v8905 = vmul.f32 %v8693, 0.5
    %v8906 = vmul.f32 %v8696, 0.5
    %v8907 = vmul.f32 %v8701, 0.5
    %v8908 = vmul.f32 %v8704, 0.5
    %v8909 = vmul.f32 %v8709, 0.5
    %v8910 = vmul.f32 %v8712, 0.5
    %v8911 = vmul.f32 %v8717, 0.5
    %v8912 = vmul.f32 %v8720, 0.5
    %v8913 = vmul.f32 %v8725, 0.5
    %v8914 = vmul.f32 %v8728, 0.5
    %v8915 = vmul.f32 %v8733, 0.5
    %v8916 = vmul.f32 %v8736, 0.5
    %v8917 = vmul.f32 %v8741, 0.5
    %v8918 = vmul.f32 %v8744, 0.5
    %v8919 = vmul.f32 %v8749, 0.5
    %v8920 = vmul.f32 %v8752, 0.5
    %v8921 = vmul.f32 %v8757, 0.5
    %v8922 = vmul.f32 %v8760, 0.5
    %v8923 = vmul.f32 %v8765, 0.5
    %v8924 = vmul.f32 %v8768, 0.5
    %v8925 = vmul.f32 %v8773, 0.5
    %v8926 = vmul.f32 %v8776, 0.5
    %v8927 = vmul.f32 %v8781, 0.5
    %v8928 = vmul.f32 %v8784, 0.5
    %v8929 = vmul.f32 %v8789, 0.5
    %v8930 = vmul.f32 %v8792, 0.5
    %v8931 = vmul.f32 %v8253, 0.044715
    %v8932 = vmul.f32 %v8256, 0.044715
    %v8933 = vmul.f32 %v8261, 0.044715
    %v8934 = vmul.f32 %v8264, 0.044715
    %v8935 = vmul.f32 %v8269, 0.044715
    %v8936 = vmul.f32 %v8272, 0.044715
    %v8937 = vmul.f32 %v8277, 0.044715
    %v8938 = vmul.f32 %v8280, 0.044715
    %v8939 = vmul.f32 %v8285, 0.044715
    %v8940 = vmul.f32 %v8288, 0.044715
    %v8941 = vmul.f32 %v8293, 0.044715
    %v8942 = vmul.f32 %v8296, 0.044715
    %v8943 = vmul.f32 %v8301, 0.044715
    %v8944 = vmul.f32 %v8304, 0.044715
    %v8945 = vmul.f32 %v8309, 0.044715
    %v8946 = vmul.f32 %v8312, 0.044715
    %v8947 = vmul.f32 %v8317, 0.044715
    %v8948 = vmul.f32 %v8320, 0.044715
    %v8949 = vmul.f32 %v8325, 0.044715
    %v8950 = vmul.f32 %v8328, 0.044715
    %v8951 = vmul.f32 %v8333, 0.044715
    %v8952 = vmul.f32 %v8336, 0.044715
    %v8953 = vmul.f32 %v8341, 0.044715
    %v8954 = vmul.f32 %v8344, 0.044715
    %v8955 = vmul.f32 %v8349, 0.044715
    %v8956 = vmul.f32 %v8352, 0.044715
    %v8957 = vmul.f32 %v8357, 0.044715
    %v8958 = vmul.f32 %v8360, 0.044715
    %v8959 = vmul.f32 %v8365, 0.044715
    %v8960 = vmul.f32 %v8368, 0.044715
    %v8961 = vmul.f32 %v8373, 0.044715
    %v8962 = vmul.f32 %v8376, 0.044715
    %v8963 = vmul.f32 %v8381, 0.044715
    %v8964 = vmul.f32 %v8384, 0.044715
    %v8965 = vmul.f32 %v8389, 0.044715
    %v8966 = vmul.f32 %v8392, 0.044715
    %v8967 = vmul.f32 %v8397, 0.044715
    %v8968 = vmul.f32 %v8400, 0.044715
    %v8969 = vmul.f32 %v8405, 0.044715
    %v8970 = vmul.f32 %v8408, 0.044715
    %v8971 = vmul.f32 %v8413, 0.044715
    %v8972 = vmul.f32 %v8416, 0.044715
    %v8973 = vmul.f32 %v8421, 0.044715
    %v8974 = vmul.f32 %v8424, 0.044715
    %v8975 = vmul.f32 %v8429, 0.044715
    %v8976 = vmul.f32 %v8432, 0.044715
    %v8977 = vmul.f32 %v8437, 0.044715
    %v8978 = vmul.f32 %v8440, 0.044715
    %v8979 = vmul.f32 %v8445, 0.044715
    %v8980 = vmul.f32 %v8448, 0.044715
    %v8981 = vmul.f32 %v8453, 0.044715
    %v8982 = vmul.f32 %v8456, 0.044715
    %v8983 = vmul.f32 %v8461, 0.044715
    %v8984 = vmul.f32 %v8464, 0.044715
    %v8985 = vmul.f32 %v8469, 0.044715
    %v8986 = vmul.f32 %v8472, 0.044715
    %v8987 = vmul.f32 %v8477, 0.044715
    %v8988 = vmul.f32 %v8480, 0.044715
    %v8989 = vmul.f32 %v8485, 0.044715
    %v8990 = vmul.f32 %v8488, 0.044715
    %v8991 = vmul.f32 %v8493, 0.044715
    %v8992 = vmul.f32 %v8496, 0.044715
    %v8993 = vmul.f32 %v8501, 0.044715
    %v8994 = vmul.f32 %v8504, 0.044715
    %v8995 = vmul.f32 %v8509, 0.044715
    %v8996 = vmul.f32 %v8512, 0.044715
    %v8997 = vmul.f32 %v8517, 0.044715
    %v8998 = vmul.f32 %v8520, 0.044715
    %v8999 = vmul.f32 %v8525, 0.044715
    %v9000 = vmul.f32 %v8528, 0.044715
    %v9001 = vmul.f32 %v8533, 0.044715
    %v9002 = vmul.f32 %v8536, 0.044715
    %v9003 = vmul.f32 %v8541, 0.044715
    %v9004 = vmul.f32 %v8544, 0.044715
    %v9005 = vmul.f32 %v8549, 0.044715
    %v9006 = vmul.f32 %v8552, 0.044715
    %v9007 = vmul.f32 %v8557, 0.044715
    %v9008 = vmul.f32 %v8560, 0.044715
    %v9009 = vmul.f32 %v8565, 0.044715
    %v9010 = vmul.f32 %v8568, 0.044715
    %v9011 = vmul.f32 %v8573, 0.044715
    %v9012 = vmul.f32 %v8576, 0.044715
    %v9013 = vmul.f32 %v8581, 0.044715
    %v9014 = vmul.f32 %v8584, 0.044715
    %v9015 = vmul.f32 %v8589, 0.044715
    %v9016 = vmul.f32 %v8592, 0.044715
    %v9017 = vmul.f32 %v8597, 0.044715
    %v9018 = vmul.f32 %v8600, 0.044715
    %v9019 = vmul.f32 %v8605, 0.044715
    %v9020 = vmul.f32 %v8608, 0.044715
    %v9021 = vmul.f32 %v8613, 0.044715
    %v9022 = vmul.f32 %v8616, 0.044715
    %v9023 = vmul.f32 %v8621, 0.044715
    %v9024 = vmul.f32 %v8624, 0.044715
    %v9025 = vmul.f32 %v8629, 0.044715
    %v9026 = vmul.f32 %v8632, 0.044715
    %v9027 = vmul.f32 %v8637, 0.044715
    %v9028 = vmul.f32 %v8640, 0.044715
    %v9029 = vmul.f32 %v8645, 0.044715
    %v9030 = vmul.f32 %v8648, 0.044715
    %v9031 = vmul.f32 %v8653, 0.044715
    %v9032 = vmul.f32 %v8656, 0.044715
    %v9033 = vmul.f32 %v8661, 0.044715
    %v9034 = vmul.f32 %v8664, 0.044715
    %v9035 = vmul.f32 %v8669, 0.044715
    %v9036 = vmul.f32 %v8672, 0.044715
    %v9037 = vmul.f32 %v8677, 0.044715
    %v9038 = vmul.f32 %v8680, 0.044715
    %v9039 = vmul.f32 %v8685, 0.044715
    %v9040 = vmul.f32 %v8688, 0.044715
    %v9041 = vmul.f32 %v8693, 0.044715
    %v9042 = vmul.f32 %v8696, 0.044715
    %v9043 = vmul.f32 %v8701, 0.044715
    %v9044 = vmul.f32 %v8704, 0.044715
    %v9045 = vmul.f32 %v8709, 0.044715
    %v9046 = vmul.f32 %v8712, 0.044715
    %v9047 = vmul.f32 %v8717, 0.044715
    %v9048 = vmul.f32 %v8720, 0.044715
    %v9049 = vmul.f32 %v8725, 0.044715
    %v9050 = vmul.f32 %v8728, 0.044715
    %v9051 = vmul.f32 %v8733, 0.044715
    %v9052 = vmul.f32 %v8736, 0.044715
    %v9053 = vmul.f32 %v8741, 0.044715
    %v9054 = vmul.f32 %v8744, 0.044715
    %v9055 = vmul.f32 %v8749, 0.044715
    %v9056 = vmul.f32 %v8752, 0.044715
    %v9057 = vmul.f32 %v8757, 0.044715
    %v9058 = vmul.f32 %v8760, 0.044715
    %v9059 = vmul.f32 %v8765, 0.044715
    %v9060 = vmul.f32 %v8768, 0.044715
    %v9061 = vmul.f32 %v8773, 0.044715
    %v9062 = vmul.f32 %v8776, 0.044715
    %v9063 = vmul.f32 %v8781, 0.044715
    %v9064 = vmul.f32 %v8784, 0.044715
    %v9065 = vmul.f32 %v8789, 0.044715
    %v9066 = vmul.f32 %v8792, 0.044715
    %v9067 = vmul.f32 %v8931, %v8253
    %v9068 = vmul.f32 %v8932, %v8256
    %v9069 = vmul.f32 %v8933, %v8261
    %v9070 = vmul.f32 %v8934, %v8264
    %v9071 = vmul.f32 %v8935, %v8269
    %v9072 = vmul.f32 %v8936, %v8272
    %v9073 = vmul.f32 %v8937, %v8277
    %v9074 = vmul.f32 %v8938, %v8280
    %v9075 = vmul.f32 %v8939, %v8285
    %v9076 = vmul.f32 %v8940, %v8288
    %v9077 = vmul.f32 %v8941, %v8293
    %v9078 = vmul.f32 %v8942, %v8296
    %v9079 = vmul.f32 %v8943, %v8301
    %v9080 = vmul.f32 %v8944, %v8304
    %v9081 = vmul.f32 %v8945, %v8309
    %v9082 = vmul.f32 %v8946, %v8312
    %v9083 = vmul.f32 %v8947, %v8317
    %v9084 = vmul.f32 %v8948, %v8320
    %v9085 = vmul.f32 %v8949, %v8325
    %v9086 = vmul.f32 %v8950, %v8328
    %v9087 = vmul.f32 %v8951, %v8333
    %v9088 = vmul.f32 %v8952, %v8336
    %v9089 = vmul.f32 %v8953, %v8341
    %v9090 = vmul.f32 %v8954, %v8344
    %v9091 = vmul.f32 %v8955, %v8349
    %v9092 = vmul.f32 %v8956, %v8352
    %v9093 = vmul.f32 %v8957, %v8357
    %v9094 = vmul.f32 %v8958, %v8360
    %v9095 = vmul.f32 %v8959, %v8365
    %v9096 = vmul.f32 %v8960, %v8368
    %v9097 = vmul.f32 %v8961, %v8373
    %v9098 = vmul.f32 %v8962, %v8376
    %v9099 = vmul.f32 %v8963, %v8381
    %v9100 = vmul.f32 %v8964, %v8384
    %v9101 = vmul.f32 %v8965, %v8389
    %v9102 = vmul.f32 %v8966, %v8392
    %v9103 = vmul.f32 %v8967, %v8397
    %v9104 = vmul.f32 %v8968, %v8400
    %v9105 = vmul.f32 %v8969, %v8405
    %v9106 = vmul.f32 %v8970, %v8408
    %v9107 = vmul.f32 %v8971, %v8413
    %v9108 = vmul.f32 %v8972, %v8416
    %v9109 = vmul.f32 %v8973, %v8421
    %v9110 = vmul.f32 %v8974, %v8424
    %v9111 = vmul.f32 %v8975, %v8429
    %v9112 = vmul.f32 %v8976, %v8432
    %v9113 = vmul.f32 %v8977, %v8437
    %v9114 = vmul.f32 %v8978, %v8440
    %v9115 = vmul.f32 %v8979, %v8445
    %v9116 = vmul.f32 %v8980, %v8448
    %v9117 = vmul.f32 %v8981, %v8453
    %v9118 = vmul.f32 %v8982, %v8456
    %v9119 = vmul.f32 %v8983, %v8461
    %v9120 = vmul.f32 %v8984, %v8464
    %v9121 = vmul.f32 %v8985, %v8469
    %v9122 = vmul.f32 %v8986, %v8472
    %v9123 = vmul.f32 %v8987, %v8477
    %v9124 = vmul.f32 %v8988, %v8480
    %v9125 = vmul.f32 %v8989, %v8485
    %v9126 = vmul.f32 %v8990, %v8488
    %v9127 = vmul.f32 %v8991, %v8493
    %v9128 = vmul.f32 %v8992, %v8496
    %v9129 = vmul.f32 %v8993, %v8501
    %v9130 = vmul.f32 %v8994, %v8504
    %v9131 = vmul.f32 %v8995, %v8509
    %v9132 = vmul.f32 %v8996, %v8512
    %v9133 = vmul.f32 %v8997, %v8517
    %v9134 = vmul.f32 %v8998, %v8520
    %v9135 = vmul.f32 %v8999, %v8525
    %v9136 = vmul.f32 %v9000, %v8528
    %v9137 = vmul.f32 %v9001, %v8533
    %v9138 = vmul.f32 %v9002, %v8536
    %v9139 = vmul.f32 %v9003, %v8541
    %v9140 = vmul.f32 %v9004, %v8544
    %v9141 = vmul.f32 %v9005, %v8549
    %v9142 = vmul.f32 %v9006, %v8552
    %v9143 = vmul.f32 %v9007, %v8557
    %v9144 = vmul.f32 %v9008, %v8560
    %v9145 = vmul.f32 %v9009, %v8565
    %v9146 = vmul.f32 %v9010, %v8568
    %v9147 = vmul.f32 %v9011, %v8573
    %v9148 = vmul.f32 %v9012, %v8576
    %v9149 = vmul.f32 %v9013, %v8581
    %v9150 = vmul.f32 %v9014, %v8584
    %v9151 = vmul.f32 %v9015, %v8589
    %v9152 = vmul.f32 %v9016, %v8592
    %v9153 = vmul.f32 %v9017, %v8597
    %v9154 = vmul.f32 %v9018, %v8600
    %v9155 = vmul.f32 %v9019, %v8605
    %v9156 = vmul.f32 %v9020, %v8608
    %v9157 = vmul.f32 %v9021, %v8613
    %v9158 = vmul.f32 %v9022, %v8616
    %v9159 = vmul.f32 %v9023, %v8621
    %v9160 = vmul.f32 %v9024, %v8624
    %v9161 = vmul.f32 %v9025, %v8629
    %v9162 = vmul.f32 %v9026, %v8632
    %v9163 = vmul.f32 %v9027, %v8637
    %v9164 = vmul.f32 %v9028, %v8640
    %v9165 = vmul.f32 %v9029, %v8645
    %v9166 = vmul.f32 %v9030, %v8648
    %v9167 = vmul.f32 %v9031, %v8653
    %v9168 = vmul.f32 %v9032, %v8656
    %v9169 = vmul.f32 %v9033, %v8661
    %v9170 = vmul.f32 %v9034, %v8664
    %v9171 = vmul.f32 %v9035, %v8669
    %v9172 = vmul.f32 %v9036, %v8672
    %v9173 = vmul.f32 %v9037, %v8677
    %v9174 = vmul.f32 %v9038, %v8680
    %v9175 = vmul.f32 %v9039, %v8685
    %v9176 = vmul.f32 %v9040, %v8688
    %v9177 = vmul.f32 %v9041, %v8693
    %v9178 = vmul.f32 %v9042, %v8696
    %v9179 = vmul.f32 %v9043, %v8701
    %v9180 = vmul.f32 %v9044, %v8704
    %v9181 = vmul.f32 %v9045, %v8709
    %v9182 = vmul.f32 %v9046, %v8712
    %v9183 = vmul.f32 %v9047, %v8717
    %v9184 = vmul.f32 %v9048, %v8720
    %v9185 = vmul.f32 %v9049, %v8725
    %v9186 = vmul.f32 %v9050, %v8728
    %v9187 = vmul.f32 %v9051, %v8733
    %v9188 = vmul.f32 %v9052, %v8736
    %v9189 = vmul.f32 %v9053, %v8741
    %v9190 = vmul.f32 %v9054, %v8744
    %v9191 = vmul.f32 %v9055, %v8749
    %v9192 = vmul.f32 %v9056, %v8752
    %v9193 = vmul.f32 %v9057, %v8757
    %v9194 = vmul.f32 %v9058, %v8760
    %v9195 = vmul.f32 %v9059, %v8765
    %v9196 = vmul.f32 %v9060, %v8768
    %v9197 = vmul.f32 %v9061, %v8773
    %v9198 = vmul.f32 %v9062, %v8776
    %v9199 = vmul.f32 %v9063, %v8781
    %v9200 = vmul.f32 %v9064, %v8784
    %v9201 = vmul.f32 %v9065, %v8789
    %v9202 = vmul.f32 %v9066, %v8792
    %v9203 = vmul.f32 %v9067, %v8253
    %v9204 = vmul.f32 %v9068, %v8256
    %v9205 = vmul.f32 %v9069, %v8261
    %v9206 = vmul.f32 %v9070, %v8264
    %v9207 = vmul.f32 %v9071, %v8269
    %v9208 = vmul.f32 %v9072, %v8272
    %v9209 = vmul.f32 %v9073, %v8277
    %v9210 = vmul.f32 %v9074, %v8280
    %v9211 = vmul.f32 %v9075, %v8285
    %v9212 = vmul.f32 %v9076, %v8288
    %v9213 = vmul.f32 %v9077, %v8293
    %v9214 = vmul.f32 %v9078, %v8296
    %v9215 = vmul.f32 %v9079, %v8301
    %v9216 = vmul.f32 %v9080, %v8304
    %v9217 = vmul.f32 %v9081, %v8309
    %v9218 = vmul.f32 %v9082, %v8312
    %v9219 = vmul.f32 %v9083, %v8317
    %v9220 = vmul.f32 %v9084, %v8320
    %v9221 = vmul.f32 %v9085, %v8325
    %v9222 = vmul.f32 %v9086, %v8328
    %v9223 = vmul.f32 %v9087, %v8333
    %v9224 = vmul.f32 %v9088, %v8336
    %v9225 = vmul.f32 %v9089, %v8341
    %v9226 = vmul.f32 %v9090, %v8344
    %v9227 = vmul.f32 %v9091, %v8349
    %v9228 = vmul.f32 %v9092, %v8352
    %v9229 = vmul.f32 %v9093, %v8357
    %v9230 = vmul.f32 %v9094, %v8360
    %v9231 = vmul.f32 %v9095, %v8365
    %v9232 = vmul.f32 %v9096, %v8368
    %v9233 = vmul.f32 %v9097, %v8373
    %v9234 = vmul.f32 %v9098, %v8376
    %v9235 = vmul.f32 %v9099, %v8381
    %v9236 = vmul.f32 %v9100, %v8384
    %v9237 = vmul.f32 %v9101, %v8389
    %v9238 = vmul.f32 %v9102, %v8392
    %v9239 = vmul.f32 %v9103, %v8397
    %v9240 = vmul.f32 %v9104, %v8400
    %v9241 = vmul.f32 %v9105, %v8405
    %v9242 = vmul.f32 %v9106, %v8408
    %v9243 = vmul.f32 %v9107, %v8413
    %v9244 = vmul.f32 %v9108, %v8416
    %v9245 = vmul.f32 %v9109, %v8421
    %v9246 = vmul.f32 %v9110, %v8424
    %v9247 = vmul.f32 %v9111, %v8429
    %v9248 = vmul.f32 %v9112, %v8432
    %v9249 = vmul.f32 %v9113, %v8437
    %v9250 = vmul.f32 %v9114, %v8440
    %v9251 = vmul.f32 %v9115, %v8445
    %v9252 = vmul.f32 %v9116, %v8448
    %v9253 = vmul.f32 %v9117, %v8453
    %v9254 = vmul.f32 %v9118, %v8456
    %v9255 = vmul.f32 %v9119, %v8461
    %v9256 = vmul.f32 %v9120, %v8464
    %v9257 = vmul.f32 %v9121, %v8469
    %v9258 = vmul.f32 %v9122, %v8472
    %v9259 = vmul.f32 %v9123, %v8477
    %v9260 = vmul.f32 %v9124, %v8480
    %v9261 = vmul.f32 %v9125, %v8485
    %v9262 = vmul.f32 %v9126, %v8488
    %v9263 = vmul.f32 %v9127, %v8493
    %v9264 = vmul.f32 %v9128, %v8496
    %v9265 = vmul.f32 %v9129, %v8501
    %v9266 = vmul.f32 %v9130, %v8504
    %v9267 = vmul.f32 %v9131, %v8509
    %v9268 = vmul.f32 %v9132, %v8512
    %v9269 = vmul.f32 %v9133, %v8517
    %v9270 = vmul.f32 %v9134, %v8520
    %v9271 = vmul.f32 %v9135, %v8525
    %v9272 = vmul.f32 %v9136, %v8528
    %v9273 = vmul.f32 %v9137, %v8533
    %v9274 = vmul.f32 %v9138, %v8536
    %v9275 = vmul.f32 %v9139, %v8541
    %v9276 = vmul.f32 %v9140, %v8544
    %v9277 = vmul.f32 %v9141, %v8549
    %v9278 = vmul.f32 %v9142, %v8552
    %v9279 = vmul.f32 %v9143, %v8557
    %v9280 = vmul.f32 %v9144, %v8560
    %v9281 = vmul.f32 %v9145, %v8565
    %v9282 = vmul.f32 %v9146, %v8568
    %v9283 = vmul.f32 %v9147, %v8573
    %v9284 = vmul.f32 %v9148, %v8576
    %v9285 = vmul.f32 %v9149, %v8581
    %v9286 = vmul.f32 %v9150, %v8584
    %v9287 = vmul.f32 %v9151, %v8589
    %v9288 = vmul.f32 %v9152, %v8592
    %v9289 = vmul.f32 %v9153, %v8597
    %v9290 = vmul.f32 %v9154, %v8600
    %v9291 = vmul.f32 %v9155, %v8605
    %v9292 = vmul.f32 %v9156, %v8608
    %v9293 = vmul.f32 %v9157, %v8613
    %v9294 = vmul.f32 %v9158, %v8616
    %v9295 = vmul.f32 %v9159, %v8621
    %v9296 = vmul.f32 %v9160, %v8624
    %v9297 = vmul.f32 %v9161, %v8629
    %v9298 = vmul.f32 %v9162, %v8632
    %v9299 = vmul.f32 %v9163, %v8637
    %v9300 = vmul.f32 %v9164, %v8640
    %v9301 = vmul.f32 %v9165, %v8645
    %v9302 = vmul.f32 %v9166, %v8648
    %v9303 = vmul.f32 %v9167, %v8653
    %v9304 = vmul.f32 %v9168, %v8656
    %v9305 = vmul.f32 %v9169, %v8661
    %v9306 = vmul.f32 %v9170, %v8664
    %v9307 = vmul.f32 %v9171, %v8669
    %v9308 = vmul.f32 %v9172, %v8672
    %v9309 = vmul.f32 %v9173, %v8677
    %v9310 = vmul.f32 %v9174, %v8680
    %v9311 = vmul.f32 %v9175, %v8685
    %v9312 = vmul.f32 %v9176, %v8688
    %v9313 = vmul.f32 %v9177, %v8693
    %v9314 = vmul.f32 %v9178, %v8696
    %v9315 = vmul.f32 %v9179, %v8701
    %v9316 = vmul.f32 %v9180, %v8704
    %v9317 = vmul.f32 %v9181, %v8709
    %v9318 = vmul.f32 %v9182, %v8712
    %v9319 = vmul.f32 %v9183, %v8717
    %v9320 = vmul.f32 %v9184, %v8720
    %v9321 = vmul.f32 %v9185, %v8725
    %v9322 = vmul.f32 %v9186, %v8728
    %v9323 = vmul.f32 %v9187, %v8733
    %v9324 = vmul.f32 %v9188, %v8736
    %v9325 = vmul.f32 %v9189, %v8741
    %v9326 = vmul.f32 %v9190, %v8744
    %v9327 = vmul.f32 %v9191, %v8749
    %v9328 = vmul.f32 %v9192, %v8752
    %v9329 = vmul.f32 %v9193, %v8757
    %v9330 = vmul.f32 %v9194, %v8760
    %v9331 = vmul.f32 %v9195, %v8765
    %v9332 = vmul.f32 %v9196, %v8768
    %v9333 = vmul.f32 %v9197, %v8773
    %v9334 = vmul.f32 %v9198, %v8776
    %v9335 = vmul.f32 %v9199, %v8781
    %v9336 = vmul.f32 %v9200, %v8784
    %v9337 = vmul.f32 %v9201, %v8789
    %v9338 = vmul.f32 %v9202, %v8792
    %v9339 = vadd.f32 %v8253, %v9203
    %v9340 = vadd.f32 %v8256, %v9204
    %v9341 = vadd.f32 %v8261, %v9205
    %v9342 = vadd.f32 %v8264, %v9206
    %v9343 = vadd.f32 %v8269, %v9207
    %v9344 = vadd.f32 %v8272, %v9208
    %v9345 = vadd.f32 %v8277, %v9209
    %v9346 = vadd.f32 %v8280, %v9210
    %v9347 = vadd.f32 %v8285, %v9211
    %v9348 = vadd.f32 %v8288, %v9212
    %v9349 = vadd.f32 %v8293, %v9213
    %v9350 = vadd.f32 %v8296, %v9214
    %v9351 = vadd.f32 %v8301, %v9215
    %v9352 = vadd.f32 %v8304, %v9216
    %v9353 = vadd.f32 %v8309, %v9217
    %v9354 = vadd.f32 %v8312, %v9218
    %v9355 = vadd.f32 %v8317, %v9219
    %v9356 = vadd.f32 %v8320, %v9220
    %v9357 = vadd.f32 %v8325, %v9221
    %v9358 = vadd.f32 %v8328, %v9222
    %v9359 = vadd.f32 %v8333, %v9223
    %v9360 = vadd.f32 %v8336, %v9224
    %v9361 = vadd.f32 %v8341, %v9225
    %v9362 = vadd.f32 %v8344, %v9226
    %v9363 = vadd.f32 %v8349, %v9227
    %v9364 = vadd.f32 %v8352, %v9228
    %v9365 = vadd.f32 %v8357, %v9229
    %v9366 = vadd.f32 %v8360, %v9230
    %v9367 = vadd.f32 %v8365, %v9231
    %v9368 = vadd.f32 %v8368, %v9232
    %v9369 = vadd.f32 %v8373, %v9233
    %v9370 = vadd.f32 %v8376, %v9234
    %v9371 = vadd.f32 %v8381, %v9235
    %v9372 = vadd.f32 %v8384, %v9236
    %v9373 = vadd.f32 %v8389, %v9237
    %v9374 = vadd.f32 %v8392, %v9238
    %v9375 = vadd.f32 %v8397, %v9239
    %v9376 = vadd.f32 %v8400, %v9240
    %v9377 = vadd.f32 %v8405, %v9241
    %v9378 = vadd.f32 %v8408, %v9242
    %v9379 = vadd.f32 %v8413, %v9243
    %v9380 = vadd.f32 %v8416, %v9244
    %v9381 = vadd.f32 %v8421, %v9245
    %v9382 = vadd.f32 %v8424, %v9246
    %v9383 = vadd.f32 %v8429, %v9247
    %v9384 = vadd.f32 %v8432, %v9248
    %v9385 = vadd.f32 %v8437, %v9249
    %v9386 = vadd.f32 %v8440, %v9250
    %v9387 = vadd.f32 %v8445, %v9251
    %v9388 = vadd.f32 %v8448, %v9252
    %v9389 = vadd.f32 %v8453, %v9253
    %v9390 = vadd.f32 %v8456, %v9254
    %v9391 = vadd.f32 %v8461, %v9255
    %v9392 = vadd.f32 %v8464, %v9256
    %v9393 = vadd.f32 %v8469, %v9257
    %v9394 = vadd.f32 %v8472, %v9258
    %v9395 = vadd.f32 %v8477, %v9259
    %v9396 = vadd.f32 %v8480, %v9260
    %v9397 = vadd.f32 %v8485, %v9261
    %v9398 = vadd.f32 %v8488, %v9262
    %v9399 = vadd.f32 %v8493, %v9263
    %v9400 = vadd.f32 %v8496, %v9264
    %v9401 = vadd.f32 %v8501, %v9265
    %v9402 = vadd.f32 %v8504, %v9266
    %v9403 = vadd.f32 %v8509, %v9267
    %v9404 = vadd.f32 %v8512, %v9268
    %v9405 = vadd.f32 %v8517, %v9269
    %v9406 = vadd.f32 %v8520, %v9270
    %v9407 = vadd.f32 %v8525, %v9271
    %v9408 = vadd.f32 %v8528, %v9272
    %v9409 = vadd.f32 %v8533, %v9273
    %v9410 = vadd.f32 %v8536, %v9274
    %v9411 = vadd.f32 %v8541, %v9275
    %v9412 = vadd.f32 %v8544, %v9276
    %v9413 = vadd.f32 %v8549, %v9277
    %v9414 = vadd.f32 %v8552, %v9278
    %v9415 = vadd.f32 %v8557, %v9279
    %v9416 = vadd.f32 %v8560, %v9280
    %v9417 = vadd.f32 %v8565, %v9281
    %v9418 = vadd.f32 %v8568, %v9282
    %v9419 = vadd.f32 %v8573, %v9283
    %v9420 = vadd.f32 %v8576, %v9284
    %v9421 = vadd.f32 %v8581, %v9285
    %v9422 = vadd.f32 %v8584, %v9286
    %v9423 = vadd.f32 %v8589, %v9287
    %v9424 = vadd.f32 %v8592, %v9288
    %v9425 = vadd.f32 %v8597, %v9289
    %v9426 = vadd.f32 %v8600, %v9290
    %v9427 = vadd.f32 %v8605, %v9291
    %v9428 = vadd.f32 %v8608, %v9292
    %v9429 = vadd.f32 %v8613, %v9293
    %v9430 = vadd.f32 %v8616, %v9294
    %v9431 = vadd.f32 %v8621, %v9295
    %v9432 = vadd.f32 %v8624, %v9296
    %v9433 = vadd.f32 %v8629, %v9297
    %v9434 = vadd.f32 %v8632, %v9298
    %v9435 = vadd.f32 %v8637, %v9299
    %v9436 = vadd.f32 %v8640, %v9300
    %v9437 = vadd.f32 %v8645, %v9301
    %v9438 = vadd.f32 %v8648, %v9302
    %v9439 = vadd.f32 %v8653, %v9303
    %v9440 = vadd.f32 %v8656, %v9304
    %v9441 = vadd.f32 %v8661, %v9305
    %v9442 = vadd.f32 %v8664, %v9306
    %v9443 = vadd.f32 %v8669, %v9307
    %v9444 = vadd.f32 %v8672, %v9308
    %v9445 = vadd.f32 %v8677, %v9309
    %v9446 = vadd.f32 %v8680, %v9310
    %v9447 = vadd.f32 %v8685, %v9311
    %v9448 = vadd.f32 %v8688, %v9312
    %v9449 = vadd.f32 %v8693, %v9313
    %v9450 = vadd.f32 %v8696, %v9314
    %v9451 = vadd.f32 %v8701, %v9315
    %v9452 = vadd.f32 %v8704, %v9316
    %v9453 = vadd.f32 %v8709, %v9317
    %v9454 = vadd.f32 %v8712, %v9318
    %v9455 = vadd.f32 %v8717, %v9319
    %v9456 = vadd.f32 %v8720, %v9320
    %v9457 = vadd.f32 %v8725, %v9321
    %v9458 = vadd.f32 %v8728, %v9322
    %v9459 = vadd.f32 %v8733, %v9323
    %v9460 = vadd.f32 %v8736, %v9324
    %v9461 = vadd.f32 %v8741, %v9325
    %v9462 = vadd.f32 %v8744, %v9326
    %v9463 = vadd.f32 %v8749, %v9327
    %v9464 = vadd.f32 %v8752, %v9328
    %v9465 = vadd.f32 %v8757, %v9329
    %v9466 = vadd.f32 %v8760, %v9330
    %v9467 = vadd.f32 %v8765, %v9331
    %v9468 = vadd.f32 %v8768, %v9332
    %v9469 = vadd.f32 %v8773, %v9333
    %v9470 = vadd.f32 %v8776, %v9334
    %v9471 = vadd.f32 %v8781, %v9335
    %v9472 = vadd.f32 %v8784, %v9336
    %v9473 = vadd.f32 %v8789, %v9337
    %v9474 = vadd.f32 %v8792, %v9338
    %v9475 = vmul.f32 %v9339, 0.7978846
    %v9476 = vmul.f32 %v9340, 0.7978846
    %v9477 = vmul.f32 %v9341, 0.7978846
    %v9478 = vmul.f32 %v9342, 0.7978846
    %v9479 = vmul.f32 %v9343, 0.7978846
    %v9480 = vmul.f32 %v9344, 0.7978846
    %v9481 = vmul.f32 %v9345, 0.7978846
    %v9482 = vmul.f32 %v9346, 0.7978846
    %v9483 = vmul.f32 %v9347, 0.7978846
    %v9484 = vmul.f32 %v9348, 0.7978846
    %v9485 = vmul.f32 %v9349, 0.7978846
    %v9486 = vmul.f32 %v9350, 0.7978846
    %v9487 = vmul.f32 %v9351, 0.7978846
    %v9488 = vmul.f32 %v9352, 0.7978846
    %v9489 = vmul.f32 %v9353, 0.7978846
    %v9490 = vmul.f32 %v9354, 0.7978846
    %v9491 = vmul.f32 %v9355, 0.7978846
    %v9492 = vmul.f32 %v9356, 0.7978846
    %v9493 = vmul.f32 %v9357, 0.7978846
    %v9494 = vmul.f32 %v9358, 0.7978846
    %v9495 = vmul.f32 %v9359, 0.7978846
    %v9496 = vmul.f32 %v9360, 0.7978846
    %v9497 = vmul.f32 %v9361, 0.7978846
    %v9498 = vmul.f32 %v9362, 0.7978846
    %v9499 = vmul.f32 %v9363, 0.7978846
    %v9500 = vmul.f32 %v9364, 0.7978846
    %v9501 = vmul.f32 %v9365, 0.7978846
    %v9502 = vmul.f32 %v9366, 0.7978846
    %v9503 = vmul.f32 %v9367, 0.7978846
    %v9504 = vmul.f32 %v9368, 0.7978846
    %v9505 = vmul.f32 %v9369, 0.7978846
    %v9506 = vmul.f32 %v9370, 0.7978846
    %v9507 = vmul.f32 %v9371, 0.7978846
    %v9508 = vmul.f32 %v9372, 0.7978846
    %v9509 = vmul.f32 %v9373, 0.7978846
    %v9510 = vmul.f32 %v9374, 0.7978846
    %v9511 = vmul.f32 %v9375, 0.7978846
    %v9512 = vmul.f32 %v9376, 0.7978846
    %v9513 = vmul.f32 %v9377, 0.7978846
    %v9514 = vmul.f32 %v9378, 0.7978846
    %v9515 = vmul.f32 %v9379, 0.7978846
    %v9516 = vmul.f32 %v9380, 0.7978846
    %v9517 = vmul.f32 %v9381, 0.7978846
    %v9518 = vmul.f32 %v9382, 0.7978846
    %v9519 = vmul.f32 %v9383, 0.7978846
    %v9520 = vmul.f32 %v9384, 0.7978846
    %v9521 = vmul.f32 %v9385, 0.7978846
    %v9522 = vmul.f32 %v9386, 0.7978846
    %v9523 = vmul.f32 %v9387, 0.7978846
    %v9524 = vmul.f32 %v9388, 0.7978846
    %v9525 = vmul.f32 %v9389, 0.7978846
    %v9526 = vmul.f32 %v9390, 0.7978846
    %v9527 = vmul.f32 %v9391, 0.7978846
    %v9528 = vmul.f32 %v9392, 0.7978846
    %v9529 = vmul.f32 %v9393, 0.7978846
    %v9530 = vmul.f32 %v9394, 0.7978846
    %v9531 = vmul.f32 %v9395, 0.7978846
    %v9532 = vmul.f32 %v9396, 0.7978846
    %v9533 = vmul.f32 %v9397, 0.7978846
    %v9534 = vmul.f32 %v9398, 0.7978846
    %v9535 = vmul.f32 %v9399, 0.7978846
    %v9536 = vmul.f32 %v9400, 0.7978846
    %v9537 = vmul.f32 %v9401, 0.7978846
    %v9538 = vmul.f32 %v9402, 0.7978846
    %v9539 = vmul.f32 %v9403, 0.7978846
    %v9540 = vmul.f32 %v9404, 0.7978846
    %v9541 = vmul.f32 %v9405, 0.7978846
    %v9542 = vmul.f32 %v9406, 0.7978846
    %v9543 = vmul.f32 %v9407, 0.7978846
    %v9544 = vmul.f32 %v9408, 0.7978846
    %v9545 = vmul.f32 %v9409, 0.7978846
    %v9546 = vmul.f32 %v9410, 0.7978846
    %v9547 = vmul.f32 %v9411, 0.7978846
    %v9548 = vmul.f32 %v9412, 0.7978846
    %v9549 = vmul.f32 %v9413, 0.7978846
    %v9550 = vmul.f32 %v9414, 0.7978846
    %v9551 = vmul.f32 %v9415, 0.7978846
    %v9552 = vmul.f32 %v9416, 0.7978846
    %v9553 = vmul.f32 %v9417, 0.7978846
    %v9554 = vmul.f32 %v9418, 0.7978846
    %v9555 = vmul.f32 %v9419, 0.7978846
    %v9556 = vmul.f32 %v9420, 0.7978846
    %v9557 = vmul.f32 %v9421, 0.7978846
    %v9558 = vmul.f32 %v9422, 0.7978846
    %v9559 = vmul.f32 %v9423, 0.7978846
    %v9560 = vmul.f32 %v9424, 0.7978846
    %v9561 = vmul.f32 %v9425, 0.7978846
    %v9562 = vmul.f32 %v9426, 0.7978846
    %v9563 = vmul.f32 %v9427, 0.7978846
    %v9564 = vmul.f32 %v9428, 0.7978846
    %v9565 = vmul.f32 %v9429, 0.7978846
    %v9566 = vmul.f32 %v9430, 0.7978846
    %v9567 = vmul.f32 %v9431, 0.7978846
    %v9568 = vmul.f32 %v9432, 0.7978846
    %v9569 = vmul.f32 %v9433, 0.7978846
    %v9570 = vmul.f32 %v9434, 0.7978846
    %v9571 = vmul.f32 %v9435, 0.7978846
    %v9572 = vmul.f32 %v9436, 0.7978846
    %v9573 = vmul.f32 %v9437, 0.7978846
    %v9574 = vmul.f32 %v9438, 0.7978846
    %v9575 = vmul.f32 %v9439, 0.7978846
    %v9576 = vmul.f32 %v9440, 0.7978846
    %v9577 = vmul.f32 %v9441, 0.7978846
    %v9578 = vmul.f32 %v9442, 0.7978846
    %v9579 = vmul.f32 %v9443, 0.7978846
    %v9580 = vmul.f32 %v9444, 0.7978846
    %v9581 = vmul.f32 %v9445, 0.7978846
    %v9582 = vmul.f32 %v9446, 0.7978846
    %v9583 = vmul.f32 %v9447, 0.7978846
    %v9584 = vmul.f32 %v9448, 0.7978846
    %v9585 = vmul.f32 %v9449, 0.7978846
    %v9586 = vmul.f32 %v9450, 0.7978846
    %v9587 = vmul.f32 %v9451, 0.7978846
    %v9588 = vmul.f32 %v9452, 0.7978846
    %v9589 = vmul.f32 %v9453, 0.7978846
    %v9590 = vmul.f32 %v9454, 0.7978846
    %v9591 = vmul.f32 %v9455, 0.7978846
    %v9592 = vmul.f32 %v9456, 0.7978846
    %v9593 = vmul.f32 %v9457, 0.7978846
    %v9594 = vmul.f32 %v9458, 0.7978846
    %v9595 = vmul.f32 %v9459, 0.7978846
    %v9596 = vmul.f32 %v9460, 0.7978846
    %v9597 = vmul.f32 %v9461, 0.7978846
    %v9598 = vmul.f32 %v9462, 0.7978846
    %v9599 = vmul.f32 %v9463, 0.7978846
    %v9600 = vmul.f32 %v9464, 0.7978846
    %v9601 = vmul.f32 %v9465, 0.7978846
    %v9602 = vmul.f32 %v9466, 0.7978846
    %v9603 = vmul.f32 %v9467, 0.7978846
    %v9604 = vmul.f32 %v9468, 0.7978846
    %v9605 = vmul.f32 %v9469, 0.7978846
    %v9606 = vmul.f32 %v9470, 0.7978846
    %v9607 = vmul.f32 %v9471, 0.7978846
    %v9608 = vmul.f32 %v9472, 0.7978846
    %v9609 = vmul.f32 %v9473, 0.7978846
    %v9610 = vmul.f32 %v9474, 0.7978846
    %v9611 = vtanh.pop %v9475
    %v9612 = vtanh.pop %v9476
    %v9613 = vtanh.pop %v9477
    %v9614 = vtanh.pop %v9478
    %v9615 = vtanh.pop %v9479
    %v9616 = vtanh.pop %v9480
    %v9617 = vtanh.pop %v9481
    %v9618 = vtanh.pop %v9482
    %v9619 = vtanh.pop %v9483
    %v9620 = vtanh.pop %v9484
    %v9621 = vtanh.pop %v9485
    %v9622 = vtanh.pop %v9486
    %v9623 = vtanh.pop %v9487
    %v9624 = vtanh.pop %v9488
    %v9625 = vtanh.pop %v9489
    %v9626 = vtanh.pop %v9490
    %v9627 = vtanh.pop %v9491
    %v9628 = vtanh.pop %v9492
    %v9629 = vtanh.pop %v9493
    %v9630 = vtanh.pop %v9494
    %v9631 = vtanh.pop %v9495
    %v9632 = vtanh.pop %v9496
    %v9633 = vtanh.pop %v9497
    %v9634 = vtanh.pop %v9498
    %v9635 = vtanh.pop %v9499
    %v9636 = vtanh.pop %v9500
    %v9637 = vtanh.pop %v9501
    %v9638 = vtanh.pop %v9502
    %v9639 = vtanh.pop %v9503
    %v9640 = vtanh.pop %v9504
    %v9641 = vtanh.pop %v9505
    %v9642 = vtanh.pop %v9506
    %v9643 = vtanh.pop %v9507
    %v9644 = vtanh.pop %v9508
    %v9645 = vtanh.pop %v9509
    %v9646 = vtanh.pop %v9510
    %v9647 = vtanh.pop %v9511
    %v9648 = vtanh.pop %v9512
    %v9649 = vtanh.pop %v9513
    %v9650 = vtanh.pop %v9514
    %v9651 = vtanh.pop %v9515
    %v9652 = vtanh.pop %v9516
    %v9653 = vtanh.pop %v9517
    %v9654 = vtanh.pop %v9518
    %v9655 = vtanh.pop %v9519
    %v9656 = vtanh.pop %v9520
    %v9657 = vtanh.pop %v9521
    %v9658 = vtanh.pop %v9522
    %v9659 = vtanh.pop %v9523
    %v9660 = vtanh.pop %v9524
    %v9661 = vtanh.pop %v9525
    %v9662 = vtanh.pop %v9526
    %v9663 = vtanh.pop %v9527
    %v9664 = vtanh.pop %v9528
    %v9665 = vtanh.pop %v9529
    %v9666 = vtanh.pop %v9530
    %v9667 = vtanh.pop %v9531
    %v9668 = vtanh.pop %v9532
    %v9669 = vtanh.pop %v9533
    %v9670 = vtanh.pop %v9534
    %v9671 = vtanh.pop %v9535
    %v9672 = vtanh.pop %v9536
    %v9673 = vtanh.pop %v9537
    %v9674 = vtanh.pop %v9538
    %v9675 = vtanh.pop %v9539
    %v9676 = vtanh.pop %v9540
    %v9677 = vtanh.pop %v9541
    %v9678 = vtanh.pop %v9542
    %v9679 = vtanh.pop %v9543
    %v9680 = vtanh.pop %v9544
    %v9681 = vtanh.pop %v9545
    %v9682 = vtanh.pop %v9546
    %v9683 = vtanh.pop %v9547
    %v9684 = vtanh.pop %v9548
    %v9685 = vtanh.pop %v9549
    %v9686 = vtanh.pop %v9550
    %v9687 = vtanh.pop %v9551
    %v9688 = vtanh.pop %v9552
    %v9689 = vtanh.pop %v9553
    %v9690 = vtanh.pop %v9554
    %v9691 = vtanh.pop %v9555
    %v9692 = vtanh.pop %v9556
    %v9693 = vtanh.pop %v9557
    %v9694 = vtanh.pop %v9558
    %v9695 = vtanh.pop %v9559
    %v9696 = vtanh.pop %v9560
    %v9697 = vtanh.pop %v9561
    %v9698 = vtanh.pop %v9562
    %v9699 = vtanh.pop %v9563
    %v9700 = vtanh.pop %v9564
    %v9701 = vtanh.pop %v9565
    %v9702 = vtanh.pop %v9566
    %v9703 = vtanh.pop %v9567
    %v9704 = vtanh.pop %v9568
    %v9705 = vtanh.pop %v9569
    %v9706 = vtanh.pop %v9570
    %v9707 = vtanh.pop %v9571
    %v9708 = vtanh.pop %v9572
    %v9709 = vtanh.pop %v9573
    %v9710 = vtanh.pop %v9574
    %v9711 = vtanh.pop %v9575
    %v9712 = vtanh.pop %v9576
    %v9713 = vtanh.pop %v9577
    %v9714 = vtanh.pop %v9578
    %v9715 = vtanh.pop %v9579
    %v9716 = vtanh.pop %v9580
    %v9717 = vtanh.pop %v9581
    %v9718 = vtanh.pop %v9582
    %v9719 = vtanh.pop %v9583
    %v9720 = vtanh.pop %v9584
    %v9721 = vtanh.pop %v9585
    %v9722 = vtanh.pop %v9586
    %v9723 = vtanh.pop %v9587
    %v9724 = vtanh.pop %v9588
    %v9725 = vtanh.pop %v9589
    %v9726 = vtanh.pop %v9590
    %v9727 = vtanh.pop %v9591
    %v9728 = vtanh.pop %v9592
    %v9729 = vtanh.pop %v9593
    %v9730 = vtanh.pop %v9594
    %v9731 = vtanh.pop %v9595
    %v9732 = vtanh.pop %v9596
    %v9733 = vtanh.pop %v9597
    %v9734 = vtanh.pop %v9598
    %v9735 = vtanh.pop %v9599
    %v9736 = vtanh.pop %v9600
    %v9737 = vtanh.pop %v9601
    %v9738 = vtanh.pop %v9602
    %v9739 = vtanh.pop %v9603
    %v9740 = vtanh.pop %v9604
    %v9741 = vtanh.pop %v9605
    %v9742 = vtanh.pop %v9606
    %v9743 = vtanh.pop %v9607
    %v9744 = vtanh.pop %v9608
    %v9745 = vtanh.pop %v9609
    %v9746 = vtanh.pop %v9610
    %v9747 = vadd.f32 %v9611, 1.0
    %v9748 = vadd.f32 %v9612, 1.0
    %v9749 = vadd.f32 %v9613, 1.0
    %v9750 = vadd.f32 %v9614, 1.0
    %v9751 = vadd.f32 %v9615, 1.0
    %v9752 = vadd.f32 %v9616, 1.0
    %v9753 = vadd.f32 %v9617, 1.0
    %v9754 = vadd.f32 %v9618, 1.0
    %v9755 = vadd.f32 %v9619, 1.0
    %v9756 = vadd.f32 %v9620, 1.0
    %v9757 = vadd.f32 %v9621, 1.0
    %v9758 = vadd.f32 %v9622, 1.0
    %v9759 = vadd.f32 %v9623, 1.0
    %v9760 = vadd.f32 %v9624, 1.0
    %v9761 = vadd.f32 %v9625, 1.0
    %v9762 = vadd.f32 %v9626, 1.0
    %v9763 = vadd.f32 %v9627, 1.0
    %v9764 = vadd.f32 %v9628, 1.0
    %v9765 = vadd.f32 %v9629, 1.0
    %v9766 = vadd.f32 %v9630, 1.0
    %v9767 = vadd.f32 %v9631, 1.0
    %v9768 = vadd.f32 %v9632, 1.0
    %v9769 = vadd.f32 %v9633, 1.0
    %v9770 = vadd.f32 %v9634, 1.0
    %v9771 = vadd.f32 %v9635, 1.0
    %v9772 = vadd.f32 %v9636, 1.0
    %v9773 = vadd.f32 %v9637, 1.0
    %v9774 = vadd.f32 %v9638, 1.0
    %v9775 = vadd.f32 %v9639, 1.0
    %v9776 = vadd.f32 %v9640, 1.0
    %v9777 = vadd.f32 %v9641, 1.0
    %v9778 = vadd.f32 %v9642, 1.0
    %v9779 = vadd.f32 %v9643, 1.0
    %v9780 = vadd.f32 %v9644, 1.0
    %v9781 = vadd.f32 %v9645, 1.0
    %v9782 = vadd.f32 %v9646, 1.0
    %v9783 = vadd.f32 %v9647, 1.0
    %v9784 = vadd.f32 %v9648, 1.0
    %v9785 = vadd.f32 %v9649, 1.0
    %v9786 = vadd.f32 %v9650, 1.0
    %v9787 = vadd.f32 %v9651, 1.0
    %v9788 = vadd.f32 %v9652, 1.0
    %v9789 = vadd.f32 %v9653, 1.0
    %v9790 = vadd.f32 %v9654, 1.0
    %v9791 = vadd.f32 %v9655, 1.0
    %v9792 = vadd.f32 %v9656, 1.0
    %v9793 = vadd.f32 %v9657, 1.0
    %v9794 = vadd.f32 %v9658, 1.0
    %v9795 = vadd.f32 %v9659, 1.0
    %v9796 = vadd.f32 %v9660, 1.0
    %v9797 = vadd.f32 %v9661, 1.0
    %v9798 = vadd.f32 %v9662, 1.0
    %v9799 = vadd.f32 %v9663, 1.0
    %v9800 = vadd.f32 %v9664, 1.0
    %v9801 = vadd.f32 %v9665, 1.0
    %v9802 = vadd.f32 %v9666, 1.0
    %v9803 = vadd.f32 %v9667, 1.0
    %v9804 = vadd.f32 %v9668, 1.0
    %v9805 = vadd.f32 %v9669, 1.0
    %v9806 = vadd.f32 %v9670, 1.0
    %v9807 = vadd.f32 %v9671, 1.0
    %v9808 = vadd.f32 %v9672, 1.0
    %v9809 = vadd.f32 %v9673, 1.0
    %v9810 = vadd.f32 %v9674, 1.0
    %v9811 = vadd.f32 %v9675, 1.0
    %v9812 = vadd.f32 %v9676, 1.0
    %v9813 = vadd.f32 %v9677, 1.0
    %v9814 = vadd.f32 %v9678, 1.0
    %v9815 = vadd.f32 %v9679, 1.0
    %v9816 = vadd.f32 %v9680, 1.0
    %v9817 = vadd.f32 %v9681, 1.0
    %v9818 = vadd.f32 %v9682, 1.0
    %v9819 = vadd.f32 %v9683, 1.0
    %v9820 = vadd.f32 %v9684, 1.0
    %v9821 = vadd.f32 %v9685, 1.0
    %v9822 = vadd.f32 %v9686, 1.0
    %v9823 = vadd.f32 %v9687, 1.0
    %v9824 = vadd.f32 %v9688, 1.0
    %v9825 = vadd.f32 %v9689, 1.0
    %v9826 = vadd.f32 %v9690, 1.0
    %v9827 = vadd.f32 %v9691, 1.0
    %v9828 = vadd.f32 %v9692, 1.0
    %v9829 = vadd.f32 %v9693, 1.0
    %v9830 = vadd.f32 %v9694, 1.0
    %v9831 = vadd.f32 %v9695, 1.0
    %v9832 = vadd.f32 %v9696, 1.0
    %v9833 = vadd.f32 %v9697, 1.0
    %v9834 = vadd.f32 %v9698, 1.0
    %v9835 = vadd.f32 %v9699, 1.0
    %v9836 = vadd.f32 %v9700, 1.0
    %v9837 = vadd.f32 %v9701, 1.0
    %v9838 = vadd.f32 %v9702, 1.0
    %v9839 = vadd.f32 %v9703, 1.0
    %v9840 = vadd.f32 %v9704, 1.0
    %v9841 = vadd.f32 %v9705, 1.0
    %v9842 = vadd.f32 %v9706, 1.0
    %v9843 = vadd.f32 %v9707, 1.0
    %v9844 = vadd.f32 %v9708, 1.0
    %v9845 = vadd.f32 %v9709, 1.0
    %v9846 = vadd.f32 %v9710, 1.0
    %v9847 = vadd.f32 %v9711, 1.0
    %v9848 = vadd.f32 %v9712, 1.0
    %v9849 = vadd.f32 %v9713, 1.0
    %v9850 = vadd.f32 %v9714, 1.0
    %v9851 = vadd.f32 %v9715, 1.0
    %v9852 = vadd.f32 %v9716, 1.0
    %v9853 = vadd.f32 %v9717, 1.0
    %v9854 = vadd.f32 %v9718, 1.0
    %v9855 = vadd.f32 %v9719, 1.0
    %v9856 = vadd.f32 %v9720, 1.0
    %v9857 = vadd.f32 %v9721, 1.0
    %v9858 = vadd.f32 %v9722, 1.0
    %v9859 = vadd.f32 %v9723, 1.0
    %v9860 = vadd.f32 %v9724, 1.0
    %v9861 = vadd.f32 %v9725, 1.0
    %v9862 = vadd.f32 %v9726, 1.0
    %v9863 = vadd.f32 %v9727, 1.0
    %v9864 = vadd.f32 %v9728, 1.0
    %v9865 = vadd.f32 %v9729, 1.0
    %v9866 = vadd.f32 %v9730, 1.0
    %v9867 = vadd.f32 %v9731, 1.0
    %v9868 = vadd.f32 %v9732, 1.0
    %v9869 = vadd.f32 %v9733, 1.0
    %v9870 = vadd.f32 %v9734, 1.0
    %v9871 = vadd.f32 %v9735, 1.0
    %v9872 = vadd.f32 %v9736, 1.0
    %v9873 = vadd.f32 %v9737, 1.0
    %v9874 = vadd.f32 %v9738, 1.0
    %v9875 = vadd.f32 %v9739, 1.0
    %v9876 = vadd.f32 %v9740, 1.0
    %v9877 = vadd.f32 %v9741, 1.0
    %v9878 = vadd.f32 %v9742, 1.0
    %v9879 = vadd.f32 %v9743, 1.0
    %v9880 = vadd.f32 %v9744, 1.0
    %v9881 = vadd.f32 %v9745, 1.0
    %v9882 = vadd.f32 %v9746, 1.0
    %v9883 = vmul.f32 %v8795, %v9747
    %v9884 = vmul.f32 %v8796, %v9748
    %v9885 = vmul.f32 %v8797, %v9749
    %v9886 = vmul.f32 %v8798, %v9750
    %v9887 = vmul.f32 %v8799, %v9751
    %v9888 = vmul.f32 %v8800, %v9752
    %v9889 = vmul.f32 %v8801, %v9753
    %v9890 = vmul.f32 %v8802, %v9754
    %v9891 = vmul.f32 %v8803, %v9755
    %v9892 = vmul.f32 %v8804, %v9756
    %v9893 = vmul.f32 %v8805, %v9757
    %v9894 = vmul.f32 %v8806, %v9758
    %v9895 = vmul.f32 %v8807, %v9759
    %v9896 = vmul.f32 %v8808, %v9760
    %v9897 = vmul.f32 %v8809, %v9761
    %v9898 = vmul.f32 %v8810, %v9762
    %v9899 = vmul.f32 %v8811, %v9763
    %v9900 = vmul.f32 %v8812, %v9764
    %v9901 = vmul.f32 %v8813, %v9765
    %v9902 = vmul.f32 %v8814, %v9766
    %v9903 = vmul.f32 %v8815, %v9767
    %v9904 = vmul.f32 %v8816, %v9768
    %v9905 = vmul.f32 %v8817, %v9769
    %v9906 = vmul.f32 %v8818, %v9770
    %v9907 = vmul.f32 %v8819, %v9771
    %v9908 = vmul.f32 %v8820, %v9772
    %v9909 = vmul.f32 %v8821, %v9773
    %v9910 = vmul.f32 %v8822, %v9774
    %v9911 = vmul.f32 %v8823, %v9775
    %v9912 = vmul.f32 %v8824, %v9776
    %v9913 = vmul.f32 %v8825, %v9777
    %v9914 = vmul.f32 %v8826, %v9778
    %v9915 = vmul.f32 %v8827, %v9779
    %v9916 = vmul.f32 %v8828, %v9780
    %v9917 = vmul.f32 %v8829, %v9781
    %v9918 = vmul.f32 %v8830, %v9782
    %v9919 = vmul.f32 %v8831, %v9783
    %v9920 = vmul.f32 %v8832, %v9784
    %v9921 = vmul.f32 %v8833, %v9785
    %v9922 = vmul.f32 %v8834, %v9786
    %v9923 = vmul.f32 %v8835, %v9787
    %v9924 = vmul.f32 %v8836, %v9788
    %v9925 = vmul.f32 %v8837, %v9789
    %v9926 = vmul.f32 %v8838, %v9790
    %v9927 = vmul.f32 %v8839, %v9791
    %v9928 = vmul.f32 %v8840, %v9792
    %v9929 = vmul.f32 %v8841, %v9793
    %v9930 = vmul.f32 %v8842, %v9794
    %v9931 = vmul.f32 %v8843, %v9795
    %v9932 = vmul.f32 %v8844, %v9796
    %v9933 = vmul.f32 %v8845, %v9797
    %v9934 = vmul.f32 %v8846, %v9798
    %v9935 = vmul.f32 %v8847, %v9799
    %v9936 = vmul.f32 %v8848, %v9800
    %v9937 = vmul.f32 %v8849, %v9801
    %v9938 = vmul.f32 %v8850, %v9802
    %v9939 = vmul.f32 %v8851, %v9803
    %v9940 = vmul.f32 %v8852, %v9804
    %v9941 = vmul.f32 %v8853, %v9805
    %v9942 = vmul.f32 %v8854, %v9806
    %v9943 = vmul.f32 %v8855, %v9807
    %v9944 = vmul.f32 %v8856, %v9808
    %v9945 = vmul.f32 %v8857, %v9809
    %v9946 = vmul.f32 %v8858, %v9810
    %v9947 = vmul.f32 %v8859, %v9811
    %v9948 = vmul.f32 %v8860, %v9812
    %v9949 = vmul.f32 %v8861, %v9813
    %v9950 = vmul.f32 %v8862, %v9814
    %v9951 = vmul.f32 %v8863, %v9815
    %v9952 = vmul.f32 %v8864, %v9816
    %v9953 = vmul.f32 %v8865, %v9817
    %v9954 = vmul.f32 %v8866, %v9818
    %v9955 = vmul.f32 %v8867, %v9819
    %v9956 = vmul.f32 %v8868, %v9820
    %v9957 = vmul.f32 %v8869, %v9821
    %v9958 = vmul.f32 %v8870, %v9822
    %v9959 = vmul.f32 %v8871, %v9823
    %v9960 = vmul.f32 %v8872, %v9824
    %v9961 = vmul.f32 %v8873, %v9825
    %v9962 = vmul.f32 %v8874, %v9826
    %v9963 = vmul.f32 %v8875, %v9827
    %v9964 = vmul.f32 %v8876, %v9828
    %v9965 = vmul.f32 %v8877, %v9829
    %v9966 = vmul.f32 %v8878, %v9830
    %v9967 = vmul.f32 %v8879, %v9831
    %v9968 = vmul.f32 %v8880, %v9832
    %v9969 = vmul.f32 %v8881, %v9833
    %v9970 = vmul.f32 %v8882, %v9834
    %v9971 = vmul.f32 %v8883, %v9835
    %v9972 = vmul.f32 %v8884, %v9836
    %v9973 = vmul.f32 %v8885, %v9837
    %v9974 = vmul.f32 %v8886, %v9838
    %v9975 = vmul.f32 %v8887, %v9839
    %v9976 = vmul.f32 %v8888, %v9840
    %v9977 = vmul.f32 %v8889, %v9841
    %v9978 = vmul.f32 %v8890, %v9842
    %v9979 = vmul.f32 %v8891, %v9843
    %v9980 = vmul.f32 %v8892, %v9844
    %v9981 = vmul.f32 %v8893, %v9845
    %v9982 = vmul.f32 %v8894, %v9846
    %v9983 = vmul.f32 %v8895, %v9847
    %v9984 = vmul.f32 %v8896, %v9848
    %v9985 = vmul.f32 %v8897, %v9849
    %v9986 = vmul.f32 %v8898, %v9850
    %v9987 = vmul.f32 %v8899, %v9851
    %v9988 = vmul.f32 %v8900, %v9852
    %v9989 = vmul.f32 %v8901, %v9853
    %v9990 = vmul.f32 %v8902, %v9854
    %v9991 = vmul.f32 %v8903, %v9855
    %v9992 = vmul.f32 %v8904, %v9856
    %v9993 = vmul.f32 %v8905, %v9857
    %v9994 = vmul.f32 %v8906, %v9858
    %v9995 = vmul.f32 %v8907, %v9859
    %v9996 = vmul.f32 %v8908, %v9860
    %v9997 = vmul.f32 %v8909, %v9861
    %v9998 = vmul.f32 %v8910, %v9862
    %v9999 = vmul.f32 %v8911, %v9863
    %v10000 = vmul.f32 %v8912, %v9864
    %v10001 = vmul.f32 %v8913, %v9865
    %v10002 = vmul.f32 %v8914, %v9866
    %v10003 = vmul.f32 %v8915, %v9867
    %v10004 = vmul.f32 %v8916, %v9868
    %v10005 = vmul.f32 %v8917, %v9869
    %v10006 = vmul.f32 %v8918, %v9870
    %v10007 = vmul.f32 %v8919, %v9871
    %v10008 = vmul.f32 %v8920, %v9872
    %v10009 = vmul.f32 %v8921, %v9873
    %v10010 = vmul.f32 %v8922, %v9874
    %v10011 = vmul.f32 %v8923, %v9875
    %v10012 = vmul.f32 %v8924, %v9876
    %v10013 = vmul.f32 %v8925, %v9877
    %v10014 = vmul.f32 %v8926, %v9878
    %v10015 = vmul.f32 %v8927, %v9879
    %v10016 = vmul.f32 %v8928, %v9880
    %v10017 = vmul.f32 %v8929, %v9881
    %v10018 = vmul.f32 %v8930, %v9882
    %v10019 = vpack.c.bf16 %v9884, %v9883
    %v10020 = vpack.c.bf16 %v9886, %v9885
    %v10021 = vpack.c.bf16 %v9888, %v9887
    %v10022 = vpack.c.bf16 %v9890, %v9889
    %v10023 = vpack.c.bf16 %v9892, %v9891
    %v10024 = vpack.c.bf16 %v9894, %v9893
    %v10025 = vpack.c.bf16 %v9896, %v9895
    %v10026 = vpack.c.bf16 %v9898, %v9897
    %v10027 = vpack.c.bf16 %v9900, %v9899
    %v10028 = vpack.c.bf16 %v9902, %v9901
    %v10029 = vpack.c.bf16 %v9904, %v9903
    %v10030 = vpack.c.bf16 %v9906, %v9905
    %v10031 = vpack.c.bf16 %v9908, %v9907
    %v10032 = vpack.c.bf16 %v9910, %v9909
    %v10033 = vpack.c.bf16 %v9912, %v9911
    %v10034 = vpack.c.bf16 %v9914, %v9913
    %v10035 = vpack.c.bf16 %v9916, %v9915
    %v10036 = vpack.c.bf16 %v9918, %v9917
    %v10037 = vpack.c.bf16 %v9920, %v9919
    %v10038 = vpack.c.bf16 %v9922, %v9921
    %v10039 = vpack.c.bf16 %v9924, %v9923
    %v10040 = vpack.c.bf16 %v9926, %v9925
    %v10041 = vpack.c.bf16 %v9928, %v9927
    %v10042 = vpack.c.bf16 %v9930, %v9929
    %v10043 = vpack.c.bf16 %v9932, %v9931
    %v10044 = vpack.c.bf16 %v9934, %v9933
    %v10045 = vpack.c.bf16 %v9936, %v9935
    %v10046 = vpack.c.bf16 %v9938, %v9937
    %v10047 = vpack.c.bf16 %v9940, %v9939
    %v10048 = vpack.c.bf16 %v9942, %v9941
    %v10049 = vpack.c.bf16 %v9944, %v9943
    %v10050 = vpack.c.bf16 %v9946, %v9945
    %v10051 = vpack.c.bf16 %v9948, %v9947
    %v10052 = vpack.c.bf16 %v9950, %v9949
    %v10053 = vpack.c.bf16 %v9952, %v9951
    %v10054 = vpack.c.bf16 %v9954, %v9953
    %v10055 = vpack.c.bf16 %v9956, %v9955
    %v10056 = vpack.c.bf16 %v9958, %v9957
    %v10057 = vpack.c.bf16 %v9960, %v9959
    %v10058 = vpack.c.bf16 %v9962, %v9961
    %v10059 = vpack.c.bf16 %v9964, %v9963
    %v10060 = vpack.c.bf16 %v9966, %v9965
    %v10061 = vpack.c.bf16 %v9968, %v9967
    %v10062 = vpack.c.bf16 %v9970, %v9969
    %v10063 = vpack.c.bf16 %v9972, %v9971
    %v10064 = vpack.c.bf16 %v9974, %v9973
    %v10065 = vpack.c.bf16 %v9976, %v9975
    %v10066 = vpack.c.bf16 %v9978, %v9977
    %v10067 = vpack.c.bf16 %v9980, %v9979
    %v10068 = vpack.c.bf16 %v9982, %v9981
    %v10069 = vpack.c.bf16 %v9984, %v9983
    %v10070 = vpack.c.bf16 %v9986, %v9985
    %v10071 = vpack.c.bf16 %v9988, %v9987
    %v10072 = vpack.c.bf16 %v9990, %v9989
    %v10073 = vpack.c.bf16 %v9992, %v9991
    %v10074 = vpack.c.bf16 %v9994, %v9993
    %v10075 = vpack.c.bf16 %v9996, %v9995
    %v10076 = vpack.c.bf16 %v9998, %v9997
    %v10077 = vpack.c.bf16 %v10000, %v9999
    %v10078 = vpack.c.bf16 %v10002, %v10001
    %v10079 = vpack.c.bf16 %v10004, %v10003
    %v10080 = vpack.c.bf16 %v10006, %v10005
    %v10081 = vpack.c.bf16 %v10008, %v10007
    %v10082 = vpack.c.bf16 %v10010, %v10009
    %v10083 = vpack.c.bf16 %v10012, %v10011
    %v10084 = vpack.c.bf16 %v10014, %v10013
    %v10085 = vpack.c.bf16 %v10016, %v10015
    %v10086 = vpack.c.bf16 %v10018, %v10017
    %v10087 = vld [vmem:[#allocation10] sm:$0xf]
    %v10088 = vld [vmem:[#allocation10 + $0x4] sm:$0xf]
    %v10089 = vld [vmem:[#allocation10 + $0x8] sm:$0xf]
    %v10090 = vld [vmem:[#allocation10 + $0xc] sm:$0xf]
    %v10091 = vld [vmem:[#allocation10 + $0x10] sm:$0xf]
    %v10092 = vld [vmem:[#allocation10 + $0x14] sm:$0xf]
    %v10093 = vld [vmem:[#allocation10 + $0x18] sm:$0xf]
    %v10094 = vld [vmem:[#allocation10 + $0x1c] sm:$0xf]
    %v10095 = vld [vmem:[#allocation10 + $0x20] sm:$0xf]
    %v10096 = vld [vmem:[#allocation10 + $0x24] sm:$0xf]
    %v10097 = vld [vmem:[#allocation10 + $0x28] sm:$0xf]
    %v10098 = vld [vmem:[#allocation10 + $0x2c] sm:$0xf]
    %v10099 = vld [vmem:[#allocation10 + $0x30] sm:$0xf]
    %v10100 = vld [vmem:[#allocation10 + $0x34] sm:$0xf]
    %v10101 = vld [vmem:[#allocation10 + $0x38] sm:$0xf]
    %v10102 = vld [vmem:[#allocation10 + $0x3c] sm:$0xf]
    %v10103 = vld [vmem:[%s12] sm:$0x1]
    %v10105 = vlaneseq
    %v10106 = vshrl.u32 %v10105, 7
    %v10107 = vsub.s32 0, %v10106
    %v10108 = vrot.slane %v10103, %v10107
    %v10126 = vunpack.c.l.b16 %v10087
    %v10127 = vunpack.c.l.b16 %v10088
    %v10128 = vunpack.c.l.b16 %v10089
    %v10129 = vunpack.c.l.b16 %v10090
    %v10130 = vunpack.c.l.b16 %v10091
    %v10131 = vunpack.c.l.b16 %v10092
    %v10132 = vunpack.c.l.b16 %v10093
    %v10133 = vunpack.c.l.b16 %v10094
    %v10134 = vunpack.c.l.b16 %v10095
    %v10135 = vunpack.c.l.b16 %v10096
    %v10136 = vunpack.c.l.b16 %v10097
    %v10137 = vunpack.c.l.b16 %v10098
    %v10138 = vunpack.c.l.b16 %v10099
    %v10139 = vunpack.c.l.b16 %v10100
    %v10140 = vunpack.c.l.b16 %v10101
    %v10141 = vunpack.c.l.b16 %v10102
    %v10142 = vpack.c.b16 %v10127, %v10126
    %v10143 = vpack.c.b16 %v10129, %v10128
    %v10144 = vpack.c.b16 %v10131, %v10130
    %v10145 = vpack.c.b16 %v10133, %v10132
    %v10146 = vpack.c.b16 %v10135, %v10134
    %v10147 = vpack.c.b16 %v10137, %v10136
    %v10148 = vpack.c.b16 %v10139, %v10138
    %v10149 = vpack.c.b16 %v10141, %v10140
    %10158 = vmatprep.subr.bf16.mxu0 0
    %10159 = vmatpush1.bf16.msra.mxu0 %v10142
    %10160 = vmatprep.subr.bf16.mxu0 0
    %10161 = vmatpush1.bf16.msra.mxu0 %v10143
    %10162 = vmatprep.subr.bf16.mxu0 0
    %10163 = vmatpush1.bf16.msra.mxu0 %v10144
    %10164 = vmatprep.subr.bf16.mxu0 0
    %10165 = vmatpush1.bf16.msra.mxu0 %v10145
    %10166 = vmatprep.subr.bf16.mxu0 0
    %10167 = vmatpush1.bf16.msra.mxu0 %v10146
    %10168 = vmatprep.subr.bf16.mxu0 0
    %10169 = vmatpush1.bf16.msra.mxu0 %v10147
    %10170 = vmatprep.subr.bf16.mxu0 0
    %10171 = vmatpush1.bf16.msra.mxu0 %v10148
    %10172 = vmatprep.subr.bf16.mxu0 0
    %10173 = vmatpush1.bf16.msra.mxu0 %v10149
    %10174 = vmatprep.subr.bf16.mxu0 0
    %10175 = vmatpush1.bf16.msra.mxu0 0
    %10176 = vmatprep.subr.bf16.mxu0 0
    %10177 = vmatpush1.bf16.msra.mxu0 0
    %10178 = vmatprep.subr.bf16.mxu0 0
    %10179 = vmatpush1.bf16.msra.mxu0 0
    %10180 = vmatprep.subr.bf16.mxu0 0
    %10181 = vmatpush1.bf16.msra.mxu0 0
    %10182 = vmatprep.subr.bf16.mxu0 0
    %10183 = vmatpush1.bf16.msra.mxu0 0
    %10184 = vmatprep.subr.bf16.mxu0 0
    %10185 = vmatpush1.bf16.msra.mxu0 0
    %10186 = vmatprep.subr.bf16.mxu0 0
    %10187 = vmatpush1.bf16.msra.mxu0 0
    %10188 = vmatprep.subr.bf16.mxu0 0
    %10189 = vmatpush1.bf16.msra.mxu0 0
    %10190 = vmatprep.mubr.bf16.mxu0 0
    %10191 = vmatmul.mubr.bf16.gmra.mrb[0].mxu0 %v10019
    %v10192 = vpop.f32.mrb[0].mxu0
    %v10193 = vadd.f32 %v10108, %v10192
    %v10194 = vpop.f32.mrb[0].mxu0
    %v10195 = vpop.f32.mrb[0].mxu0
    %v10196 = vadd.f32 %v10108, %v10195
    %v10197 = vpop.f32.mrb[0].mxu0
    %10198 = vmatprep.mubr.bf16.mxu0 0
    %10199 = vmatmul.mubr.bf16.gmra.mrb[0].mxu0 %v10020
    %v10200 = vpop.f32.mrb[0].mxu0
    %v10201 = vadd.f32 %v10108, %v10200
    %v10202 = vpop.f32.mrb[0].mxu0
    %v10203 = vpop.f32.mrb[0].mxu0
    %v10204 = vadd.f32 %v10108, %v10203
    %v10205 = vpop.f32.mrb[0].mxu0
    %10206 = vmatprep.mubr.bf16.mxu0 0
    %10207 = vmatmul.mubr.bf16.gmra.mrb[0].mxu0 %v10021
    %v10208 = vpop.f32.mrb[0].mxu0
    %v10209 = vadd.f32 %v10108, %v10208
    %v10210 = vpop.f32.mrb[0].mxu0
    %v10211 = vpop.f32.mrb[0].mxu0
    %v10212 = vadd.f32 %v10108, %v10211
    %v10213 = vpop.f32.mrb[0].mxu0
    %10214 = vmatprep.mubr.bf16.mxu0 0
    %10215 = vmatmul.mubr.bf16.gmra.mrb[0].mxu0 %v10022
    %v10216 = vpop.f32.mrb[0].mxu0
    %v10217 = vadd.f32 %v10108, %v10216
    %v10218 = vpop.f32.mrb[0].mxu0
    %v10219 = vpop.f32.mrb[0].mxu0
    %v10220 = vadd.f32 %v10108, %v10219
    %v10221 = vpop.f32.mrb[0].mxu0
    %10222 = vmatprep.mubr.bf16.mxu0 0
    %10223 = vmatmul.mubr.bf16.gmra.mrb[0].mxu0 %v10023
    %v10224 = vpop.f32.mrb[0].mxu0
    %v10225 = vadd.f32 %v10108, %v10224
    %v10226 = vpop.f32.mrb[0].mxu0
    %v10227 = vpop.f32.mrb[0].mxu0
    %v10228 = vadd.f32 %v10108, %v10227
    %v10229 = vpop.f32.mrb[0].mxu0
    %10230 = vmatprep.mubr.bf16.mxu0 0
    %10231 = vmatmul.mubr.bf16.gmra.mrb[0].mxu0 %v10024
    %v10232 = vpop.f32.mrb[0].mxu0
    %v10233 = vadd.f32 %v10108, %v10232
    %v10234 = vpop.f32.mrb[0].mxu0
    %v10235 = vpop.f32.mrb[0].mxu0
    %v10236 = vadd.f32 %v10108, %v10235
    %v10237 = vpop.f32.mrb[0].mxu0
    %10238 = vmatprep.mubr.bf16.mxu0 0
    %10239 = vmatmul.mubr.bf16.gmra.mrb[0].mxu0 %v10025
    %v10240 = vpop.f32.mrb[0].mxu0
    %v10241 = vadd.f32 %v10108, %v10240
    %v10242 = vpop.f32.mrb[0].mxu0
    %v10243 = vpop.f32.mrb[0].mxu0
    %v10244 = vadd.f32 %v10108, %v10243
    %v10245 = vpop.f32.mrb[0].mxu0
    %10246 = vmatprep.mubr.bf16.mxu0 0
    %10247 = vmatmul.mubr.bf16.gmra.mrb[0].mxu0 %v10026
    %v10248 = vpop.f32.mrb[0].mxu0
    %v10249 = vadd.f32 %v10108, %v10248
    %v10250 = vpop.f32.mrb[0].mxu0
    %v10251 = vpop.f32.mrb[0].mxu0
    %v10252 = vadd.f32 %v10108, %v10251
    %v10253 = vpop.f32.mrb[0].mxu0
    %10254 = vmatprep.mubr.bf16.mxu0 0
    %10255 = vmatmul.mubr.bf16.gmra.mrb[0].mxu0 %v10027
    %v10256 = vpop.f32.mrb[0].mxu0
    %v10257 = vadd.f32 %v10108, %v10256
    %v10258 = vpop.f32.mrb[0].mxu0
    %v10259 = vpop.f32.mrb[0].mxu0
    %v10260 = vadd.f32 %v10108, %v10259
    %v10261 = vpop.f32.mrb[0].mxu0
    %10262 = vmatprep.mubr.bf16.mxu0 0
    %10263 = vmatmul.mubr.bf16.gmra.mrb[0].mxu0 %v10028
    %v10264 = vpop.f32.mrb[0].mxu0
    %v10265 = vadd.f32 %v10108, %v10264
    %v10266 = vpop.f32.mrb[0].mxu0
    %v10267 = vpop.f32.mrb[0].mxu0
    %v10268 = vadd.f32 %v10108, %v10267
    %v10269 = vpop.f32.mrb[0].mxu0
    %10270 = vmatprep.mubr.bf16.mxu0 0
    %10271 = vmatmul.mubr.bf16.gmra.mrb[0].mxu0 %v10029
    %v10272 = vpop.f32.mrb[0].mxu0
    %v10273 = vadd.f32 %v10108, %v10272
    %v10274 = vpop.f32.mrb[0].mxu0
    %v10275 = vpop.f32.mrb[0].mxu0
    %v10276 = vadd.f32 %v10108, %v10275
    %v10277 = vpop.f32.mrb[0].mxu0
    %10278 = vmatprep.mubr.bf16.mxu0 0
    %10279 = vmatmul.mubr.bf16.gmra.mrb[0].mxu0 %v10030
    %v10280 = vpop.f32.mrb[0].mxu0
    %v10281 = vadd.f32 %v10108, %v10280
    %v10282 = vpop.f32.mrb[0].mxu0
    %v10283 = vpop.f32.mrb[0].mxu0
    %v10284 = vadd.f32 %v10108, %v10283
    %v10285 = vpop.f32.mrb[0].mxu0
    %10286 = vmatprep.mubr.bf16.mxu0 0
    %10287 = vmatmul.mubr.bf16.gmra.mrb[0].mxu0 %v10031
    %v10288 = vpop.f32.mrb[0].mxu0
    %v10289 = vadd.f32 %v10108, %v10288
    %v10290 = vpop.f32.mrb[0].mxu0
    %v10291 = vpop.f32.mrb[0].mxu0
    %v10292 = vadd.f32 %v10108, %v10291
    %v10293 = vpop.f32.mrb[0].mxu0
    %10294 = vmatprep.mubr.bf16.mxu0 0
    %10295 = vmatmul.mubr.bf16.gmra.mrb[0].mxu0 %v10032
    %v10296 = vpop.f32.mrb[0].mxu0
    %v10297 = vadd.f32 %v10108, %v10296
    %v10298 = vpop.f32.mrb[0].mxu0
    %v10299 = vpop.f32.mrb[0].mxu0
    %v10300 = vadd.f32 %v10108, %v10299
    %v10301 = vpop.f32.mrb[0].mxu0
    %10302 = vmatprep.mubr.bf16.mxu0 0
    %10303 = vmatmul.mubr.bf16.gmra.mrb[0].mxu0 %v10033
    %v10304 = vpop.f32.mrb[0].mxu0
    %v10305 = vadd.f32 %v10108, %v10304
    %v10306 = vpop.f32.mrb[0].mxu0
    %v10307 = vpop.f32.mrb[0].mxu0
    %v10308 = vadd.f32 %v10108, %v10307
    %v10309 = vpop.f32.mrb[0].mxu0
    %10310 = vmatprep.mubr.bf16.mxu0 0
    %10311 = vmatmul.mubr.bf16.gmra.mrb[0].mxu0 %v10034
    %v10312 = vpop.f32.mrb[0].mxu0
    %v10313 = vadd.f32 %v10108, %v10312
    %v10314 = vpop.f32.mrb[0].mxu0
    %v10315 = vpop.f32.mrb[0].mxu0
    %v10316 = vadd.f32 %v10108, %v10315
    %v10317 = vpop.f32.mrb[0].mxu0
    %10318 = vmatprep.mubr.bf16.mxu0 0
    %10319 = vmatmul.mubr.bf16.gmra.mrb[0].mxu0 %v10035
    %v10320 = vpop.f32.mrb[0].mxu0
    %v10321 = vadd.f32 %v10108, %v10320
    %v10322 = vpop.f32.mrb[0].mxu0
    %v10323 = vpop.f32.mrb[0].mxu0
    %v10324 = vadd.f32 %v10108, %v10323
    %v10325 = vpop.f32.mrb[0].mxu0
    %10326 = vmatprep.mubr.bf16.mxu0 0
    %10327 = vmatmul.mubr.bf16.gmra.mrb[0].mxu0 %v10036
    %v10328 = vpop.f32.mrb[0].mxu0
    %v10329 = vadd.f32 %v10108, %v10328
    %v10330 = vpop.f32.mrb[0].mxu0
    %v10331 = vpop.f32.mrb[0].mxu0
    %v10332 = vadd.f32 %v10108, %v10331
    %v10333 = vpop.f32.mrb[0].mxu0
    %10334 = vmatprep.mubr.bf16.mxu0 0
    %10335 = vmatmul.mubr.bf16.gmra.mrb[0].mxu0 %v10037
    %v10336 = vpop.f32.mrb[0].mxu0
    %v10337 = vadd.f32 %v10108, %v10336
    %v10338 = vpop.f32.mrb[0].mxu0
    %v10339 = vpop.f32.mrb[0].mxu0
    %v10340 = vadd.f32 %v10108, %v10339
    %v10341 = vpop.f32.mrb[0].mxu0
    %10342 = vmatprep.mubr.bf16.mxu0 0
    %10343 = vmatmul.mubr.bf16.gmra.mrb[0].mxu0 %v10038
    %v10344 = vpop.f32.mrb[0].mxu0
    %v10345 = vadd.f32 %v10108, %v10344
    %v10346 = vpop.f32.mrb[0].mxu0
    %v10347 = vpop.f32.mrb[0].mxu0
    %v10348 = vadd.f32 %v10108, %v10347
    %v10349 = vpop.f32.mrb[0].mxu0
    %10350 = vmatprep.mubr.bf16.mxu0 0
    %10351 = vmatmul.mubr.bf16.gmra.mrb[0].mxu0 %v10039
    %v10352 = vpop.f32.mrb[0].mxu0
    %v10353 = vadd.f32 %v10108, %v10352
    %v10354 = vpop.f32.mrb[0].mxu0
    %v10355 = vpop.f32.mrb[0].mxu0
    %v10356 = vadd.f32 %v10108, %v10355
    %v10357 = vpop.f32.mrb[0].mxu0
    %10358 = vmatprep.mubr.bf16.mxu0 0
    %10359 = vmatmul.mubr.bf16.gmra.mrb[0].mxu0 %v10040
    %v10360 = vpop.f32.mrb[0].mxu0
    %v10361 = vadd.f32 %v10108, %v10360
    %v10362 = vpop.f32.mrb[0].mxu0
    %v10363 = vpop.f32.mrb[0].mxu0
    %v10364 = vadd.f32 %v10108, %v10363
    %v10365 = vpop.f32.mrb[0].mxu0
    %10366 = vmatprep.mubr.bf16.mxu0 0
    %10367 = vmatmul.mubr.bf16.gmra.mrb[0].mxu0 %v10041
    %v10368 = vpop.f32.mrb[0].mxu0
    %v10369 = vadd.f32 %v10108, %v10368
    %v10370 = vpop.f32.mrb[0].mxu0
    %v10371 = vpop.f32.mrb[0].mxu0
    %v10372 = vadd.f32 %v10108, %v10371
    %v10373 = vpop.f32.mrb[0].mxu0
    %10374 = vmatprep.mubr.bf16.mxu0 0
    %10375 = vmatmul.mubr.bf16.gmra.mrb[0].mxu0 %v10042
    %v10376 = vpop.f32.mrb[0].mxu0
    %v10377 = vadd.f32 %v10108, %v10376
    %v10378 = vpop.f32.mrb[0].mxu0
    %v10379 = vpop.f32.mrb[0].mxu0
    %v10380 = vadd.f32 %v10108, %v10379
    %v10381 = vpop.f32.mrb[0].mxu0
    %10382 = vmatprep.mubr.bf16.mxu0 0
    %10383 = vmatmul.mubr.bf16.gmra.mrb[0].mxu0 %v10043
    %v10384 = vpop.f32.mrb[0].mxu0
    %v10385 = vadd.f32 %v10108, %v10384
    %v10386 = vpop.f32.mrb[0].mxu0
    %v10387 = vpop.f32.mrb[0].mxu0
    %v10388 = vadd.f32 %v10108, %v10387
    %v10389 = vpop.f32.mrb[0].mxu0
    %10390 = vmatprep.mubr.bf16.mxu0 0
    %10391 = vmatmul.mubr.bf16.gmra.mrb[0].mxu0 %v10044
    %v10392 = vpop.f32.mrb[0].mxu0
    %v10393 = vadd.f32 %v10108, %v10392
    %v10394 = vpop.f32.mrb[0].mxu0
    %v10395 = vpop.f32.mrb[0].mxu0
    %v10396 = vadd.f32 %v10108, %v10395
    %v10397 = vpop.f32.mrb[0].mxu0
    %10398 = vmatprep.mubr.bf16.mxu0 0
    %10399 = vmatmul.mubr.bf16.gmra.mrb[0].mxu0 %v10045
    %v10400 = vpop.f32.mrb[0].mxu0
    %v10401 = vadd.f32 %v10108, %v10400
    %v10402 = vpop.f32.mrb[0].mxu0
    %v10403 = vpop.f32.mrb[0].mxu0
    %v10404 = vadd.f32 %v10108, %v10403
    %v10405 = vpop.f32.mrb[0].mxu0
    %10406 = vmatprep.mubr.bf16.mxu0 0
    %10407 = vmatmul.mubr.bf16.gmra.mrb[0].mxu0 %v10046
    %v10408 = vpop.f32.mrb[0].mxu0
    %v10409 = vadd.f32 %v10108, %v10408
    %v10410 = vpop.f32.mrb[0].mxu0
    %v10411 = vpop.f32.mrb[0].mxu0
    %v10412 = vadd.f32 %v10108, %v10411
    %v10413 = vpop.f32.mrb[0].mxu0
    %10414 = vmatprep.mubr.bf16.mxu0 0
    %10415 = vmatmul.mubr.bf16.gmra.mrb[0].mxu0 %v10047
    %v10416 = vpop.f32.mrb[0].mxu0
    %v10417 = vadd.f32 %v10108, %v10416
    %v10418 = vpop.f32.mrb[0].mxu0
    %v10419 = vpop.f32.mrb[0].mxu0
    %v10420 = vadd.f32 %v10108, %v10419
    %v10421 = vpop.f32.mrb[0].mxu0
    %10422 = vmatprep.mubr.bf16.mxu0 0
    %10423 = vmatmul.mubr.bf16.gmra.mrb[0].mxu0 %v10048
    %v10424 = vpop.f32.mrb[0].mxu0
    %v10425 = vadd.f32 %v10108, %v10424
    %v10426 = vpop.f32.mrb[0].mxu0
    %v10427 = vpop.f32.mrb[0].mxu0
    %v10428 = vadd.f32 %v10108, %v10427
    %v10429 = vpop.f32.mrb[0].mxu0
    %10430 = vmatprep.mubr.bf16.mxu0 0
    %10431 = vmatmul.mubr.bf16.gmra.mrb[0].mxu0 %v10049
    %v10432 = vpop.f32.mrb[0].mxu0
    %v10433 = vadd.f32 %v10108, %v10432
    %v10434 = vpop.f32.mrb[0].mxu0
    %v10435 = vpop.f32.mrb[0].mxu0
    %v10436 = vadd.f32 %v10108, %v10435
    %v10437 = vpop.f32.mrb[0].mxu0
    %10438 = vmatprep.mubr.bf16.mxu0 0
    %10439 = vmatmul.mubr.bf16.gmra.mrb[0].mxu0 %v10050
    %v10440 = vpop.f32.mrb[0].mxu0
    %v10441 = vadd.f32 %v10108, %v10440
    %v10442 = vpop.f32.mrb[0].mxu0
    %v10443 = vpop.f32.mrb[0].mxu0
    %v10444 = vadd.f32 %v10108, %v10443
    %v10445 = vpop.f32.mrb[0].mxu0
    %10446 = vmatprep.mubr.bf16.mxu0 0
    %10447 = vmatmul.mubr.bf16.gmra.mrb[0].mxu0 %v10051
    %v10448 = vpop.f32.mrb[0].mxu0
    %v10449 = vadd.f32 %v10108, %v10448
    %v10450 = vpop.f32.mrb[0].mxu0
    %v10451 = vpop.f32.mrb[0].mxu0
    %v10452 = vadd.f32 %v10108, %v10451
    %v10453 = vpop.f32.mrb[0].mxu0
    %10454 = vmatprep.mubr.bf16.mxu0 0
    %10455 = vmatmul.mubr.bf16.gmra.mrb[0].mxu0 %v10052
    %v10456 = vpop.f32.mrb[0].mxu0
    %v10457 = vadd.f32 %v10108, %v10456
    %v10458 = vpop.f32.mrb[0].mxu0
    %v10459 = vpop.f32.mrb[0].mxu0
    %v10460 = vadd.f32 %v10108, %v10459
    %v10461 = vpop.f32.mrb[0].mxu0
    %10462 = vmatprep.mubr.bf16.mxu0 0
    %10463 = vmatmul.mubr.bf16.gmra.mrb[0].mxu0 %v10053
    %v10464 = vpop.f32.mrb[0].mxu0
    %v10465 = vadd.f32 %v10108, %v10464
    %v10466 = vpop.f32.mrb[0].mxu0
    %v10467 = vpop.f32.mrb[0].mxu0
    %v10468 = vadd.f32 %v10108, %v10467
    %v10469 = vpop.f32.mrb[0].mxu0
    %10470 = vmatprep.mubr.bf16.mxu0 0
    %10471 = vmatmul.mubr.bf16.gmra.mrb[0].mxu0 %v10054
    %v10472 = vpop.f32.mrb[0].mxu0
    %v10473 = vadd.f32 %v10108, %v10472
    %v10474 = vpop.f32.mrb[0].mxu0
    %v10475 = vpop.f32.mrb[0].mxu0
    %v10476 = vadd.f32 %v10108, %v10475
    %v10477 = vpop.f32.mrb[0].mxu0
    %10478 = vmatprep.mubr.bf16.mxu0 0
    %10479 = vmatmul.mubr.bf16.gmra.mrb[0].mxu0 %v10055
    %v10480 = vpop.f32.mrb[0].mxu0
    %v10481 = vadd.f32 %v10108, %v10480
    %v10482 = vpop.f32.mrb[0].mxu0
    %v10483 = vpop.f32.mrb[0].mxu0
    %v10484 = vadd.f32 %v10108, %v10483
    %v10485 = vpop.f32.mrb[0].mxu0
    %10486 = vmatprep.mubr.bf16.mxu0 0
    %10487 = vmatmul.mubr.bf16.gmra.mrb[0].mxu0 %v10056
    %v10488 = vpop.f32.mrb[0].mxu0
    %v10489 = vadd.f32 %v10108, %v10488
    %v10490 = vpop.f32.mrb[0].mxu0
    %v10491 = vpop.f32.mrb[0].mxu0
    %v10492 = vadd.f32 %v10108, %v10491
    %v10493 = vpop.f32.mrb[0].mxu0
    %10494 = vmatprep.mubr.bf16.mxu0 0
    %10495 = vmatmul.mubr.bf16.gmra.mrb[0].mxu0 %v10057
    %v10496 = vpop.f32.mrb[0].mxu0
    %v10497 = vadd.f32 %v10108, %v10496
    %v10498 = vpop.f32.mrb[0].mxu0
    %v10499 = vpop.f32.mrb[0].mxu0
    %v10500 = vadd.f32 %v10108, %v10499
    %v10501 = vpop.f32.mrb[0].mxu0
    %10502 = vmatprep.mubr.bf16.mxu0 0
    %10503 = vmatmul.mubr.bf16.gmra.mrb[0].mxu0 %v10058
    %v10504 = vpop.f32.mrb[0].mxu0
    %v10505 = vadd.f32 %v10108, %v10504
    %v10506 = vpop.f32.mrb[0].mxu0
    %v10507 = vpop.f32.mrb[0].mxu0
    %v10508 = vadd.f32 %v10108, %v10507
    %v10509 = vpop.f32.mrb[0].mxu0
    %10510 = vmatprep.mubr.bf16.mxu0 0
    %10511 = vmatmul.mubr.bf16.gmra.mrb[0].mxu0 %v10059
    %v10512 = vpop.f32.mrb[0].mxu0
    %v10513 = vadd.f32 %v10108, %v10512
    %v10514 = vpop.f32.mrb[0].mxu0
    %v10515 = vpop.f32.mrb[0].mxu0
    %v10516 = vadd.f32 %v10108, %v10515
    %v10517 = vpop.f32.mrb[0].mxu0
    %10518 = vmatprep.mubr.bf16.mxu0 0
    %10519 = vmatmul.mubr.bf16.gmra.mrb[0].mxu0 %v10060
    %v10520 = vpop.f32.mrb[0].mxu0
    %v10521 = vadd.f32 %v10108, %v10520
    %v10522 = vpop.f32.mrb[0].mxu0
    %v10523 = vpop.f32.mrb[0].mxu0
    %v10524 = vadd.f32 %v10108, %v10523
    %v10525 = vpop.f32.mrb[0].mxu0
    %10526 = vmatprep.mubr.bf16.mxu0 0
    %10527 = vmatmul.mubr.bf16.gmra.mrb[0].mxu0 %v10061
    %v10528 = vpop.f32.mrb[0].mxu0
    %v10529 = vadd.f32 %v10108, %v10528
    %v10530 = vpop.f32.mrb[0].mxu0
    %v10531 = vpop.f32.mrb[0].mxu0
    %v10532 = vadd.f32 %v10108, %v10531
    %v10533 = vpop.f32.mrb[0].mxu0
    %10534 = vmatprep.mubr.bf16.mxu0 0
    %10535 = vmatmul.mubr.bf16.gmra.mrb[0].mxu0 %v10062
    %v10536 = vpop.f32.mrb[0].mxu0
    %v10537 = vadd.f32 %v10108, %v10536
    %v10538 = vpop.f32.mrb[0].mxu0
    %v10539 = vpop.f32.mrb[0].mxu0
    %v10540 = vadd.f32 %v10108, %v10539
    %v10541 = vpop.f32.mrb[0].mxu0
    %10542 = vmatprep.mubr.bf16.mxu0 0
    %10543 = vmatmul.mubr.bf16.gmra.mrb[0].mxu0 %v10063
    %v10544 = vpop.f32.mrb[0].mxu0
    %v10545 = vadd.f32 %v10108, %v10544
    %v10546 = vpop.f32.mrb[0].mxu0
    %v10547 = vpop.f32.mrb[0].mxu0
    %v10548 = vadd.f32 %v10108, %v10547
    %v10549 = vpop.f32.mrb[0].mxu0
    %10550 = vmatprep.mubr.bf16.mxu0 0
    %10551 = vmatmul.mubr.bf16.gmra.mrb[0].mxu0 %v10064
    %v10552 = vpop.f32.mrb[0].mxu0
    %v10553 = vadd.f32 %v10108, %v10552
    %v10554 = vpop.f32.mrb[0].mxu0
    %v10555 = vpop.f32.mrb[0].mxu0
    %v10556 = vadd.f32 %v10108, %v10555
    %v10557 = vpop.f32.mrb[0].mxu0
    %10558 = vmatprep.mubr.bf16.mxu0 0
    %10559 = vmatmul.mubr.bf16.gmra.mrb[0].mxu0 %v10065
    %v10560 = vpop.f32.mrb[0].mxu0
    %v10561 = vadd.f32 %v10108, %v10560
    %v10562 = vpop.f32.mrb[0].mxu0
    %v10563 = vpop.f32.mrb[0].mxu0
    %v10564 = vadd.f32 %v10108, %v10563
    %v10565 = vpop.f32.mrb[0].mxu0
    %10566 = vmatprep.mubr.bf16.mxu0 0
    %10567 = vmatmul.mubr.bf16.gmra.mrb[0].mxu0 %v10066
    %v10568 = vpop.f32.mrb[0].mxu0
    %v10569 = vadd.f32 %v10108, %v10568
    %v10570 = vpop.f32.mrb[0].mxu0
    %v10571 = vpop.f32.mrb[0].mxu0
    %v10572 = vadd.f32 %v10108, %v10571
    %v10573 = vpop.f32.mrb[0].mxu0
    %10574 = vmatprep.mubr.bf16.mxu0 0
    %10575 = vmatmul.mubr.bf16.gmra.mrb[0].mxu0 %v10067
    %v10576 = vpop.f32.mrb[0].mxu0
    %v10577 = vadd.f32 %v10108, %v10576
    %v10578 = vpop.f32.mrb[0].mxu0
    %v10579 = vpop.f32.mrb[0].mxu0
    %v10580 = vadd.f32 %v10108, %v10579
    %v10581 = vpop.f32.mrb[0].mxu0
    %10582 = vmatprep.mubr.bf16.mxu0 0
    %10583 = vmatmul.mubr.bf16.gmra.mrb[0].mxu0 %v10068
    %v10584 = vpop.f32.mrb[0].mxu0
    %v10585 = vadd.f32 %v10108, %v10584
    %v10586 = vpop.f32.mrb[0].mxu0
    %v10587 = vpop.f32.mrb[0].mxu0
    %v10588 = vadd.f32 %v10108, %v10587
    %v10589 = vpop.f32.mrb[0].mxu0
    %10590 = vmatprep.mubr.bf16.mxu0 0
    %10591 = vmatmul.mubr.bf16.gmra.mrb[0].mxu0 %v10069
    %v10592 = vpop.f32.mrb[0].mxu0
    %v10593 = vadd.f32 %v10108, %v10592
    %v10594 = vpop.f32.mrb[0].mxu0
    %v10595 = vpop.f32.mrb[0].mxu0
    %v10596 = vadd.f32 %v10108, %v10595
    %v10597 = vpop.f32.mrb[0].mxu0
    %10598 = vmatprep.mubr.bf16.mxu0 0
    %10599 = vmatmul.mubr.bf16.gmra.mrb[0].mxu0 %v10070
    %v10600 = vpop.f32.mrb[0].mxu0
    %v10601 = vadd.f32 %v10108, %v10600
    %v10602 = vpop.f32.mrb[0].mxu0
    %v10603 = vpop.f32.mrb[0].mxu0
    %v10604 = vadd.f32 %v10108, %v10603
    %v10605 = vpop.f32.mrb[0].mxu0
    %10606 = vmatprep.mubr.bf16.mxu0 0
    %10607 = vmatmul.mubr.bf16.gmra.mrb[0].mxu0 %v10071
    %v10608 = vpop.f32.mrb[0].mxu0
    %v10609 = vadd.f32 %v10108, %v10608
    %v10610 = vpop.f32.mrb[0].mxu0
    %v10611 = vpop.f32.mrb[0].mxu0
    %v10612 = vadd.f32 %v10108, %v10611
    %v10613 = vpop.f32.mrb[0].mxu0
    %10614 = vmatprep.mubr.bf16.mxu0 0
    %10615 = vmatmul.mubr.bf16.gmra.mrb[0].mxu0 %v10072
    %v10616 = vpop.f32.mrb[0].mxu0
    %v10617 = vadd.f32 %v10108, %v10616
    %v10618 = vpop.f32.mrb[0].mxu0
    %v10619 = vpop.f32.mrb[0].mxu0
    %v10620 = vadd.f32 %v10108, %v10619
    %v10621 = vpop.f32.mrb[0].mxu0
    %10622 = vmatprep.mubr.bf16.mxu0 0
    %10623 = vmatmul.mubr.bf16.gmra.mrb[0].mxu0 %v10073
    %v10624 = vpop.f32.mrb[0].mxu0
    %v10625 = vadd.f32 %v10108, %v10624
    %v10626 = vpop.f32.mrb[0].mxu0
    %v10627 = vpop.f32.mrb[0].mxu0
    %v10628 = vadd.f32 %v10108, %v10627
    %v10629 = vpop.f32.mrb[0].mxu0
    %10630 = vmatprep.mubr.bf16.mxu0 0
    %10631 = vmatmul.mubr.bf16.gmra.mrb[0].mxu0 %v10074
    %v10632 = vpop.f32.mrb[0].mxu0
    %v10633 = vadd.f32 %v10108, %v10632
    %v10634 = vpop.f32.mrb[0].mxu0
    %v10635 = vpop.f32.mrb[0].mxu0
    %v10636 = vadd.f32 %v10108, %v10635
    %v10637 = vpop.f32.mrb[0].mxu0
    %10638 = vmatprep.mubr.bf16.mxu0 0
    %10639 = vmatmul.mubr.bf16.gmra.mrb[0].mxu0 %v10075
    %v10640 = vpop.f32.mrb[0].mxu0
    %v10641 = vadd.f32 %v10108, %v10640
    %v10642 = vpop.f32.mrb[0].mxu0
    %v10643 = vpop.f32.mrb[0].mxu0
    %v10644 = vadd.f32 %v10108, %v10643
    %v10645 = vpop.f32.mrb[0].mxu0
    %10646 = vmatprep.mubr.bf16.mxu0 0
    %10647 = vmatmul.mubr.bf16.gmra.mrb[0].mxu0 %v10076
    %v10648 = vpop.f32.mrb[0].mxu0
    %v10649 = vadd.f32 %v10108, %v10648
    %v10650 = vpop.f32.mrb[0].mxu0
    %v10651 = vpop.f32.mrb[0].mxu0
    %v10652 = vadd.f32 %v10108, %v10651
    %v10653 = vpop.f32.mrb[0].mxu0
    %10654 = vmatprep.mubr.bf16.mxu0 0
    %10655 = vmatmul.mubr.bf16.gmra.mrb[0].mxu0 %v10077
    %v10656 = vpop.f32.mrb[0].mxu0
    %v10657 = vadd.f32 %v10108, %v10656
    %v10658 = vpop.f32.mrb[0].mxu0
    %v10659 = vpop.f32.mrb[0].mxu0
    %v10660 = vadd.f32 %v10108, %v10659
    %v10661 = vpop.f32.mrb[0].mxu0
    %10662 = vmatprep.mubr.bf16.mxu0 0
    %10663 = vmatmul.mubr.bf16.gmra.mrb[0].mxu0 %v10078
    %v10664 = vpop.f32.mrb[0].mxu0
    %v10665 = vadd.f32 %v10108, %v10664
    %v10666 = vpop.f32.mrb[0].mxu0
    %v10667 = vpop.f32.mrb[0].mxu0
    %v10668 = vadd.f32 %v10108, %v10667
    %v10669 = vpop.f32.mrb[0].mxu0
    %10670 = vmatprep.mubr.bf16.mxu0 0
    %10671 = vmatmul.mubr.bf16.gmra.mrb[0].mxu0 %v10079
    %v10672 = vpop.f32.mrb[0].mxu0
    %v10673 = vadd.f32 %v10108, %v10672
    %v10674 = vpop.f32.mrb[0].mxu0
    %v10675 = vpop.f32.mrb[0].mxu0
    %v10676 = vadd.f32 %v10108, %v10675
    %v10677 = vpop.f32.mrb[0].mxu0
    %10678 = vmatprep.mubr.bf16.mxu0 0
    %10679 = vmatmul.mubr.bf16.gmra.mrb[0].mxu0 %v10080
    %v10680 = vpop.f32.mrb[0].mxu0
    %v10681 = vadd.f32 %v10108, %v10680
    %v10682 = vpop.f32.mrb[0].mxu0
    %v10683 = vpop.f32.mrb[0].mxu0
    %v10684 = vadd.f32 %v10108, %v10683
    %v10685 = vpop.f32.mrb[0].mxu0
    %10686 = vmatprep.mubr.bf16.mxu0 0
    %10687 = vmatmul.mubr.bf16.gmra.mrb[0].mxu0 %v10081
    %v10688 = vpop.f32.mrb[0].mxu0
    %v10689 = vadd.f32 %v10108, %v10688
    %v10690 = vpop.f32.mrb[0].mxu0
    %v10691 = vpop.f32.mrb[0].mxu0
    %v10692 = vadd.f32 %v10108, %v10691
    %v10693 = vpop.f32.mrb[0].mxu0
    %10694 = vmatprep.mubr.bf16.mxu0 0
    %10695 = vmatmul.mubr.bf16.gmra.mrb[0].mxu0 %v10082
    %v10696 = vpop.f32.mrb[0].mxu0
    %v10697 = vadd.f32 %v10108, %v10696
    %v10698 = vpop.f32.mrb[0].mxu0
    %v10699 = vpop.f32.mrb[0].mxu0
    %v10700 = vadd.f32 %v10108, %v10699
    %v10701 = vpop.f32.mrb[0].mxu0
    %10702 = vmatprep.mubr.bf16.mxu0 0
    %10703 = vmatmul.mubr.bf16.gmra.mrb[0].mxu0 %v10083
    %v10704 = vpop.f32.mrb[0].mxu0
    %v10705 = vadd.f32 %v10108, %v10704
    %v10706 = vpop.f32.mrb[0].mxu0
    %v10707 = vpop.f32.mrb[0].mxu0
    %v10708 = vadd.f32 %v10108, %v10707
    %v10709 = vpop.f32.mrb[0].mxu0
    %10710 = vmatprep.mubr.bf16.mxu0 0
    %10711 = vmatmul.mubr.bf16.gmra.mrb[0].mxu0 %v10084
    %v10712 = vpop.f32.mrb[0].mxu0
    %v10713 = vadd.f32 %v10108, %v10712
    %v10714 = vpop.f32.mrb[0].mxu0
    %v10715 = vpop.f32.mrb[0].mxu0
    %v10716 = vadd.f32 %v10108, %v10715
    %v10717 = vpop.f32.mrb[0].mxu0
    %10718 = vmatprep.mubr.bf16.mxu0 0
    %10719 = vmatmul.mubr.bf16.gmra.mrb[0].mxu0 %v10085
    %v10720 = vpop.f32.mrb[0].mxu0
    %v10721 = vadd.f32 %v10108, %v10720
    %v10722 = vpop.f32.mrb[0].mxu0
    %v10723 = vpop.f32.mrb[0].mxu0
    %v10724 = vadd.f32 %v10108, %v10723
    %v10725 = vpop.f32.mrb[0].mxu0
    %10726 = vmatprep.mubr.bf16.mxu0 0
    %10727 = vmatmul.mubr.bf16.gmra.mrb[0].mxu0 %v10086
    %v10728 = vpop.f32.mrb[0].mxu0
    %v10729 = vadd.f32 %v10108, %v10728
    %v10730 = vpop.f32.mrb[0].mxu0
    %v10731 = vpop.f32.mrb[0].mxu0
    %v10732 = vadd.f32 %v10108, %v10731
    %v10733 = vpop.f32.mrb[0].mxu0
    %10734 = vdwg.mxu0
    %v10735 = vadd.f32 %v5889, %v10193
    %v10736 = vadd.f32 %v5890, %v10196
    %v10737 = vadd.f32 %v5891, %v10201
    %v10738 = vadd.f32 %v5892, %v10204
    %v10739 = vadd.f32 %v5893, %v10209
    %v10740 = vadd.f32 %v5894, %v10212
    %v10741 = vadd.f32 %v5895, %v10217
    %v10742 = vadd.f32 %v5896, %v10220
    %v10743 = vadd.f32 %v5897, %v10225
    %v10744 = vadd.f32 %v5898, %v10228
    %v10745 = vadd.f32 %v5899, %v10233
    %v10746 = vadd.f32 %v5900, %v10236
    %v10747 = vadd.f32 %v5901, %v10241
    %v10748 = vadd.f32 %v5902, %v10244
    %v10749 = vadd.f32 %v5903, %v10249
    %v10750 = vadd.f32 %v5904, %v10252
    %v10751 = vadd.f32 %v5905, %v10257
    %v10752 = vadd.f32 %v5906, %v10260
    %v10753 = vadd.f32 %v5907, %v10265
    %v10754 = vadd.f32 %v5908, %v10268
    %v10755 = vadd.f32 %v5909, %v10273
    %v10756 = vadd.f32 %v5910, %v10276
    %v10757 = vadd.f32 %v5911, %v10281
    %v10758 = vadd.f32 %v5912, %v10284
    %v10759 = vadd.f32 %v5913, %v10289
    %v10760 = vadd.f32 %v5914, %v10292
    %v10761 = vadd.f32 %v5915, %v10297
    %v10762 = vadd.f32 %v5916, %v10300
    %v10763 = vadd.f32 %v5917, %v10305
    %v10764 = vadd.f32 %v5918, %v10308
    %v10765 = vadd.f32 %v5919, %v10313
    %v10766 = vadd.f32 %v5920, %v10316
    %v10767 = vadd.f32 %v5921, %v10321
    %v10768 = vadd.f32 %v5922, %v10324
    %v10769 = vadd.f32 %v5923, %v10329
    %v10770 = vadd.f32 %v5924, %v10332
    %v10771 = vadd.f32 %v5925, %v10337
    %v10772 = vadd.f32 %v5926, %v10340
    %v10773 = vadd.f32 %v5927, %v10345
    %v10774 = vadd.f32 %v5928, %v10348
    %v10775 = vadd.f32 %v5929, %v10353
    %v10776 = vadd.f32 %v5930, %v10356
    %v10777 = vadd.f32 %v5931, %v10361
    %v10778 = vadd.f32 %v5932, %v10364
    %v10779 = vadd.f32 %v5933, %v10369
    %v10780 = vadd.f32 %v5934, %v10372
    %v10781 = vadd.f32 %v5935, %v10377
    %v10782 = vadd.f32 %v5936, %v10380
    %v10783 = vadd.f32 %v5937, %v10385
    %v10784 = vadd.f32 %v5938, %v10388
    %v10785 = vadd.f32 %v5939, %v10393
    %v10786 = vadd.f32 %v5940, %v10396
    %v10787 = vadd.f32 %v5941, %v10401
    %v10788 = vadd.f32 %v5942, %v10404
    %v10789 = vadd.f32 %v5943, %v10409
    %v10790 = vadd.f32 %v5944, %v10412
    %v10791 = vadd.f32 %v5945, %v10417
    %v10792 = vadd.f32 %v5946, %v10420
    %v10793 = vadd.f32 %v5947, %v10425
    %v10794 = vadd.f32 %v5948, %v10428
    %v10795 = vadd.f32 %v5949, %v10433
    %v10796 = vadd.f32 %v5950, %v10436
    %v10797 = vadd.f32 %v5951, %v10441
    %v10798 = vadd.f32 %v5952, %v10444
    %v10799 = vadd.f32 %v5953, %v10449
    %v10800 = vadd.f32 %v5954, %v10452
    %v10801 = vadd.f32 %v5955, %v10457
    %v10802 = vadd.f32 %v5956, %v10460
    %v10803 = vadd.f32 %v5957, %v10465
    %v10804 = vadd.f32 %v5958, %v10468
    %v10805 = vadd.f32 %v5959, %v10473
    %v10806 = vadd.f32 %v5960, %v10476
    %v10807 = vadd.f32 %v5961, %v10481
    %v10808 = vadd.f32 %v5962, %v10484
    %v10809 = vadd.f32 %v5963, %v10489
    %v10810 = vadd.f32 %v5964, %v10492
    %v10811 = vadd.f32 %v5965, %v10497
    %v10812 = vadd.f32 %v5966, %v10500
    %v10813 = vadd.f32 %v5967, %v10505
    %v10814 = vadd.f32 %v5968, %v10508
    %v10815 = vadd.f32 %v5969, %v10513
    %v10816 = vadd.f32 %v5970, %v10516
    %v10817 = vadd.f32 %v5971, %v10521
    %v10818 = vadd.f32 %v5972, %v10524
    %v10819 = vadd.f32 %v5973, %v10529
    %v10820 = vadd.f32 %v5974, %v10532
    %v10821 = vadd.f32 %v5975, %v10537
    %v10822 = vadd.f32 %v5976, %v10540
    %v10823 = vadd.f32 %v5977, %v10545
    %v10824 = vadd.f32 %v5978, %v10548
    %v10825 = vadd.f32 %v5979, %v10553
    %v10826 = vadd.f32 %v5980, %v10556
    %v10827 = vadd.f32 %v5981, %v10561
    %v10828 = vadd.f32 %v5982, %v10564
    %v10829 = vadd.f32 %v5983, %v10569
    %v10830 = vadd.f32 %v5984, %v10572
    %v10831 = vadd.f32 %v5985, %v10577
    %v10832 = vadd.f32 %v5986, %v10580
    %v10833 = vadd.f32 %v5987, %v10585
    %v10834 = vadd.f32 %v5988, %v10588
    %v10835 = vadd.f32 %v5989, %v10593
    %v10836 = vadd.f32 %v5990, %v10596
    %v10837 = vadd.f32 %v5991, %v10601
    %v10838 = vadd.f32 %v5992, %v10604
    %v10839 = vadd.f32 %v5993, %v10609
    %v10840 = vadd.f32 %v5994, %v10612
    %v10841 = vadd.f32 %v5995, %v10617
    %v10842 = vadd.f32 %v5996, %v10620
    %v10843 = vadd.f32 %v5997, %v10625
    %v10844 = vadd.f32 %v5998, %v10628
    %v10845 = vadd.f32 %v5999, %v10633
    %v10846 = vadd.f32 %v6000, %v10636
    %v10847 = vadd.f32 %v6001, %v10641
    %v10848 = vadd.f32 %v6002, %v10644
    %v10849 = vadd.f32 %v6003, %v10649
    %v10850 = vadd.f32 %v6004, %v10652
    %v10851 = vadd.f32 %v6005, %v10657
    %v10852 = vadd.f32 %v6006, %v10660
    %v10853 = vadd.f32 %v6007, %v10665
    %v10854 = vadd.f32 %v6008, %v10668
    %v10855 = vadd.f32 %v6009, %v10673
    %v10856 = vadd.f32 %v6010, %v10676
    %v10857 = vadd.f32 %v6011, %v10681
    %v10858 = vadd.f32 %v6012, %v10684
    %v10859 = vadd.f32 %v6013, %v10689
    %v10860 = vadd.f32 %v6014, %v10692
    %v10861 = vadd.f32 %v6015, %v10697
    %v10862 = vadd.f32 %v6016, %v10700
    %v10863 = vadd.f32 %v6017, %v10705
    %v10864 = vadd.f32 %v6018, %v10708
    %v10865 = vadd.f32 %v6019, %v10713
    %v10866 = vadd.f32 %v6020, %v10716
    %v10867 = vadd.f32 %v6021, %v10721
    %v10868 = vadd.f32 %v6022, %v10724
    %v10869 = vadd.f32 %v6023, %v10729
    %v10870 = vadd.f32 %v6024, %v10732
    %10871 = vst [vmem:[#allocation11] sm:$0xff] %v10735
    %10872 = vst [vmem:[#allocation11 + $0x8] sm:$0xff] %v10736
    %10873 = vst [vmem:[#allocation11 + $0x10] sm:$0xff] %v10737
    %10874 = vst [vmem:[#allocation11 + $0x18] sm:$0xff] %v10738
    %10875 = vst [vmem:[#allocation11 + $0x20] sm:$0xff] %v10739
    %10876 = vst [vmem:[#allocation11 + $0x28] sm:$0xff] %v10740
    %10877 = vst [vmem:[#allocation11 + $0x30] sm:$0xff] %v10741
    %10878 = vst [vmem:[#allocation11 + $0x38] sm:$0xff] %v10742
    %10879 = vst [vmem:[#allocation11 + $0x40] sm:$0xff] %v10743
    %10880 = vst [vmem:[#allocation11 + $0x48] sm:$0xff] %v10744
    %10881 = vst [vmem:[#allocation11 + $0x50] sm:$0xff] %v10745
    %10882 = vst [vmem:[#allocation11 + $0x58] sm:$0xff] %v10746
    %10883 = vst [vmem:[#allocation11 + $0x60] sm:$0xff] %v10747
    %10884 = vst [vmem:[#allocation11 + $0x68] sm:$0xff] %v10748
    %10885 = vst [vmem:[#allocation11 + $0x70] sm:$0xff] %v10749
    %10886 = vst [vmem:[#allocation11 + $0x78] sm:$0xff] %v10750
    %10887 = vst [vmem:[#allocation11 + $0x80] sm:$0xff] %v10751
    %10888 = vst [vmem:[#allocation11 + $0x88] sm:$0xff] %v10752
    %10889 = vst [vmem:[#allocation11 + $0x90] sm:$0xff] %v10753
    %10890 = vst [vmem:[#allocation11 + $0x98] sm:$0xff] %v10754
    %10891 = vst [vmem:[#allocation11 + $0xa0] sm:$0xff] %v10755
    %10892 = vst [vmem:[#allocation11 + $0xa8] sm:$0xff] %v10756
    %10893 = vst [vmem:[#allocation11 + $0xb0] sm:$0xff] %v10757
    %10894 = vst [vmem:[#allocation11 + $0xb8] sm:$0xff] %v10758
    %10895 = vst [vmem:[#allocation11 + $0xc0] sm:$0xff] %v10759
    %10896 = vst [vmem:[#allocation11 + $0xc8] sm:$0xff] %v10760
    %10897 = vst [vmem:[#allocation11 + $0xd0] sm:$0xff] %v10761
    %10898 = vst [vmem:[#allocation11 + $0xd8] sm:$0xff] %v10762
    %10899 = vst [vmem:[#allocation11 + $0xe0] sm:$0xff] %v10763
    %10900 = vst [vmem:[#allocation11 + $0xe8] sm:$0xff] %v10764
    %10901 = vst [vmem:[#allocation11 + $0xf0] sm:$0xff] %v10765
    %10902 = vst [vmem:[#allocation11 + $0xf8] sm:$0xff] %v10766
    %10903 = vst [vmem:[#allocation11 + $0x100] sm:$0xff] %v10767
    %10904 = vst [vmem:[#allocation11 + $0x108] sm:$0xff] %v10768
    %10905 = vst [vmem:[#allocation11 + $0x110] sm:$0xff] %v10769
    %10906 = vst [vmem:[#allocation11 + $0x118] sm:$0xff] %v10770
    %10907 = vst [vmem:[#allocation11 + $0x120] sm:$0xff] %v10771
    %10908 = vst [vmem:[#allocation11 + $0x128] sm:$0xff] %v10772
    %10909 = vst [vmem:[#allocation11 + $0x130] sm:$0xff] %v10773
    %10910 = vst [vmem:[#allocation11 + $0x138] sm:$0xff] %v10774
    %10911 = vst [vmem:[#allocation11 + $0x140] sm:$0xff] %v10775
    %10912 = vst [vmem:[#allocation11 + $0x148] sm:$0xff] %v10776
    %10913 = vst [vmem:[#allocation11 + $0x150] sm:$0xff] %v10777
    %10914 = vst [vmem:[#allocation11 + $0x158] sm:$0xff] %v10778
    %10915 = vst [vmem:[#allocation11 + $0x160] sm:$0xff] %v10779
    %10916 = vst [vmem:[#allocation11 + $0x168] sm:$0xff] %v10780
    %10917 = vst [vmem:[#allocation11 + $0x170] sm:$0xff] %v10781
    %10918 = vst [vmem:[#allocation11 + $0x178] sm:$0xff] %v10782
    %10919 = vst [vmem:[#allocation11 + $0x180] sm:$0xff] %v10783
    %10920 = vst [vmem:[#allocation11 + $0x188] sm:$0xff] %v10784
    %10921 = vst [vmem:[#allocation11 + $0x190] sm:$0xff] %v10785
    %10922 = vst [vmem:[#allocation11 + $0x198] sm:$0xff] %v10786
    %10923 = vst [vmem:[#allocation11 + $0x1a0] sm:$0xff] %v10787
    %10924 = vst [vmem:[#allocation11 + $0x1a8] sm:$0xff] %v10788
    %10925 = vst [vmem:[#allocation11 + $0x1b0] sm:$0xff] %v10789
    %10926 = vst [vmem:[#allocation11 + $0x1b8] sm:$0xff] %v10790
    %10927 = vst [vmem:[#allocation11 + $0x1c0] sm:$0xff] %v10791
    %10928 = vst [vmem:[#allocation11 + $0x1c8] sm:$0xff] %v10792
    %10929 = vst [vmem:[#allocation11 + $0x1d0] sm:$0xff] %v10793
    %10930 = vst [vmem:[#allocation11 + $0x1d8] sm:$0xff] %v10794
    %10931 = vst [vmem:[#allocation11 + $0x1e0] sm:$0xff] %v10795
    %10932 = vst [vmem:[#allocation11 + $0x1e8] sm:$0xff] %v10796
    %10933 = vst [vmem:[#allocation11 + $0x1f0] sm:$0xff] %v10797
    %10934 = vst [vmem:[#allocation11 + $0x1f8] sm:$0xff] %v10798
    %10935 = vst [vmem:[#allocation11 + $0x200] sm:$0xff] %v10799
    %10936 = vst [vmem:[#allocation11 + $0x208] sm:$0xff] %v10800
    %10937 = vst [vmem:[#allocation11 + $0x210] sm:$0xff] %v10801
    %10938 = vst [vmem:[#allocation11 + $0x218] sm:$0xff] %v10802
    %10939 = vst [vmem:[#allocation11 + $0x220] sm:$0xff] %v10803
    %10940 = vst [vmem:[#allocation11 + $0x228] sm:$0xff] %v10804
    %10941 = vst [vmem:[#allocation11 + $0x230] sm:$0xff] %v10805
    %10942 = vst [vmem:[#allocation11 + $0x238] sm:$0xff] %v10806
    %10943 = vst [vmem:[#allocation11 + $0x240] sm:$0xff] %v10807
    %10944 = vst [vmem:[#allocation11 + $0x248] sm:$0xff] %v10808
    %10945 = vst [vmem:[#allocation11 + $0x250] sm:$0xff] %v10809
    %10946 = vst [vmem:[#allocation11 + $0x258] sm:$0xff] %v10810
    %10947 = vst [vmem:[#allocation11 + $0x260] sm:$0xff] %v10811
    %10948 = vst [vmem:[#allocation11 + $0x268] sm:$0xff] %v10812
    %10949 = vst [vmem:[#allocation11 + $0x270] sm:$0xff] %v10813
    %10950 = vst [vmem:[#allocation11 + $0x278] sm:$0xff] %v10814
    %10951 = vst [vmem:[#allocation11 + $0x280] sm:$0xff] %v10815
    %10952 = vst [vmem:[#allocation11 + $0x288] sm:$0xff] %v10816
    %10953 = vst [vmem:[#allocation11 + $0x290] sm:$0xff] %v10817
    %10954 = vst [vmem:[#allocation11 + $0x298] sm:$0xff] %v10818
    %10955 = vst [vmem:[#allocation11 + $0x2a0] sm:$0xff] %v10819
    %10956 = vst [vmem:[#allocation11 + $0x2a8] sm:$0xff] %v10820
    %10957 = vst [vmem:[#allocation11 + $0x2b0] sm:$0xff] %v10821
    %10958 = vst [vmem:[#allocation11 + $0x2b8] sm:$0xff] %v10822
    %10959 = vst [vmem:[#allocation11 + $0x2c0] sm:$0xff] %v10823
    %10960 = vst [vmem:[#allocation11 + $0x2c8] sm:$0xff] %v10824
    %10961 = vst [vmem:[#allocation11 + $0x2d0] sm:$0xff] %v10825
    %10962 = vst [vmem:[#allocation11 + $0x2d8] sm:$0xff] %v10826
    %10963 = vst [vmem:[#allocation11 + $0x2e0] sm:$0xff] %v10827
    %10964 = vst [vmem:[#allocation11 + $0x2e8] sm:$0xff] %v10828
    %10965 = vst [vmem:[#allocation11 + $0x2f0] sm:$0xff] %v10829
    %10966 = vst [vmem:[#allocation11 + $0x2f8] sm:$0xff] %v10830
    %10967 = vst [vmem:[#allocation11 + $0x300] sm:$0xff] %v10831
    %10968 = vst [vmem:[#allocation11 + $0x308] sm:$0xff] %v10832
    %10969 = vst [vmem:[#allocation11 + $0x310] sm:$0xff] %v10833
    %10970 = vst [vmem:[#allocation11 + $0x318] sm:$0xff] %v10834
    %10971 = vst [vmem:[#allocation11 + $0x320] sm:$0xff] %v10835
    %10972 = vst [vmem:[#allocation11 + $0x328] sm:$0xff] %v10836
    %10973 = vst [vmem:[#allocation11 + $0x330] sm:$0xff] %v10837
    %10974 = vst [vmem:[#allocation11 + $0x338] sm:$0xff] %v10838
    %10975 = vst [vmem:[#allocation11 + $0x340] sm:$0xff] %v10839
    %10976 = vst [vmem:[#allocation11 + $0x348] sm:$0xff] %v10840
    %10977 = vst [vmem:[#allocation11 + $0x350] sm:$0xff] %v10841
    %10978 = vst [vmem:[#allocation11 + $0x358] sm:$0xff] %v10842
    %10979 = vst [vmem:[#allocation11 + $0x360] sm:$0xff] %v10843
    %10980 = vst [vmem:[#allocation11 + $0x368] sm:$0xff] %v10844
    %10981 = vst [vmem:[#allocation11 + $0x370] sm:$0xff] %v10845
    %10982 = vst [vmem:[#allocation11 + $0x378] sm:$0xff] %v10846
    %10983 = vst [vmem:[#allocation11 + $0x380] sm:$0xff] %v10847
    %10984 = vst [vmem:[#allocation11 + $0x388] sm:$0xff] %v10848
    %10985 = vst [vmem:[#allocation11 + $0x390] sm:$0xff] %v10849
    %10986 = vst [vmem:[#allocation11 + $0x398] sm:$0xff] %v10850
    %10987 = vst [vmem:[#allocation11 + $0x3a0] sm:$0xff] %v10851
    %10988 = vst [vmem:[#allocation11 + $0x3a8] sm:$0xff] %v10852
    %10989 = vst [vmem:[#allocation11 + $0x3b0] sm:$0xff] %v10853
    %10990 = vst [vmem:[#allocation11 + $0x3b8] sm:$0xff] %v10854
    %10991 = vst [vmem:[#allocation11 + $0x3c0] sm:$0xff] %v10855
    %10992 = vst [vmem:[#allocation11 + $0x3c8] sm:$0xff] %v10856
    %10993 = vst [vmem:[#allocation11 + $0x3d0] sm:$0xff] %v10857
    %10994 = vst [vmem:[#allocation11 + $0x3d8] sm:$0xff] %v10858
    %10995 = vst [vmem:[#allocation11 + $0x3e0] sm:$0xff] %v10859
    %10996 = vst [vmem:[#allocation11 + $0x3e8] sm:$0xff] %v10860
    %10997 = vst [vmem:[#allocation11 + $0x3f0] sm:$0xff] %v10861
    %10998 = vst [vmem:[#allocation11 + $0x3f8] sm:$0xff] %v10862
    %10999 = vst [vmem:[#allocation11 + $0x400] sm:$0xff] %v10863
    %11000 = vst [vmem:[#allocation11 + $0x408] sm:$0xff] %v10864
    %11001 = vst [vmem:[#allocation11 + $0x410] sm:$0xff] %v10865
    %11002 = vst [vmem:[#allocation11 + $0x418] sm:$0xff] %v10866
    %11003 = vst [vmem:[#allocation11 + $0x420] sm:$0xff] %v10867
    %11004 = vst [vmem:[#allocation11 + $0x428] sm:$0xff] %v10868
    %11005 = vst [vmem:[#allocation11 + $0x430] sm:$0xff] %v10869
    %11006 = vst [vmem:[#allocation11 + $0x438] sm:$0xff] %v10870
    // Predicated region
    $region74: #{tpu_custom_call.1} parent=1 // pred_check
      _
    $region75: #{tpu_custom_call.1} parent=1 // pred_check_branch
      %11008 = sbr.rel (0) target = $region77
    $region76: #{tpu_custom_call.1} parent=1 // pred_region
      %s11010 = ssub.s32 17408, 17408
      %11011 = vsyncadd [#allocation4], %s11010
      %s11012 = sshll.u32 [#allocation11], 4
      %s11013 = int_to_ptr.vmem [resolvable:$true] %s11012
      %11018 = dma.vmem_to_hbm [thread:$0]  %s11013, 17408, %s13, [#allocation4], 128, 128, 8
    $region77: #{tpu_custom_call.1} parent=1 // pred_fallthru
      _
    // Predicated region
    $region78: #{tpu_custom_call.1} parent=1 // pred_check
      _
    $region79: #{tpu_custom_call.1} parent=1 // pred_check_branch
      %11020 = sbr.rel (0) target = $region81
    $region80: #{tpu_custom_call.1} parent=1 // pred_region
      %11021 = dma.done [#allocation4], 17408
    $region81: #{tpu_custom_call.1} parent=1 // pred_fallthru
      _
    %11022 = vsyncpa [#allocation3], 1
    %11023 = vsyncpa [#allocation6], 1
    %11024 = vsyncpa [#allocation9], 1
    %11025 = vsyncpa [#allocation4], 1

</llo_original>
